<compile_context>
chip_gen: v7x
topology: tpu7x:2x2x1
jax: 0.10.0
libtpu: 0.0.40
codegen_flags: <defaults>
</compile_context>

<pallas_src>
import functools
import math

import jax
import jax.numpy as jnp
from jax import lax
from jax.experimental import pallas as pl
from jax.experimental.pallas import tpu as pltpu

_LN_EPS = 1e-5
_TM_CAP = 512  # big row tiles amortize the ~0.35us/step overhead (v5e/v6e roofline)


# ---------------- generation-aware knobs ----------------

def _detect_vmem_limit():
    """Scoped-VMEM budget: <=3/4 of physical and >=24 MiB headroom for the compiler."""
    try:
        phys = int(pltpu.get_tpu_info().vmem_capacity_bytes)
        return max(32 << 20, min(3 * phys // 4, phys - (24 << 20)))
    except Exception:
        return 40 << 20  # safe on every generation (v7x has 64 MiB physical)


_VMEM_LIMIT = _detect_vmem_limit()


def _cparams(grid_len=1):
    return pltpu.CompilerParams(
        dimension_semantics=("parallel",) * grid_len,
        vmem_limit_bytes=_VMEM_LIMIT,
    )


def _tile_m(M):
    """Row tiling: <=_TM_CAP rows per tile, prefer >=2 grid steps (v7x megacore)."""
    if M > _TM_CAP:
        return _TM_CAP, pl.cdiv(M, _TM_CAP)
    if M >= 16 and M % 16 == 0:
        return M // 2, 2
    return M, 1


def _probe_buffered():
    """Check that pipeline_mode=pl.Buffered(1) constructs AND lowers on this jax."""
    try:
        spec = pl.BlockSpec((8, 128), lambda i: (0, 0), pipeline_mode=pl.Buffered(1))

        def k(a_ref, o_ref):
            o_ref[...] = a_ref[...] + 1.0

        out = pl.pallas_call(
            k,
            out_shape=jax.ShapeDtypeStruct((16, 128), jnp.float32),
            grid=(2,),
            in_specs=[spec],
            out_specs=pl.BlockSpec((8, 128), lambda i: (i, 0)),
        )(jnp.zeros((8, 128), jnp.float32))
        jax.block_until_ready(out)
        return True
    except Exception:
        return False


_HAS_BUFFERED = _probe_buffered()


def _const_spec(shape):
    """BlockSpec for blocks whose index never changes (weights / biases / LN params).
    Single-buffered when supported — default double-buffering only wastes VMEM here."""
    nd = len(shape)
    idx = lambda i: (0,) * nd
    if _HAS_BUFFERED:
        return pl.BlockSpec(shape, idx, pipeline_mode=pl.Buffered(1))
    return pl.BlockSpec(shape, idx)


# ---------------- kernel bodies ----------------

def _layernorm(y, g, b):
    mean = jnp.mean(y, axis=-1, keepdims=True)
    c = y - mean
    var = jnp.mean(c * c, axis=-1, keepdims=True)
    return (c * lax.rsqrt(var + _LN_EPS)) * g + b


def _linear_kernel(*refs, act, has_res):
    """y = x @ w + b [; relu] [; + residual]   (fp32 accumulate, cast on store)."""
    if has_res:
        x_ref, w_ref, b_ref, r_ref, o_ref = refs
    else:
        x_ref, w_ref, b_ref, o_ref = refs
        r_ref = None
    y = jnp.dot(x_ref[...], w_ref[...], preferred_element_type=jnp.float32) + b_ref[...]
    if act == "relu":
        y = jnp.maximum(y, 0.0)
    if r_ref is not None:
        y = y + r_ref[...].astype(jnp.float32)
    o_ref[...] = y.astype(o_ref.dtype)


def _linear_ln_kernel(x_ref, w_ref, b_ref, g_ref, bt_ref, o_ref):
    """out = LayerNorm(x @ w + b)   (fp32 statistics)."""
    y = jnp.dot(x_ref[...], w_ref[...], preferred_element_type=jnp.float32) + b_ref[...]
    o_ref[...] = _layernorm(y, g_ref[...], bt_ref[...]).astype(o_ref.dtype)


def _ffn_ln_kernel(x_ref, w1_ref, b1_ref, w2_ref, b2_ref, g_ref, bt_ref, o_ref):
    """out = LayerNorm(x + linear2(relu(linear1(x)))) — dff activation never leaves VMEM."""
    x = x_ref[...]
    h = jnp.dot(x, w1_ref[...], preferred_element_type=jnp.float32) + b1_ref[...]
    h = jnp.maximum(h, 0.0).astype(x.dtype)
    y = jnp.dot(h, w2_ref[...], preferred_element_type=jnp.float32) + b2_ref[...]
    t = x.astype(jnp.float32) + y
    o_ref[...] = _layernorm(t, g_ref[...], bt_ref[...]).astype(o_ref.dtype)


def _mha_heads(q, k, v, nhead, compute_dtype):
    """Per-head softmax attention for ONE batch element.
    q: (S, D) fp32 (softmax scale already folded into W_q), k/v: (Skv, D) fp32.
    Returns the lane-dense (S, D) head concatenation in `compute_dtype`."""
    D = q.shape[-1]
    dh = D // nhead
    outs = []
    for h in range(nhead):
        sl = slice(h * dh, (h + 1) * dh)
        qh = q[:, sl].astype(compute_dtype)
        kh = k[:, sl].astype(compute_dtype)
        vh = v[:, sl].astype(compute_dtype)
        s = lax.dot_general(qh, kh, (((1,), (1,)), ((), ())),
                            preferred_element_type=jnp.float32)      # (S, Skv)
        m = jnp.max(s, axis=-1, keepdims=True)
        p = jnp.exp(s - m)
        p = p / jnp.sum(p, axis=-1, keepdims=True)                    # exact softmax
        outs.append(jnp.dot(p.astype(compute_dtype), vh,
                            preferred_element_type=jnp.float32))      # (S, dh)
    return jnp.concatenate(outs, axis=-1).astype(compute_dtype)       # (S, D)


def _sa_block_kernel(x_ref, wqkv_ref, bqkv_ref, wout_ref, bout_ref,
                     g_ref, bt_ref, o_ref, *, nhead):
    """Fused self-attention block: QKV proj + MHA + out-proj + residual + LayerNorm."""
    x = x_ref[...]                                                    # (S, D) bf16
    D = x.shape[-1]
    qkv = jnp.dot(x, wqkv_ref[...], preferred_element_type=jnp.float32) + bqkv_ref[...]
    attn = _mha_heads(qkv[:, :D], qkv[:, D:2 * D], qkv[:, 2 * D:], nhead, x.dtype)
    y = jnp.dot(attn, wout_ref[...], preferred_element_type=jnp.float32) + bout_ref[...]
    y = y + x.astype(jnp.float32)                                     # residual
    o_ref[...] = _layernorm(y, g_ref[...], bt_ref[...]).astype(o_ref.dtype)


def _ca_block_kernel(x_ref, m_ref, wq_ref, bq_ref, wkv_ref, bkv_ref,
                     wout_ref, bout_ref, g_ref, bt_ref, o_ref, *, nhead):
    """Fused cross-attention block: Q/KV proj + MHA + out-proj + residual + LayerNorm."""
    x = x_ref[...]                                                    # (S, D)
    mem = m_ref[...]                                                  # (Sm, D)
    D = x.shape[-1]
    q = jnp.dot(x, wq_ref[...], preferred_element_type=jnp.float32) + bq_ref[...]
    kv = jnp.dot(mem, wkv_ref[...], preferred_element_type=jnp.float32) + bkv_ref[...]
    attn = _mha_heads(q, kv[:, :D], kv[:, D:], nhead, x.dtype)
    y = jnp.dot(attn, wout_ref[...], preferred_element_type=jnp.float32) + bout_ref[...]
    y = y + x.astype(jnp.float32)                                     # residual
    o_ref[...] = _layernorm(y, g_ref[...], bt_ref[...]).astype(o_ref.dtype)


# ---------------- pallas_call wrappers ----------------

def linear_pallas(x, w, b, act=None, residual=None, out_dtype=jnp.bfloat16):
    """x: (M,K), w: (K,N) pre-transposed, b: (1,N)."""
    M, K = x.shape
    N = w.shape[1]
    tm, nt = _tile_m(M)
    in_specs = [pl.BlockSpec((tm, K), lambda i: (i, 0)),
                _const_spec((K, N)),
                _const_spec((1, N))]
    args = [x, w, b]
    if residual is not None:
        in_specs.append(pl.BlockSpec((tm, N), lambda i: (i, 0)))
        args.append(residual)
    return pl.pallas_call(
        functools.partial(_linear_kernel, act=act, has_res=residual is not None),
        out_shape=jax.ShapeDtypeStruct((M, N), out_dtype),
        grid=(nt,),
        in_specs=in_specs,
        out_specs=pl.BlockSpec((tm, N), lambda i: (i, 0)),
        compiler_params=_cparams(1),
    )(*args)


def linear_ln_pallas(x, w, b, gamma, beta, out_dtype=jnp.bfloat16):
    """LayerNorm(x @ w + b)."""
    M, K = x.shape
    N = w.shape[1]
    tm, nt = _tile_m(M)
    return pl.pallas_call(
        _linear_ln_kernel,
        out_shape=jax.ShapeDtypeStruct((M, N), out_dtype),
        grid=(nt,),
        in_specs=[pl.BlockSpec((tm, K), lambda i: (i, 0)),
                  _const_spec((K, N)), _const_spec((1, N)),
                  _const_spec((1, N)), _const_spec((1, N))],
        out_specs=pl.BlockSpec((tm, N), lambda i: (i, 0)),
        compiler_params=_cparams(1),
    )(x, w, b, gamma, beta)


def ffn_ln_pallas(x, w1, b1, w2, b2, gamma, beta, out_dtype=jnp.bfloat16):
    """LayerNorm(x + W2 relu(W1 x + b1) + b2)."""
    M, D = x.shape
    dff = w1.shape[1]
    tm, nt = _tile_m(M)
    return pl.pallas_call(
        _ffn_ln_kernel,
        out_shape=jax.ShapeDtypeStruct((M, D), out_dtype),
        grid=(nt,),
        in_specs=[pl.BlockSpec((tm, D), lambda i: (i, 0)),
                  _const_spec((D, dff)), _const_spec((1, dff)),
                  _const_spec((dff, D)), _const_spec((1, D)),
                  _const_spec((1, D)), _const_spec((1, D))],
        out_specs=pl.BlockSpec((tm, D), lambda i: (i, 0)),
        compiler_params=_cparams(1),
    )(x, w1, b1, w2, b2, gamma, beta)


def sa_block_pallas(x, p, gamma, beta, *, B, S, nhead):
    """Fused self-attention block over batch-major rows (B*S, D); grid over batch."""
    M, D = x.shape
    assert M == B * S
    assert B == 1 or S % 8 == 0, "per-batch sequence length must be a multiple of 8"
    return pl.pallas_call(
        functools.partial(_sa_block_kernel, nhead=nhead),
        out_shape=jax.ShapeDtypeStruct((M, D), x.dtype),
        grid=(B,),
        in_specs=[pl.BlockSpec((S, D), lambda bi: (bi, 0)),
                  _const_spec((D, 3 * D)), _const_spec((1, 3 * D)),
                  _const_spec((D, D)), _const_spec((1, D)),
                  _const_spec((1, D)), _const_spec((1, D))],
        out_specs=pl.BlockSpec((S, D), lambda bi: (bi, 0)),
        compiler_params=_cparams(1),
    )(x, p["w_qkv"], p["b_qkv"], p["w_out"], p["b_out"], gamma, beta)


def ca_block_pallas(x, mem, p, gamma, beta, *, B, S, Sm, nhead):
    """Fused cross-attention block; x: (B*S, D), mem: (B*Sm, D); grid over batch."""
    M, D = x.shape
    assert M == B * S and mem.shape[0] == B * Sm
    assert B == 1 or (S % 8 == 0 and Sm % 8 == 0)
    return pl.pallas_call(
        functools.partial(_ca_block_kernel, nhead=nhead),
        out_shape=jax.ShapeDtypeStruct((M, D), x.dtype),
        grid=(B,),
        in_specs=[pl.BlockSpec((S, D), lambda bi: (bi, 0)),
                  pl.BlockSpec((Sm, D), lambda bi: (bi, 0)),
                  _const_spec((D, D)), _const_spec((1, D)),
                  _const_spec((D, 2 * D)), _const_spec((1, 2 * D)),
                  _const_spec((D, D)), _const_spec((1, D)),
                  _const_spec((1, D)), _const_spec((1, D))],
        out_specs=pl.BlockSpec((S, D), lambda bi: (bi, 0)),
        compiler_params=_cparams(1),
    )(x, mem, p["w_q"], p["b_q"], p["w_kv"], p["b_kv"],
      p["w_out"], p["b_out"], gamma, beta)


# ---------------- module glue (batch-major, no XLA transposes between kernels) -----

def interactor_forward(x, mem, p, *, B, S, Sm, nhead):
    """Interactor.forward (pos=query_pos=None, no masks, eval-mode dropout).
    x: (B*S, D) bf16 batch-major, mem: (B*Sm, D) bf16 batch-major."""
    x = sa_block_pallas(x, p["self_attn"], p["norm1_g"], p["norm1_b"],
                        B=B, S=S, nhead=nhead)
    x = ca_block_pallas(x, mem, p["cross_attn"], p["norm2_g"], p["norm2_b"],
                        B=B, S=S, Sm=Sm, nhead=nhead)
    x = ffn_ln_pallas(x, p["linear1_w"], p["linear1_b"],
                      p["linear2_w"], p["linear2_b"],
                      p["norm3_g"], p["norm3_b"])
    return x


def bridger_forward(vis, txt, params, *, nhead, strides=2):
    # vis: (B, d_img, H, W) NCHW ; txt: (B, L, d_txt)
    B, d_img, H, W = vis.shape
    L, d_txt = txt.shape[1], txt.shape[2]
    s = strides
    H2, W2 = H // s, W // s
    S_v = H2 * W2

    # Patch view of vis (bf16, batch-major rows (b, i, j)); stored once and reused
    # as the zoom_out residual (ConvT output columns share the (c,kh,kw) ordering).
    vis_p = vis.reshape(B, d_img, H2, s, W2, s).transpose(0, 2, 4, 1, 3, 5)
    vis_p = vis_p.reshape(B * S_v, d_img * s * s).astype(jnp.bfloat16)

    # zoom_in (Conv2d k=s stride=s, bias-free) fused with ln_v
    v_flat = linear_ln_pallas(vis_p, params["zoom_in_w"], params["zoom_in_b0"],
                              params["ln_v_g"], params["ln_v_b"])    # (B*S_v, D)

    # txt: batch-major rows (b, l); linear1 (d_txt -> d_model) fused with ln_t
    txt_flat = txt.reshape(B * L, d_txt)                              # fp32 view
    t_flat = linear_ln_pallas(txt_flat.astype(jnp.bfloat16),
                              params["linear1_w"], params["linear1_b"],
                              params["ln_t_g"], params["ln_t_b"])     # (B*L, D)

    # Tuple assignment in the reference: both Interactors consume the pre-fusion,
    # layer-normed counterparts.
    v2 = interactor_forward(v_flat, t_flat, params["fusion_v"],
                            B=B, S=S_v, Sm=L, nhead=nhead)
    t2 = interactor_forward(t_flat, v_flat, params["fusion_t"],
                            B=B, S=L, Sm=S_v, nhead=nhead)

    # zoom_out (ConvTranspose2d k=s stride=s, bias-free) + vis residual fused
    y_patch = linear_pallas(v2, params["zoom_out_w"], params["zoom_out_b0"],
                            residual=vis_p, out_dtype=jnp.float32)
    vis_out = y_patch.reshape(B, H2, W2, d_img, s, s) \
                     .transpose(0, 3, 1, 4, 2, 5).reshape(B, d_img, H, W)

    # linear2 (d_model -> d_txt) + txt residual fused
    t_out = linear_pallas(t2, params["linear2_w"], params["linear2_b"],
                          residual=txt_flat, out_dtype=jnp.float32)
    txt_out = t_out.reshape(B, L, d_txt)
    return vis_out, txt_out


# ---------------- deterministic synthetic parameters (no checkpoint) ---------------
# Weights pre-transposed / pre-fused in bf16; biases & LayerNorm params fp32.
# The 1/sqrt(dh) softmax scale is folded into W_q (and b_q) here.

def _nrm(key, shape, std=0.02):
    return std * jax.random.normal(key, shape, jnp.float32)


def init_interactor(key, d_model, nhead, dff=128):
    ks = jax.random.split(key, 4)
    scale = 1.0 / math.sqrt(d_model // nhead)

    def attn_self(k):
        k1, k2 = jax.random.split(k)
        in_w = _nrm(k1, (3 * d_model, d_model))          # torch in_proj_weight [q;k;v]
        in_w = in_w.at[:d_model].multiply(scale)         # fold softmax scale into W_q
        out_w = _nrm(k2, (d_model, d_model))
        return {
            "w_qkv": in_w.T.astype(jnp.bfloat16),                     # (D, 3D)
            "b_qkv": jnp.zeros((1, 3 * d_model), jnp.float32),        # (q part pre-scaled)
            "w_out": out_w.T.astype(jnp.bfloat16),                    # (D, D)
            "b_out": jnp.zeros((1, d_model), jnp.float32),
        }

    def attn_cross(k):
        k1, k2 = jax.random.split(k)
        in_w = _nrm(k1, (3 * d_model, d_model))
        out_w = _nrm(k2, (d_model, d_model))
        return {
            "w_q": (in_w[:d_model] * scale).T.astype(jnp.bfloat16),   # (D, D), scale folded
            "b_q": jnp.zeros((1, d_model), jnp.float32),
            "w_kv": in_w[d_model:].T.astype(jnp.bfloat16),            # (D, 2D)
            "b_kv": jnp.zeros((1, 2 * d_model), jnp.float32),
            "w_out": out_w.T.astype(jnp.bfloat16),
            "b_out": jnp.zeros((1, d_model), jnp.float32),
        }

    return {
        "self_attn": attn_self(ks[0]),
        "cross_attn": attn_cross(ks[1]),
        "linear1_w": _nrm(ks[2], (dff, d_model)).T.astype(jnp.bfloat16),   # (D, dff)
        "linear1_b": jnp.zeros((1, dff), jnp.float32),
        "linear2_w": _nrm(ks[3], (d_model, dff)).T.astype(jnp.bfloat16),   # (dff, D)
        "linear2_b": jnp.zeros((1, d_model), jnp.float32),
        "norm1_g": jnp.ones((1, d_model), jnp.float32),
        "norm1_b": jnp.zeros((1, d_model), jnp.float32),
        "norm2_g": jnp.ones((1, d_model), jnp.float32),
        "norm2_b": jnp.zeros((1, d_model), jnp.float32),
        "norm3_g": jnp.ones((1, d_model), jnp.float32),
        "norm3_b": jnp.zeros((1, d_model), jnp.float32),
    }


def init_bridger(key, d_img, d_txt, d_model, nhead, strides=2):
    ks = jax.random.split(key, 6)
    s = strides
    # kaiming fan_out for Conv2d / ConvTranspose2d
    conv_w = jax.random.normal(ks[2], (d_model, d_img, s, s), jnp.float32) \
        * math.sqrt(2.0 / (d_model * s * s))
    deconv_w = jax.random.normal(ks[3], (d_model, d_img, s, s), jnp.float32) \
        * math.sqrt(2.0 / (d_img * s * s))
    return {
        "fusion_v": init_interactor(ks[0], d_model, nhead),
        "fusion_t": init_interactor(ks[1], d_model, nhead),
        # Conv2d weight (out,in,kh,kw) -> (in*kh*kw, out), matches patch K order
        "zoom_in_w": conv_w.reshape(d_model, d_img * s * s).T.astype(jnp.bfloat16),
        "zoom_in_b0": jnp.zeros((1, d_model), jnp.float32),
        # ConvTranspose2d weight (in,out,kh,kw) -> (in, out*kh*kw)
        "zoom_out_w": deconv_w.reshape(d_model, d_img * s * s).astype(jnp.bfloat16),
        "zoom_out_b0": jnp.zeros((1, d_img * s * s), jnp.float32),
        "linear1_w": _nrm(ks[4], (d_model, d_txt)).T.astype(jnp.bfloat16),  # (d_txt, D)
        "linear1_b": jnp.zeros((1, d_model), jnp.float32),
        "linear2_w": _nrm(ks[5], (d_txt, d_model)).T.astype(jnp.bfloat16),  # (D, d_txt)
        "linear2_b": jnp.zeros((1, d_txt), jnp.float32),
        "ln_v_g": jnp.ones((1, d_model), jnp.float32),
        "ln_v_b": jnp.zeros((1, d_model), jnp.float32),
        "ln_t_g": jnp.ones((1, d_model), jnp.float32),
        "ln_t_b": jnp.zeros((1, d_model), jnp.float32),
    }


if __name__ == "__main__":
    # Small shapes consistent with the module (scaled down from the defaults).
    B, d_img, H, W = 2, 32, 16, 16
    L, d_txt = 8, 48
    d_model, nhead, strides = 32, 4, 2

    key = jax.random.PRNGKey(0)
    kp, kv, kt = jax.random.split(key, 3)
    params = init_bridger(kp, d_img, d_txt, d_model, nhead, strides)
    vis = jax.random.normal(kv, (B, d_img, H, W), jnp.float32)
    txt = jax.random.normal(kt, (B, L, d_txt), jnp.float32)

    fwd = jax.jit(functools.partial(bridger_forward, nhead=nhead, strides=strides))
    vis_out, txt_out = fwd(vis, txt, params)
    jax.block_until_ready((vis_out, txt_out))

    assert vis_out.shape == (B, d_img, H, W), vis_out.shape
    assert txt_out.shape == (B, L, d_txt), txt_out.shape
    assert bool(jnp.all(jnp.isfinite(vis_out))) and bool(jnp.all(jnp.isfinite(txt_out)))
    print("KERNEL_OK")
</pallas_src>

<mosaic_0001>
module attributes {stable_mosaic.version = 11 : i64} {
  func.func @k(%arg0: i32, %arg1: memref<8x128xf32, #tpu.memory_space<vmem>>, %arg2: memref<8x128xf32, #tpu.memory_space<vmem>>) attributes {dimension_semantics = [#tpu.dimension_semantics<arbitrary>], iteration_bounds = array<i64: 2>, scalar_prefetch = 0 : i64, scratch_operands = 0 : i64, tpu.core_type = #tpu.core_type<tc>, window_params = [{pipeline_mode = #tpu.pipeline_mode<synchronous>, transform_indices = @transform_0, window_bounds = array<i64: 8, 128>}, {transform_indices = @transform_1, window_bounds = array<i64: 8, 128>}]} {
    %c0 = arith.constant 0 : index
    %c0_0 = arith.constant 0 : index
    %0 = vector.load %arg1[%c0, %c0_0] : memref<8x128xf32, #tpu.memory_space<vmem>>, vector<8x128xf32>
    %cst = arith.constant 1.000000e+00 : f32
    %1 = vector.broadcast %cst : f32 to vector<8x128xf32>
    %2 = arith.addf %0, %1 : vector<8x128xf32>
    %c0_1 = arith.constant 0 : index
    %c0_2 = arith.constant 0 : index
    %3 = vector.load %arg2[%c0_1, %c0_2] : memref<8x128xf32, #tpu.memory_space<vmem>>, vector<8x128xf32>
    tpu.vector_store %arg2[%c0_1, %c0_2], %2 {strides = array<i32>} : memref<8x128xf32, #tpu.memory_space<vmem>>, vector<8x128xf32>,
    return
  }
  func.func @transform_0(%arg0: i32) -> (i32, i32) {
    %c0_i32 = arith.constant 0 : i32
    %c0_i32_0 = arith.constant 0 : i32
    %c0_i32_1 = arith.constant 0 : i32
    return %c0_i32, %c0_i32_0 : i32, i32
  }
  func.func @transform_1(%arg0: i32) -> (i32, i32) {
    %c0_i32 = arith.constant 0 : i32
    %c0_i32_0 = arith.constant 0 : i32
    return %arg0, %c0_i32 : i32, i32
  }
}

module attributes {stable_mosaic.version = 11 : i64} {
  func.func @_sa_block_kernel(%arg0: i32, %arg1: memref<8x32xbf16, #tpu.memory_space<vmem>>, %arg2: memref<32x96xbf16, #tpu.memory_space<vmem>>, %arg3: memref<1x96xf32, #tpu.memory_space<vmem>>, %arg4: memref<32x32xbf16, #tpu.memory_space<vmem>>, %arg5: memref<1x32xf32, #tpu.memory_space<vmem>>, %arg6: memref<1x32xf32, #tpu.memory_space<vmem>>, %arg7: memref<1x32xf32, #tpu.memory_space<vmem>>, %arg8: memref<8x32xbf16, #tpu.memory_space<vmem>>) attributes {dimension_semantics = [#tpu.dimension_semantics<parallel>], iteration_bounds = array<i64: 2>, scalar_prefetch = 0 : i64, scratch_operands = 0 : i64, tpu.core_type = #tpu.core_type<tc>, window_params = [{transform_indices = @transform_0, window_bounds = array<i64: 8, 32>}, {pipeline_mode = #tpu.pipeline_mode<synchronous>, transform_indices = @transform_1, window_bounds = array<i64: 32, 96>}, {pipeline_mode = #tpu.pipeline_mode<synchronous>, transform_indices = @transform_2, window_bounds = array<i64: 1, 96>}, {pipeline_mode = #tpu.pipeline_mode<synchronous>, transform_indices = @transform_3, window_bounds = array<i64: 32, 32>}, {pipeline_mode = #tpu.pipeline_mode<synchronous>, transform_indices = @transform_4, window_bounds = array<i64: 1, 32>}, {pipeline_mode = #tpu.pipeline_mode<synchronous>, transform_indices = @transform_5, window_bounds = array<i64: 1, 32>}, {pipeline_mode = #tpu.pipeline_mode<synchronous>, transform_indices = @transform_6, window_bounds = array<i64: 1, 32>}, {transform_indices = @transform_7, window_bounds = array<i64: 8, 32>}]} {
    %c0 = arith.constant 0 : index
    %c0_0 = arith.constant 0 : index
    %0 = vector.load %arg1[%c0, %c0_0] : memref<8x32xbf16, #tpu.memory_space<vmem>>, vector<8x32xbf16>
    %c0_1 = arith.constant 0 : index
    %c0_2 = arith.constant 0 : index
    %1 = vector.load %arg2[%c0_1, %c0_2] : memref<32x96xbf16, #tpu.memory_space<vmem>>, vector<32x96xbf16>
    %cst = arith.constant dense<0.000000e+00> : vector<8x96xf32>
    %2 = tpu.matmul %0, %1, %cst {dimension_numbers = #tpu.dot_dimension_numbers<[1], [0], [0], [1], [0, 0, 1, 1], [], []>} : vector<8x32xbf16>, vector<32x96xbf16>, vector<8x96xf32> -> vector<8x96xf32>
    %c0_3 = arith.constant 0 : index
    %c0_4 = arith.constant 0 : index
    %3 = vector.load %arg3[%c0_3, %c0_4] : memref<1x96xf32, #tpu.memory_space<vmem>>, vector<1x96xf32>
    %4 = vector.broadcast %3 : vector<1x96xf32> to vector<8x96xf32>
    %5 = arith.addf %2, %4 : vector<8x96xf32>
    %6 = vector.extract_strided_slice %5 {offsets = [0, 0], sizes = [8, 32], strides = [1, 1]} : vector<8x96xf32> to vector<8x32xf32>
    %7 = vector.extract_strided_slice %5 {offsets = [0, 32], sizes = [8, 32], strides = [1, 1]} : vector<8x96xf32> to vector<8x32xf32>
    %8 = vector.extract_strided_slice %5 {offsets = [0, 64], sizes = [8, 32], strides = [1, 1]} : vector<8x96xf32> to vector<8x32xf32>
    %9 = vector.extract_strided_slice %6 {offsets = [0, 0], sizes = [8, 8], strides = [1, 1]} : vector<8x32xf32> to vector<8x8xf32>
    %10 = arith.truncf %9 : vector<8x8xf32> to vector<8x8xbf16>
    %11 = vector.extract_strided_slice %7 {offsets = [0, 0], sizes = [8, 8], strides = [1, 1]} : vector<8x32xf32> to vector<8x8xf32>
    %12 = arith.truncf %11 : vector<8x8xf32> to vector<8x8xbf16>
    %13 = vector.extract_strided_slice %8 {offsets = [0, 0], sizes = [8, 8], strides = [1, 1]} : vector<8x32xf32> to vector<8x8xf32>
    %14 = arith.truncf %13 : vector<8x8xf32> to vector<8x8xbf16>
    %cst_5 = arith.constant dense<0.000000e+00> : vector<8x8xf32>
    %15 = tpu.matmul %10, %12, %cst_5 {dimension_numbers = #tpu.dot_dimension_numbers<[1], [1], [0], [0], [0, 0, 1, 0], [], []>} : vector<8x8xbf16>, vector<8x8xbf16>, vector<8x8xf32> -> vector<8x8xf32>
    %cst_6 = arith.constant dense<0xFF800000> : vector<8xf32>
    %16 = vector.multi_reduction <maximumf>, %15, %cst_6 [1] : vector<8x8xf32> to vector<8xf32>
    %17 = vector.shape_cast %16 : vector<8xf32> to vector<8x1xf32>
    %18 = vector.broadcast %17 : vector<8x1xf32> to vector<8x8xf32>
    %19 = arith.subf %15, %18 : vector<8x8xf32>
    %20 = math.exp %19 : vector<8x8xf32>
    %cst_7 = arith.constant dense<0.000000e+00> : vector<8xf32>
    %21 = vector.multi_reduction <add>, %20, %cst_7 [1] : vector<8x8xf32> to vector<8xf32>
    %22 = vector.shape_cast %21 : vector<8xf32> to vector<8x1xf32>
    %23 = vector.broadcast %22 : vector<8x1xf32> to vector<8x8xf32>
    %24 = arith.divf %20, %23 : vector<8x8xf32>
    %25 = arith.truncf %24 : vector<8x8xf32> to vector<8x8xbf16>
    %cst_8 = arith.constant dense<0.000000e+00> : vector<8x8xf32>
    %26 = tpu.matmul %25, %14, %cst_8 {dimension_numbers = #tpu.dot_dimension_numbers<[1], [0], [0], [1], [0, 0, 1, 1], [], []>} : vector<8x8xbf16>, vector<8x8xbf16>, vector<8x8xf32> -> vector<8x8xf32>
    %27 = vector.extract_strided_slice %6 {offsets = [0, 8], sizes = [8, 8], strides = [1, 1]} : vector<8x32xf32> to vector<8x8xf32>
    %28 = arith.truncf %27 : vector<8x8xf32> to vector<8x8xbf16>
    %29 = vector.extract_strided_slice %7 {offsets = [0, 8], sizes = [8, 8], strides = [1, 1]} : vector<8x32xf32> to vector<8x8xf32>
    %30 = arith.truncf %29 : vector<8x8xf32> to vector<8x8xbf16>
    %31 = vector.extract_strided_slice %8 {offsets = [0, 8], sizes = [8, 8], strides = [1, 1]} : vector<8x32xf32> to vector<8x8xf32>
    %32 = arith.truncf %31 : vector<8x8xf32> to vector<8x8xbf16>
    %cst_9 = arith.constant dense<0.000000e+00> : vector<8x8xf32>
    %33 = tpu.matmul %28, %30, %cst_9 {dimension_numbers = #tpu.dot_dimension_numbers<[1], [1], [0], [0], [0, 0, 1, 0], [], []>} : vector<8x8xbf16>, vector<8x8xbf16>, vector<8x8xf32> -> vector<8x8xf32>
    %cst_10 = arith.constant dense<0xFF800000> : vector<8xf32>
    %34 = vector.multi_reduction <maximumf>, %33, %cst_10 [1] : vector<8x8xf32> to vector<8xf32>
    %35 = vector.shape_cast %34 : vector<8xf32> to vector<8x1xf32>
    %36 = vector.broadcast %35 : vector<8x1xf32> to vector<8x8xf32>
    %37 = arith.subf %33, %36 : vector<8x8xf32>
    %38 = math.exp %37 : vector<8x8xf32>
    %cst_11 = arith.constant dense<0.000000e+00> : vector<8xf32>
    %39 = vector.multi_reduction <add>, %38, %cst_11 [1] : vector<8x8xf32> to vector<8xf32>
    %40 = vector.shape_cast %39 : vector<8xf32> to vector<8x1xf32>
    %41 = vector.broadcast %40 : vector<8x1xf32> to vector<8x8xf32>
    %42 = arith.divf %38, %41 : vector<8x8xf32>
    %43 = arith.truncf %42 : vector<8x8xf32> to vector<8x8xbf16>
    %cst_12 = arith.constant dense<0.000000e+00> : vector<8x8xf32>
    %44 = tpu.matmul %43, %32, %cst_12 {dimension_numbers = #tpu.dot_dimension_numbers<[1], [0], [0], [1], [0, 0, 1, 1], [], []>} : vector<8x8xbf16>, vector<8x8xbf16>, vector<8x8xf32> -> vector<8x8xf32>
    %45 = vector.extract_strided_slice %6 {offsets = [0, 16], sizes = [8, 8], strides = [1, 1]} : vector<8x32xf32> to vector<8x8xf32>
    %46 = arith.truncf %45 : vector<8x8xf32> to vector<8x8xbf16>
    %47 = vector.extract_strided_slice %7 {offsets = [0, 16], sizes = [8, 8], strides = [1, 1]} : vector<8x32xf32> to vector<8x8xf32>
    %48 = arith.truncf %47 : vector<8x8xf32> to vector<8x8xbf16>
    %49 = vector.extract_strided_slice %8 {offsets = [0, 16], sizes = [8, 8], strides = [1, 1]} : vector<8x32xf32> to vector<8x8xf32>
    %50 = arith.truncf %49 : vector<8x8xf32> to vector<8x8xbf16>
    %cst_13 = arith.constant dense<0.000000e+00> : vector<8x8xf32>
    %51 = tpu.matmul %46, %48, %cst_13 {dimension_numbers = #tpu.dot_dimension_numbers<[1], [1], [0], [0], [0, 0, 1, 0], [], []>} : vector<8x8xbf16>, vector<8x8xbf16>, vector<8x8xf32> -> vector<8x8xf32>
    %cst_14 = arith.constant dense<0xFF800000> : vector<8xf32>
    %52 = vector.multi_reduction <maximumf>, %51, %cst_14 [1] : vector<8x8xf32> to vector<8xf32>
    %53 = vector.shape_cast %52 : vector<8xf32> to vector<8x1xf32>
    %54 = vector.broadcast %53 : vector<8x1xf32> to vector<8x8xf32>
    %55 = arith.subf %51, %54 : vector<8x8xf32>
    %56 = math.exp %55 : vector<8x8xf32>
    %cst_15 = arith.constant dense<0.000000e+00> : vector<8xf32>
    %57 = vector.multi_reduction <add>, %56, %cst_15 [1] : vector<8x8xf32> to vector<8xf32>
    %58 = vector.shape_cast %57 : vector<8xf32> to vector<8x1xf32>
    %59 = vector.broadcast %58 : vector<8x1xf32> to vector<8x8xf32>
    %60 = arith.divf %56, %59 : vector<8x8xf32>
    %61 = arith.truncf %60 : vector<8x8xf32> to vector<8x8xbf16>
    %cst_16 = arith.constant dense<0.000000e+00> : vector<8x8xf32>
    %62 = tpu.matmul %61, %50, %cst_16 {dimension_numbers = #tpu.dot_dimension_numbers<[1], [0], [0], [1], [0, 0, 1, 1], [], []>} : vector<8x8xbf16>, vector<8x8xbf16>, vector<8x8xf32> -> vector<8x8xf32>
    %63 = vector.extract_strided_slice %6 {offsets = [0, 24], sizes = [8, 8], strides = [1, 1]} : vector<8x32xf32> to vector<8x8xf32>
    %64 = arith.truncf %63 : vector<8x8xf32> to vector<8x8xbf16>
    %65 = vector.extract_strided_slice %7 {offsets = [0, 24], sizes = [8, 8], strides = [1, 1]} : vector<8x32xf32> to vector<8x8xf32>
    %66 = arith.truncf %65 : vector<8x8xf32> to vector<8x8xbf16>
    %67 = vector.extract_strided_slice %8 {offsets = [0, 24], sizes = [8, 8], strides = [1, 1]} : vector<8x32xf32> to vector<8x8xf32>
    %68 = arith.truncf %67 : vector<8x8xf32> to vector<8x8xbf16>
    %cst_17 = arith.constant dense<0.000000e+00> : vector<8x8xf32>
    %69 = tpu.matmul %64, %66, %cst_17 {dimension_numbers = #tpu.dot_dimension_numbers<[1], [1], [0], [0], [0, 0, 1, 0], [], []>} : vector<8x8xbf16>, vector<8x8xbf16>, vector<8x8xf32> -> vector<8x8xf32>
    %cst_18 = arith.constant dense<0xFF800000> : vector<8xf32>
    %70 = vector.multi_reduction <maximumf>, %69, %cst_18 [1] : vector<8x8xf32> to vector<8xf32>
    %71 = vector.shape_cast %70 : vector<8xf32> to vector<8x1xf32>
    %72 = vector.broadcast %71 : vector<8x1xf32> to vector<8x8xf32>
    %73 = arith.subf %69, %72 : vector<8x8xf32>
    %74 = math.exp %73 : vector<8x8xf32>
    %cst_19 = arith.constant dense<0.000000e+00> : vector<8xf32>
    %75 = vector.multi_reduction <add>, %74, %cst_19 [1] : vector<8x8xf32> to vector<8xf32>
    %76 = vector.shape_cast %75 : vector<8xf32> to vector<8x1xf32>
    %77 = vector.broadcast %76 : vector<8x1xf32> to vector<8x8xf32>
    %78 = arith.divf %74, %77 : vector<8x8xf32>
    %79 = arith.truncf %78 : vector<8x8xf32> to vector<8x8xbf16>
    %cst_20 = arith.constant dense<0.000000e+00> : vector<8x8xf32>
    %80 = tpu.matmul %79, %68, %cst_20 {dimension_numbers = #tpu.dot_dimension_numbers<[1], [0], [0], [1], [0, 0, 1, 1], [], []>} : vector<8x8xbf16>, vector<8x8xbf16>, vector<8x8xf32> -> vector<8x8xf32>
    %81 = tpu.concatenate %26, %44, %62, %80 in 1 : vector<8x8xf32>, vector<8x8xf32>, vector<8x8xf32>, vector<8x8xf32> -> vector<8x32xf32>
    %82 = arith.truncf %81 : vector<8x32xf32> to vector<8x32xbf16>
    %c0_21 = arith.constant 0 : index
    %c0_22 = arith.constant 0 : index
    %83 = vector.load %arg4[%c0_21, %c0_22] : memref<32x32xbf16, #tpu.memory_space<vmem>>, vector<32x32xbf16>
    %cst_23 = arith.constant dense<0.000000e+00> : vector<8x32xf32>
    %84 = tpu.matmul %82, %83, %cst_23 {dimension_numbers = #tpu.dot_dimension_numbers<[1], [0], [0], [1], [0, 0, 1, 1], [], []>} : vector<8x32xbf16>, vector<32x32xbf16>, vector<8x32xf32> -> vector<8x32xf32>
    %c0_24 = arith.constant 0 : index
    %c0_25 = arith.constant 0 : index
    %85 = vector.load %arg5[%c0_24, %c0_25] : memref<1x32xf32, #tpu.memory_space<vmem>>, vector<1x32xf32>
    %86 = vector.broadcast %85 : vector<1x32xf32> to vector<8x32xf32>
    %87 = arith.addf %84, %86 : vector<8x32xf32>
    %88 = arith.extf %0 : vector<8x32xbf16> to vector<8x32xf32>
    %89 = arith.addf %87, %88 : vector<8x32xf32>
    %c0_26 = arith.constant 0 : index
    %c0_27 = arith.constant 0 : index
    %90 = vector.load %arg6[%c0_26, %c0_27] : memref<1x32xf32, #tpu.memory_space<vmem>>, vector<1x32xf32>
    %c0_28 = arith.constant 0 : index
    %c0_29 = arith.constant 0 : index
    %91 = vector.load %arg7[%c0_28, %c0_29] : memref<1x32xf32, #tpu.memory_space<vmem>>, vector<1x32xf32>
    %cst_30 = arith.constant dense<0.000000e+00> : vector<8xf32>
    %92 = vector.multi_reduction <add>, %89, %cst_30 [1] : vector<8x32xf32> to vector<8xf32>
    %93 = vector.shape_cast %92 : vector<8xf32> to vector<8x1xf32>
    %cst_31 = arith.constant 3.200000e+01 : f32
    %94 = vector.broadcast %cst_31 : f32 to vector<8x1xf32>
    %95 = arith.divf %93, %94 : vector<8x1xf32>
    %96 = vector.broadcast %95 : vector<8x1xf32> to vector<8x32xf32>
    %97 = arith.subf %89, %96 : vector<8x32xf32>
    %98 = arith.mulf %97, %97 : vector<8x32xf32>
    %cst_32 = arith.constant dense<0.000000e+00> : vector<8xf32>
    %99 = vector.multi_reduction <add>, %98, %cst_32 [1] : vector<8x32xf32> to vector<8xf32>
    %100 = vector.shape_cast %99 : vector<8xf32> to vector<8x1xf32>
    %cst_33 = arith.constant 3.200000e+01 : f32
    %101 = vector.broadcast %cst_33 : f32 to vector<8x1xf32>
    %102 = arith.divf %100, %101 : vector<8x1xf32>
    %cst_34 = arith.constant 9.99999974E-6 : f32
    %103 = vector.broadcast %cst_34 : f32 to vector<8x1xf32>
    %104 = arith.addf %102, %103 : vector<8x1xf32>
    %105 = math.rsqrt %104 : vector<8x1xf32>
    %106 = vector.broadcast %105 : vector<8x1xf32> to vector<8x32xf32>
    %107 = arith.mulf %97, %106 : vector<8x32xf32>
    %108 = vector.broadcast %90 : vector<1x32xf32> to vector<8x32xf32>
    %109 = arith.mulf %107, %108 : vector<8x32xf32>
    %110 = vector.broadcast %91 : vector<1x32xf32> to vector<8x32xf32>
    %111 = arith.addf %109, %110 : vector<8x32xf32>
    %112 = arith.truncf %111 : vector<8x32xf32> to vector<8x32xbf16>
    %c0_35 = arith.constant 0 : index
    %c0_36 = arith.constant 0 : index
    %113 = vector.load %arg8[%c0_35, %c0_36] : memref<8x32xbf16, #tpu.memory_space<vmem>>, vector<8x32xbf16>
    tpu.vector_store %arg8[%c0_35, %c0_36], %112 {strides = array<i32>} : memref<8x32xbf16, #tpu.memory_space<vmem>>, vector<8x32xbf16>,
    return
  }
  func.func @transform_0(%arg0: i32) -> (i32, i32) {
    %c0_i32 = arith.constant 0 : i32
    %c0_i32_0 = arith.constant 0 : i32
    return %arg0, %c0_i32 : i32, i32
  }
  func.func @transform_1(%arg0: i32) -> (i32, i32) {
    %c0_i32 = arith.constant 0 : i32
    %c0_i32_0 = arith.constant 0 : i32
    %c0_i32_1 = arith.constant 0 : i32
    return %c0_i32, %c0_i32_0 : i32, i32
  }
  func.func @transform_2(%arg0: i32) -> (i32, i32) {
    %c0_i32 = arith.constant 0 : i32
    %c0_i32_0 = arith.constant 0 : i32
    %c0_i32_1 = arith.constant 0 : i32
    return %c0_i32, %c0_i32_0 : i32, i32
  }
  func.func @transform_3(%arg0: i32) -> (i32, i32) {
    %c0_i32 = arith.constant 0 : i32
    %c0_i32_0 = arith.constant 0 : i32
    %c0_i32_1 = arith.constant 0 : i32
    return %c0_i32, %c0_i32_0 : i32, i32
  }
  func.func @transform_4(%arg0: i32) -> (i32, i32) {
    %c0_i32 = arith.constant 0 : i32
    %c0_i32_0 = arith.constant 0 : i32
    %c0_i32_1 = arith.constant 0 : i32
    return %c0_i32, %c0_i32_0 : i32, i32
  }
  func.func @transform_5(%arg0: i32) -> (i32, i32) {
    %c0_i32 = arith.constant 0 : i32
    %c0_i32_0 = arith.constant 0 : i32
    %c0_i32_1 = arith.constant 0 : i32
    return %c0_i32, %c0_i32_0 : i32, i32
  }
  func.func @transform_6(%arg0: i32) -> (i32, i32) {
    %c0_i32 = arith.constant 0 : i32
    %c0_i32_0 = arith.constant 0 : i32
    %c0_i32_1 = arith.constant 0 : i32
    return %c0_i32, %c0_i32_0 : i32, i32
  }
  func.func @transform_7(%arg0: i32) -> (i32, i32) {
    %c0_i32 = arith.constant 0 : i32
    %c0_i32_0 = arith.constant 0 : i32
    return %arg0, %c0_i32 : i32, i32
  }
}

module attributes {stable_mosaic.version = 11 : i64} {
  func.func @_linear_ln_kernel(%arg0: i32, %arg1: memref<8x48xbf16, #tpu.memory_space<vmem>>, %arg2: memref<48x32xbf16, #tpu.memory_space<vmem>>, %arg3: memref<1x32xf32, #tpu.memory_space<vmem>>, %arg4: memref<1x32xf32, #tpu.memory_space<vmem>>, %arg5: memref<1x32xf32, #tpu.memory_space<vmem>>, %arg6: memref<8x32xbf16, #tpu.memory_space<vmem>>) attributes {dimension_semantics = [#tpu.dimension_semantics<parallel>], iteration_bounds = array<i64: 2>, scalar_prefetch = 0 : i64, scratch_operands = 0 : i64, tpu.core_type = #tpu.core_type<tc>, window_params = [{transform_indices = @transform_0, window_bounds = array<i64: 8, 48>}, {pipeline_mode = #tpu.pipeline_mode<synchronous>, transform_indices = @transform_1, window_bounds = array<i64: 48, 32>}, {pipeline_mode = #tpu.pipeline_mode<synchronous>, transform_indices = @transform_2, window_bounds = array<i64: 1, 32>}, {pipeline_mode = #tpu.pipeline_mode<synchronous>, transform_indices = @transform_3, window_bounds = array<i64: 1, 32>}, {pipeline_mode = #tpu.pipeline_mode<synchronous>, transform_indices = @transform_4, window_bounds = array<i64: 1, 32>}, {transform_indices = @transform_5, window_bounds = array<i64: 8, 32>}]} {
    %c0 = arith.constant 0 : index
    %c0_0 = arith.constant 0 : index
    %0 = vector.load %arg1[%c0, %c0_0] : memref<8x48xbf16, #tpu.memory_space<vmem>>, vector<8x48xbf16>
    %c0_1 = arith.constant 0 : index
    %c0_2 = arith.constant 0 : index
    %1 = vector.load %arg2[%c0_1, %c0_2] : memref<48x32xbf16, #tpu.memory_space<vmem>>, vector<48x32xbf16>
    %cst = arith.constant dense<0.000000e+00> : vector<8x32xf32>
    %2 = tpu.matmul %0, %1, %cst {dimension_numbers = #tpu.dot_dimension_numbers<[1], [0], [0], [1], [0, 0, 1, 1], [], []>} : vector<8x48xbf16>, vector<48x32xbf16>, vector<8x32xf32> -> vector<8x32xf32>
    %c0_3 = arith.constant 0 : index
    %c0_4 = arith.constant 0 : index
    %3 = vector.load %arg3[%c0_3, %c0_4] : memref<1x32xf32, #tpu.memory_space<vmem>>, vector<1x32xf32>
    %4 = vector.broadcast %3 : vector<1x32xf32> to vector<8x32xf32>
    %5 = arith.addf %2, %4 : vector<8x32xf32>
    %c0_5 = arith.constant 0 : index
    %c0_6 = arith.constant 0 : index
    %6 = vector.load %arg4[%c0_5, %c0_6] : memref<1x32xf32, #tpu.memory_space<vmem>>, vector<1x32xf32>
    %c0_7 = arith.constant 0 : index
    %c0_8 = arith.constant 0 : index
    %7 = vector.load %arg5[%c0_7, %c0_8] : memref<1x32xf32, #tpu.memory_space<vmem>>, vector<1x32xf32>
    %cst_9 = arith.constant dense<0.000000e+00> : vector<8xf32>
    %8 = vector.multi_reduction <add>, %5, %cst_9 [1] : vector<8x32xf32> to vector<8xf32>
    %9 = vector.shape_cast %8 : vector<8xf32> to vector<8x1xf32>
    %cst_10 = arith.constant 3.200000e+01 : f32
    %10 = vector.broadcast %cst_10 : f32 to vector<8x1xf32>
    %11 = arith.divf %9, %10 : vector<8x1xf32>
    %12 = vector.broadcast %11 : vector<8x1xf32> to vector<8x32xf32>
    %13 = arith.subf %5, %12 : vector<8x32xf32>
    %14 = arith.mulf %13, %13 : vector<8x32xf32>
    %cst_11 = arith.constant dense<0.000000e+00> : vector<8xf32>
    %15 = vector.multi_reduction <add>, %14, %cst_11 [1] : vector<8x32xf32> to vector<8xf32>
    %16 = vector.shape_cast %15 : vector<8xf32> to vector<8x1xf32>
    %cst_12 = arith.constant 3.200000e+01 : f32
    %17 = vector.broadcast %cst_12 : f32 to vector<8x1xf32>
    %18 = arith.divf %16, %17 : vector<8x1xf32>
    %cst_13 = arith.constant 9.99999974E-6 : f32
    %19 = vector.broadcast %cst_13 : f32 to vector<8x1xf32>
    %20 = arith.addf %18, %19 : vector<8x1xf32>
    %21 = math.rsqrt %20 : vector<8x1xf32>
    %22 = vector.broadcast %21 : vector<8x1xf32> to vector<8x32xf32>
    %23 = arith.mulf %13, %22 : vector<8x32xf32>
    %24 = vector.broadcast %6 : vector<1x32xf32> to vector<8x32xf32>
    %25 = arith.mulf %23, %24 : vector<8x32xf32>
    %26 = vector.broadcast %7 : vector<1x32xf32> to vector<8x32xf32>
    %27 = arith.addf %25, %26 : vector<8x32xf32>
    %28 = arith.truncf %27 : vector<8x32xf32> to vector<8x32xbf16>
    %c0_14 = arith.constant 0 : index
    %c0_15 = arith.constant 0 : index
    %29 = vector.load %arg6[%c0_14, %c0_15] : memref<8x32xbf16, #tpu.memory_space<vmem>>, vector<8x32xbf16>
    tpu.vector_store %arg6[%c0_14, %c0_15], %28 {strides = array<i32>} : memref<8x32xbf16, #tpu.memory_space<vmem>>, vector<8x32xbf16>,
    return
  }
  func.func @transform_0(%arg0: i32) -> (i32, i32) {
    %c0_i32 = arith.constant 0 : i32
    %c0_i32_0 = arith.constant 0 : i32
    return %arg0, %c0_i32 : i32, i32
  }
  func.func @transform_1(%arg0: i32) -> (i32, i32) {
    %c0_i32 = arith.constant 0 : i32
    %c0_i32_0 = arith.constant 0 : i32
    %c0_i32_1 = arith.constant 0 : i32
    return %c0_i32, %c0_i32_0 : i32, i32
  }
  func.func @transform_2(%arg0: i32) -> (i32, i32) {
    %c0_i32 = arith.constant 0 : i32
    %c0_i32_0 = arith.constant 0 : i32
    %c0_i32_1 = arith.constant 0 : i32
    return %c0_i32, %c0_i32_0 : i32, i32
  }
  func.func @transform_3(%arg0: i32) -> (i32, i32) {
    %c0_i32 = arith.constant 0 : i32
    %c0_i32_0 = arith.constant 0 : i32
    %c0_i32_1 = arith.constant 0 : i32
    return %c0_i32, %c0_i32_0 : i32, i32
  }
  func.func @transform_4(%arg0: i32) -> (i32, i32) {
    %c0_i32 = arith.constant 0 : i32
    %c0_i32_0 = arith.constant 0 : i32
    %c0_i32_1 = arith.constant 0 : i32
    return %c0_i32, %c0_i32_0 : i32, i32
  }
  func.func @transform_5(%arg0: i32) -> (i32, i32) {
    %c0_i32 = arith.constant 0 : i32
    %c0_i32_0 = arith.constant 0 : i32
    return %arg0, %c0_i32 : i32, i32
  }
}

module attributes {stable_mosaic.version = 11 : i64} {
  func.func @_linear_ln_kernel(%arg0: i32, %arg1: memref<64x128xbf16, #tpu.memory_space<vmem>>, %arg2: memref<128x32xbf16, #tpu.memory_space<vmem>>, %arg3: memref<1x32xf32, #tpu.memory_space<vmem>>, %arg4: memref<1x32xf32, #tpu.memory_space<vmem>>, %arg5: memref<1x32xf32, #tpu.memory_space<vmem>>, %arg6: memref<64x32xbf16, #tpu.memory_space<vmem>>) attributes {dimension_semantics = [#tpu.dimension_semantics<parallel>], iteration_bounds = array<i64: 2>, scalar_prefetch = 0 : i64, scratch_operands = 0 : i64, tpu.core_type = #tpu.core_type<tc>, window_params = [{transform_indices = @transform_0, window_bounds = array<i64: 64, 128>}, {pipeline_mode = #tpu.pipeline_mode<synchronous>, transform_indices = @transform_1, window_bounds = array<i64: 128, 32>}, {pipeline_mode = #tpu.pipeline_mode<synchronous>, transform_indices = @transform_2, window_bounds = array<i64: 1, 32>}, {pipeline_mode = #tpu.pipeline_mode<synchronous>, transform_indices = @transform_3, window_bounds = array<i64: 1, 32>}, {pipeline_mode = #tpu.pipeline_mode<synchronous>, transform_indices = @transform_4, window_bounds = array<i64: 1, 32>}, {transform_indices = @transform_5, window_bounds = array<i64: 64, 32>}]} {
    %c0 = arith.constant 0 : index
    %c0_0 = arith.constant 0 : index
    %0 = vector.load %arg1[%c0, %c0_0] : memref<64x128xbf16, #tpu.memory_space<vmem>>, vector<64x128xbf16>
    %c0_1 = arith.constant 0 : index
    %c0_2 = arith.constant 0 : index
    %1 = vector.load %arg2[%c0_1, %c0_2] : memref<128x32xbf16, #tpu.memory_space<vmem>>, vector<128x32xbf16>
    %cst = arith.constant dense<0.000000e+00> : vector<64x32xf32>
    %2 = tpu.matmul %0, %1, %cst {dimension_numbers = #tpu.dot_dimension_numbers<[1], [0], [0], [1], [0, 0, 1, 1], [], []>} : vector<64x128xbf16>, vector<128x32xbf16>, vector<64x32xf32> -> vector<64x32xf32>
    %c0_3 = arith.constant 0 : index
    %c0_4 = arith.constant 0 : index
    %3 = vector.load %arg3[%c0_3, %c0_4] : memref<1x32xf32, #tpu.memory_space<vmem>>, vector<1x32xf32>
    %4 = vector.broadcast %3 : vector<1x32xf32> to vector<64x32xf32>
    %5 = arith.addf %2, %4 : vector<64x32xf32>
    %c0_5 = arith.constant 0 : index
    %c0_6 = arith.constant 0 : index
    %6 = vector.load %arg4[%c0_5, %c0_6] : memref<1x32xf32, #tpu.memory_space<vmem>>, vector<1x32xf32>
    %c0_7 = arith.constant 0 : index
    %c0_8 = arith.constant 0 : index
    %7 = vector.load %arg5[%c0_7, %c0_8] : memref<1x32xf32, #tpu.memory_space<vmem>>, vector<1x32xf32>
    %cst_9 = arith.constant dense<0.000000e+00> : vector<64xf32>
    %8 = vector.multi_reduction <add>, %5, %cst_9 [1] : vector<64x32xf32> to vector<64xf32>
    %9 = vector.shape_cast %8 : vector<64xf32> to vector<64x1xf32>
    %cst_10 = arith.constant 3.200000e+01 : f32
    %10 = vector.broadcast %cst_10 : f32 to vector<64x1xf32>
    %11 = arith.divf %9, %10 : vector<64x1xf32>
    %12 = vector.broadcast %11 : vector<64x1xf32> to vector<64x32xf32>
    %13 = arith.subf %5, %12 : vector<64x32xf32>
    %14 = arith.mulf %13, %13 : vector<64x32xf32>
    %cst_11 = arith.constant dense<0.000000e+00> : vector<64xf32>
    %15 = vector.multi_reduction <add>, %14, %cst_11 [1] : vector<64x32xf32> to vector<64xf32>
    %16 = vector.shape_cast %15 : vector<64xf32> to vector<64x1xf32>
    %cst_12 = arith.constant 3.200000e+01 : f32
    %17 = vector.broadcast %cst_12 : f32 to vector<64x1xf32>
    %18 = arith.divf %16, %17 : vector<64x1xf32>
    %cst_13 = arith.constant 9.99999974E-6 : f32
    %19 = vector.broadcast %cst_13 : f32 to vector<64x1xf32>
    %20 = arith.addf %18, %19 : vector<64x1xf32>
    %21 = math.rsqrt %20 : vector<64x1xf32>
    %22 = vector.broadcast %21 : vector<64x1xf32> to vector<64x32xf32>
    %23 = arith.mulf %13, %22 : vector<64x32xf32>
    %24 = vector.broadcast %6 : vector<1x32xf32> to vector<64x32xf32>
    %25 = arith.mulf %23, %24 : vector<64x32xf32>
    %26 = vector.broadcast %7 : vector<1x32xf32> to vector<64x32xf32>
    %27 = arith.addf %25, %26 : vector<64x32xf32>
    %28 = arith.truncf %27 : vector<64x32xf32> to vector<64x32xbf16>
    %c0_14 = arith.constant 0 : index
    %c0_15 = arith.constant 0 : index
    %29 = vector.load %arg6[%c0_14, %c0_15] : memref<64x32xbf16, #tpu.memory_space<vmem>>, vector<64x32xbf16>
    tpu.vector_store %arg6[%c0_14, %c0_15], %28 {strides = array<i32>} : memref<64x32xbf16, #tpu.memory_space<vmem>>, vector<64x32xbf16>,
    return
  }
  func.func @transform_0(%arg0: i32) -> (i32, i32) {
    %c0_i32 = arith.constant 0 : i32
    %c0_i32_0 = arith.constant 0 : i32
    return %arg0, %c0_i32 : i32, i32
  }
  func.func @transform_1(%arg0: i32) -> (i32, i32) {
    %c0_i32 = arith.constant 0 : i32
    %c0_i32_0 = arith.constant 0 : i32
    %c0_i32_1 = arith.constant 0 : i32
    return %c0_i32, %c0_i32_0 : i32, i32
  }
  func.func @transform_2(%arg0: i32) -> (i32, i32) {
    %c0_i32 = arith.constant 0 : i32
    %c0_i32_0 = arith.constant 0 : i32
    %c0_i32_1 = arith.constant 0 : i32
    return %c0_i32, %c0_i32_0 : i32, i32
  }
  func.func @transform_3(%arg0: i32) -> (i32, i32) {
    %c0_i32 = arith.constant 0 : i32
    %c0_i32_0 = arith.constant 0 : i32
    %c0_i32_1 = arith.constant 0 : i32
    return %c0_i32, %c0_i32_0 : i32, i32
  }
  func.func @transform_4(%arg0: i32) -> (i32, i32) {
    %c0_i32 = arith.constant 0 : i32
    %c0_i32_0 = arith.constant 0 : i32
    %c0_i32_1 = arith.constant 0 : i32
    return %c0_i32, %c0_i32_0 : i32, i32
  }
  func.func @transform_5(%arg0: i32) -> (i32, i32) {
    %c0_i32 = arith.constant 0 : i32
    %c0_i32_0 = arith.constant 0 : i32
    return %arg0, %c0_i32 : i32, i32
  }
}

module attributes {stable_mosaic.version = 11 : i64} {
  func.func @_ca_block_kernel(%arg0: i32, %arg1: memref<8x32xbf16, #tpu.memory_space<vmem>>, %arg2: memref<64x32xbf16, #tpu.memory_space<vmem>>, %arg3: memref<32x32xbf16, #tpu.memory_space<vmem>>, %arg4: memref<1x32xf32, #tpu.memory_space<vmem>>, %arg5: memref<32x64xbf16, #tpu.memory_space<vmem>>, %arg6: memref<1x64xf32, #tpu.memory_space<vmem>>, %arg7: memref<32x32xbf16, #tpu.memory_space<vmem>>, %arg8: memref<1x32xf32, #tpu.memory_space<vmem>>, %arg9: memref<1x32xf32, #tpu.memory_space<vmem>>, %arg10: memref<1x32xf32, #tpu.memory_space<vmem>>, %arg11: memref<8x32xbf16, #tpu.memory_space<vmem>>) attributes {dimension_semantics = [#tpu.dimension_semantics<parallel>], iteration_bounds = array<i64: 2>, scalar_prefetch = 0 : i64, scratch_operands = 0 : i64, tpu.core_type = #tpu.core_type<tc>, window_params = [{transform_indices = @transform_0, window_bounds = array<i64: 8, 32>}, {transform_indices = @transform_1, window_bounds = array<i64: 64, 32>}, {pipeline_mode = #tpu.pipeline_mode<synchronous>, transform_indices = @transform_2, window_bounds = array<i64: 32, 32>}, {pipeline_mode = #tpu.pipeline_mode<synchronous>, transform_indices = @transform_3, window_bounds = array<i64: 1, 32>}, {pipeline_mode = #tpu.pipeline_mode<synchronous>, transform_indices = @transform_4, window_bounds = array<i64: 32, 64>}, {pipeline_mode = #tpu.pipeline_mode<synchronous>, transform_indices = @transform_5, window_bounds = array<i64: 1, 64>}, {pipeline_mode = #tpu.pipeline_mode<synchronous>, transform_indices = @transform_6, window_bounds = array<i64: 32, 32>}, {pipeline_mode = #tpu.pipeline_mode<synchronous>, transform_indices = @transform_7, window_bounds = array<i64: 1, 32>}, {pipeline_mode = #tpu.pipeline_mode<synchronous>, transform_indices = @transform_8, window_bounds = array<i64: 1, 32>}, {pipeline_mode = #tpu.pipeline_mode<synchronous>, transform_indices = @transform_9, window_bounds = array<i64: 1, 32>}, {transform_indices = @transform_10, window_bounds = array<i64: 8, 32>}]} {
    %c0 = arith.constant 0 : index
    %c0_0 = arith.constant 0 : index
    %0 = vector.load %arg1[%c0, %c0_0] : memref<8x32xbf16, #tpu.memory_space<vmem>>, vector<8x32xbf16>
    %c0_1 = arith.constant 0 : index
    %c0_2 = arith.constant 0 : index
    %1 = vector.load %arg2[%c0_1, %c0_2] : memref<64x32xbf16, #tpu.memory_space<vmem>>, vector<64x32xbf16>
    %c0_3 = arith.constant 0 : index
    %c0_4 = arith.constant 0 : index
    %2 = vector.load %arg3[%c0_3, %c0_4] : memref<32x32xbf16, #tpu.memory_space<vmem>>, vector<32x32xbf16>
    %cst = arith.constant dense<0.000000e+00> : vector<8x32xf32>
    %3 = tpu.matmul %0, %2, %cst {dimension_numbers = #tpu.dot_dimension_numbers<[1], [0], [0], [1], [0, 0, 1, 1], [], []>} : vector<8x32xbf16>, vector<32x32xbf16>, vector<8x32xf32> -> vector<8x32xf32>
    %c0_5 = arith.constant 0 : index
    %c0_6 = arith.constant 0 : index
    %4 = vector.load %arg4[%c0_5, %c0_6] : memref<1x32xf32, #tpu.memory_space<vmem>>, vector<1x32xf32>
    %5 = vector.broadcast %4 : vector<1x32xf32> to vector<8x32xf32>
    %6 = arith.addf %3, %5 : vector<8x32xf32>
    %c0_7 = arith.constant 0 : index
    %c0_8 = arith.constant 0 : index
    %7 = vector.load %arg5[%c0_7, %c0_8] : memref<32x64xbf16, #tpu.memory_space<vmem>>, vector<32x64xbf16>
    %cst_9 = arith.constant dense<0.000000e+00> : vector<64x64xf32>
    %8 = tpu.matmul %1, %7, %cst_9 {dimension_numbers = #tpu.dot_dimension_numbers<[1], [0], [0], [1], [0, 0, 1, 1], [], []>} : vector<64x32xbf16>, vector<32x64xbf16>, vector<64x64xf32> -> vector<64x64xf32>
    %c0_10 = arith.constant 0 : index
    %c0_11 = arith.constant 0 : index
    %9 = vector.load %arg6[%c0_10, %c0_11] : memref<1x64xf32, #tpu.memory_space<vmem>>, vector<1x64xf32>
    %10 = vector.broadcast %9 : vector<1x64xf32> to vector<64x64xf32>
    %11 = arith.addf %8, %10 : vector<64x64xf32>
    %12 = vector.extract_strided_slice %11 {offsets = [0, 0], sizes = [64, 32], strides = [1, 1]} : vector<64x64xf32> to vector<64x32xf32>
    %13 = vector.extract_strided_slice %11 {offsets = [0, 32], sizes = [64, 32], strides = [1, 1]} : vector<64x64xf32> to vector<64x32xf32>
    %14 = vector.extract_strided_slice %6 {offsets = [0, 0], sizes = [8, 8], strides = [1, 1]} : vector<8x32xf32> to vector<8x8xf32>
    %15 = arith.truncf %14 : vector<8x8xf32> to vector<8x8xbf16>
    %16 = vector.extract_strided_slice %12 {offsets = [0, 0], sizes = [64, 8], strides = [1, 1]} : vector<64x32xf32> to vector<64x8xf32>
    %17 = arith.truncf %16 : vector<64x8xf32> to vector<64x8xbf16>
    %18 = vector.extract_strided_slice %13 {offsets = [0, 0], sizes = [64, 8], strides = [1, 1]} : vector<64x32xf32> to vector<64x8xf32>
    %19 = arith.truncf %18 : vector<64x8xf32> to vector<64x8xbf16>
    %cst_12 = arith.constant dense<0.000000e+00> : vector<8x64xf32>
    %20 = tpu.matmul %15, %17, %cst_12 {dimension_numbers = #tpu.dot_dimension_numbers<[1], [1], [0], [0], [0, 0, 1, 0], [], []>} : vector<8x8xbf16>, vector<64x8xbf16>, vector<8x64xf32> -> vector<8x64xf32>
    %cst_13 = arith.constant dense<0xFF800000> : vector<8xf32>
    %21 = vector.multi_reduction <maximumf>, %20, %cst_13 [1] : vector<8x64xf32> to vector<8xf32>
    %22 = vector.shape_cast %21 : vector<8xf32> to vector<8x1xf32>
    %23 = vector.broadcast %22 : vector<8x1xf32> to vector<8x64xf32>
    %24 = arith.subf %20, %23 : vector<8x64xf32>
    %25 = math.exp %24 : vector<8x64xf32>
    %cst_14 = arith.constant dense<0.000000e+00> : vector<8xf32>
    %26 = vector.multi_reduction <add>, %25, %cst_14 [1] : vector<8x64xf32> to vector<8xf32>
    %27 = vector.shape_cast %26 : vector<8xf32> to vector<8x1xf32>
    %28 = vector.broadcast %27 : vector<8x1xf32> to vector<8x64xf32>
    %29 = arith.divf %25, %28 : vector<8x64xf32>
    %30 = arith.truncf %29 : vector<8x64xf32> to vector<8x64xbf16>
    %cst_15 = arith.constant dense<0.000000e+00> : vector<8x8xf32>
    %31 = tpu.matmul %30, %19, %cst_15 {dimension_numbers = #tpu.dot_dimension_numbers<[1], [0], [0], [1], [0, 0, 1, 1], [], []>} : vector<8x64xbf16>, vector<64x8xbf16>, vector<8x8xf32> -> vector<8x8xf32>
    %32 = vector.extract_strided_slice %6 {offsets = [0, 8], sizes = [8, 8], strides = [1, 1]} : vector<8x32xf32> to vector<8x8xf32>
    %33 = arith.truncf %32 : vector<8x8xf32> to vector<8x8xbf16>
    %34 = vector.extract_strided_slice %12 {offsets = [0, 8], sizes = [64, 8], strides = [1, 1]} : vector<64x32xf32> to vector<64x8xf32>
    %35 = arith.truncf %34 : vector<64x8xf32> to vector<64x8xbf16>
    %36 = vector.extract_strided_slice %13 {offsets = [0, 8], sizes = [64, 8], strides = [1, 1]} : vector<64x32xf32> to vector<64x8xf32>
    %37 = arith.truncf %36 : vector<64x8xf32> to vector<64x8xbf16>
    %cst_16 = arith.constant dense<0.000000e+00> : vector<8x64xf32>
    %38 = tpu.matmul %33, %35, %cst_16 {dimension_numbers = #tpu.dot_dimension_numbers<[1], [1], [0], [0], [0, 0, 1, 0], [], []>} : vector<8x8xbf16>, vector<64x8xbf16>, vector<8x64xf32> -> vector<8x64xf32>
    %cst_17 = arith.constant dense<0xFF800000> : vector<8xf32>
    %39 = vector.multi_reduction <maximumf>, %38, %cst_17 [1] : vector<8x64xf32> to vector<8xf32>
    %40 = vector.shape_cast %39 : vector<8xf32> to vector<8x1xf32>
    %41 = vector.broadcast %40 : vector<8x1xf32> to vector<8x64xf32>
    %42 = arith.subf %38, %41 : vector<8x64xf32>
    %43 = math.exp %42 : vector<8x64xf32>
    %cst_18 = arith.constant dense<0.000000e+00> : vector<8xf32>
    %44 = vector.multi_reduction <add>, %43, %cst_18 [1] : vector<8x64xf32> to vector<8xf32>
    %45 = vector.shape_cast %44 : vector<8xf32> to vector<8x1xf32>
    %46 = vector.broadcast %45 : vector<8x1xf32> to vector<8x64xf32>
    %47 = arith.divf %43, %46 : vector<8x64xf32>
    %48 = arith.truncf %47 : vector<8x64xf32> to vector<8x64xbf16>
    %cst_19 = arith.constant dense<0.000000e+00> : vector<8x8xf32>
    %49 = tpu.matmul %48, %37, %cst_19 {dimension_numbers = #tpu.dot_dimension_numbers<[1], [0], [0], [1], [0, 0, 1, 1], [], []>} : vector<8x64xbf16>, vector<64x8xbf16>, vector<8x8xf32> -> vector<8x8xf32>
    %50 = vector.extract_strided_slice %6 {offsets = [0, 16], sizes = [8, 8], strides = [1, 1]} : vector<8x32xf32> to vector<8x8xf32>
    %51 = arith.truncf %50 : vector<8x8xf32> to vector<8x8xbf16>
    %52 = vector.extract_strided_slice %12 {offsets = [0, 16], sizes = [64, 8], strides = [1, 1]} : vector<64x32xf32> to vector<64x8xf32>
    %53 = arith.truncf %52 : vector<64x8xf32> to vector<64x8xbf16>
    %54 = vector.extract_strided_slice %13 {offsets = [0, 16], sizes = [64, 8], strides = [1, 1]} : vector<64x32xf32> to vector<64x8xf32>
    %55 = arith.truncf %54 : vector<64x8xf32> to vector<64x8xbf16>
    %cst_20 = arith.constant dense<0.000000e+00> : vector<8x64xf32>
    %56 = tpu.matmul %51, %53, %cst_20 {dimension_numbers = #tpu.dot_dimension_numbers<[1], [1], [0], [0], [0, 0, 1, 0], [], []>} : vector<8x8xbf16>, vector<64x8xbf16>, vector<8x64xf32> -> vector<8x64xf32>
    %cst_21 = arith.constant dense<0xFF800000> : vector<8xf32>
    %57 = vector.multi_reduction <maximumf>, %56, %cst_21 [1] : vector<8x64xf32> to vector<8xf32>
    %58 = vector.shape_cast %57 : vector<8xf32> to vector<8x1xf32>
    %59 = vector.broadcast %58 : vector<8x1xf32> to vector<8x64xf32>
    %60 = arith.subf %56, %59 : vector<8x64xf32>
    %61 = math.exp %60 : vector<8x64xf32>
    %cst_22 = arith.constant dense<0.000000e+00> : vector<8xf32>
    %62 = vector.multi_reduction <add>, %61, %cst_22 [1] : vector<8x64xf32> to vector<8xf32>
    %63 = vector.shape_cast %62 : vector<8xf32> to vector<8x1xf32>
    %64 = vector.broadcast %63 : vector<8x1xf32> to vector<8x64xf32>
    %65 = arith.divf %61, %64 : vector<8x64xf32>
    %66 = arith.truncf %65 : vector<8x64xf32> to vector<8x64xbf16>
    %cst_23 = arith.constant dense<0.000000e+00> : vector<8x8xf32>
    %67 = tpu.matmul %66, %55, %cst_23 {dimension_numbers = #tpu.dot_dimension_numbers<[1], [0], [0], [1], [0, 0, 1, 1], [], []>} : vector<8x64xbf16>, vector<64x8xbf16>, vector<8x8xf32> -> vector<8x8xf32>
    %68 = vector.extract_strided_slice %6 {offsets = [0, 24], sizes = [8, 8], strides = [1, 1]} : vector<8x32xf32> to vector<8x8xf32>
    %69 = arith.truncf %68 : vector<8x8xf32> to vector<8x8xbf16>
    %70 = vector.extract_strided_slice %12 {offsets = [0, 24], sizes = [64, 8], strides = [1, 1]} : vector<64x32xf32> to vector<64x8xf32>
    %71 = arith.truncf %70 : vector<64x8xf32> to vector<64x8xbf16>
    %72 = vector.extract_strided_slice %13 {offsets = [0, 24], sizes = [64, 8], strides = [1, 1]} : vector<64x32xf32> to vector<64x8xf32>
    %73 = arith.truncf %72 : vector<64x8xf32> to vector<64x8xbf16>
    %cst_24 = arith.constant dense<0.000000e+00> : vector<8x64xf32>
    %74 = tpu.matmul %69, %71, %cst_24 {dimension_numbers = #tpu.dot_dimension_numbers<[1], [1], [0], [0], [0, 0, 1, 0], [], []>} : vector<8x8xbf16>, vector<64x8xbf16>, vector<8x64xf32> -> vector<8x64xf32>
    %cst_25 = arith.constant dense<0xFF800000> : vector<8xf32>
    %75 = vector.multi_reduction <maximumf>, %74, %cst_25 [1] : vector<8x64xf32> to vector<8xf32>
    %76 = vector.shape_cast %75 : vector<8xf32> to vector<8x1xf32>
    %77 = vector.broadcast %76 : vector<8x1xf32> to vector<8x64xf32>
    %78 = arith.subf %74, %77 : vector<8x64xf32>
    %79 = math.exp %78 : vector<8x64xf32>
    %cst_26 = arith.constant dense<0.000000e+00> : vector<8xf32>
    %80 = vector.multi_reduction <add>, %79, %cst_26 [1] : vector<8x64xf32> to vector<8xf32>
    %81 = vector.shape_cast %80 : vector<8xf32> to vector<8x1xf32>
    %82 = vector.broadcast %81 : vector<8x1xf32> to vector<8x64xf32>
    %83 = arith.divf %79, %82 : vector<8x64xf32>
    %84 = arith.truncf %83 : vector<8x64xf32> to vector<8x64xbf16>
    %cst_27 = arith.constant dense<0.000000e+00> : vector<8x8xf32>
    %85 = tpu.matmul %84, %73, %cst_27 {dimension_numbers = #tpu.dot_dimension_numbers<[1], [0], [0], [1], [0, 0, 1, 1], [], []>} : vector<8x64xbf16>, vector<64x8xbf16>, vector<8x8xf32> -> vector<8x8xf32>
    %86 = tpu.concatenate %31, %49, %67, %85 in 1 : vector<8x8xf32>, vector<8x8xf32>, vector<8x8xf32>, vector<8x8xf32> -> vector<8x32xf32>
    %87 = arith.truncf %86 : vector<8x32xf32> to vector<8x32xbf16>
    %c0_28 = arith.constant 0 : index
    %c0_29 = arith.constant 0 : index
    %88 = vector.load %arg7[%c0_28, %c0_29] : memref<32x32xbf16, #tpu.memory_space<vmem>>, vector<32x32xbf16>
    %cst_30 = arith.constant dense<0.000000e+00> : vector<8x32xf32>
    %89 = tpu.matmul %87, %88, %cst_30 {dimension_numbers = #tpu.dot_dimension_numbers<[1], [0], [0], [1], [0, 0, 1, 1], [], []>} : vector<8x32xbf16>, vector<32x32xbf16>, vector<8x32xf32> -> vector<8x32xf32>
    %c0_31 = arith.constant 0 : index
    %c0_32 = arith.constant 0 : index
    %90 = vector.load %arg8[%c0_31, %c0_32] : memref<1x32xf32, #tpu.memory_space<vmem>>, vector<1x32xf32>
    %91 = vector.broadcast %90 : vector<1x32xf32> to vector<8x32xf32>
    %92 = arith.addf %89, %91 : vector<8x32xf32>
    %93 = arith.extf %0 : vector<8x32xbf16> to vector<8x32xf32>
    %94 = arith.addf %92, %93 : vector<8x32xf32>
    %c0_33 = arith.constant 0 : index
    %c0_34 = arith.constant 0 : index
    %95 = vector.load %arg9[%c0_33, %c0_34] : memref<1x32xf32, #tpu.memory_space<vmem>>, vector<1x32xf32>
    %c0_35 = arith.constant 0 : index
    %c0_36 = arith.constant 0 : index
    %96 = vector.load %arg10[%c0_35, %c0_36] : memref<1x32xf32, #tpu.memory_space<vmem>>, vector<1x32xf32>
    %cst_37 = arith.constant dense<0.000000e+00> : vector<8xf32>
    %97 = vector.multi_reduction <add>, %94, %cst_37 [1] : vector<8x32xf32> to vector<8xf32>
    %98 = vector.shape_cast %97 : vector<8xf32> to vector<8x1xf32>
    %cst_38 = arith.constant 3.200000e+01 : f32
    %99 = vector.broadcast %cst_38 : f32 to vector<8x1xf32>
    %100 = arith.divf %98, %99 : vector<8x1xf32>
    %101 = vector.broadcast %100 : vector<8x1xf32> to vector<8x32xf32>
    %102 = arith.subf %94, %101 : vector<8x32xf32>
    %103 = arith.mulf %102, %102 : vector<8x32xf32>
    %cst_39 = arith.constant dense<0.000000e+00> : vector<8xf32>
    %104 = vector.multi_reduction <add>, %103, %cst_39 [1] : vector<8x32xf32> to vector<8xf32>
    %105 = vector.shape_cast %104 : vector<8xf32> to vector<8x1xf32>
    %cst_40 = arith.constant 3.200000e+01 : f32
    %106 = vector.broadcast %cst_40 : f32 to vector<8x1xf32>
    %107 = arith.divf %105, %106 : vector<8x1xf32>
    %cst_41 = arith.constant 9.99999974E-6 : f32
    %108 = vector.broadcast %cst_41 : f32 to vector<8x1xf32>
    %109 = arith.addf %107, %108 : vector<8x1xf32>
    %110 = math.rsqrt %109 : vector<8x1xf32>
    %111 = vector.broadcast %110 : vector<8x1xf32> to vector<8x32xf32>
    %112 = arith.mulf %102, %111 : vector<8x32xf32>
    %113 = vector.broadcast %95 : vector<1x32xf32> to vector<8x32xf32>
    %114 = arith.mulf %112, %113 : vector<8x32xf32>
    %115 = vector.broadcast %96 : vector<1x32xf32> to vector<8x32xf32>
    %116 = arith.addf %114, %115 : vector<8x32xf32>
    %117 = arith.truncf %116 : vector<8x32xf32> to vector<8x32xbf16>
    %c0_42 = arith.constant 0 : index
    %c0_43 = arith.constant 0 : index
    %118 = vector.load %arg11[%c0_42, %c0_43] : memref<8x32xbf16, #tpu.memory_space<vmem>>, vector<8x32xbf16>
    tpu.vector_store %arg11[%c0_42, %c0_43], %117 {strides = array<i32>} : memref<8x32xbf16, #tpu.memory_space<vmem>>, vector<8x32xbf16>,
    return
  }
  func.func @transform_0(%arg0: i32) -> (i32, i32) {
    %c0_i32 = arith.constant 0 : i32
    %c0_i32_0 = arith.constant 0 : i32
    return %arg0, %c0_i32 : i32, i32
  }
  func.func @transform_1(%arg0: i32) -> (i32, i32) {
    %c0_i32 = arith.constant 0 : i32
    %c0_i32_0 = arith.constant 0 : i32
    return %arg0, %c0_i32 : i32, i32
  }
  func.func @transform_2(%arg0: i32) -> (i32, i32) {
    %c0_i32 = arith.constant 0 : i32
    %c0_i32_0 = arith.constant 0 : i32
    %c0_i32_1 = arith.constant 0 : i32
    return %c0_i32, %c0_i32_0 : i32, i32
  }
  func.func @transform_3(%arg0: i32) -> (i32, i32) {
    %c0_i32 = arith.constant 0 : i32
    %c0_i32_0 = arith.constant 0 : i32
    %c0_i32_1 = arith.constant 0 : i32
    return %c0_i32, %c0_i32_0 : i32, i32
  }
  func.func @transform_4(%arg0: i32) -> (i32, i32) {
    %c0_i32 = arith.constant 0 : i32
    %c0_i32_0 = arith.constant 0 : i32
    %c0_i32_1 = arith.constant 0 : i32
    return %c0_i32, %c0_i32_0 : i32, i32
  }
  func.func @transform_5(%arg0: i32) -> (i32, i32) {
    %c0_i32 = arith.constant 0 : i32
    %c0_i32_0 = arith.constant 0 : i32
    %c0_i32_1 = arith.constant 0 : i32
    return %c0_i32, %c0_i32_0 : i32, i32
  }
  func.func @transform_6(%arg0: i32) -> (i32, i32) {
    %c0_i32 = arith.constant 0 : i32
    %c0_i32_0 = arith.constant 0 : i32
    %c0_i32_1 = arith.constant 0 : i32
    return %c0_i32, %c0_i32_0 : i32, i32
  }
  func.func @transform_7(%arg0: i32) -> (i32, i32) {
    %c0_i32 = arith.constant 0 : i32
    %c0_i32_0 = arith.constant 0 : i32
    %c0_i32_1 = arith.constant 0 : i32
    return %c0_i32, %c0_i32_0 : i32, i32
  }
  func.func @transform_8(%arg0: i32) -> (i32, i32) {
    %c0_i32 = arith.constant 0 : i32
    %c0_i32_0 = arith.constant 0 : i32
    %c0_i32_1 = arith.constant 0 : i32
    return %c0_i32, %c0_i32_0 : i32, i32
  }
  func.func @transform_9(%arg0: i32) -> (i32, i32) {
    %c0_i32 = arith.constant 0 : i32
    %c0_i32_0 = arith.constant 0 : i32
    %c0_i32_1 = arith.constant 0 : i32
    return %c0_i32, %c0_i32_0 : i32, i32
  }
  func.func @transform_10(%arg0: i32) -> (i32, i32) {
    %c0_i32 = arith.constant 0 : i32
    %c0_i32_0 = arith.constant 0 : i32
    return %arg0, %c0_i32 : i32, i32
  }
}

module attributes {stable_mosaic.version = 11 : i64} {
  func.func @_ffn_ln_kernel(%arg0: i32, %arg1: memref<8x32xbf16, #tpu.memory_space<vmem>>, %arg2: memref<32x128xbf16, #tpu.memory_space<vmem>>, %arg3: memref<1x128xf32, #tpu.memory_space<vmem>>, %arg4: memref<128x32xbf16, #tpu.memory_space<vmem>>, %arg5: memref<1x32xf32, #tpu.memory_space<vmem>>, %arg6: memref<1x32xf32, #tpu.memory_space<vmem>>, %arg7: memref<1x32xf32, #tpu.memory_space<vmem>>, %arg8: memref<8x32xbf16, #tpu.memory_space<vmem>>) attributes {dimension_semantics = [#tpu.dimension_semantics<parallel>], iteration_bounds = array<i64: 2>, scalar_prefetch = 0 : i64, scratch_operands = 0 : i64, tpu.core_type = #tpu.core_type<tc>, window_params = [{transform_indices = @transform_0, window_bounds = array<i64: 8, 32>}, {pipeline_mode = #tpu.pipeline_mode<synchronous>, transform_indices = @transform_1, window_bounds = array<i64: 32, 128>}, {pipeline_mode = #tpu.pipeline_mode<synchronous>, transform_indices = @transform_2, window_bounds = array<i64: 1, 128>}, {pipeline_mode = #tpu.pipeline_mode<synchronous>, transform_indices = @transform_3, window_bounds = array<i64: 128, 32>}, {pipeline_mode = #tpu.pipeline_mode<synchronous>, transform_indices = @transform_4, window_bounds = array<i64: 1, 32>}, {pipeline_mode = #tpu.pipeline_mode<synchronous>, transform_indices = @transform_5, window_bounds = array<i64: 1, 32>}, {pipeline_mode = #tpu.pipeline_mode<synchronous>, transform_indices = @transform_6, window_bounds = array<i64: 1, 32>}, {transform_indices = @transform_7, window_bounds = array<i64: 8, 32>}]} {
    %c0 = arith.constant 0 : index
    %c0_0 = arith.constant 0 : index
    %0 = vector.load %arg1[%c0, %c0_0] : memref<8x32xbf16, #tpu.memory_space<vmem>>, vector<8x32xbf16>
    %c0_1 = arith.constant 0 : index
    %c0_2 = arith.constant 0 : index
    %1 = vector.load %arg2[%c0_1, %c0_2] : memref<32x128xbf16, #tpu.memory_space<vmem>>, vector<32x128xbf16>
    %cst = arith.constant dense<0.000000e+00> : vector<8x128xf32>
    %2 = tpu.matmul %0, %1, %cst {dimension_numbers = #tpu.dot_dimension_numbers<[1], [0], [0], [1], [0, 0, 1, 1], [], []>} : vector<8x32xbf16>, vector<32x128xbf16>, vector<8x128xf32> -> vector<8x128xf32>
    %c0_3 = arith.constant 0 : index
    %c0_4 = arith.constant 0 : index
    %3 = vector.load %arg3[%c0_3, %c0_4] : memref<1x128xf32, #tpu.memory_space<vmem>>, vector<1x128xf32>
    %4 = vector.broadcast %3 : vector<1x128xf32> to vector<8x128xf32>
    %5 = arith.addf %2, %4 : vector<8x128xf32>
    %cst_5 = arith.constant 0.000000e+00 : f32
    %6 = vector.broadcast %cst_5 : f32 to vector<8x128xf32>
    %7 = arith.maximumf %5, %6 : vector<8x128xf32>
    %8 = arith.truncf %7 : vector<8x128xf32> to vector<8x128xbf16>
    %c0_6 = arith.constant 0 : index
    %c0_7 = arith.constant 0 : index
    %9 = vector.load %arg4[%c0_6, %c0_7] : memref<128x32xbf16, #tpu.memory_space<vmem>>, vector<128x32xbf16>
    %cst_8 = arith.constant dense<0.000000e+00> : vector<8x32xf32>
    %10 = tpu.matmul %8, %9, %cst_8 {dimension_numbers = #tpu.dot_dimension_numbers<[1], [0], [0], [1], [0, 0, 1, 1], [], []>} : vector<8x128xbf16>, vector<128x32xbf16>, vector<8x32xf32> -> vector<8x32xf32>
    %c0_9 = arith.constant 0 : index
    %c0_10 = arith.constant 0 : index
    %11 = vector.load %arg5[%c0_9, %c0_10] : memref<1x32xf32, #tpu.memory_space<vmem>>, vector<1x32xf32>
    %12 = vector.broadcast %11 : vector<1x32xf32> to vector<8x32xf32>
    %13 = arith.addf %10, %12 : vector<8x32xf32>
    %14 = arith.extf %0 : vector<8x32xbf16> to vector<8x32xf32>
    %15 = arith.addf %14, %13 : vector<8x32xf32>
    %c0_11 = arith.constant 0 : index
    %c0_12 = arith.constant 0 : index
    %16 = vector.load %arg6[%c0_11, %c0_12] : memref<1x32xf32, #tpu.memory_space<vmem>>, vector<1x32xf32>
    %c0_13 = arith.constant 0 : index
    %c0_14 = arith.constant 0 : index
    %17 = vector.load %arg7[%c0_13, %c0_14] : memref<1x32xf32, #tpu.memory_space<vmem>>, vector<1x32xf32>
    %cst_15 = arith.constant dense<0.000000e+00> : vector<8xf32>
    %18 = vector.multi_reduction <add>, %15, %cst_15 [1] : vector<8x32xf32> to vector<8xf32>
    %19 = vector.shape_cast %18 : vector<8xf32> to vector<8x1xf32>
    %cst_16 = arith.constant 3.200000e+01 : f32
    %20 = vector.broadcast %cst_16 : f32 to vector<8x1xf32>
    %21 = arith.divf %19, %20 : vector<8x1xf32>
    %22 = vector.broadcast %21 : vector<8x1xf32> to vector<8x32xf32>
    %23 = arith.subf %15, %22 : vector<8x32xf32>
    %24 = arith.mulf %23, %23 : vector<8x32xf32>
    %cst_17 = arith.constant dense<0.000000e+00> : vector<8xf32>
    %25 = vector.multi_reduction <add>, %24, %cst_17 [1] : vector<8x32xf32> to vector<8xf32>
    %26 = vector.shape_cast %25 : vector<8xf32> to vector<8x1xf32>
    %cst_18 = arith.constant 3.200000e+01 : f32
    %27 = vector.broadcast %cst_18 : f32 to vector<8x1xf32>
    %28 = arith.divf %26, %27 : vector<8x1xf32>
    %cst_19 = arith.constant 9.99999974E-6 : f32
    %29 = vector.broadcast %cst_19 : f32 to vector<8x1xf32>
    %30 = arith.addf %28, %29 : vector<8x1xf32>
    %31 = math.rsqrt %30 : vector<8x1xf32>
    %32 = vector.broadcast %31 : vector<8x1xf32> to vector<8x32xf32>
    %33 = arith.mulf %23, %32 : vector<8x32xf32>
    %34 = vector.broadcast %16 : vector<1x32xf32> to vector<8x32xf32>
    %35 = arith.mulf %33, %34 : vector<8x32xf32>
    %36 = vector.broadcast %17 : vector<1x32xf32> to vector<8x32xf32>
    %37 = arith.addf %35, %36 : vector<8x32xf32>
    %38 = arith.truncf %37 : vector<8x32xf32> to vector<8x32xbf16>
    %c0_20 = arith.constant 0 : index
    %c0_21 = arith.constant 0 : index
    %39 = vector.load %arg8[%c0_20, %c0_21] : memref<8x32xbf16, #tpu.memory_space<vmem>>, vector<8x32xbf16>
    tpu.vector_store %arg8[%c0_20, %c0_21], %38 {strides = array<i32>} : memref<8x32xbf16, #tpu.memory_space<vmem>>, vector<8x32xbf16>,
    return
  }
  func.func @transform_0(%arg0: i32) -> (i32, i32) {
    %c0_i32 = arith.constant 0 : i32
    %c0_i32_0 = arith.constant 0 : i32
    return %arg0, %c0_i32 : i32, i32
  }
  func.func @transform_1(%arg0: i32) -> (i32, i32) {
    %c0_i32 = arith.constant 0 : i32
    %c0_i32_0 = arith.constant 0 : i32
    %c0_i32_1 = arith.constant 0 : i32
    return %c0_i32, %c0_i32_0 : i32, i32
  }
  func.func @transform_2(%arg0: i32) -> (i32, i32) {
    %c0_i32 = arith.constant 0 : i32
    %c0_i32_0 = arith.constant 0 : i32
    %c0_i32_1 = arith.constant 0 : i32
    return %c0_i32, %c0_i32_0 : i32, i32
  }
  func.func @transform_3(%arg0: i32) -> (i32, i32) {
    %c0_i32 = arith.constant 0 : i32
    %c0_i32_0 = arith.constant 0 : i32
    %c0_i32_1 = arith.constant 0 : i32
    return %c0_i32, %c0_i32_0 : i32, i32
  }
  func.func @transform_4(%arg0: i32) -> (i32, i32) {
    %c0_i32 = arith.constant 0 : i32
    %c0_i32_0 = arith.constant 0 : i32
    %c0_i32_1 = arith.constant 0 : i32
    return %c0_i32, %c0_i32_0 : i32, i32
  }
  func.func @transform_5(%arg0: i32) -> (i32, i32) {
    %c0_i32 = arith.constant 0 : i32
    %c0_i32_0 = arith.constant 0 : i32
    %c0_i32_1 = arith.constant 0 : i32
    return %c0_i32, %c0_i32_0 : i32, i32
  }
  func.func @transform_6(%arg0: i32) -> (i32, i32) {
    %c0_i32 = arith.constant 0 : i32
    %c0_i32_0 = arith.constant 0 : i32
    %c0_i32_1 = arith.constant 0 : i32
    return %c0_i32, %c0_i32_0 : i32, i32
  }
  func.func @transform_7(%arg0: i32) -> (i32, i32) {
    %c0_i32 = arith.constant 0 : i32
    %c0_i32_0 = arith.constant 0 : i32
    return %arg0, %c0_i32 : i32, i32
  }
}

module attributes {stable_mosaic.version = 11 : i64} {
  func.func @_sa_block_kernel(%arg0: i32, %arg1: memref<64x32xbf16, #tpu.memory_space<vmem>>, %arg2: memref<32x96xbf16, #tpu.memory_space<vmem>>, %arg3: memref<1x96xf32, #tpu.memory_space<vmem>>, %arg4: memref<32x32xbf16, #tpu.memory_space<vmem>>, %arg5: memref<1x32xf32, #tpu.memory_space<vmem>>, %arg6: memref<1x32xf32, #tpu.memory_space<vmem>>, %arg7: memref<1x32xf32, #tpu.memory_space<vmem>>, %arg8: memref<64x32xbf16, #tpu.memory_space<vmem>>) attributes {dimension_semantics = [#tpu.dimension_semantics<parallel>], iteration_bounds = array<i64: 2>, scalar_prefetch = 0 : i64, scratch_operands = 0 : i64, tpu.core_type = #tpu.core_type<tc>, window_params = [{transform_indices = @transform_0, window_bounds = array<i64: 64, 32>}, {pipeline_mode = #tpu.pipeline_mode<synchronous>, transform_indices = @transform_1, window_bounds = array<i64: 32, 96>}, {pipeline_mode = #tpu.pipeline_mode<synchronous>, transform_indices = @transform_2, window_bounds = array<i64: 1, 96>}, {pipeline_mode = #tpu.pipeline_mode<synchronous>, transform_indices = @transform_3, window_bounds = array<i64: 32, 32>}, {pipeline_mode = #tpu.pipeline_mode<synchronous>, transform_indices = @transform_4, window_bounds = array<i64: 1, 32>}, {pipeline_mode = #tpu.pipeline_mode<synchronous>, transform_indices = @transform_5, window_bounds = array<i64: 1, 32>}, {pipeline_mode = #tpu.pipeline_mode<synchronous>, transform_indices = @transform_6, window_bounds = array<i64: 1, 32>}, {transform_indices = @transform_7, window_bounds = array<i64: 64, 32>}]} {
    %c0 = arith.constant 0 : index
    %c0_0 = arith.constant 0 : index
    %0 = vector.load %arg1[%c0, %c0_0] : memref<64x32xbf16, #tpu.memory_space<vmem>>, vector<64x32xbf16>
    %c0_1 = arith.constant 0 : index
    %c0_2 = arith.constant 0 : index
    %1 = vector.load %arg2[%c0_1, %c0_2] : memref<32x96xbf16, #tpu.memory_space<vmem>>, vector<32x96xbf16>
    %cst = arith.constant dense<0.000000e+00> : vector<64x96xf32>
    %2 = tpu.matmul %0, %1, %cst {dimension_numbers = #tpu.dot_dimension_numbers<[1], [0], [0], [1], [0, 0, 1, 1], [], []>} : vector<64x32xbf16>, vector<32x96xbf16>, vector<64x96xf32> -> vector<64x96xf32>
    %c0_3 = arith.constant 0 : index
    %c0_4 = arith.constant 0 : index
    %3 = vector.load %arg3[%c0_3, %c0_4] : memref<1x96xf32, #tpu.memory_space<vmem>>, vector<1x96xf32>
    %4 = vector.broadcast %3 : vector<1x96xf32> to vector<64x96xf32>
    %5 = arith.addf %2, %4 : vector<64x96xf32>
    %6 = vector.extract_strided_slice %5 {offsets = [0, 0], sizes = [64, 32], strides = [1, 1]} : vector<64x96xf32> to vector<64x32xf32>
    %7 = vector.extract_strided_slice %5 {offsets = [0, 32], sizes = [64, 32], strides = [1, 1]} : vector<64x96xf32> to vector<64x32xf32>
    %8 = vector.extract_strided_slice %5 {offsets = [0, 64], sizes = [64, 32], strides = [1, 1]} : vector<64x96xf32> to vector<64x32xf32>
    %9 = vector.extract_strided_slice %6 {offsets = [0, 0], sizes = [64, 8], strides = [1, 1]} : vector<64x32xf32> to vector<64x8xf32>
    %10 = arith.truncf %9 : vector<64x8xf32> to vector<64x8xbf16>
    %11 = vector.extract_strided_slice %7 {offsets = [0, 0], sizes = [64, 8], strides = [1, 1]} : vector<64x32xf32> to vector<64x8xf32>
    %12 = arith.truncf %11 : vector<64x8xf32> to vector<64x8xbf16>
    %13 = vector.extract_strided_slice %8 {offsets = [0, 0], sizes = [64, 8], strides = [1, 1]} : vector<64x32xf32> to vector<64x8xf32>
    %14 = arith.truncf %13 : vector<64x8xf32> to vector<64x8xbf16>
    %cst_5 = arith.constant dense<0.000000e+00> : vector<64x64xf32>
    %15 = tpu.matmul %10, %12, %cst_5 {dimension_numbers = #tpu.dot_dimension_numbers<[1], [1], [0], [0], [0, 0, 1, 0], [], []>} : vector<64x8xbf16>, vector<64x8xbf16>, vector<64x64xf32> -> vector<64x64xf32>
    %cst_6 = arith.constant dense<0xFF800000> : vector<64xf32>
    %16 = vector.multi_reduction <maximumf>, %15, %cst_6 [1] : vector<64x64xf32> to vector<64xf32>
    %17 = vector.shape_cast %16 : vector<64xf32> to vector<64x1xf32>
    %18 = vector.broadcast %17 : vector<64x1xf32> to vector<64x64xf32>
    %19 = arith.subf %15, %18 : vector<64x64xf32>
    %20 = math.exp %19 : vector<64x64xf32>
    %cst_7 = arith.constant dense<0.000000e+00> : vector<64xf32>
    %21 = vector.multi_reduction <add>, %20, %cst_7 [1] : vector<64x64xf32> to vector<64xf32>
    %22 = vector.shape_cast %21 : vector<64xf32> to vector<64x1xf32>
    %23 = vector.broadcast %22 : vector<64x1xf32> to vector<64x64xf32>
    %24 = arith.divf %20, %23 : vector<64x64xf32>
    %25 = arith.truncf %24 : vector<64x64xf32> to vector<64x64xbf16>
    %cst_8 = arith.constant dense<0.000000e+00> : vector<64x8xf32>
    %26 = tpu.matmul %25, %14, %cst_8 {dimension_numbers = #tpu.dot_dimension_numbers<[1], [0], [0], [1], [0, 0, 1, 1], [], []>} : vector<64x64xbf16>, vector<64x8xbf16>, vector<64x8xf32> -> vector<64x8xf32>
    %27 = vector.extract_strided_slice %6 {offsets = [0, 8], sizes = [64, 8], strides = [1, 1]} : vector<64x32xf32> to vector<64x8xf32>
    %28 = arith.truncf %27 : vector<64x8xf32> to vector<64x8xbf16>
    %29 = vector.extract_strided_slice %7 {offsets = [0, 8], sizes = [64, 8], strides = [1, 1]} : vector<64x32xf32> to vector<64x8xf32>
    %30 = arith.truncf %29 : vector<64x8xf32> to vector<64x8xbf16>
    %31 = vector.extract_strided_slice %8 {offsets = [0, 8], sizes = [64, 8], strides = [1, 1]} : vector<64x32xf32> to vector<64x8xf32>
    %32 = arith.truncf %31 : vector<64x8xf32> to vector<64x8xbf16>
    %cst_9 = arith.constant dense<0.000000e+00> : vector<64x64xf32>
    %33 = tpu.matmul %28, %30, %cst_9 {dimension_numbers = #tpu.dot_dimension_numbers<[1], [1], [0], [0], [0, 0, 1, 0], [], []>} : vector<64x8xbf16>, vector<64x8xbf16>, vector<64x64xf32> -> vector<64x64xf32>
    %cst_10 = arith.constant dense<0xFF800000> : vector<64xf32>
    %34 = vector.multi_reduction <maximumf>, %33, %cst_10 [1] : vector<64x64xf32> to vector<64xf32>
    %35 = vector.shape_cast %34 : vector<64xf32> to vector<64x1xf32>
    %36 = vector.broadcast %35 : vector<64x1xf32> to vector<64x64xf32>
    %37 = arith.subf %33, %36 : vector<64x64xf32>
    %38 = math.exp %37 : vector<64x64xf32>
    %cst_11 = arith.constant dense<0.000000e+00> : vector<64xf32>
    %39 = vector.multi_reduction <add>, %38, %cst_11 [1] : vector<64x64xf32> to vector<64xf32>
    %40 = vector.shape_cast %39 : vector<64xf32> to vector<64x1xf32>
    %41 = vector.broadcast %40 : vector<64x1xf32> to vector<64x64xf32>
    %42 = arith.divf %38, %41 : vector<64x64xf32>
    %43 = arith.truncf %42 : vector<64x64xf32> to vector<64x64xbf16>
    %cst_12 = arith.constant dense<0.000000e+00> : vector<64x8xf32>
    %44 = tpu.matmul %43, %32, %cst_12 {dimension_numbers = #tpu.dot_dimension_numbers<[1], [0], [0], [1], [0, 0, 1, 1], [], []>} : vector<64x64xbf16>, vector<64x8xbf16>, vector<64x8xf32> -> vector<64x8xf32>
    %45 = vector.extract_strided_slice %6 {offsets = [0, 16], sizes = [64, 8], strides = [1, 1]} : vector<64x32xf32> to vector<64x8xf32>
    %46 = arith.truncf %45 : vector<64x8xf32> to vector<64x8xbf16>
    %47 = vector.extract_strided_slice %7 {offsets = [0, 16], sizes = [64, 8], strides = [1, 1]} : vector<64x32xf32> to vector<64x8xf32>
    %48 = arith.truncf %47 : vector<64x8xf32> to vector<64x8xbf16>
    %49 = vector.extract_strided_slice %8 {offsets = [0, 16], sizes = [64, 8], strides = [1, 1]} : vector<64x32xf32> to vector<64x8xf32>
    %50 = arith.truncf %49 : vector<64x8xf32> to vector<64x8xbf16>
    %cst_13 = arith.constant dense<0.000000e+00> : vector<64x64xf32>
    %51 = tpu.matmul %46, %48, %cst_13 {dimension_numbers = #tpu.dot_dimension_numbers<[1], [1], [0], [0], [0, 0, 1, 0], [], []>} : vector<64x8xbf16>, vector<64x8xbf16>, vector<64x64xf32> -> vector<64x64xf32>
    %cst_14 = arith.constant dense<0xFF800000> : vector<64xf32>
    %52 = vector.multi_reduction <maximumf>, %51, %cst_14 [1] : vector<64x64xf32> to vector<64xf32>
    %53 = vector.shape_cast %52 : vector<64xf32> to vector<64x1xf32>
    %54 = vector.broadcast %53 : vector<64x1xf32> to vector<64x64xf32>
    %55 = arith.subf %51, %54 : vector<64x64xf32>
    %56 = math.exp %55 : vector<64x64xf32>
    %cst_15 = arith.constant dense<0.000000e+00> : vector<64xf32>
    %57 = vector.multi_reduction <add>, %56, %cst_15 [1] : vector<64x64xf32> to vector<64xf32>
    %58 = vector.shape_cast %57 : vector<64xf32> to vector<64x1xf32>
    %59 = vector.broadcast %58 : vector<64x1xf32> to vector<64x64xf32>
    %60 = arith.divf %56, %59 : vector<64x64xf32>
    %61 = arith.truncf %60 : vector<64x64xf32> to vector<64x64xbf16>
    %cst_16 = arith.constant dense<0.000000e+00> : vector<64x8xf32>
    %62 = tpu.matmul %61, %50, %cst_16 {dimension_numbers = #tpu.dot_dimension_numbers<[1], [0], [0], [1], [0, 0, 1, 1], [], []>} : vector<64x64xbf16>, vector<64x8xbf16>, vector<64x8xf32> -> vector<64x8xf32>
    %63 = vector.extract_strided_slice %6 {offsets = [0, 24], sizes = [64, 8], strides = [1, 1]} : vector<64x32xf32> to vector<64x8xf32>
    %64 = arith.truncf %63 : vector<64x8xf32> to vector<64x8xbf16>
    %65 = vector.extract_strided_slice %7 {offsets = [0, 24], sizes = [64, 8], strides = [1, 1]} : vector<64x32xf32> to vector<64x8xf32>
    %66 = arith.truncf %65 : vector<64x8xf32> to vector<64x8xbf16>
    %67 = vector.extract_strided_slice %8 {offsets = [0, 24], sizes = [64, 8], strides = [1, 1]} : vector<64x32xf32> to vector<64x8xf32>
    %68 = arith.truncf %67 : vector<64x8xf32> to vector<64x8xbf16>
    %cst_17 = arith.constant dense<0.000000e+00> : vector<64x64xf32>
    %69 = tpu.matmul %64, %66, %cst_17 {dimension_numbers = #tpu.dot_dimension_numbers<[1], [1], [0], [0], [0, 0, 1, 0], [], []>} : vector<64x8xbf16>, vector<64x8xbf16>, vector<64x64xf32> -> vector<64x64xf32>
    %cst_18 = arith.constant dense<0xFF800000> : vector<64xf32>
    %70 = vector.multi_reduction <maximumf>, %69, %cst_18 [1] : vector<64x64xf32> to vector<64xf32>
    %71 = vector.shape_cast %70 : vector<64xf32> to vector<64x1xf32>
    %72 = vector.broadcast %71 : vector<64x1xf32> to vector<64x64xf32>
    %73 = arith.subf %69, %72 : vector<64x64xf32>
    %74 = math.exp %73 : vector<64x64xf32>
    %cst_19 = arith.constant dense<0.000000e+00> : vector<64xf32>
    %75 = vector.multi_reduction <add>, %74, %cst_19 [1] : vector<64x64xf32> to vector<64xf32>
    %76 = vector.shape_cast %75 : vector<64xf32> to vector<64x1xf32>
    %77 = vector.broadcast %76 : vector<64x1xf32> to vector<64x64xf32>
    %78 = arith.divf %74, %77 : vector<64x64xf32>
    %79 = arith.truncf %78 : vector<64x64xf32> to vector<64x64xbf16>
    %cst_20 = arith.constant dense<0.000000e+00> : vector<64x8xf32>
    %80 = tpu.matmul %79, %68, %cst_20 {dimension_numbers = #tpu.dot_dimension_numbers<[1], [0], [0], [1], [0, 0, 1, 1], [], []>} : vector<64x64xbf16>, vector<64x8xbf16>, vector<64x8xf32> -> vector<64x8xf32>
    %81 = tpu.concatenate %26, %44, %62, %80 in 1 : vector<64x8xf32>, vector<64x8xf32>, vector<64x8xf32>, vector<64x8xf32> -> vector<64x32xf32>
    %82 = arith.truncf %81 : vector<64x32xf32> to vector<64x32xbf16>
    %c0_21 = arith.constant 0 : index
    %c0_22 = arith.constant 0 : index
    %83 = vector.load %arg4[%c0_21, %c0_22] : memref<32x32xbf16, #tpu.memory_space<vmem>>, vector<32x32xbf16>
    %cst_23 = arith.constant dense<0.000000e+00> : vector<64x32xf32>
    %84 = tpu.matmul %82, %83, %cst_23 {dimension_numbers = #tpu.dot_dimension_numbers<[1], [0], [0], [1], [0, 0, 1, 1], [], []>} : vector<64x32xbf16>, vector<32x32xbf16>, vector<64x32xf32> -> vector<64x32xf32>
    %c0_24 = arith.constant 0 : index
    %c0_25 = arith.constant 0 : index
    %85 = vector.load %arg5[%c0_24, %c0_25] : memref<1x32xf32, #tpu.memory_space<vmem>>, vector<1x32xf32>
    %86 = vector.broadcast %85 : vector<1x32xf32> to vector<64x32xf32>
    %87 = arith.addf %84, %86 : vector<64x32xf32>
    %88 = arith.extf %0 : vector<64x32xbf16> to vector<64x32xf32>
    %89 = arith.addf %87, %88 : vector<64x32xf32>
    %c0_26 = arith.constant 0 : index
    %c0_27 = arith.constant 0 : index
    %90 = vector.load %arg6[%c0_26, %c0_27] : memref<1x32xf32, #tpu.memory_space<vmem>>, vector<1x32xf32>
    %c0_28 = arith.constant 0 : index
    %c0_29 = arith.constant 0 : index
    %91 = vector.load %arg7[%c0_28, %c0_29] : memref<1x32xf32, #tpu.memory_space<vmem>>, vector<1x32xf32>
    %cst_30 = arith.constant dense<0.000000e+00> : vector<64xf32>
    %92 = vector.multi_reduction <add>, %89, %cst_30 [1] : vector<64x32xf32> to vector<64xf32>
    %93 = vector.shape_cast %92 : vector<64xf32> to vector<64x1xf32>
    %cst_31 = arith.constant 3.200000e+01 : f32
    %94 = vector.broadcast %cst_31 : f32 to vector<64x1xf32>
    %95 = arith.divf %93, %94 : vector<64x1xf32>
    %96 = vector.broadcast %95 : vector<64x1xf32> to vector<64x32xf32>
    %97 = arith.subf %89, %96 : vector<64x32xf32>
    %98 = arith.mulf %97, %97 : vector<64x32xf32>
    %cst_32 = arith.constant dense<0.000000e+00> : vector<64xf32>
    %99 = vector.multi_reduction <add>, %98, %cst_32 [1] : vector<64x32xf32> to vector<64xf32>
    %100 = vector.shape_cast %99 : vector<64xf32> to vector<64x1xf32>
    %cst_33 = arith.constant 3.200000e+01 : f32
    %101 = vector.broadcast %cst_33 : f32 to vector<64x1xf32>
    %102 = arith.divf %100, %101 : vector<64x1xf32>
    %cst_34 = arith.constant 9.99999974E-6 : f32
    %103 = vector.broadcast %cst_34 : f32 to vector<64x1xf32>
    %104 = arith.addf %102, %103 : vector<64x1xf32>
    %105 = math.rsqrt %104 : vector<64x1xf32>
    %106 = vector.broadcast %105 : vector<64x1xf32> to vector<64x32xf32>
    %107 = arith.mulf %97, %106 : vector<64x32xf32>
    %108 = vector.broadcast %90 : vector<1x32xf32> to vector<64x32xf32>
    %109 = arith.mulf %107, %108 : vector<64x32xf32>
    %110 = vector.broadcast %91 : vector<1x32xf32> to vector<64x32xf32>
    %111 = arith.addf %109, %110 : vector<64x32xf32>
    %112 = arith.truncf %111 : vector<64x32xf32> to vector<64x32xbf16>
    %c0_35 = arith.constant 0 : index
    %c0_36 = arith.constant 0 : index
    %113 = vector.load %arg8[%c0_35, %c0_36] : memref<64x32xbf16, #tpu.memory_space<vmem>>, vector<64x32xbf16>
    tpu.vector_store %arg8[%c0_35, %c0_36], %112 {strides = array<i32>} : memref<64x32xbf16, #tpu.memory_space<vmem>>, vector<64x32xbf16>,
    return
  }
  func.func @transform_0(%arg0: i32) -> (i32, i32) {
    %c0_i32 = arith.constant 0 : i32
    %c0_i32_0 = arith.constant 0 : i32
    return %arg0, %c0_i32 : i32, i32
  }
  func.func @transform_1(%arg0: i32) -> (i32, i32) {
    %c0_i32 = arith.constant 0 : i32
    %c0_i32_0 = arith.constant 0 : i32
    %c0_i32_1 = arith.constant 0 : i32
    return %c0_i32, %c0_i32_0 : i32, i32
  }
  func.func @transform_2(%arg0: i32) -> (i32, i32) {
    %c0_i32 = arith.constant 0 : i32
    %c0_i32_0 = arith.constant 0 : i32
    %c0_i32_1 = arith.constant 0 : i32
    return %c0_i32, %c0_i32_0 : i32, i32
  }
  func.func @transform_3(%arg0: i32) -> (i32, i32) {
    %c0_i32 = arith.constant 0 : i32
    %c0_i32_0 = arith.constant 0 : i32
    %c0_i32_1 = arith.constant 0 : i32
    return %c0_i32, %c0_i32_0 : i32, i32
  }
  func.func @transform_4(%arg0: i32) -> (i32, i32) {
    %c0_i32 = arith.constant 0 : i32
    %c0_i32_0 = arith.constant 0 : i32
    %c0_i32_1 = arith.constant 0 : i32
    return %c0_i32, %c0_i32_0 : i32, i32
  }
  func.func @transform_5(%arg0: i32) -> (i32, i32) {
    %c0_i32 = arith.constant 0 : i32
    %c0_i32_0 = arith.constant 0 : i32
    %c0_i32_1 = arith.constant 0 : i32
    return %c0_i32, %c0_i32_0 : i32, i32
  }
  func.func @transform_6(%arg0: i32) -> (i32, i32) {
    %c0_i32 = arith.constant 0 : i32
    %c0_i32_0 = arith.constant 0 : i32
    %c0_i32_1 = arith.constant 0 : i32
    return %c0_i32, %c0_i32_0 : i32, i32
  }
  func.func @transform_7(%arg0: i32) -> (i32, i32) {
    %c0_i32 = arith.constant 0 : i32
    %c0_i32_0 = arith.constant 0 : i32
    return %arg0, %c0_i32 : i32, i32
  }
}

module attributes {stable_mosaic.version = 11 : i64} {
  func.func @_ca_block_kernel(%arg0: i32, %arg1: memref<64x32xbf16, #tpu.memory_space<vmem>>, %arg2: memref<8x32xbf16, #tpu.memory_space<vmem>>, %arg3: memref<32x32xbf16, #tpu.memory_space<vmem>>, %arg4: memref<1x32xf32, #tpu.memory_space<vmem>>, %arg5: memref<32x64xbf16, #tpu.memory_space<vmem>>, %arg6: memref<1x64xf32, #tpu.memory_space<vmem>>, %arg7: memref<32x32xbf16, #tpu.memory_space<vmem>>, %arg8: memref<1x32xf32, #tpu.memory_space<vmem>>, %arg9: memref<1x32xf32, #tpu.memory_space<vmem>>, %arg10: memref<1x32xf32, #tpu.memory_space<vmem>>, %arg11: memref<64x32xbf16, #tpu.memory_space<vmem>>) attributes {dimension_semantics = [#tpu.dimension_semantics<parallel>], iteration_bounds = array<i64: 2>, scalar_prefetch = 0 : i64, scratch_operands = 0 : i64, tpu.core_type = #tpu.core_type<tc>, window_params = [{transform_indices = @transform_0, window_bounds = array<i64: 64, 32>}, {transform_indices = @transform_1, window_bounds = array<i64: 8, 32>}, {pipeline_mode = #tpu.pipeline_mode<synchronous>, transform_indices = @transform_2, window_bounds = array<i64: 32, 32>}, {pipeline_mode = #tpu.pipeline_mode<synchronous>, transform_indices = @transform_3, window_bounds = array<i64: 1, 32>}, {pipeline_mode = #tpu.pipeline_mode<synchronous>, transform_indices = @transform_4, window_bounds = array<i64: 32, 64>}, {pipeline_mode = #tpu.pipeline_mode<synchronous>, transform_indices = @transform_5, window_bounds = array<i64: 1, 64>}, {pipeline_mode = #tpu.pipeline_mode<synchronous>, transform_indices = @transform_6, window_bounds = array<i64: 32, 32>}, {pipeline_mode = #tpu.pipeline_mode<synchronous>, transform_indices = @transform_7, window_bounds = array<i64: 1, 32>}, {pipeline_mode = #tpu.pipeline_mode<synchronous>, transform_indices = @transform_8, window_bounds = array<i64: 1, 32>}, {pipeline_mode = #tpu.pipeline_mode<synchronous>, transform_indices = @transform_9, window_bounds = array<i64: 1, 32>}, {transform_indices = @transform_10, window_bounds = array<i64: 64, 32>}]} {
    %c0 = arith.constant 0 : index
    %c0_0 = arith.constant 0 : index
    %0 = vector.load %arg1[%c0, %c0_0] : memref<64x32xbf16, #tpu.memory_space<vmem>>, vector<64x32xbf16>
    %c0_1 = arith.constant 0 : index
    %c0_2 = arith.constant 0 : index
    %1 = vector.load %arg2[%c0_1, %c0_2] : memref<8x32xbf16, #tpu.memory_space<vmem>>, vector<8x32xbf16>
    %c0_3 = arith.constant 0 : index
    %c0_4 = arith.constant 0 : index
    %2 = vector.load %arg3[%c0_3, %c0_4] : memref<32x32xbf16, #tpu.memory_space<vmem>>, vector<32x32xbf16>
    %cst = arith.constant dense<0.000000e+00> : vector<64x32xf32>
    %3 = tpu.matmul %0, %2, %cst {dimension_numbers = #tpu.dot_dimension_numbers<[1], [0], [0], [1], [0, 0, 1, 1], [], []>} : vector<64x32xbf16>, vector<32x32xbf16>, vector<64x32xf32> -> vector<64x32xf32>
    %c0_5 = arith.constant 0 : index
    %c0_6 = arith.constant 0 : index
    %4 = vector.load %arg4[%c0_5, %c0_6] : memref<1x32xf32, #tpu.memory_space<vmem>>, vector<1x32xf32>
    %5 = vector.broadcast %4 : vector<1x32xf32> to vector<64x32xf32>
    %6 = arith.addf %3, %5 : vector<64x32xf32>
    %c0_7 = arith.constant 0 : index
    %c0_8 = arith.constant 0 : index
    %7 = vector.load %arg5[%c0_7, %c0_8] : memref<32x64xbf16, #tpu.memory_space<vmem>>, vector<32x64xbf16>
    %cst_9 = arith.constant dense<0.000000e+00> : vector<8x64xf32>
    %8 = tpu.matmul %1, %7, %cst_9 {dimension_numbers = #tpu.dot_dimension_numbers<[1], [0], [0], [1], [0, 0, 1, 1], [], []>} : vector<8x32xbf16>, vector<32x64xbf16>, vector<8x64xf32> -> vector<8x64xf32>
    %c0_10 = arith.constant 0 : index
    %c0_11 = arith.constant 0 : index
    %9 = vector.load %arg6[%c0_10, %c0_11] : memref<1x64xf32, #tpu.memory_space<vmem>>, vector<1x64xf32>
    %10 = vector.broadcast %9 : vector<1x64xf32> to vector<8x64xf32>
    %11 = arith.addf %8, %10 : vector<8x64xf32>
    %12 = vector.extract_strided_slice %11 {offsets = [0, 0], sizes = [8, 32], strides = [1, 1]} : vector<8x64xf32> to vector<8x32xf32>
    %13 = vector.extract_strided_slice %11 {offsets = [0, 32], sizes = [8, 32], strides = [1, 1]} : vector<8x64xf32> to vector<8x32xf32>
    %14 = vector.extract_strided_slice %6 {offsets = [0, 0], sizes = [64, 8], strides = [1, 1]} : vector<64x32xf32> to vector<64x8xf32>
    %15 = arith.truncf %14 : vector<64x8xf32> to vector<64x8xbf16>
    %16 = vector.extract_strided_slice %12 {offsets = [0, 0], sizes = [8, 8], strides = [1, 1]} : vector<8x32xf32> to vector<8x8xf32>
    %17 = arith.truncf %16 : vector<8x8xf32> to vector<8x8xbf16>
    %18 = vector.extract_strided_slice %13 {offsets = [0, 0], sizes = [8, 8], strides = [1, 1]} : vector<8x32xf32> to vector<8x8xf32>
    %19 = arith.truncf %18 : vector<8x8xf32> to vector<8x8xbf16>
    %cst_12 = arith.constant dense<0.000000e+00> : vector<64x8xf32>
    %20 = tpu.matmul %15, %17, %cst_12 {dimension_numbers = #tpu.dot_dimension_numbers<[1], [1], [0], [0], [0, 0, 1, 0], [], []>} : vector<64x8xbf16>, vector<8x8xbf16>, vector<64x8xf32> -> vector<64x8xf32>
    %cst_13 = arith.constant dense<0xFF800000> : vector<64xf32>
    %21 = vector.multi_reduction <maximumf>, %20, %cst_13 [1] : vector<64x8xf32> to vector<64xf32>
    %22 = vector.shape_cast %21 : vector<64xf32> to vector<64x1xf32>
    %23 = vector.broadcast %22 : vector<64x1xf32> to vector<64x8xf32>
    %24 = arith.subf %20, %23 : vector<64x8xf32>
    %25 = math.exp %24 : vector<64x8xf32>
    %cst_14 = arith.constant dense<0.000000e+00> : vector<64xf32>
    %26 = vector.multi_reduction <add>, %25, %cst_14 [1] : vector<64x8xf32> to vector<64xf32>
    %27 = vector.shape_cast %26 : vector<64xf32> to vector<64x1xf32>
    %28 = vector.broadcast %27 : vector<64x1xf32> to vector<64x8xf32>
    %29 = arith.divf %25, %28 : vector<64x8xf32>
    %30 = arith.truncf %29 : vector<64x8xf32> to vector<64x8xbf16>
    %cst_15 = arith.constant dense<0.000000e+00> : vector<64x8xf32>
    %31 = tpu.matmul %30, %19, %cst_15 {dimension_numbers = #tpu.dot_dimension_numbers<[1], [0], [0], [1], [0, 0, 1, 1], [], []>} : vector<64x8xbf16>, vector<8x8xbf16>, vector<64x8xf32> -> vector<64x8xf32>
    %32 = vector.extract_strided_slice %6 {offsets = [0, 8], sizes = [64, 8], strides = [1, 1]} : vector<64x32xf32> to vector<64x8xf32>
    %33 = arith.truncf %32 : vector<64x8xf32> to vector<64x8xbf16>
    %34 = vector.extract_strided_slice %12 {offsets = [0, 8], sizes = [8, 8], strides = [1, 1]} : vector<8x32xf32> to vector<8x8xf32>
    %35 = arith.truncf %34 : vector<8x8xf32> to vector<8x8xbf16>
    %36 = vector.extract_strided_slice %13 {offsets = [0, 8], sizes = [8, 8], strides = [1, 1]} : vector<8x32xf32> to vector<8x8xf32>
    %37 = arith.truncf %36 : vector<8x8xf32> to vector<8x8xbf16>
    %cst_16 = arith.constant dense<0.000000e+00> : vector<64x8xf32>
    %38 = tpu.matmul %33, %35, %cst_16 {dimension_numbers = #tpu.dot_dimension_numbers<[1], [1], [0], [0], [0, 0, 1, 0], [], []>} : vector<64x8xbf16>, vector<8x8xbf16>, vector<64x8xf32> -> vector<64x8xf32>
    %cst_17 = arith.constant dense<0xFF800000> : vector<64xf32>
    %39 = vector.multi_reduction <maximumf>, %38, %cst_17 [1] : vector<64x8xf32> to vector<64xf32>
    %40 = vector.shape_cast %39 : vector<64xf32> to vector<64x1xf32>
    %41 = vector.broadcast %40 : vector<64x1xf32> to vector<64x8xf32>
    %42 = arith.subf %38, %41 : vector<64x8xf32>
    %43 = math.exp %42 : vector<64x8xf32>
    %cst_18 = arith.constant dense<0.000000e+00> : vector<64xf32>
    %44 = vector.multi_reduction <add>, %43, %cst_18 [1] : vector<64x8xf32> to vector<64xf32>
    %45 = vector.shape_cast %44 : vector<64xf32> to vector<64x1xf32>
    %46 = vector.broadcast %45 : vector<64x1xf32> to vector<64x8xf32>
    %47 = arith.divf %43, %46 : vector<64x8xf32>
    %48 = arith.truncf %47 : vector<64x8xf32> to vector<64x8xbf16>
    %cst_19 = arith.constant dense<0.000000e+00> : vector<64x8xf32>
    %49 = tpu.matmul %48, %37, %cst_19 {dimension_numbers = #tpu.dot_dimension_numbers<[1], [0], [0], [1], [0, 0, 1, 1], [], []>} : vector<64x8xbf16>, vector<8x8xbf16>, vector<64x8xf32> -> vector<64x8xf32>
    %50 = vector.extract_strided_slice %6 {offsets = [0, 16], sizes = [64, 8], strides = [1, 1]} : vector<64x32xf32> to vector<64x8xf32>
    %51 = arith.truncf %50 : vector<64x8xf32> to vector<64x8xbf16>
    %52 = vector.extract_strided_slice %12 {offsets = [0, 16], sizes = [8, 8], strides = [1, 1]} : vector<8x32xf32> to vector<8x8xf32>
    %53 = arith.truncf %52 : vector<8x8xf32> to vector<8x8xbf16>
    %54 = vector.extract_strided_slice %13 {offsets = [0, 16], sizes = [8, 8], strides = [1, 1]} : vector<8x32xf32> to vector<8x8xf32>
    %55 = arith.truncf %54 : vector<8x8xf32> to vector<8x8xbf16>
    %cst_20 = arith.constant dense<0.000000e+00> : vector<64x8xf32>
    %56 = tpu.matmul %51, %53, %cst_20 {dimension_numbers = #tpu.dot_dimension_numbers<[1], [1], [0], [0], [0, 0, 1, 0], [], []>} : vector<64x8xbf16>, vector<8x8xbf16>, vector<64x8xf32> -> vector<64x8xf32>
    %cst_21 = arith.constant dense<0xFF800000> : vector<64xf32>
    %57 = vector.multi_reduction <maximumf>, %56, %cst_21 [1] : vector<64x8xf32> to vector<64xf32>
    %58 = vector.shape_cast %57 : vector<64xf32> to vector<64x1xf32>
    %59 = vector.broadcast %58 : vector<64x1xf32> to vector<64x8xf32>
    %60 = arith.subf %56, %59 : vector<64x8xf32>
    %61 = math.exp %60 : vector<64x8xf32>
    %cst_22 = arith.constant dense<0.000000e+00> : vector<64xf32>
    %62 = vector.multi_reduction <add>, %61, %cst_22 [1] : vector<64x8xf32> to vector<64xf32>
    %63 = vector.shape_cast %62 : vector<64xf32> to vector<64x1xf32>
    %64 = vector.broadcast %63 : vector<64x1xf32> to vector<64x8xf32>
    %65 = arith.divf %61, %64 : vector<64x8xf32>
    %66 = arith.truncf %65 : vector<64x8xf32> to vector<64x8xbf16>
    %cst_23 = arith.constant dense<0.000000e+00> : vector<64x8xf32>
    %67 = tpu.matmul %66, %55, %cst_23 {dimension_numbers = #tpu.dot_dimension_numbers<[1], [0], [0], [1], [0, 0, 1, 1], [], []>} : vector<64x8xbf16>, vector<8x8xbf16>, vector<64x8xf32> -> vector<64x8xf32>
    %68 = vector.extract_strided_slice %6 {offsets = [0, 24], sizes = [64, 8], strides = [1, 1]} : vector<64x32xf32> to vector<64x8xf32>
    %69 = arith.truncf %68 : vector<64x8xf32> to vector<64x8xbf16>
    %70 = vector.extract_strided_slice %12 {offsets = [0, 24], sizes = [8, 8], strides = [1, 1]} : vector<8x32xf32> to vector<8x8xf32>
    %71 = arith.truncf %70 : vector<8x8xf32> to vector<8x8xbf16>
    %72 = vector.extract_strided_slice %13 {offsets = [0, 24], sizes = [8, 8], strides = [1, 1]} : vector<8x32xf32> to vector<8x8xf32>
    %73 = arith.truncf %72 : vector<8x8xf32> to vector<8x8xbf16>
    %cst_24 = arith.constant dense<0.000000e+00> : vector<64x8xf32>
    %74 = tpu.matmul %69, %71, %cst_24 {dimension_numbers = #tpu.dot_dimension_numbers<[1], [1], [0], [0], [0, 0, 1, 0], [], []>} : vector<64x8xbf16>, vector<8x8xbf16>, vector<64x8xf32> -> vector<64x8xf32>
    %cst_25 = arith.constant dense<0xFF800000> : vector<64xf32>
    %75 = vector.multi_reduction <maximumf>, %74, %cst_25 [1] : vector<64x8xf32> to vector<64xf32>
    %76 = vector.shape_cast %75 : vector<64xf32> to vector<64x1xf32>
    %77 = vector.broadcast %76 : vector<64x1xf32> to vector<64x8xf32>
    %78 = arith.subf %74, %77 : vector<64x8xf32>
    %79 = math.exp %78 : vector<64x8xf32>
    %cst_26 = arith.constant dense<0.000000e+00> : vector<64xf32>
    %80 = vector.multi_reduction <add>, %79, %cst_26 [1] : vector<64x8xf32> to vector<64xf32>
    %81 = vector.shape_cast %80 : vector<64xf32> to vector<64x1xf32>
    %82 = vector.broadcast %81 : vector<64x1xf32> to vector<64x8xf32>
    %83 = arith.divf %79, %82 : vector<64x8xf32>
    %84 = arith.truncf %83 : vector<64x8xf32> to vector<64x8xbf16>
    %cst_27 = arith.constant dense<0.000000e+00> : vector<64x8xf32>
    %85 = tpu.matmul %84, %73, %cst_27 {dimension_numbers = #tpu.dot_dimension_numbers<[1], [0], [0], [1], [0, 0, 1, 1], [], []>} : vector<64x8xbf16>, vector<8x8xbf16>, vector<64x8xf32> -> vector<64x8xf32>
    %86 = tpu.concatenate %31, %49, %67, %85 in 1 : vector<64x8xf32>, vector<64x8xf32>, vector<64x8xf32>, vector<64x8xf32> -> vector<64x32xf32>
    %87 = arith.truncf %86 : vector<64x32xf32> to vector<64x32xbf16>
    %c0_28 = arith.constant 0 : index
    %c0_29 = arith.constant 0 : index
    %88 = vector.load %arg7[%c0_28, %c0_29] : memref<32x32xbf16, #tpu.memory_space<vmem>>, vector<32x32xbf16>
    %cst_30 = arith.constant dense<0.000000e+00> : vector<64x32xf32>
    %89 = tpu.matmul %87, %88, %cst_30 {dimension_numbers = #tpu.dot_dimension_numbers<[1], [0], [0], [1], [0, 0, 1, 1], [], []>} : vector<64x32xbf16>, vector<32x32xbf16>, vector<64x32xf32> -> vector<64x32xf32>
    %c0_31 = arith.constant 0 : index
    %c0_32 = arith.constant 0 : index
    %90 = vector.load %arg8[%c0_31, %c0_32] : memref<1x32xf32, #tpu.memory_space<vmem>>, vector<1x32xf32>
    %91 = vector.broadcast %90 : vector<1x32xf32> to vector<64x32xf32>
    %92 = arith.addf %89, %91 : vector<64x32xf32>
    %93 = arith.extf %0 : vector<64x32xbf16> to vector<64x32xf32>
    %94 = arith.addf %92, %93 : vector<64x32xf32>
    %c0_33 = arith.constant 0 : index
    %c0_34 = arith.constant 0 : index
    %95 = vector.load %arg9[%c0_33, %c0_34] : memref<1x32xf32, #tpu.memory_space<vmem>>, vector<1x32xf32>
    %c0_35 = arith.constant 0 : index
    %c0_36 = arith.constant 0 : index
    %96 = vector.load %arg10[%c0_35, %c0_36] : memref<1x32xf32, #tpu.memory_space<vmem>>, vector<1x32xf32>
    %cst_37 = arith.constant dense<0.000000e+00> : vector<64xf32>
    %97 = vector.multi_reduction <add>, %94, %cst_37 [1] : vector<64x32xf32> to vector<64xf32>
    %98 = vector.shape_cast %97 : vector<64xf32> to vector<64x1xf32>
    %cst_38 = arith.constant 3.200000e+01 : f32
    %99 = vector.broadcast %cst_38 : f32 to vector<64x1xf32>
    %100 = arith.divf %98, %99 : vector<64x1xf32>
    %101 = vector.broadcast %100 : vector<64x1xf32> to vector<64x32xf32>
    %102 = arith.subf %94, %101 : vector<64x32xf32>
    %103 = arith.mulf %102, %102 : vector<64x32xf32>
    %cst_39 = arith.constant dense<0.000000e+00> : vector<64xf32>
    %104 = vector.multi_reduction <add>, %103, %cst_39 [1] : vector<64x32xf32> to vector<64xf32>
    %105 = vector.shape_cast %104 : vector<64xf32> to vector<64x1xf32>
    %cst_40 = arith.constant 3.200000e+01 : f32
    %106 = vector.broadcast %cst_40 : f32 to vector<64x1xf32>
    %107 = arith.divf %105, %106 : vector<64x1xf32>
    %cst_41 = arith.constant 9.99999974E-6 : f32
    %108 = vector.broadcast %cst_41 : f32 to vector<64x1xf32>
    %109 = arith.addf %107, %108 : vector<64x1xf32>
    %110 = math.rsqrt %109 : vector<64x1xf32>
    %111 = vector.broadcast %110 : vector<64x1xf32> to vector<64x32xf32>
    %112 = arith.mulf %102, %111 : vector<64x32xf32>
    %113 = vector.broadcast %95 : vector<1x32xf32> to vector<64x32xf32>
    %114 = arith.mulf %112, %113 : vector<64x32xf32>
    %115 = vector.broadcast %96 : vector<1x32xf32> to vector<64x32xf32>
    %116 = arith.addf %114, %115 : vector<64x32xf32>
    %117 = arith.truncf %116 : vector<64x32xf32> to vector<64x32xbf16>
    %c0_42 = arith.constant 0 : index
    %c0_43 = arith.constant 0 : index
    %118 = vector.load %arg11[%c0_42, %c0_43] : memref<64x32xbf16, #tpu.memory_space<vmem>>, vector<64x32xbf16>
    tpu.vector_store %arg11[%c0_42, %c0_43], %117 {strides = array<i32>} : memref<64x32xbf16, #tpu.memory_space<vmem>>, vector<64x32xbf16>,
    return
  }
  func.func @transform_0(%arg0: i32) -> (i32, i32) {
    %c0_i32 = arith.constant 0 : i32
    %c0_i32_0 = arith.constant 0 : i32
    return %arg0, %c0_i32 : i32, i32
  }
  func.func @transform_1(%arg0: i32) -> (i32, i32) {
    %c0_i32 = arith.constant 0 : i32
    %c0_i32_0 = arith.constant 0 : i32
    return %arg0, %c0_i32 : i32, i32
  }
  func.func @transform_2(%arg0: i32) -> (i32, i32) {
    %c0_i32 = arith.constant 0 : i32
    %c0_i32_0 = arith.constant 0 : i32
    %c0_i32_1 = arith.constant 0 : i32
    return %c0_i32, %c0_i32_0 : i32, i32
  }
  func.func @transform_3(%arg0: i32) -> (i32, i32) {
    %c0_i32 = arith.constant 0 : i32
    %c0_i32_0 = arith.constant 0 : i32
    %c0_i32_1 = arith.constant 0 : i32
    return %c0_i32, %c0_i32_0 : i32, i32
  }
  func.func @transform_4(%arg0: i32) -> (i32, i32) {
    %c0_i32 = arith.constant 0 : i32
    %c0_i32_0 = arith.constant 0 : i32
    %c0_i32_1 = arith.constant 0 : i32
    return %c0_i32, %c0_i32_0 : i32, i32
  }
  func.func @transform_5(%arg0: i32) -> (i32, i32) {
    %c0_i32 = arith.constant 0 : i32
    %c0_i32_0 = arith.constant 0 : i32
    %c0_i32_1 = arith.constant 0 : i32
    return %c0_i32, %c0_i32_0 : i32, i32
  }
  func.func @transform_6(%arg0: i32) -> (i32, i32) {
    %c0_i32 = arith.constant 0 : i32
    %c0_i32_0 = arith.constant 0 : i32
    %c0_i32_1 = arith.constant 0 : i32
    return %c0_i32, %c0_i32_0 : i32, i32
  }
  func.func @transform_7(%arg0: i32) -> (i32, i32) {
    %c0_i32 = arith.constant 0 : i32
    %c0_i32_0 = arith.constant 0 : i32
    %c0_i32_1 = arith.constant 0 : i32
    return %c0_i32, %c0_i32_0 : i32, i32
  }
  func.func @transform_8(%arg0: i32) -> (i32, i32) {
    %c0_i32 = arith.constant 0 : i32
    %c0_i32_0 = arith.constant 0 : i32
    %c0_i32_1 = arith.constant 0 : i32
    return %c0_i32, %c0_i32_0 : i32, i32
  }
  func.func @transform_9(%arg0: i32) -> (i32, i32) {
    %c0_i32 = arith.constant 0 : i32
    %c0_i32_0 = arith.constant 0 : i32
    %c0_i32_1 = arith.constant 0 : i32
    return %c0_i32, %c0_i32_0 : i32, i32
  }
  func.func @transform_10(%arg0: i32) -> (i32, i32) {
    %c0_i32 = arith.constant 0 : i32
    %c0_i32_0 = arith.constant 0 : i32
    return %arg0, %c0_i32 : i32, i32
  }
}

module attributes {stable_mosaic.version = 11 : i64} {
  func.func @_ffn_ln_kernel(%arg0: i32, %arg1: memref<64x32xbf16, #tpu.memory_space<vmem>>, %arg2: memref<32x128xbf16, #tpu.memory_space<vmem>>, %arg3: memref<1x128xf32, #tpu.memory_space<vmem>>, %arg4: memref<128x32xbf16, #tpu.memory_space<vmem>>, %arg5: memref<1x32xf32, #tpu.memory_space<vmem>>, %arg6: memref<1x32xf32, #tpu.memory_space<vmem>>, %arg7: memref<1x32xf32, #tpu.memory_space<vmem>>, %arg8: memref<64x32xbf16, #tpu.memory_space<vmem>>) attributes {dimension_semantics = [#tpu.dimension_semantics<parallel>], iteration_bounds = array<i64: 2>, scalar_prefetch = 0 : i64, scratch_operands = 0 : i64, tpu.core_type = #tpu.core_type<tc>, window_params = [{transform_indices = @transform_0, window_bounds = array<i64: 64, 32>}, {pipeline_mode = #tpu.pipeline_mode<synchronous>, transform_indices = @transform_1, window_bounds = array<i64: 32, 128>}, {pipeline_mode = #tpu.pipeline_mode<synchronous>, transform_indices = @transform_2, window_bounds = array<i64: 1, 128>}, {pipeline_mode = #tpu.pipeline_mode<synchronous>, transform_indices = @transform_3, window_bounds = array<i64: 128, 32>}, {pipeline_mode = #tpu.pipeline_mode<synchronous>, transform_indices = @transform_4, window_bounds = array<i64: 1, 32>}, {pipeline_mode = #tpu.pipeline_mode<synchronous>, transform_indices = @transform_5, window_bounds = array<i64: 1, 32>}, {pipeline_mode = #tpu.pipeline_mode<synchronous>, transform_indices = @transform_6, window_bounds = array<i64: 1, 32>}, {transform_indices = @transform_7, window_bounds = array<i64: 64, 32>}]} {
    %c0 = arith.constant 0 : index
    %c0_0 = arith.constant 0 : index
    %0 = vector.load %arg1[%c0, %c0_0] : memref<64x32xbf16, #tpu.memory_space<vmem>>, vector<64x32xbf16>
    %c0_1 = arith.constant 0 : index
    %c0_2 = arith.constant 0 : index
    %1 = vector.load %arg2[%c0_1, %c0_2] : memref<32x128xbf16, #tpu.memory_space<vmem>>, vector<32x128xbf16>
    %cst = arith.constant dense<0.000000e+00> : vector<64x128xf32>
    %2 = tpu.matmul %0, %1, %cst {dimension_numbers = #tpu.dot_dimension_numbers<[1], [0], [0], [1], [0, 0, 1, 1], [], []>} : vector<64x32xbf16>, vector<32x128xbf16>, vector<64x128xf32> -> vector<64x128xf32>
    %c0_3 = arith.constant 0 : index
    %c0_4 = arith.constant 0 : index
    %3 = vector.load %arg3[%c0_3, %c0_4] : memref<1x128xf32, #tpu.memory_space<vmem>>, vector<1x128xf32>
    %4 = vector.broadcast %3 : vector<1x128xf32> to vector<64x128xf32>
    %5 = arith.addf %2, %4 : vector<64x128xf32>
    %cst_5 = arith.constant 0.000000e+00 : f32
    %6 = vector.broadcast %cst_5 : f32 to vector<64x128xf32>
    %7 = arith.maximumf %5, %6 : vector<64x128xf32>
    %8 = arith.truncf %7 : vector<64x128xf32> to vector<64x128xbf16>
    %c0_6 = arith.constant 0 : index
    %c0_7 = arith.constant 0 : index
    %9 = vector.load %arg4[%c0_6, %c0_7] : memref<128x32xbf16, #tpu.memory_space<vmem>>, vector<128x32xbf16>
    %cst_8 = arith.constant dense<0.000000e+00> : vector<64x32xf32>
    %10 = tpu.matmul %8, %9, %cst_8 {dimension_numbers = #tpu.dot_dimension_numbers<[1], [0], [0], [1], [0, 0, 1, 1], [], []>} : vector<64x128xbf16>, vector<128x32xbf16>, vector<64x32xf32> -> vector<64x32xf32>
    %c0_9 = arith.constant 0 : index
    %c0_10 = arith.constant 0 : index
    %11 = vector.load %arg5[%c0_9, %c0_10] : memref<1x32xf32, #tpu.memory_space<vmem>>, vector<1x32xf32>
    %12 = vector.broadcast %11 : vector<1x32xf32> to vector<64x32xf32>
    %13 = arith.addf %10, %12 : vector<64x32xf32>
    %14 = arith.extf %0 : vector<64x32xbf16> to vector<64x32xf32>
    %15 = arith.addf %14, %13 : vector<64x32xf32>
    %c0_11 = arith.constant 0 : index
    %c0_12 = arith.constant 0 : index
    %16 = vector.load %arg6[%c0_11, %c0_12] : memref<1x32xf32, #tpu.memory_space<vmem>>, vector<1x32xf32>
    %c0_13 = arith.constant 0 : index
    %c0_14 = arith.constant 0 : index
    %17 = vector.load %arg7[%c0_13, %c0_14] : memref<1x32xf32, #tpu.memory_space<vmem>>, vector<1x32xf32>
    %cst_15 = arith.constant dense<0.000000e+00> : vector<64xf32>
    %18 = vector.multi_reduction <add>, %15, %cst_15 [1] : vector<64x32xf32> to vector<64xf32>
    %19 = vector.shape_cast %18 : vector<64xf32> to vector<64x1xf32>
    %cst_16 = arith.constant 3.200000e+01 : f32
    %20 = vector.broadcast %cst_16 : f32 to vector<64x1xf32>
    %21 = arith.divf %19, %20 : vector<64x1xf32>
    %22 = vector.broadcast %21 : vector<64x1xf32> to vector<64x32xf32>
    %23 = arith.subf %15, %22 : vector<64x32xf32>
    %24 = arith.mulf %23, %23 : vector<64x32xf32>
    %cst_17 = arith.constant dense<0.000000e+00> : vector<64xf32>
    %25 = vector.multi_reduction <add>, %24, %cst_17 [1] : vector<64x32xf32> to vector<64xf32>
    %26 = vector.shape_cast %25 : vector<64xf32> to vector<64x1xf32>
    %cst_18 = arith.constant 3.200000e+01 : f32
    %27 = vector.broadcast %cst_18 : f32 to vector<64x1xf32>
    %28 = arith.divf %26, %27 : vector<64x1xf32>
    %cst_19 = arith.constant 9.99999974E-6 : f32
    %29 = vector.broadcast %cst_19 : f32 to vector<64x1xf32>
    %30 = arith.addf %28, %29 : vector<64x1xf32>
    %31 = math.rsqrt %30 : vector<64x1xf32>
    %32 = vector.broadcast %31 : vector<64x1xf32> to vector<64x32xf32>
    %33 = arith.mulf %23, %32 : vector<64x32xf32>
    %34 = vector.broadcast %16 : vector<1x32xf32> to vector<64x32xf32>
    %35 = arith.mulf %33, %34 : vector<64x32xf32>
    %36 = vector.broadcast %17 : vector<1x32xf32> to vector<64x32xf32>
    %37 = arith.addf %35, %36 : vector<64x32xf32>
    %38 = arith.truncf %37 : vector<64x32xf32> to vector<64x32xbf16>
    %c0_20 = arith.constant 0 : index
    %c0_21 = arith.constant 0 : index
    %39 = vector.load %arg8[%c0_20, %c0_21] : memref<64x32xbf16, #tpu.memory_space<vmem>>, vector<64x32xbf16>
    tpu.vector_store %arg8[%c0_20, %c0_21], %38 {strides = array<i32>} : memref<64x32xbf16, #tpu.memory_space<vmem>>, vector<64x32xbf16>,
    return
  }
  func.func @transform_0(%arg0: i32) -> (i32, i32) {
    %c0_i32 = arith.constant 0 : i32
    %c0_i32_0 = arith.constant 0 : i32
    return %arg0, %c0_i32 : i32, i32
  }
  func.func @transform_1(%arg0: i32) -> (i32, i32) {
    %c0_i32 = arith.constant 0 : i32
    %c0_i32_0 = arith.constant 0 : i32
    %c0_i32_1 = arith.constant 0 : i32
    return %c0_i32, %c0_i32_0 : i32, i32
  }
  func.func @transform_2(%arg0: i32) -> (i32, i32) {
    %c0_i32 = arith.constant 0 : i32
    %c0_i32_0 = arith.constant 0 : i32
    %c0_i32_1 = arith.constant 0 : i32
    return %c0_i32, %c0_i32_0 : i32, i32
  }
  func.func @transform_3(%arg0: i32) -> (i32, i32) {
    %c0_i32 = arith.constant 0 : i32
    %c0_i32_0 = arith.constant 0 : i32
    %c0_i32_1 = arith.constant 0 : i32
    return %c0_i32, %c0_i32_0 : i32, i32
  }
  func.func @transform_4(%arg0: i32) -> (i32, i32) {
    %c0_i32 = arith.constant 0 : i32
    %c0_i32_0 = arith.constant 0 : i32
    %c0_i32_1 = arith.constant 0 : i32
    return %c0_i32, %c0_i32_0 : i32, i32
  }
  func.func @transform_5(%arg0: i32) -> (i32, i32) {
    %c0_i32 = arith.constant 0 : i32
    %c0_i32_0 = arith.constant 0 : i32
    %c0_i32_1 = arith.constant 0 : i32
    return %c0_i32, %c0_i32_0 : i32, i32
  }
  func.func @transform_6(%arg0: i32) -> (i32, i32) {
    %c0_i32 = arith.constant 0 : i32
    %c0_i32_0 = arith.constant 0 : i32
    %c0_i32_1 = arith.constant 0 : i32
    return %c0_i32, %c0_i32_0 : i32, i32
  }
  func.func @transform_7(%arg0: i32) -> (i32, i32) {
    %c0_i32 = arith.constant 0 : i32
    %c0_i32_0 = arith.constant 0 : i32
    return %arg0, %c0_i32 : i32, i32
  }
}

module attributes {stable_mosaic.version = 11 : i64} {
  func.func @_linear_kernel(%arg0: i32, %arg1: memref<64x32xbf16, #tpu.memory_space<vmem>>, %arg2: memref<32x128xbf16, #tpu.memory_space<vmem>>, %arg3: memref<1x128xf32, #tpu.memory_space<vmem>>, %arg4: memref<64x128xbf16, #tpu.memory_space<vmem>>, %arg5: memref<64x128xf32, #tpu.memory_space<vmem>>) attributes {dimension_semantics = [#tpu.dimension_semantics<parallel>], iteration_bounds = array<i64: 2>, scalar_prefetch = 0 : i64, scratch_operands = 0 : i64, tpu.core_type = #tpu.core_type<tc>, window_params = [{transform_indices = @transform_0, window_bounds = array<i64: 64, 32>}, {pipeline_mode = #tpu.pipeline_mode<synchronous>, transform_indices = @transform_1, window_bounds = array<i64: 32, 128>}, {pipeline_mode = #tpu.pipeline_mode<synchronous>, transform_indices = @transform_2, window_bounds = array<i64: 1, 128>}, {transform_indices = @transform_3, window_bounds = array<i64: 64, 128>}, {transform_indices = @transform_4, window_bounds = array<i64: 64, 128>}]} {
    %c0 = arith.constant 0 : index
    %c0_0 = arith.constant 0 : index
    %0 = vector.load %arg1[%c0, %c0_0] : memref<64x32xbf16, #tpu.memory_space<vmem>>, vector<64x32xbf16>
    %c0_1 = arith.constant 0 : index
    %c0_2 = arith.constant 0 : index
    %1 = vector.load %arg2[%c0_1, %c0_2] : memref<32x128xbf16, #tpu.memory_space<vmem>>, vector<32x128xbf16>
    %cst = arith.constant dense<0.000000e+00> : vector<64x128xf32>
    %2 = tpu.matmul %0, %1, %cst {dimension_numbers = #tpu.dot_dimension_numbers<[1], [0], [0], [1], [0, 0, 1, 1], [], []>} : vector<64x32xbf16>, vector<32x128xbf16>, vector<64x128xf32> -> vector<64x128xf32>
    %c0_3 = arith.constant 0 : index
    %c0_4 = arith.constant 0 : index
    %3 = vector.load %arg3[%c0_3, %c0_4] : memref<1x128xf32, #tpu.memory_space<vmem>>, vector<1x128xf32>
    %4 = vector.broadcast %3 : vector<1x128xf32> to vector<64x128xf32>
    %5 = arith.addf %2, %4 : vector<64x128xf32>
    %c0_5 = arith.constant 0 : index
    %c0_6 = arith.constant 0 : index
    %6 = vector.load %arg4[%c0_5, %c0_6] : memref<64x128xbf16, #tpu.memory_space<vmem>>, vector<64x128xbf16>
    %7 = arith.extf %6 : vector<64x128xbf16> to vector<64x128xf32>
    %8 = arith.addf %5, %7 : vector<64x128xf32>
    %c0_7 = arith.constant 0 : index
    %c0_8 = arith.constant 0 : index
    %9 = vector.load %arg5[%c0_7, %c0_8] : memref<64x128xf32, #tpu.memory_space<vmem>>, vector<64x128xf32>
    tpu.vector_store %arg5[%c0_7, %c0_8], %8 {strides = array<i32>} : memref<64x128xf32, #tpu.memory_space<vmem>>, vector<64x128xf32>,
    return
  }
  func.func @transform_0(%arg0: i32) -> (i32, i32) {
    %c0_i32 = arith.constant 0 : i32
    %c0_i32_0 = arith.constant 0 : i32
    return %arg0, %c0_i32 : i32, i32
  }
  func.func @transform_1(%arg0: i32) -> (i32, i32) {
    %c0_i32 = arith.constant 0 : i32
    %c0_i32_0 = arith.constant 0 : i32
    %c0_i32_1 = arith.constant 0 : i32
    return %c0_i32, %c0_i32_0 : i32, i32
  }
  func.func @transform_2(%arg0: i32) -> (i32, i32) {
    %c0_i32 = arith.constant 0 : i32
    %c0_i32_0 = arith.constant 0 : i32
    %c0_i32_1 = arith.constant 0 : i32
    return %c0_i32, %c0_i32_0 : i32, i32
  }
  func.func @transform_3(%arg0: i32) -> (i32, i32) {
    %c0_i32 = arith.constant 0 : i32
    %c0_i32_0 = arith.constant 0 : i32
    return %arg0, %c0_i32 : i32, i32
  }
  func.func @transform_4(%arg0: i32) -> (i32, i32) {
    %c0_i32 = arith.constant 0 : i32
    %c0_i32_0 = arith.constant 0 : i32
    return %arg0, %c0_i32 : i32, i32
  }
}

module attributes {stable_mosaic.version = 11 : i64} {
  func.func @_linear_kernel(%arg0: i32, %arg1: memref<8x32xbf16, #tpu.memory_space<vmem>>, %arg2: memref<32x48xbf16, #tpu.memory_space<vmem>>, %arg3: memref<1x48xf32, #tpu.memory_space<vmem>>, %arg4: memref<8x48xf32, #tpu.memory_space<vmem>>, %arg5: memref<8x48xf32, #tpu.memory_space<vmem>>) attributes {dimension_semantics = [#tpu.dimension_semantics<parallel>], iteration_bounds = array<i64: 2>, scalar_prefetch = 0 : i64, scratch_operands = 0 : i64, tpu.core_type = #tpu.core_type<tc>, window_params = [{transform_indices = @transform_0, window_bounds = array<i64: 8, 32>}, {pipeline_mode = #tpu.pipeline_mode<synchronous>, transform_indices = @transform_1, window_bounds = array<i64: 32, 48>}, {pipeline_mode = #tpu.pipeline_mode<synchronous>, transform_indices = @transform_2, window_bounds = array<i64: 1, 48>}, {transform_indices = @transform_3, window_bounds = array<i64: 8, 48>}, {transform_indices = @transform_4, window_bounds = array<i64: 8, 48>}]} {
    %c0 = arith.constant 0 : index
    %c0_0 = arith.constant 0 : index
    %0 = vector.load %arg1[%c0, %c0_0] : memref<8x32xbf16, #tpu.memory_space<vmem>>, vector<8x32xbf16>
    %c0_1 = arith.constant 0 : index
    %c0_2 = arith.constant 0 : index
    %1 = vector.load %arg2[%c0_1, %c0_2] : memref<32x48xbf16, #tpu.memory_space<vmem>>, vector<32x48xbf16>
    %cst = arith.constant dense<0.000000e+00> : vector<8x48xf32>
    %2 = tpu.matmul %0, %1, %cst {dimension_numbers = #tpu.dot_dimension_numbers<[1], [0], [0], [1], [0, 0, 1, 1], [], []>} : vector<8x32xbf16>, vector<32x48xbf16>, vector<8x48xf32> -> vector<8x48xf32>
    %c0_3 = arith.constant 0 : index
    %c0_4 = arith.constant 0 : index
    %3 = vector.load %arg3[%c0_3, %c0_4] : memref<1x48xf32, #tpu.memory_space<vmem>>, vector<1x48xf32>
    %4 = vector.broadcast %3 : vector<1x48xf32> to vector<8x48xf32>
    %5 = arith.addf %2, %4 : vector<8x48xf32>
    %c0_5 = arith.constant 0 : index
    %c0_6 = arith.constant 0 : index
    %6 = vector.load %arg4[%c0_5, %c0_6] : memref<8x48xf32, #tpu.memory_space<vmem>>, vector<8x48xf32>
    %7 = arith.addf %5, %6 : vector<8x48xf32>
    %c0_7 = arith.constant 0 : index
    %c0_8 = arith.constant 0 : index
    %8 = vector.load %arg5[%c0_7, %c0_8] : memref<8x48xf32, #tpu.memory_space<vmem>>, vector<8x48xf32>
    tpu.vector_store %arg5[%c0_7, %c0_8], %7 {strides = array<i32>} : memref<8x48xf32, #tpu.memory_space<vmem>>, vector<8x48xf32>,
    return
  }
  func.func @transform_0(%arg0: i32) -> (i32, i32) {
    %c0_i32 = arith.constant 0 : i32
    %c0_i32_0 = arith.constant 0 : i32
    return %arg0, %c0_i32 : i32, i32
  }
  func.func @transform_1(%arg0: i32) -> (i32, i32) {
    %c0_i32 = arith.constant 0 : i32
    %c0_i32_0 = arith.constant 0 : i32
    %c0_i32_1 = arith.constant 0 : i32
    return %c0_i32, %c0_i32_0 : i32, i32
  }
  func.func @transform_2(%arg0: i32) -> (i32, i32) {
    %c0_i32 = arith.constant 0 : i32
    %c0_i32_0 = arith.constant 0 : i32
    %c0_i32_1 = arith.constant 0 : i32
    return %c0_i32, %c0_i32_0 : i32, i32
  }
  func.func @transform_3(%arg0: i32) -> (i32, i32) {
    %c0_i32 = arith.constant 0 : i32
    %c0_i32_0 = arith.constant 0 : i32
    return %arg0, %c0_i32 : i32, i32
  }
  func.func @transform_4(%arg0: i32) -> (i32, i32) {
    %c0_i32 = arith.constant 0 : i32
    %c0_i32_0 = arith.constant 0 : i32
    return %arg0, %c0_i32 : i32, i32
  }
}

</mosaic_0001>

<llo_original>
// kernel: tpu_custom_call.1
$region0: #{tpu_custom_call.1}
  #allocation0 [shape = 'u32[]', space=smem, size = 0x4, offset = 0x4, fixed_abs, tag = 'smem constant byte address 0x4 - core index']
  #allocation1 [shape = 'u32[144,128]{1,0:T(1,128)}', space=vmem, size = 0x12000, scoped, tag = 'internal scratch']
  %s0 = inlined_call_operand.hbm [shape: f32[8,128], index: 0, kind: input, shape index: {}]
  %s1 = inlined_call_operand.hbm [shape: f32[16,128], index: 1, kind: output, shape index: {}]
  %s2 = sld [smem:[#allocation0]]
  $region41: #{tpu_custom_call.1} parent=0
    _
  %s4 = ssub.s32 1, %s2
  %s5 = scalar_select 0, %s4, %s2
  $region1: #{tpu_custom_call.1} parent=0
    #allocation2 [shape = 'u8[4096]{0}', space=vmem, size = 0x1000, scoped, tag = 'input window, operand 0, single buffered']
    #allocation3 [shape = 's32[2]{0}', space=sflag, size = 0x8, scoped, tag = 'scoped memory for tpu_custom_call.1']
    #allocation4 [shape = 's32[2]{0}', space=sflag, size = 0x8, scoped, tag = 'scoped memory for tpu_custom_call.1']
    #allocation5 [shape = 'u8[8192]{0}', space=vmem, size = 0x2000, scoped, tag = 'output window, operand 0']
    %6 = vsyncpa [#allocation3], 0
    %7 = vsyncpa [#allocation4], 0
    %s8 = scalar_lea.sflag [#allocation4], 1
    %9 = vsyncpa %s8, 0
    loop: start=0, step=1, limit=4
    $region2: #{tpu_custom_call.1} parent=1 // loop_pre_header
      _
    $region3: #{tpu_custom_call.1} parent=1 // loop_header
      %s11 = sphi 0, %s15
      %p12 = scmp.ge.s32.totalorder %s11, 4
      %s19 = sphi 0, %s19
      %s21 = sphi 0, %s19
      %s22 = sphi 0, %s21
      %s36 = sphi 0, %s22
      %s42 = sphi 0, %s44
      %s45 = sphi 0, %s42
      %s46 = sphi 0, %s45
      %s62 = sphi 0, %s46
    $region4: #{tpu_custom_call.1} parent=1 // loop_header_branch
      %14 = sbr.rel (%p12) target = $region8
    $region5: #{tpu_custom_call.1} parent=1 // loop_body
      %s16 = ssub.s32 %s11, 1
      %s17 = ssub.s32 %s11, 2
      %s18 = sadd.s32 %s11, 1
      %s20 = sadd.s32 %s19, 1
      %p23 = scmp.eq.s32.totalorder %s11, 1
      %p24 = scmp.ne.s32.totalorder %s19, %s21
      %p25 = scmp.eq.s32.totalorder %s11, 0
      %p26 = por %p24, %p25
      %p27 = scmp.ne.s32.totalorder %s19, %s21
      %p28 = scmp.eq.s32.totalorder %s16, 1
      %p29 = por %p27, %p28
      %p30 = scmp.ne.s32.totalorder %s21, %s22
      %p31 = scmp.eq.s32.totalorder %s16, 0
      %p32 = por %p30, %p31
      %p33 = scmp.ne.s32.totalorder %s21, %s22
      %p34 = scmp.eq.s32.totalorder %s17, 1
      %p35 = por %p33, %p34
      %p37 = scmp.ne.s32.totalorder %s22, %s36
      %p38 = scmp.eq.s32.totalorder %s17, 0
      %p39 = por %p37, %p38
      %s40 = ssub.s32 %s11, %s18
      %p41 = scmp.eq.s32.totalorder %s40, 0
      %s43 = sadd.s32 %s42, 1
      %s44 = scalar_select %p41, %s42, %s43
      %p47 = pneg %p41
      %p48 = scmp.eq.s32.totalorder %s11, 1
      %p49 = por %p47, %p48
      %p50 = scmp.ne.s32.totalorder %s42, %s45
      %p51 = scmp.eq.s32.totalorder %s11, 0
      %p52 = por %p50, %p51
      %p53 = scmp.ne.s32.totalorder %s42, %s45
      %p54 = scmp.eq.s32.totalorder %s16, 1
      %p55 = por %p53, %p54
      %p56 = scmp.ne.s32.totalorder %s45, %s46
      %p57 = scmp.eq.s32.totalorder %s16, 0
      %p58 = por %p56, %p57
      %p59 = scmp.ne.s32.totalorder %s45, %s46
      %p60 = scmp.eq.s32.totalorder %s17, 1
      %p61 = por %p59, %p60
      %p63 = scmp.ne.s32.totalorder %s46, %s62
      %p64 = scmp.eq.s32.totalorder %s17, 0
      %p65 = por %p63, %p64
      %p66 = scmp.le.s32.totalorder 1, %s11
      %p67 = scmp.lt.s32.totalorder %s11, 3
      %p68 = pnand %p66, %p67
      %p69 = pneg %p68
      // Predicated region
      $region9: #{tpu_custom_call.1} parent=5 // pred_check
        _
      $region10: #{tpu_custom_call.1} parent=5 // pred_check_branch
        %71 = sbr.rel (%p68) target = $region12
      $region11: #{tpu_custom_call.1} parent=5 // pred_region
        %s72 = ssub.s32 %s11, 1
        // Predicated region
        $region13: #{tpu_custom_call.1} parent=11 // pred_check
          %p73 = pneg %p32
        $region14: #{tpu_custom_call.1} parent=11 // pred_check_branch
          %75 = sbr.rel (%p73) target = $region16
        $region15: #{tpu_custom_call.1} parent=11 // pred_region
          %s77 = ssub.s32 128, 128
          %78 = vsyncadd [#allocation3], %s77
          %s80 = sshll.u32 [#allocation2], 4
          %s81 = int_to_ptr.vmem [resolvable:$true] %s80
          %83 = dma.hbm_to_vmem [thread:$0]  %s0, 128, %s81, [#allocation3]
        $region16: #{tpu_custom_call.1} parent=11 // pred_fallthru
          _
      $region12: #{tpu_custom_call.1} parent=5 // pred_fallthru
        _
      %p84 = scmp.lt.s32.totalorder %s11, 2
      // Predicated region
      $region17: #{tpu_custom_call.1} parent=5 // pred_check
        %p85 = pneg %p84
      $region18: #{tpu_custom_call.1} parent=5 // pred_check_branch
        %87 = sbr.rel (%p85) target = $region20
      $region19: #{tpu_custom_call.1} parent=5 // pred_region
        _
      $region20: #{tpu_custom_call.1} parent=5 // pred_fallthru
        _
      %p88 = scmp.le.s32.totalorder 1, %s11
      %p89 = scmp.lt.s32.totalorder %s11, 3
      %p90 = pnand %p88, %p89
      %p91 = pneg %p90
      // Predicated region
      $region21: #{tpu_custom_call.1} parent=5 // pred_check
        _
      $region22: #{tpu_custom_call.1} parent=5 // pred_check_branch
        %93 = sbr.rel (%p90) target = $region24
      $region23: #{tpu_custom_call.1} parent=5 // pred_region
        %s94 = ssub.s32 %s11, 1
        // Predicated region
        $region25: #{tpu_custom_call.1} parent=23 // pred_check
          %p95 = pneg %p32
        $region26: #{tpu_custom_call.1} parent=23 // pred_check_branch
          %97 = sbr.rel (%p95) target = $region28
        $region27: #{tpu_custom_call.1} parent=23 // pred_region
          %98 = dma.done [#allocation3], 128
        $region28: #{tpu_custom_call.1} parent=23 // pred_fallthru
          _
        %p99 = pneg %p32
        %p100 = pneg %p29
        %p101 = pneg %p58
        %p102 = pneg %p55
        %s103 = sand.u32 %s45, 1
        %s104 = scalar_lea.sflag [#allocation4], %s103
        %s105 = sand.u32 %s45, 1
        %s106 = smul.addr %s105, 8
        %s107 = scalar_lea.vmem [#allocation5], %s106
        %v108 = vld [vmem:[#allocation2] sm:$0xff]
        %v109 = vadd.f32 %v108, 1.0
        %110 = vst [vmem:[%s107] sm:$0xff] %v109
        %s111 = sand.u32 %s45, 1
        %s112 = scalar_lea.sflag [#allocation4], %s111
        %s113 = sand.u32 %s45, 1
        %s114 = smul.addr %s113, 8
        %s115 = scalar_lea.vmem [#allocation5], %s114
        // Predicated region
        $region29: #{tpu_custom_call.1} parent=23 // pred_check
          %p116 = pneg %p55
        $region30: #{tpu_custom_call.1} parent=23 // pred_check_branch
          %118 = sbr.rel (%p116) target = $region32
        $region31: #{tpu_custom_call.1} parent=23 // pred_region
          %s120 = ssub.s32 128, 128
          %121 = vsyncadd %s112, %s120
          %s122 = smul.addr %s16, 128
          %s123 = scalar_lea.hbm %s1, %s122
          %s125 = sshll.u32 %s115, 4
          %s126 = int_to_ptr.vmem [resolvable:$true] %s125
          %128 = dma.vmem_to_hbm [thread:$0]  %s126, 128, %s123, %s112
        $region32: #{tpu_custom_call.1} parent=23 // pred_fallthru
          _
      $region24: #{tpu_custom_call.1} parent=5 // pred_fallthru
        _
      %p129 = scmp.le.s32.totalorder 2, %s11
      // Predicated region
      $region33: #{tpu_custom_call.1} parent=5 // pred_check
        %p130 = pneg %p129
      $region34: #{tpu_custom_call.1} parent=5 // pred_check_branch
        %132 = sbr.rel (%p130) target = $region36
      $region35: #{tpu_custom_call.1} parent=5 // pred_region
        %s133 = ssub.s32 %s11, 2
        // Predicated region
        $region37: #{tpu_custom_call.1} parent=35 // pred_check
          %p134 = pneg %p61
        $region38: #{tpu_custom_call.1} parent=35 // pred_check_branch
          %136 = sbr.rel (%p134) target = $region40
        $region39: #{tpu_custom_call.1} parent=35 // pred_region
          %s137 = sand.u32 %s46, 1
          %s138 = scalar_lea.sflag [#allocation4], %s137
          %s139 = sand.u32 %s46, 1
          %s140 = smul.addr %s139, 8
          %s141 = scalar_lea.vmem [#allocation5], %s140
          %142 = dma.done %s138, 128
        $region40: #{tpu_custom_call.1} parent=35 // pred_fallthru
          _
      $region36: #{tpu_custom_call.1} parent=5 // pred_fallthru
        _
    $region6: #{tpu_custom_call.1} parent=1 // loop_footer
      %s15 = sadd.s32 1, %s11
    $region7: #{tpu_custom_call.1} parent=1 // loop_footer_branch
      %10 = sbr.rel target = $region3
    $region8: #{tpu_custom_call.1} parent=1 // loop_exit
      _
    %143 = vsyncpa [#allocation3], 1
    %s144 = scalar_lea.sflag [#allocation3], 1
    %145 = vsyncpa %s144, 1
    %146 = vsyncpa [#allocation4], 1
    %s147 = scalar_lea.sflag [#allocation4], 1
    %148 = vsyncpa %s147, 1

// kernel: bridger_forward.15
$region0: #{bridger_forward.15}
  #allocation0 [shape = 'u32[]', space=smem, size = 0x4, offset = 0x4, fixed_abs, tag = 'smem constant byte address 0x4 - core index']
  #allocation1 [shape = 'u32[144,128]{1,0:T(1,128)}', space=vmem, size = 0x12000, scoped, tag = 'internal scratch']
  %s0 = inlined_call_operand.vmem [shape: bf16[16,32], index: 0, kind: input, shape index: {}]
  %s1 = inlined_call_operand.vmem [shape: bf16[32,96], index: 1, kind: input, shape index: {}]
  %s2 = inlined_call_operand.vmem [shape: f32[1,96], index: 2, kind: input, shape index: {}]
  %s3 = inlined_call_operand.vmem [shape: bf16[32,32], index: 3, kind: input, shape index: {}]
  %s4 = inlined_call_operand.vmem [shape: f32[1,32], index: 4, kind: input, shape index: {}]
  %s5 = inlined_call_operand.vmem [shape: f32[1,32], index: 5, kind: input, shape index: {}]
  %s6 = inlined_call_operand.vmem [shape: f32[1,32], index: 6, kind: input, shape index: {}]
  %s7 = inlined_call_operand.vmem [shape: bf16[16,32], index: 7, kind: output, shape index: {}]
  %s8 = sld [smem:[#allocation0]]
  $region61: #{bridger_forward.15} parent=0
    _
  %s10 = ssub.s32 1, %s8
  %s11 = scalar_select 0, %s10, %s8
  loop: start=0, step=1, limit=4
  $region2: #{bridger_forward.15} parent=0 // loop_pre_header
    _
  $region3: #{bridger_forward.15} parent=0 // loop_header
    %s13 = sphi 0, %s17
    %p14 = scmp.ge.s32.totalorder %s13, 4
    %s23 = sphi 0, %s25
    %s26 = sphi 0, %s23
    %s27 = sphi 0, %s26
    %s43 = sphi 0, %s27
    %s47 = sphi 0, %s47
    %s49 = sphi 0, %s47
    %s50 = sphi 0, %s49
    %s64 = sphi 0, %s50
    %s68 = sphi 0, %s68
    %s70 = sphi 0, %s68
    %s71 = sphi 0, %s70
    %s85 = sphi 0, %s71
    %s89 = sphi 0, %s89
    %s91 = sphi 0, %s89
    %s92 = sphi 0, %s91
    %s106 = sphi 0, %s92
    %s110 = sphi 0, %s110
    %s112 = sphi 0, %s110
    %s113 = sphi 0, %s112
    %s127 = sphi 0, %s113
    %s131 = sphi 0, %s131
    %s133 = sphi 0, %s131
    %s134 = sphi 0, %s133
    %s148 = sphi 0, %s134
    %s152 = sphi 0, %s152
    %s154 = sphi 0, %s152
    %s155 = sphi 0, %s154
    %s169 = sphi 0, %s155
    %s175 = sphi 0, %s177
    %s178 = sphi 0, %s175
    %s179 = sphi 0, %s178
    %s195 = sphi 0, %s179
  $region4: #{bridger_forward.15} parent=0 // loop_header_branch
    %16 = sbr.rel (%p14) target = $region8
  $region5: #{bridger_forward.15} parent=0 // loop_body
    %s18 = ssub.s32 %s13, 1
    %s19 = ssub.s32 %s13, 2
    %s20 = sadd.s32 %s13, 1
    %s21 = ssub.s32 %s13, %s20
    %p22 = scmp.eq.s32.totalorder %s21, 0
    %s24 = sadd.s32 %s23, 1
    %s25 = scalar_select %p22, %s23, %s24
    %p28 = pneg %p22
    %p29 = scmp.eq.s32.totalorder %s13, 1
    %p30 = por %p28, %p29
    %p31 = scmp.ne.s32.totalorder %s23, %s26
    %p32 = scmp.eq.s32.totalorder %s13, 0
    %p33 = por %p31, %p32
    %p34 = scmp.ne.s32.totalorder %s23, %s26
    %p35 = scmp.eq.s32.totalorder %s18, 1
    %p36 = por %p34, %p35
    %p37 = scmp.ne.s32.totalorder %s26, %s27
    %p38 = scmp.eq.s32.totalorder %s18, 0
    %p39 = por %p37, %p38
    %p40 = scmp.ne.s32.totalorder %s26, %s27
    %p41 = scmp.eq.s32.totalorder %s19, 1
    %p42 = por %p40, %p41
    %p44 = scmp.ne.s32.totalorder %s27, %s43
    %p45 = scmp.eq.s32.totalorder %s19, 0
    %p46 = por %p44, %p45
    %s48 = sadd.s32 %s47, 1
    %p51 = scmp.eq.s32.totalorder %s13, 1
    %p52 = scmp.ne.s32.totalorder %s47, %s49
    %p53 = scmp.eq.s32.totalorder %s13, 0
    %p54 = por %p52, %p53
    %p55 = scmp.ne.s32.totalorder %s47, %s49
    %p56 = scmp.eq.s32.totalorder %s18, 1
    %p57 = por %p55, %p56
    %p58 = scmp.ne.s32.totalorder %s49, %s50
    %p59 = scmp.eq.s32.totalorder %s18, 0
    %p60 = por %p58, %p59
    %p61 = scmp.ne.s32.totalorder %s49, %s50
    %p62 = scmp.eq.s32.totalorder %s19, 1
    %p63 = por %p61, %p62
    %p65 = scmp.ne.s32.totalorder %s50, %s64
    %p66 = scmp.eq.s32.totalorder %s19, 0
    %p67 = por %p65, %p66
    %s69 = sadd.s32 %s68, 1
    %p72 = scmp.eq.s32.totalorder %s13, 1
    %p73 = scmp.ne.s32.totalorder %s68, %s70
    %p74 = scmp.eq.s32.totalorder %s13, 0
    %p75 = por %p73, %p74
    %p76 = scmp.ne.s32.totalorder %s68, %s70
    %p77 = scmp.eq.s32.totalorder %s18, 1
    %p78 = por %p76, %p77
    %p79 = scmp.ne.s32.totalorder %s70, %s71
    %p80 = scmp.eq.s32.totalorder %s18, 0
    %p81 = por %p79, %p80
    %p82 = scmp.ne.s32.totalorder %s70, %s71
    %p83 = scmp.eq.s32.totalorder %s19, 1
    %p84 = por %p82, %p83
    %p86 = scmp.ne.s32.totalorder %s71, %s85
    %p87 = scmp.eq.s32.totalorder %s19, 0
    %p88 = por %p86, %p87
    %s90 = sadd.s32 %s89, 1
    %p93 = scmp.eq.s32.totalorder %s13, 1
    %p94 = scmp.ne.s32.totalorder %s89, %s91
    %p95 = scmp.eq.s32.totalorder %s13, 0
    %p96 = por %p94, %p95
    %p97 = scmp.ne.s32.totalorder %s89, %s91
    %p98 = scmp.eq.s32.totalorder %s18, 1
    %p99 = por %p97, %p98
    %p100 = scmp.ne.s32.totalorder %s91, %s92
    %p101 = scmp.eq.s32.totalorder %s18, 0
    %p102 = por %p100, %p101
    %p103 = scmp.ne.s32.totalorder %s91, %s92
    %p104 = scmp.eq.s32.totalorder %s19, 1
    %p105 = por %p103, %p104
    %p107 = scmp.ne.s32.totalorder %s92, %s106
    %p108 = scmp.eq.s32.totalorder %s19, 0
    %p109 = por %p107, %p108
    %s111 = sadd.s32 %s110, 1
    %p114 = scmp.eq.s32.totalorder %s13, 1
    %p115 = scmp.ne.s32.totalorder %s110, %s112
    %p116 = scmp.eq.s32.totalorder %s13, 0
    %p117 = por %p115, %p116
    %p118 = scmp.ne.s32.totalorder %s110, %s112
    %p119 = scmp.eq.s32.totalorder %s18, 1
    %p120 = por %p118, %p119
    %p121 = scmp.ne.s32.totalorder %s112, %s113
    %p122 = scmp.eq.s32.totalorder %s18, 0
    %p123 = por %p121, %p122
    %p124 = scmp.ne.s32.totalorder %s112, %s113
    %p125 = scmp.eq.s32.totalorder %s19, 1
    %p126 = por %p124, %p125
    %p128 = scmp.ne.s32.totalorder %s113, %s127
    %p129 = scmp.eq.s32.totalorder %s19, 0
    %p130 = por %p128, %p129
    %s132 = sadd.s32 %s131, 1
    %p135 = scmp.eq.s32.totalorder %s13, 1
    %p136 = scmp.ne.s32.totalorder %s131, %s133
    %p137 = scmp.eq.s32.totalorder %s13, 0
    %p138 = por %p136, %p137
    %p139 = scmp.ne.s32.totalorder %s131, %s133
    %p140 = scmp.eq.s32.totalorder %s18, 1
    %p141 = por %p139, %p140
    %p142 = scmp.ne.s32.totalorder %s133, %s134
    %p143 = scmp.eq.s32.totalorder %s18, 0
    %p144 = por %p142, %p143
    %p145 = scmp.ne.s32.totalorder %s133, %s134
    %p146 = scmp.eq.s32.totalorder %s19, 1
    %p147 = por %p145, %p146
    %p149 = scmp.ne.s32.totalorder %s134, %s148
    %p150 = scmp.eq.s32.totalorder %s19, 0
    %p151 = por %p149, %p150
    %s153 = sadd.s32 %s152, 1
    %p156 = scmp.eq.s32.totalorder %s13, 1
    %p157 = scmp.ne.s32.totalorder %s152, %s154
    %p158 = scmp.eq.s32.totalorder %s13, 0
    %p159 = por %p157, %p158
    %p160 = scmp.ne.s32.totalorder %s152, %s154
    %p161 = scmp.eq.s32.totalorder %s18, 1
    %p162 = por %p160, %p161
    %p163 = scmp.ne.s32.totalorder %s154, %s155
    %p164 = scmp.eq.s32.totalorder %s18, 0
    %p165 = por %p163, %p164
    %p166 = scmp.ne.s32.totalorder %s154, %s155
    %p167 = scmp.eq.s32.totalorder %s19, 1
    %p168 = por %p166, %p167
    %p170 = scmp.ne.s32.totalorder %s155, %s169
    %p171 = scmp.eq.s32.totalorder %s19, 0
    %p172 = por %p170, %p171
    %s173 = ssub.s32 %s13, %s20
    %p174 = scmp.eq.s32.totalorder %s173, 0
    %s176 = sadd.s32 %s175, 1
    %s177 = scalar_select %p174, %s175, %s176
    %p180 = pneg %p174
    %p181 = scmp.eq.s32.totalorder %s13, 1
    %p182 = por %p180, %p181
    %p183 = scmp.ne.s32.totalorder %s175, %s178
    %p184 = scmp.eq.s32.totalorder %s13, 0
    %p185 = por %p183, %p184
    %p186 = scmp.ne.s32.totalorder %s175, %s178
    %p187 = scmp.eq.s32.totalorder %s18, 1
    %p188 = por %p186, %p187
    %p189 = scmp.ne.s32.totalorder %s178, %s179
    %p190 = scmp.eq.s32.totalorder %s18, 0
    %p191 = por %p189, %p190
    %p192 = scmp.ne.s32.totalorder %s178, %s179
    %p193 = scmp.eq.s32.totalorder %s19, 1
    %p194 = por %p192, %p193
    %p196 = scmp.ne.s32.totalorder %s179, %s195
    %p197 = scmp.eq.s32.totalorder %s19, 0
    %p198 = por %p196, %p197
    %p199 = scmp.le.s32.totalorder 1, %s13
    %p200 = scmp.lt.s32.totalorder %s13, 3
    %p201 = pnand %p199, %p200
    %p202 = pneg %p201
    // Predicated region
    $region9: #{bridger_forward.15} parent=5 // pred_check
      _
    $region10: #{bridger_forward.15} parent=5 // pred_check_branch
      %204 = sbr.rel (%p201) target = $region12
    $region11: #{bridger_forward.15} parent=5 // pred_region
      %s205 = ssub.s32 %s13, 1
      // Predicated region
      $region13: #{bridger_forward.15} parent=11 // pred_check
        %p206 = pneg %p60
      $region14: #{bridger_forward.15} parent=11 // pred_check_branch
        %208 = sbr.rel (%p206) target = $region16
      $region15: #{bridger_forward.15} parent=11 // pred_region
        _
      $region16: #{bridger_forward.15} parent=11 // pred_fallthru
        _
      // Predicated region
      $region17: #{bridger_forward.15} parent=11 // pred_check
        %p209 = pneg %p81
      $region18: #{bridger_forward.15} parent=11 // pred_check_branch
        %211 = sbr.rel (%p209) target = $region20
      $region19: #{bridger_forward.15} parent=11 // pred_region
        _
      $region20: #{bridger_forward.15} parent=11 // pred_fallthru
        _
      // Predicated region
      $region21: #{bridger_forward.15} parent=11 // pred_check
        %p212 = pneg %p102
      $region22: #{bridger_forward.15} parent=11 // pred_check_branch
        %214 = sbr.rel (%p212) target = $region24
      $region23: #{bridger_forward.15} parent=11 // pred_region
        _
      $region24: #{bridger_forward.15} parent=11 // pred_fallthru
        _
      // Predicated region
      $region25: #{bridger_forward.15} parent=11 // pred_check
        %p215 = pneg %p123
      $region26: #{bridger_forward.15} parent=11 // pred_check_branch
        %217 = sbr.rel (%p215) target = $region28
      $region27: #{bridger_forward.15} parent=11 // pred_region
        _
      $region28: #{bridger_forward.15} parent=11 // pred_fallthru
        _
      // Predicated region
      $region29: #{bridger_forward.15} parent=11 // pred_check
        %p218 = pneg %p144
      $region30: #{bridger_forward.15} parent=11 // pred_check_branch
        %220 = sbr.rel (%p218) target = $region32
      $region31: #{bridger_forward.15} parent=11 // pred_region
        _
      $region32: #{bridger_forward.15} parent=11 // pred_fallthru
        _
      // Predicated region
      $region33: #{bridger_forward.15} parent=11 // pred_check
        %p221 = pneg %p165
      $region34: #{bridger_forward.15} parent=11 // pred_check_branch
        %223 = sbr.rel (%p221) target = $region36
      $region35: #{bridger_forward.15} parent=11 // pred_region
        _
      $region36: #{bridger_forward.15} parent=11 // pred_fallthru
        _
    $region12: #{bridger_forward.15} parent=5 // pred_fallthru
      _
    %p224 = scmp.lt.s32.totalorder %s13, 2
    // Predicated region
    $region37: #{bridger_forward.15} parent=5 // pred_check
      %p225 = pneg %p224
    $region38: #{bridger_forward.15} parent=5 // pred_check_branch
      %227 = sbr.rel (%p225) target = $region40
    $region39: #{bridger_forward.15} parent=5 // pred_region
      // Predicated region
      $region41: #{bridger_forward.15} parent=39 // pred_check
        %p228 = pneg %p33
      $region42: #{bridger_forward.15} parent=39 // pred_check_branch
        %230 = sbr.rel (%p228) target = $region44
      $region43: #{bridger_forward.15} parent=39 // pred_region
        %p231 = scmp.lt.s32.totalorder %s13, 1
        %s232 = scalar_select %p231, %s13, 1
        %s233 = smul.addr %s232, 4
        %s234 = scalar_lea.vmem %s0, %s233
      $region44: #{bridger_forward.15} parent=39 // pred_fallthru
        _
    $region40: #{bridger_forward.15} parent=5 // pred_fallthru
      _
    %p235 = scmp.le.s32.totalorder 1, %s13
    %p236 = scmp.lt.s32.totalorder %s13, 3
    %p237 = pnand %p235, %p236
    %p238 = pneg %p237
    // Predicated region
    $region45: #{bridger_forward.15} parent=5 // pred_check
      _
    $region46: #{bridger_forward.15} parent=5 // pred_check_branch
      %240 = sbr.rel (%p237) target = $region48
    $region47: #{bridger_forward.15} parent=5 // pred_region
      %s241 = ssub.s32 %s13, 1
      %p242 = scmp.lt.s32.totalorder %s18, 1
      %s243 = scalar_select %p242, %s18, 1
      %s244 = smul.addr %s243, 4
      %s245 = scalar_lea.vmem %s0, %s244
      %p246 = pneg %p39
      %p247 = pneg %p36
      %p248 = pneg %p60
      %p249 = pneg %p57
      %p250 = pneg %p81
      %p251 = pneg %p78
      %p252 = pneg %p102
      %p253 = pneg %p99
      %p254 = pneg %p123
      %p255 = pneg %p120
      %p256 = pneg %p144
      %p257 = pneg %p141
      %p258 = pneg %p165
      %p259 = pneg %p162
      %p260 = pneg %p191
      %p261 = pneg %p188
      %p262 = scmp.lt.s32.totalorder %s18, 1
      %s263 = scalar_select %p262, %s18, 1
      %s264 = smul.addr %s263, 4
      %s265 = scalar_lea.vmem %s7, %s264
      %p266 = scmp.lt.s32.totalorder %s18, 1
      %s267 = scalar_select %p266, %s18, 1
      %s268 = smul.addr %s267, 4
      %s269 = scalar_lea.vmem %s0, %s268
      %p270 = scmp.lt.s32.totalorder %s18, 1
      %s271 = scalar_select %p270, %s18, 1
      %s272 = smul.addr %s271, 4
      %s273 = scalar_lea.vmem %s7, %s272
      %v275 = vld [vmem:[%s269] sm:$0xf]
      %v276 = vld [vmem:[%s1] sm:$0xf]
      %v277 = vld [vmem:[%s1 + $0x4] sm:$0xf]
      %v278 = vld [vmem:[%s1 + $0x8] sm:$0xf]
      %v279 = vld [vmem:[%s1 + $0xc] sm:$0xf]
      %v280 = vld [vmem:[%s2] sm:$0x1]
      %v282 = vlaneseq
      %v283 = vshrl.u32 %v282, 7
      %v284 = vsub.s32 0, %v283
      %v285 = vrot.slane %v280, %v284
      %v291 = vunpack.c.l.b16 %v276
      %v292 = vunpack.c.l.b16 %v277
      %v293 = vunpack.c.l.b16 %v278
      %v294 = vunpack.c.l.b16 %v279
      %v295 = vpack.c.b16 %v292, %v291
      %v296 = vpack.c.b16 %v294, %v293
      %vm299 = vcmask 261120
      %v301 = vsel %vm299, %v275, 0
      %303 = vmatprep.subr.bf16.mxu0 0
      %304 = vmatpush1.bf16.msra.mxu0 %v295
      %305 = vmatprep.subr.bf16.mxu0 0
      %306 = vmatpush1.bf16.msra.mxu0 %v296
      %307 = vmatprep.subr.bf16.mxu0 0
      %308 = vmatpush1.bf16.msra.mxu0 0
      %309 = vmatprep.subr.bf16.mxu0 0
      %310 = vmatpush1.bf16.msra.mxu0 0
      %311 = vmatprep.subr.bf16.mxu0 0
      %312 = vmatpush1.bf16.msra.mxu0 0
      %313 = vmatprep.subr.bf16.mxu0 0
      %314 = vmatpush1.bf16.msra.mxu0 0
      %315 = vmatprep.subr.bf16.mxu0 0
      %316 = vmatpush1.bf16.msra.mxu0 0
      %317 = vmatprep.subr.bf16.mxu0 0
      %318 = vmatpush1.bf16.msra.mxu0 0
      %319 = vmatprep.subr.bf16.mxu0 0
      %320 = vmatpush1.bf16.msra.mxu0 0
      %321 = vmatprep.subr.bf16.mxu0 0
      %322 = vmatpush1.bf16.msra.mxu0 0
      %323 = vmatprep.subr.bf16.mxu0 0
      %324 = vmatpush1.bf16.msra.mxu0 0
      %325 = vmatprep.subr.bf16.mxu0 0
      %326 = vmatpush1.bf16.msra.mxu0 0
      %327 = vmatprep.subr.bf16.mxu0 0
      %328 = vmatpush1.bf16.msra.mxu0 0
      %329 = vmatprep.subr.bf16.mxu0 0
      %330 = vmatpush1.bf16.msra.mxu0 0
      %331 = vmatprep.subr.bf16.mxu0 0
      %332 = vmatpush1.bf16.msra.mxu0 0
      %333 = vmatprep.subr.bf16.mxu0 0
      %334 = vmatpush1.bf16.msra.mxu0 0
      %335 = vmatprep.mubr.bf16.mxu0 0
      %336 = vmatmul.mubr.bf16.gmra.mrb[0].mxu0 %v301
      %v337 = vpop.f32.mrb[0].mxu0
      %v338 = vadd.f32 %v285, %v337
      %v339 = vpop.f32.mrb[0].mxu0
      %v340 = vpop.f32.mrb[0].mxu0
      %v341 = vpop.f32.mrb[0].mxu0
      %342 = vdwg.mxu0
      %v343 = vpack.c.bf16 %v338, %v338
      %345 = vrot.lane.b32.xlu0 %v343, 96
      %v346 = vpop.permute.xlu0 %345
      %vm347 = vcmask 64512
      %v349 = vsel %vm347, %v343, 0
      %v352 = vsel %vm347, %v346, 0
      %354 = vmatprep.subr.bf16.mxu0 0
      %355 = vmatpush1.bf16.xpose.msra.mxu0 %v352
      %356 = vmatprep.subr.bf16.mxu0 0
      %357 = vmatpush1.bf16.xpose.msra.mxu0 0
      %358 = vmatprep.subr.bf16.mxu0 0
      %359 = vmatpush1.bf16.xpose.msra.mxu0 0
      %360 = vmatprep.subr.bf16.mxu0 0
      %361 = vmatpush1.bf16.xpose.msra.mxu0 0
      %362 = vmatprep.subr.bf16.mxu0 0
      %363 = vmatpush1.bf16.xpose.msra.mxu0 0
      %364 = vmatprep.subr.bf16.mxu0 0
      %365 = vmatpush1.bf16.xpose.msra.mxu0 0
      %366 = vmatprep.subr.bf16.mxu0 0
      %367 = vmatpush1.bf16.xpose.msra.mxu0 0
      %368 = vmatprep.subr.bf16.mxu0 0
      %369 = vmatpush1.bf16.xpose.msra.mxu0 0
      %370 = vmatprep.subr.bf16.mxu0 0
      %371 = vmatpush1.bf16.xpose.msra.mxu0 0
      %372 = vmatprep.subr.bf16.mxu0 0
      %373 = vmatpush1.bf16.xpose.msra.mxu0 0
      %374 = vmatprep.subr.bf16.mxu0 0
      %375 = vmatpush1.bf16.xpose.msra.mxu0 0
      %376 = vmatprep.subr.bf16.mxu0 0
      %377 = vmatpush1.bf16.xpose.msra.mxu0 0
      %378 = vmatprep.subr.bf16.mxu0 0
      %379 = vmatpush1.bf16.xpose.msra.mxu0 0
      %380 = vmatprep.subr.bf16.mxu0 0
      %381 = vmatpush1.bf16.xpose.msra.mxu0 0
      %382 = vmatprep.subr.bf16.mxu0 0
      %383 = vmatpush1.bf16.xpose.msra.mxu0 0
      %384 = vmatprep.subr.bf16.mxu0 0
      %385 = vmatpush1.bf16.xpose.msra.mxu0 0
      %386 = vmatprep.mubr.bf16.mxu0 0
      %387 = vmatmul.mubr.bf16.gmra.mrb[0].mxu0 %v349
      %v388 = vpop.f32.mrb[0].mxu0
      %v389 = vadd.f32 0.0, %v388
      %v390 = vpop.f32.mrb[0].mxu0
      %v391 = vpop.f32.mrb[0].mxu0
      %v392 = vpop.f32.mrb[0].mxu0
      %393 = vdwg.mxu0
      %v394 = vsel %vm347, %v389, -inf
      %395 = vmax.xlane.f32.xlu0 %v394
      %v396 = vpop.xlane.xlu0 %395
      %v397 = vsub.f32 %v389, %v396
      %v398 = vmul.f32 %v397, 1.442695
      %v399 = vpow.pop %v398
      %v400 = vsel %vm347, %v399, 0.0
      %401 = vadd.xlane.f32.xlu0 %v400
      %v402 = vpop.xlane.xlu0 %401
      %v403 = vrcp.pop %v402
      %v404 = vmul.f32 %v399, %v403
      %v405 = vpack.c.bf16 %v404, %v404
      %406 = vrot.lane.b32.xlu0 %v343, 64
      %v407 = vpop.permute.xlu0 %406
      %v409 = vsel %vm347, %v405, 0
      %vm411 = vcmask 1043456
      %v413 = vsel %vm411, %v407, 0
      %415 = vmatprep.subr.bf16.mxu0 0
      %416 = vmatpush1.bf16.msra.mxu0 %v413
      %417 = vmatprep.subr.bf16.mxu0 0
      %418 = vmatpush1.bf16.msra.mxu0 0
      %419 = vmatprep.subr.bf16.mxu0 0
      %420 = vmatpush1.bf16.msra.mxu0 0
      %421 = vmatprep.subr.bf16.mxu0 0
      %422 = vmatpush1.bf16.msra.mxu0 0
      %423 = vmatprep.subr.bf16.mxu0 0
      %424 = vmatpush1.bf16.msra.mxu0 0
      %425 = vmatprep.subr.bf16.mxu0 0
      %426 = vmatpush1.bf16.msra.mxu0 0
      %427 = vmatprep.subr.bf16.mxu0 0
      %428 = vmatpush1.bf16.msra.mxu0 0
      %429 = vmatprep.subr.bf16.mxu0 0
      %430 = vmatpush1.bf16.msra.mxu0 0
      %431 = vmatprep.subr.bf16.mxu0 0
      %432 = vmatpush1.bf16.msra.mxu0 0
      %433 = vmatprep.subr.bf16.mxu0 0
      %434 = vmatpush1.bf16.msra.mxu0 0
      %435 = vmatprep.subr.bf16.mxu0 0
      %436 = vmatpush1.bf16.msra.mxu0 0
      %437 = vmatprep.subr.bf16.mxu0 0
      %438 = vmatpush1.bf16.msra.mxu0 0
      %439 = vmatprep.subr.bf16.mxu0 0
      %440 = vmatpush1.bf16.msra.mxu0 0
      %441 = vmatprep.subr.bf16.mxu0 0
      %442 = vmatpush1.bf16.msra.mxu0 0
      %443 = vmatprep.subr.bf16.mxu0 0
      %444 = vmatpush1.bf16.msra.mxu0 0
      %445 = vmatprep.subr.bf16.mxu0 0
      %446 = vmatpush1.bf16.msra.mxu0 0
      %447 = vmatprep.mubr.bf16.mxu0 0
      %448 = vmatmul.mubr.bf16.gmra.mrb[0].mxu0 %v409
      %v449 = vpop.f32.mrb[0].mxu0
      %v450 = vadd.f32 0.0, %v449
      %v451 = vpop.f32.mrb[0].mxu0
      %v452 = vpop.f32.mrb[0].mxu0
      %v453 = vpop.f32.mrb[0].mxu0
      %454 = vdwg.mxu0
      %455 = vrot.lane.b32.xlu0 %v343, 120
      %v456 = vpop.permute.xlu0 %455
      %457 = vrot.lane.b32.xlu0 %v343, 88
      %v458 = vpop.permute.xlu0 %457
      %v460 = vsel %vm347, %v456, 0
      %v463 = vsel %vm347, %v458, 0
      %465 = vmatprep.subr.bf16.mxu0 0
      %466 = vmatpush1.bf16.xpose.msra.mxu0 %v463
      %467 = vmatprep.subr.bf16.mxu0 0
      %468 = vmatpush1.bf16.xpose.msra.mxu0 0
      %469 = vmatprep.subr.bf16.mxu0 0
      %470 = vmatpush1.bf16.xpose.msra.mxu0 0
      %471 = vmatprep.subr.bf16.mxu0 0
      %472 = vmatpush1.bf16.xpose.msra.mxu0 0
      %473 = vmatprep.subr.bf16.mxu0 0
      %474 = vmatpush1.bf16.xpose.msra.mxu0 0
      %475 = vmatprep.subr.bf16.mxu0 0
      %476 = vmatpush1.bf16.xpose.msra.mxu0 0
      %477 = vmatprep.subr.bf16.mxu0 0
      %478 = vmatpush1.bf16.xpose.msra.mxu0 0
      %479 = vmatprep.subr.bf16.mxu0 0
      %480 = vmatpush1.bf16.xpose.msra.mxu0 0
      %481 = vmatprep.subr.bf16.mxu0 0
      %482 = vmatpush1.bf16.xpose.msra.mxu0 0
      %483 = vmatprep.subr.bf16.mxu0 0
      %484 = vmatpush1.bf16.xpose.msra.mxu0 0
      %485 = vmatprep.subr.bf16.mxu0 0
      %486 = vmatpush1.bf16.xpose.msra.mxu0 0
      %487 = vmatprep.subr.bf16.mxu0 0
      %488 = vmatpush1.bf16.xpose.msra.mxu0 0
      %489 = vmatprep.subr.bf16.mxu0 0
      %490 = vmatpush1.bf16.xpose.msra.mxu0 0
      %491 = vmatprep.subr.bf16.mxu0 0
      %492 = vmatpush1.bf16.xpose.msra.mxu0 0
      %493 = vmatprep.subr.bf16.mxu0 0
      %494 = vmatpush1.bf16.xpose.msra.mxu0 0
      %495 = vmatprep.subr.bf16.mxu0 0
      %496 = vmatpush1.bf16.xpose.msra.mxu0 0
      %497 = vmatprep.mubr.bf16.mxu0 0
      %498 = vmatmul.mubr.bf16.gmra.mrb[0].mxu0 %v460
      %v499 = vpop.f32.mrb[0].mxu0
      %v500 = vadd.f32 0.0, %v499
      %v501 = vpop.f32.mrb[0].mxu0
      %v502 = vpop.f32.mrb[0].mxu0
      %v503 = vpop.f32.mrb[0].mxu0
      %504 = vdwg.mxu0
      %v505 = vsel %vm347, %v500, -inf
      %506 = vmax.xlane.f32.xlu0 %v505
      %v507 = vpop.xlane.xlu0 %506
      %v508 = vsub.f32 %v500, %v507
      %v509 = vmul.f32 %v508, 1.442695
      %v510 = vpow.pop %v509
      %v511 = vsel %vm347, %v510, 0.0
      %512 = vadd.xlane.f32.xlu0 %v511
      %v513 = vpop.xlane.xlu0 %512
      %v514 = vrcp.pop %v513
      %v515 = vmul.f32 %v510, %v514
      %v516 = vpack.c.bf16 %v515, %v515
      %517 = vrot.lane.b32.xlu0 %v343, 56
      %v518 = vpop.permute.xlu0 %517
      %v520 = vsel %vm347, %v516, 0
      %v523 = vsel %vm411, %v518, 0
      %525 = vmatprep.subr.bf16.mxu0 0
      %526 = vmatpush1.bf16.msra.mxu0 %v523
      %527 = vmatprep.subr.bf16.mxu0 0
      %528 = vmatpush1.bf16.msra.mxu0 0
      %529 = vmatprep.subr.bf16.mxu0 0
      %530 = vmatpush1.bf16.msra.mxu0 0
      %531 = vmatprep.subr.bf16.mxu0 0
      %532 = vmatpush1.bf16.msra.mxu0 0
      %533 = vmatprep.subr.bf16.mxu0 0
      %534 = vmatpush1.bf16.msra.mxu0 0
      %535 = vmatprep.subr.bf16.mxu0 0
      %536 = vmatpush1.bf16.msra.mxu0 0
      %537 = vmatprep.subr.bf16.mxu0 0
      %538 = vmatpush1.bf16.msra.mxu0 0
      %539 = vmatprep.subr.bf16.mxu0 0
      %540 = vmatpush1.bf16.msra.mxu0 0
      %541 = vmatprep.subr.bf16.mxu0 0
      %542 = vmatpush1.bf16.msra.mxu0 0
      %543 = vmatprep.subr.bf16.mxu0 0
      %544 = vmatpush1.bf16.msra.mxu0 0
      %545 = vmatprep.subr.bf16.mxu0 0
      %546 = vmatpush1.bf16.msra.mxu0 0
      %547 = vmatprep.subr.bf16.mxu0 0
      %548 = vmatpush1.bf16.msra.mxu0 0
      %549 = vmatprep.subr.bf16.mxu0 0
      %550 = vmatpush1.bf16.msra.mxu0 0
      %551 = vmatprep.subr.bf16.mxu0 0
      %552 = vmatpush1.bf16.msra.mxu0 0
      %553 = vmatprep.subr.bf16.mxu0 0
      %554 = vmatpush1.bf16.msra.mxu0 0
      %555 = vmatprep.subr.bf16.mxu0 0
      %556 = vmatpush1.bf16.msra.mxu0 0
      %557 = vmatprep.mubr.bf16.mxu0 0
      %558 = vmatmul.mubr.bf16.gmra.mrb[0].mxu0 %v520
      %v559 = vpop.f32.mrb[0].mxu0
      %v560 = vadd.f32 0.0, %v559
      %v561 = vpop.f32.mrb[0].mxu0
      %v562 = vpop.f32.mrb[0].mxu0
      %v563 = vpop.f32.mrb[0].mxu0
      %564 = vdwg.mxu0
      %565 = vrot.lane.b32.xlu0 %v343, 112
      %v566 = vpop.permute.xlu0 %565
      %567 = vrot.lane.b32.xlu0 %v343, 80
      %v568 = vpop.permute.xlu0 %567
      %v570 = vsel %vm347, %v566, 0
      %v573 = vsel %vm347, %v568, 0
      %575 = vmatprep.subr.bf16.mxu0 0
      %576 = vmatpush1.bf16.xpose.msra.mxu0 %v573
      %577 = vmatprep.subr.bf16.mxu0 0
      %578 = vmatpush1.bf16.xpose.msra.mxu0 0
      %579 = vmatprep.subr.bf16.mxu0 0
      %580 = vmatpush1.bf16.xpose.msra.mxu0 0
      %581 = vmatprep.subr.bf16.mxu0 0
      %582 = vmatpush1.bf16.xpose.msra.mxu0 0
      %583 = vmatprep.subr.bf16.mxu0 0
      %584 = vmatpush1.bf16.xpose.msra.mxu0 0
      %585 = vmatprep.subr.bf16.mxu0 0
      %586 = vmatpush1.bf16.xpose.msra.mxu0 0
      %587 = vmatprep.subr.bf16.mxu0 0
      %588 = vmatpush1.bf16.xpose.msra.mxu0 0
      %589 = vmatprep.subr.bf16.mxu0 0
      %590 = vmatpush1.bf16.xpose.msra.mxu0 0
      %591 = vmatprep.subr.bf16.mxu0 0
      %592 = vmatpush1.bf16.xpose.msra.mxu0 0
      %593 = vmatprep.subr.bf16.mxu0 0
      %594 = vmatpush1.bf16.xpose.msra.mxu0 0
      %595 = vmatprep.subr.bf16.mxu0 0
      %596 = vmatpush1.bf16.xpose.msra.mxu0 0
      %597 = vmatprep.subr.bf16.mxu0 0
      %598 = vmatpush1.bf16.xpose.msra.mxu0 0
      %599 = vmatprep.subr.bf16.mxu0 0
      %600 = vmatpush1.bf16.xpose.msra.mxu0 0
      %601 = vmatprep.subr.bf16.mxu0 0
      %602 = vmatpush1.bf16.xpose.msra.mxu0 0
      %603 = vmatprep.subr.bf16.mxu0 0
      %604 = vmatpush1.bf16.xpose.msra.mxu0 0
      %605 = vmatprep.subr.bf16.mxu0 0
      %606 = vmatpush1.bf16.xpose.msra.mxu0 0
      %607 = vmatprep.mubr.bf16.mxu0 0
      %608 = vmatmul.mubr.bf16.gmra.mrb[0].mxu0 %v570
      %v609 = vpop.f32.mrb[0].mxu0
      %v610 = vadd.f32 0.0, %v609
      %v611 = vpop.f32.mrb[0].mxu0
      %v612 = vpop.f32.mrb[0].mxu0
      %v613 = vpop.f32.mrb[0].mxu0
      %614 = vdwg.mxu0
      %v615 = vsel %vm347, %v610, -inf
      %616 = vmax.xlane.f32.xlu0 %v615
      %v617 = vpop.xlane.xlu0 %616
      %v618 = vsub.f32 %v610, %v617
      %v619 = vmul.f32 %v618, 1.442695
      %v620 = vpow.pop %v619
      %v621 = vsel %vm347, %v620, 0.0
      %622 = vadd.xlane.f32.xlu0 %v621
      %v623 = vpop.xlane.xlu0 %622
      %v624 = vrcp.pop %v623
      %v625 = vmul.f32 %v620, %v624
      %v626 = vpack.c.bf16 %v625, %v625
      %627 = vrot.lane.b32.xlu0 %v343, 48
      %v628 = vpop.permute.xlu0 %627
      %v630 = vsel %vm347, %v626, 0
      %v633 = vsel %vm411, %v628, 0
      %635 = vmatprep.subr.bf16.mxu0 0
      %636 = vmatpush1.bf16.msra.mxu0 %v633
      %637 = vmatprep.subr.bf16.mxu0 0
      %638 = vmatpush1.bf16.msra.mxu0 0
      %639 = vmatprep.subr.bf16.mxu0 0
      %640 = vmatpush1.bf16.msra.mxu0 0
      %641 = vmatprep.subr.bf16.mxu0 0
      %642 = vmatpush1.bf16.msra.mxu0 0
      %643 = vmatprep.subr.bf16.mxu0 0
      %644 = vmatpush1.bf16.msra.mxu0 0
      %645 = vmatprep.subr.bf16.mxu0 0
      %646 = vmatpush1.bf16.msra.mxu0 0
      %647 = vmatprep.subr.bf16.mxu0 0
      %648 = vmatpush1.bf16.msra.mxu0 0
      %649 = vmatprep.subr.bf16.mxu0 0
      %650 = vmatpush1.bf16.msra.mxu0 0
      %651 = vmatprep.subr.bf16.mxu0 0
      %652 = vmatpush1.bf16.msra.mxu0 0
      %653 = vmatprep.subr.bf16.mxu0 0
      %654 = vmatpush1.bf16.msra.mxu0 0
      %655 = vmatprep.subr.bf16.mxu0 0
      %656 = vmatpush1.bf16.msra.mxu0 0
      %657 = vmatprep.subr.bf16.mxu0 0
      %658 = vmatpush1.bf16.msra.mxu0 0
      %659 = vmatprep.subr.bf16.mxu0 0
      %660 = vmatpush1.bf16.msra.mxu0 0
      %661 = vmatprep.subr.bf16.mxu0 0
      %662 = vmatpush1.bf16.msra.mxu0 0
      %663 = vmatprep.subr.bf16.mxu0 0
      %664 = vmatpush1.bf16.msra.mxu0 0
      %665 = vmatprep.subr.bf16.mxu0 0
      %666 = vmatpush1.bf16.msra.mxu0 0
      %667 = vmatprep.mubr.bf16.mxu0 0
      %668 = vmatmul.mubr.bf16.gmra.mrb[0].mxu0 %v630
      %v669 = vpop.f32.mrb[0].mxu0
      %v670 = vadd.f32 0.0, %v669
      %v671 = vpop.f32.mrb[0].mxu0
      %v672 = vpop.f32.mrb[0].mxu0
      %v673 = vpop.f32.mrb[0].mxu0
      %674 = vdwg.mxu0
      %675 = vrot.lane.b32.xlu0 %v343, 104
      %v676 = vpop.permute.xlu0 %675
      %677 = vrot.lane.b32.xlu0 %v343, 72
      %v678 = vpop.permute.xlu0 %677
      %v680 = vsel %vm347, %v676, 0
      %v683 = vsel %vm347, %v678, 0
      %685 = vmatprep.subr.bf16.mxu0 0
      %686 = vmatpush1.bf16.xpose.msra.mxu0 %v683
      %687 = vmatprep.subr.bf16.mxu0 0
      %688 = vmatpush1.bf16.xpose.msra.mxu0 0
      %689 = vmatprep.subr.bf16.mxu0 0
      %690 = vmatpush1.bf16.xpose.msra.mxu0 0
      %691 = vmatprep.subr.bf16.mxu0 0
      %692 = vmatpush1.bf16.xpose.msra.mxu0 0
      %693 = vmatprep.subr.bf16.mxu0 0
      %694 = vmatpush1.bf16.xpose.msra.mxu0 0
      %695 = vmatprep.subr.bf16.mxu0 0
      %696 = vmatpush1.bf16.xpose.msra.mxu0 0
      %697 = vmatprep.subr.bf16.mxu0 0
      %698 = vmatpush1.bf16.xpose.msra.mxu0 0
      %699 = vmatprep.subr.bf16.mxu0 0
      %700 = vmatpush1.bf16.xpose.msra.mxu0 0
      %701 = vmatprep.subr.bf16.mxu0 0
      %702 = vmatpush1.bf16.xpose.msra.mxu0 0
      %703 = vmatprep.subr.bf16.mxu0 0
      %704 = vmatpush1.bf16.xpose.msra.mxu0 0
      %705 = vmatprep.subr.bf16.mxu0 0
      %706 = vmatpush1.bf16.xpose.msra.mxu0 0
      %707 = vmatprep.subr.bf16.mxu0 0
      %708 = vmatpush1.bf16.xpose.msra.mxu0 0
      %709 = vmatprep.subr.bf16.mxu0 0
      %710 = vmatpush1.bf16.xpose.msra.mxu0 0
      %711 = vmatprep.subr.bf16.mxu0 0
      %712 = vmatpush1.bf16.xpose.msra.mxu0 0
      %713 = vmatprep.subr.bf16.mxu0 0
      %714 = vmatpush1.bf16.xpose.msra.mxu0 0
      %715 = vmatprep.subr.bf16.mxu0 0
      %716 = vmatpush1.bf16.xpose.msra.mxu0 0
      %717 = vmatprep.mubr.bf16.mxu0 0
      %718 = vmatmul.mubr.bf16.gmra.mrb[0].mxu0 %v680
      %v719 = vpop.f32.mrb[0].mxu0
      %v720 = vadd.f32 0.0, %v719
      %v721 = vpop.f32.mrb[0].mxu0
      %v722 = vpop.f32.mrb[0].mxu0
      %v723 = vpop.f32.mrb[0].mxu0
      %724 = vdwg.mxu0
      %v725 = vsel %vm347, %v720, -inf
      %726 = vmax.xlane.f32.xlu0 %v725
      %v727 = vpop.xlane.xlu0 %726
      %v728 = vsub.f32 %v720, %v727
      %v729 = vmul.f32 %v728, 1.442695
      %v730 = vpow.pop %v729
      %v731 = vsel %vm347, %v730, 0.0
      %732 = vadd.xlane.f32.xlu0 %v731
      %v733 = vpop.xlane.xlu0 %732
      %v734 = vrcp.pop %v733
      %v735 = vmul.f32 %v730, %v734
      %v736 = vpack.c.bf16 %v735, %v735
      %737 = vrot.lane.b32.xlu0 %v343, 40
      %v738 = vpop.permute.xlu0 %737
      %v740 = vsel %vm347, %v736, 0
      %v743 = vsel %vm411, %v738, 0
      %745 = vmatprep.subr.bf16.mxu0 0
      %746 = vmatpush1.bf16.msra.mxu0 %v743
      %747 = vmatprep.subr.bf16.mxu0 0
      %748 = vmatpush1.bf16.msra.mxu0 0
      %749 = vmatprep.subr.bf16.mxu0 0
      %750 = vmatpush1.bf16.msra.mxu0 0
      %751 = vmatprep.subr.bf16.mxu0 0
      %752 = vmatpush1.bf16.msra.mxu0 0
      %753 = vmatprep.subr.bf16.mxu0 0
      %754 = vmatpush1.bf16.msra.mxu0 0
      %755 = vmatprep.subr.bf16.mxu0 0
      %756 = vmatpush1.bf16.msra.mxu0 0
      %757 = vmatprep.subr.bf16.mxu0 0
      %758 = vmatpush1.bf16.msra.mxu0 0
      %759 = vmatprep.subr.bf16.mxu0 0
      %760 = vmatpush1.bf16.msra.mxu0 0
      %761 = vmatprep.subr.bf16.mxu0 0
      %762 = vmatpush1.bf16.msra.mxu0 0
      %763 = vmatprep.subr.bf16.mxu0 0
      %764 = vmatpush1.bf16.msra.mxu0 0
      %765 = vmatprep.subr.bf16.mxu0 0
      %766 = vmatpush1.bf16.msra.mxu0 0
      %767 = vmatprep.subr.bf16.mxu0 0
      %768 = vmatpush1.bf16.msra.mxu0 0
      %769 = vmatprep.subr.bf16.mxu0 0
      %770 = vmatpush1.bf16.msra.mxu0 0
      %771 = vmatprep.subr.bf16.mxu0 0
      %772 = vmatpush1.bf16.msra.mxu0 0
      %773 = vmatprep.subr.bf16.mxu0 0
      %774 = vmatpush1.bf16.msra.mxu0 0
      %775 = vmatprep.subr.bf16.mxu0 0
      %776 = vmatpush1.bf16.msra.mxu0 0
      %777 = vmatprep.mubr.bf16.mxu0 0
      %778 = vmatmul.mubr.bf16.gmra.mrb[0].mxu0 %v740
      %v779 = vpop.f32.mrb[0].mxu0
      %v780 = vadd.f32 0.0, %v779
      %v781 = vpop.f32.mrb[0].mxu0
      %v782 = vpop.f32.mrb[0].mxu0
      %v783 = vpop.f32.mrb[0].mxu0
      %784 = vdwg.mxu0
      %786 = vrot.lane.b32.xlu0 %v560, 8
      %v787 = vpop.permute.xlu0 %786
      %790 = vrot.lane.b32.xlu0 %v670, 16
      %v791 = vpop.permute.xlu0 %790
      %794 = vrot.lane.b32.xlu0 %v780, 24
      %v795 = vpop.permute.xlu0 %794
      %v797 = vsel %vm347, %v450, %v787
      %vm798 = vcmask 130048
      %v799 = vsel %vm798, %v797, %v791
      %vm800 = vcmask 195584
      %v801 = vsel %vm800, %v799, %v795
      %v802 = vpack.c.bf16 %v801, %v801
      %v803 = vld [vmem:[%s3] sm:$0xf]
      %v804 = vld [vmem:[%s3 + $0x4] sm:$0xf]
      %v805 = vld [vmem:[%s3 + $0x8] sm:$0xf]
      %v806 = vld [vmem:[%s3 + $0xc] sm:$0xf]
      %v807 = vld [vmem:[%s4] sm:$0x1]
      %v809 = vlaneseq
      %v810 = vshrl.u32 %v809, 7
      %v811 = vsub.s32 0, %v810
      %v812 = vrot.slane %v807, %v811
      %v818 = vunpack.c.l.b16 %v803
      %v819 = vunpack.c.l.b16 %v804
      %v820 = vunpack.c.l.b16 %v805
      %v821 = vunpack.c.l.b16 %v806
      %v822 = vpack.c.b16 %v819, %v818
      %v823 = vpack.c.b16 %v821, %v820
      %v827 = vsel %vm299, %v802, 0
      %829 = vmatprep.subr.bf16.mxu0 0
      %830 = vmatpush1.bf16.msra.mxu0 %v822
      %831 = vmatprep.subr.bf16.mxu0 0
      %832 = vmatpush1.bf16.msra.mxu0 %v823
      %833 = vmatprep.subr.bf16.mxu0 0
      %834 = vmatpush1.bf16.msra.mxu0 0
      %835 = vmatprep.subr.bf16.mxu0 0
      %836 = vmatpush1.bf16.msra.mxu0 0
      %837 = vmatprep.subr.bf16.mxu0 0
      %838 = vmatpush1.bf16.msra.mxu0 0
      %839 = vmatprep.subr.bf16.mxu0 0
      %840 = vmatpush1.bf16.msra.mxu0 0
      %841 = vmatprep.subr.bf16.mxu0 0
      %842 = vmatpush1.bf16.msra.mxu0 0
      %843 = vmatprep.subr.bf16.mxu0 0
      %844 = vmatpush1.bf16.msra.mxu0 0
      %845 = vmatprep.subr.bf16.mxu0 0
      %846 = vmatpush1.bf16.msra.mxu0 0
      %847 = vmatprep.subr.bf16.mxu0 0
      %848 = vmatpush1.bf16.msra.mxu0 0
      %849 = vmatprep.subr.bf16.mxu0 0
      %850 = vmatpush1.bf16.msra.mxu0 0
      %851 = vmatprep.subr.bf16.mxu0 0
      %852 = vmatpush1.bf16.msra.mxu0 0
      %853 = vmatprep.subr.bf16.mxu0 0
      %854 = vmatpush1.bf16.msra.mxu0 0
      %855 = vmatprep.subr.bf16.mxu0 0
      %856 = vmatpush1.bf16.msra.mxu0 0
      %857 = vmatprep.subr.bf16.mxu0 0
      %858 = vmatpush1.bf16.msra.mxu0 0
      %859 = vmatprep.subr.bf16.mxu0 0
      %860 = vmatpush1.bf16.msra.mxu0 0
      %861 = vmatprep.mubr.bf16.mxu0 0
      %862 = vmatmul.mubr.bf16.gmra.mrb[0].mxu0 %v827
      %v863 = vpop.f32.mrb[0].mxu0
      %v864 = vadd.f32 %v812, %v863
      %v865 = vpop.f32.mrb[0].mxu0
      %v866 = vpop.f32.mrb[0].mxu0
      %v867 = vpop.f32.mrb[0].mxu0
      %868 = vdwg.mxu0
      %v869 = vunpack.c.l.bf16 %v275
      %v870 = vadd.f32 %v864, %v869
      %v871 = vld [vmem:[%s5] sm:$0x1]
      %v872 = vld [vmem:[%s6] sm:$0x1]
      %v873 = vsel %vm299, %v870, 0.0
      %874 = vadd.xlane.f32.xlu0 %v873
      %v875 = vpop.xlane.xlu0 %874
      %v876 = vrcp.pop 32.0
      %v877 = vmul.f32 %v875, %v876
      %v878 = vsub.f32 %v870, %v877
      %v879 = vmul.f32 %v878, %v878
      %v880 = vsel %vm299, %v879, 0.0
      %881 = vadd.xlane.f32.xlu0 %v880
      %v882 = vpop.xlane.xlu0 %881
      %v883 = vmul.f32 %v882, %v876
      %v884 = vadd.f32 %v883, 1e-05
      %v885 = vrsqrt.pop %v884
      %v886 = vmul.f32 %v878, %v885
      %v888 = vlaneseq
      %v889 = vshrl.u32 %v888, 7
      %v890 = vsub.s32 0, %v889
      %v891 = vrot.slane %v871, %v890
      %v893 = vmul.f32 %v886, %v891
      %v895 = vlaneseq
      %v896 = vshrl.u32 %v895, 7
      %v897 = vsub.s32 0, %v896
      %v898 = vrot.slane %v872, %v897
      %v900 = vadd.f32 %v893, %v898
      %v901 = vpack.c.bf16 %v900, %v900
      %vm902 = vcmask 257024
      %903 = vst.msk [vmem:[%s273] sm:$0xf] %vm902, %v901
      %p904 = scmp.lt.s32.totalorder %s18, 1
      %s905 = scalar_select %p904, %s18, 1
      %s906 = smul.addr %s905, 4
      %s907 = scalar_lea.vmem %s7, %s906
      // Predicated region
      $region49: #{bridger_forward.15} parent=47 // pred_check
        %p908 = pneg %p188
      $region50: #{bridger_forward.15} parent=47 // pred_check_branch
        %910 = sbr.rel (%p908) target = $region52
      $region51: #{bridger_forward.15} parent=47 // pred_region
        _
      $region52: #{bridger_forward.15} parent=47 // pred_fallthru
        _
    $region48: #{bridger_forward.15} parent=5 // pred_fallthru
      _
    %p911 = scmp.le.s32.totalorder 2, %s13
    // Predicated region
    $region53: #{bridger_forward.15} parent=5 // pred_check
      %p912 = pneg %p911
    $region54: #{bridger_forward.15} parent=5 // pred_check_branch
      %914 = sbr.rel (%p912) target = $region56
    $region55: #{bridger_forward.15} parent=5 // pred_region
      %s915 = ssub.s32 %s13, 2
      // Predicated region
      $region57: #{bridger_forward.15} parent=55 // pred_check
        %p916 = pneg %p194
      $region58: #{bridger_forward.15} parent=55 // pred_check_branch
        %918 = sbr.rel (%p916) target = $region60
      $region59: #{bridger_forward.15} parent=55 // pred_region
        %p919 = scmp.lt.s32.totalorder %s19, 1
        %s920 = scalar_select %p919, %s19, 1
        %s921 = smul.addr %s920, 4
        %s922 = scalar_lea.vmem %s7, %s921
      $region60: #{bridger_forward.15} parent=55 // pred_fallthru
        _
    $region56: #{bridger_forward.15} parent=5 // pred_fallthru
      _
  $region6: #{bridger_forward.15} parent=0 // loop_footer
    %s17 = sadd.s32 1, %s13
  $region7: #{bridger_forward.15} parent=0 // loop_footer_branch
    %12 = sbr.rel target = $region3
  $region8: #{bridger_forward.15} parent=0 // loop_exit
    _

// kernel: bridger_forward.11
$region0: #{bridger_forward.11}
  #allocation0 [shape = 'u32[]', space=smem, size = 0x4, offset = 0x4, fixed_abs, tag = 'smem constant byte address 0x4 - core index']
  #allocation1 [shape = 'u32[144,128]{1,0:T(1,128)}', space=vmem, size = 0x12000, scoped, tag = 'internal scratch']
  %s0 = inlined_call_operand.vmem [shape: bf16[16,48], index: 0, kind: input, shape index: {}]
  %s1 = inlined_call_operand.vmem [shape: bf16[48,32], index: 1, kind: input, shape index: {}]
  %s2 = inlined_call_operand.vmem [shape: f32[1,32], index: 2, kind: input, shape index: {}]
  %s3 = inlined_call_operand.vmem [shape: f32[1,32], index: 3, kind: input, shape index: {}]
  %s4 = inlined_call_operand.vmem [shape: f32[1,32], index: 4, kind: input, shape index: {}]
  %s5 = inlined_call_operand.vmem [shape: bf16[16,32], index: 5, kind: output, shape index: {}]
  %s6 = sld [smem:[#allocation0]]
  $region53: #{bridger_forward.11} parent=0
    _
  %s8 = ssub.s32 1, %s6
  %s9 = scalar_select 0, %s8, %s6
  loop: start=0, step=1, limit=4
  $region2: #{bridger_forward.11} parent=0 // loop_pre_header
    _
  $region3: #{bridger_forward.11} parent=0 // loop_header
    %s11 = sphi 0, %s15
    %p12 = scmp.ge.s32.totalorder %s11, 4
    %s21 = sphi 0, %s23
    %s24 = sphi 0, %s21
    %s25 = sphi 0, %s24
    %s41 = sphi 0, %s25
    %s45 = sphi 0, %s45
    %s47 = sphi 0, %s45
    %s48 = sphi 0, %s47
    %s62 = sphi 0, %s48
    %s66 = sphi 0, %s66
    %s68 = sphi 0, %s66
    %s69 = sphi 0, %s68
    %s83 = sphi 0, %s69
    %s87 = sphi 0, %s87
    %s89 = sphi 0, %s87
    %s90 = sphi 0, %s89
    %s104 = sphi 0, %s90
    %s108 = sphi 0, %s108
    %s110 = sphi 0, %s108
    %s111 = sphi 0, %s110
    %s125 = sphi 0, %s111
    %s131 = sphi 0, %s133
    %s134 = sphi 0, %s131
    %s135 = sphi 0, %s134
    %s151 = sphi 0, %s135
  $region4: #{bridger_forward.11} parent=0 // loop_header_branch
    %14 = sbr.rel (%p12) target = $region8
  $region5: #{bridger_forward.11} parent=0 // loop_body
    %s16 = ssub.s32 %s11, 1
    %s17 = ssub.s32 %s11, 2
    %s18 = sadd.s32 %s11, 1
    %s19 = ssub.s32 %s11, %s18
    %p20 = scmp.eq.s32.totalorder %s19, 0
    %s22 = sadd.s32 %s21, 1
    %s23 = scalar_select %p20, %s21, %s22
    %p26 = pneg %p20
    %p27 = scmp.eq.s32.totalorder %s11, 1
    %p28 = por %p26, %p27
    %p29 = scmp.ne.s32.totalorder %s21, %s24
    %p30 = scmp.eq.s32.totalorder %s11, 0
    %p31 = por %p29, %p30
    %p32 = scmp.ne.s32.totalorder %s21, %s24
    %p33 = scmp.eq.s32.totalorder %s16, 1
    %p34 = por %p32, %p33
    %p35 = scmp.ne.s32.totalorder %s24, %s25
    %p36 = scmp.eq.s32.totalorder %s16, 0
    %p37 = por %p35, %p36
    %p38 = scmp.ne.s32.totalorder %s24, %s25
    %p39 = scmp.eq.s32.totalorder %s17, 1
    %p40 = por %p38, %p39
    %p42 = scmp.ne.s32.totalorder %s25, %s41
    %p43 = scmp.eq.s32.totalorder %s17, 0
    %p44 = por %p42, %p43
    %s46 = sadd.s32 %s45, 1
    %p49 = scmp.eq.s32.totalorder %s11, 1
    %p50 = scmp.ne.s32.totalorder %s45, %s47
    %p51 = scmp.eq.s32.totalorder %s11, 0
    %p52 = por %p50, %p51
    %p53 = scmp.ne.s32.totalorder %s45, %s47
    %p54 = scmp.eq.s32.totalorder %s16, 1
    %p55 = por %p53, %p54
    %p56 = scmp.ne.s32.totalorder %s47, %s48
    %p57 = scmp.eq.s32.totalorder %s16, 0
    %p58 = por %p56, %p57
    %p59 = scmp.ne.s32.totalorder %s47, %s48
    %p60 = scmp.eq.s32.totalorder %s17, 1
    %p61 = por %p59, %p60
    %p63 = scmp.ne.s32.totalorder %s48, %s62
    %p64 = scmp.eq.s32.totalorder %s17, 0
    %p65 = por %p63, %p64
    %s67 = sadd.s32 %s66, 1
    %p70 = scmp.eq.s32.totalorder %s11, 1
    %p71 = scmp.ne.s32.totalorder %s66, %s68
    %p72 = scmp.eq.s32.totalorder %s11, 0
    %p73 = por %p71, %p72
    %p74 = scmp.ne.s32.totalorder %s66, %s68
    %p75 = scmp.eq.s32.totalorder %s16, 1
    %p76 = por %p74, %p75
    %p77 = scmp.ne.s32.totalorder %s68, %s69
    %p78 = scmp.eq.s32.totalorder %s16, 0
    %p79 = por %p77, %p78
    %p80 = scmp.ne.s32.totalorder %s68, %s69
    %p81 = scmp.eq.s32.totalorder %s17, 1
    %p82 = por %p80, %p81
    %p84 = scmp.ne.s32.totalorder %s69, %s83
    %p85 = scmp.eq.s32.totalorder %s17, 0
    %p86 = por %p84, %p85
    %s88 = sadd.s32 %s87, 1
    %p91 = scmp.eq.s32.totalorder %s11, 1
    %p92 = scmp.ne.s32.totalorder %s87, %s89
    %p93 = scmp.eq.s32.totalorder %s11, 0
    %p94 = por %p92, %p93
    %p95 = scmp.ne.s32.totalorder %s87, %s89
    %p96 = scmp.eq.s32.totalorder %s16, 1
    %p97 = por %p95, %p96
    %p98 = scmp.ne.s32.totalorder %s89, %s90
    %p99 = scmp.eq.s32.totalorder %s16, 0
    %p100 = por %p98, %p99
    %p101 = scmp.ne.s32.totalorder %s89, %s90
    %p102 = scmp.eq.s32.totalorder %s17, 1
    %p103 = por %p101, %p102
    %p105 = scmp.ne.s32.totalorder %s90, %s104
    %p106 = scmp.eq.s32.totalorder %s17, 0
    %p107 = por %p105, %p106
    %s109 = sadd.s32 %s108, 1
    %p112 = scmp.eq.s32.totalorder %s11, 1
    %p113 = scmp.ne.s32.totalorder %s108, %s110
    %p114 = scmp.eq.s32.totalorder %s11, 0
    %p115 = por %p113, %p114
    %p116 = scmp.ne.s32.totalorder %s108, %s110
    %p117 = scmp.eq.s32.totalorder %s16, 1
    %p118 = por %p116, %p117
    %p119 = scmp.ne.s32.totalorder %s110, %s111
    %p120 = scmp.eq.s32.totalorder %s16, 0
    %p121 = por %p119, %p120
    %p122 = scmp.ne.s32.totalorder %s110, %s111
    %p123 = scmp.eq.s32.totalorder %s17, 1
    %p124 = por %p122, %p123
    %p126 = scmp.ne.s32.totalorder %s111, %s125
    %p127 = scmp.eq.s32.totalorder %s17, 0
    %p128 = por %p126, %p127
    %s129 = ssub.s32 %s11, %s18
    %p130 = scmp.eq.s32.totalorder %s129, 0
    %s132 = sadd.s32 %s131, 1
    %s133 = scalar_select %p130, %s131, %s132
    %p136 = pneg %p130
    %p137 = scmp.eq.s32.totalorder %s11, 1
    %p138 = por %p136, %p137
    %p139 = scmp.ne.s32.totalorder %s131, %s134
    %p140 = scmp.eq.s32.totalorder %s11, 0
    %p141 = por %p139, %p140
    %p142 = scmp.ne.s32.totalorder %s131, %s134
    %p143 = scmp.eq.s32.totalorder %s16, 1
    %p144 = por %p142, %p143
    %p145 = scmp.ne.s32.totalorder %s134, %s135
    %p146 = scmp.eq.s32.totalorder %s16, 0
    %p147 = por %p145, %p146
    %p148 = scmp.ne.s32.totalorder %s134, %s135
    %p149 = scmp.eq.s32.totalorder %s17, 1
    %p150 = por %p148, %p149
    %p152 = scmp.ne.s32.totalorder %s135, %s151
    %p153 = scmp.eq.s32.totalorder %s17, 0
    %p154 = por %p152, %p153
    %p155 = scmp.le.s32.totalorder 1, %s11
    %p156 = scmp.lt.s32.totalorder %s11, 3
    %p157 = pnand %p155, %p156
    %p158 = pneg %p157
    // Predicated region
    $region9: #{bridger_forward.11} parent=5 // pred_check
      _
    $region10: #{bridger_forward.11} parent=5 // pred_check_branch
      %160 = sbr.rel (%p157) target = $region12
    $region11: #{bridger_forward.11} parent=5 // pred_region
      %s161 = ssub.s32 %s11, 1
      // Predicated region
      $region13: #{bridger_forward.11} parent=11 // pred_check
        %p162 = pneg %p58
      $region14: #{bridger_forward.11} parent=11 // pred_check_branch
        %164 = sbr.rel (%p162) target = $region16
      $region15: #{bridger_forward.11} parent=11 // pred_region
        _
      $region16: #{bridger_forward.11} parent=11 // pred_fallthru
        _
      // Predicated region
      $region17: #{bridger_forward.11} parent=11 // pred_check
        %p165 = pneg %p79
      $region18: #{bridger_forward.11} parent=11 // pred_check_branch
        %167 = sbr.rel (%p165) target = $region20
      $region19: #{bridger_forward.11} parent=11 // pred_region
        _
      $region20: #{bridger_forward.11} parent=11 // pred_fallthru
        _
      // Predicated region
      $region21: #{bridger_forward.11} parent=11 // pred_check
        %p168 = pneg %p100
      $region22: #{bridger_forward.11} parent=11 // pred_check_branch
        %170 = sbr.rel (%p168) target = $region24
      $region23: #{bridger_forward.11} parent=11 // pred_region
        _
      $region24: #{bridger_forward.11} parent=11 // pred_fallthru
        _
      // Predicated region
      $region25: #{bridger_forward.11} parent=11 // pred_check
        %p171 = pneg %p121
      $region26: #{bridger_forward.11} parent=11 // pred_check_branch
        %173 = sbr.rel (%p171) target = $region28
      $region27: #{bridger_forward.11} parent=11 // pred_region
        _
      $region28: #{bridger_forward.11} parent=11 // pred_fallthru
        _
    $region12: #{bridger_forward.11} parent=5 // pred_fallthru
      _
    %p174 = scmp.lt.s32.totalorder %s11, 2
    // Predicated region
    $region29: #{bridger_forward.11} parent=5 // pred_check
      %p175 = pneg %p174
    $region30: #{bridger_forward.11} parent=5 // pred_check_branch
      %177 = sbr.rel (%p175) target = $region32
    $region31: #{bridger_forward.11} parent=5 // pred_region
      // Predicated region
      $region33: #{bridger_forward.11} parent=31 // pred_check
        %p178 = pneg %p31
      $region34: #{bridger_forward.11} parent=31 // pred_check_branch
        %180 = sbr.rel (%p178) target = $region36
      $region35: #{bridger_forward.11} parent=31 // pred_region
        %p181 = scmp.lt.s32.totalorder %s11, 1
        %s182 = scalar_select %p181, %s11, 1
        %s183 = smul.addr %s182, 4
        %s184 = scalar_lea.vmem %s0, %s183
      $region36: #{bridger_forward.11} parent=31 // pred_fallthru
        _
    $region32: #{bridger_forward.11} parent=5 // pred_fallthru
      _
    %p185 = scmp.le.s32.totalorder 1, %s11
    %p186 = scmp.lt.s32.totalorder %s11, 3
    %p187 = pnand %p185, %p186
    %p188 = pneg %p187
    // Predicated region
    $region37: #{bridger_forward.11} parent=5 // pred_check
      _
    $region38: #{bridger_forward.11} parent=5 // pred_check_branch
      %190 = sbr.rel (%p187) target = $region40
    $region39: #{bridger_forward.11} parent=5 // pred_region
      %s191 = ssub.s32 %s11, 1
      %p192 = scmp.lt.s32.totalorder %s16, 1
      %s193 = scalar_select %p192, %s16, 1
      %s194 = smul.addr %s193, 4
      %s195 = scalar_lea.vmem %s0, %s194
      %p196 = pneg %p37
      %p197 = pneg %p34
      %p198 = pneg %p58
      %p199 = pneg %p55
      %p200 = pneg %p79
      %p201 = pneg %p76
      %p202 = pneg %p100
      %p203 = pneg %p97
      %p204 = pneg %p121
      %p205 = pneg %p118
      %p206 = pneg %p147
      %p207 = pneg %p144
      %p208 = scmp.lt.s32.totalorder %s16, 1
      %s209 = scalar_select %p208, %s16, 1
      %s210 = smul.addr %s209, 4
      %s211 = scalar_lea.vmem %s5, %s210
      %p212 = scmp.lt.s32.totalorder %s16, 1
      %s213 = scalar_select %p212, %s16, 1
      %s214 = smul.addr %s213, 4
      %s215 = scalar_lea.vmem %s0, %s214
      %p216 = scmp.lt.s32.totalorder %s16, 1
      %s217 = scalar_select %p216, %s16, 1
      %s218 = smul.addr %s217, 4
      %s219 = scalar_lea.vmem %s5, %s218
      %v221 = vld [vmem:[%s215] sm:$0xf]
      %v222 = vld [vmem:[%s1] sm:$0xf]
      %v223 = vld [vmem:[%s1 + $0x4] sm:$0xf]
      %v224 = vld [vmem:[%s1 + $0x8] sm:$0xf]
      %v225 = vld [vmem:[%s1 + $0xc] sm:$0xf]
      %v226 = vld [vmem:[%s1 + $0x10] sm:$0xf]
      %v227 = vld [vmem:[%s1 + $0x14] sm:$0xf]
      %v228 = vld [vmem:[%s2] sm:$0x1]
      %v230 = vlaneseq
      %v231 = vshrl.u32 %v230, 7
      %v232 = vsub.s32 0, %v231
      %v233 = vrot.slane %v228, %v232
      %v241 = vunpack.c.l.b16 %v222
      %v242 = vunpack.c.l.b16 %v223
      %v243 = vunpack.c.l.b16 %v224
      %v244 = vunpack.c.l.b16 %v225
      %v245 = vunpack.c.l.b16 %v226
      %v246 = vunpack.c.l.b16 %v227
      %v247 = vpack.c.b16 %v242, %v241
      %v248 = vpack.c.b16 %v244, %v243
      %v249 = vpack.c.b16 %v246, %v245
      %vm253 = vcmask 392192
      %v255 = vsel %vm253, %v221, 0
      %257 = vmatprep.subr.bf16.mxu0 0
      %258 = vmatpush1.bf16.msra.mxu0 %v247
      %259 = vmatprep.subr.bf16.mxu0 0
      %260 = vmatpush1.bf16.msra.mxu0 %v248
      %261 = vmatprep.subr.bf16.mxu0 0
      %262 = vmatpush1.bf16.msra.mxu0 %v249
      %263 = vmatprep.subr.bf16.mxu0 0
      %264 = vmatpush1.bf16.msra.mxu0 0
      %265 = vmatprep.subr.bf16.mxu0 0
      %266 = vmatpush1.bf16.msra.mxu0 0
      %267 = vmatprep.subr.bf16.mxu0 0
      %268 = vmatpush1.bf16.msra.mxu0 0
      %269 = vmatprep.subr.bf16.mxu0 0
      %270 = vmatpush1.bf16.msra.mxu0 0
      %271 = vmatprep.subr.bf16.mxu0 0
      %272 = vmatpush1.bf16.msra.mxu0 0
      %273 = vmatprep.subr.bf16.mxu0 0
      %274 = vmatpush1.bf16.msra.mxu0 0
      %275 = vmatprep.subr.bf16.mxu0 0
      %276 = vmatpush1.bf16.msra.mxu0 0
      %277 = vmatprep.subr.bf16.mxu0 0
      %278 = vmatpush1.bf16.msra.mxu0 0
      %279 = vmatprep.subr.bf16.mxu0 0
      %280 = vmatpush1.bf16.msra.mxu0 0
      %281 = vmatprep.subr.bf16.mxu0 0
      %282 = vmatpush1.bf16.msra.mxu0 0
      %283 = vmatprep.subr.bf16.mxu0 0
      %284 = vmatpush1.bf16.msra.mxu0 0
      %285 = vmatprep.subr.bf16.mxu0 0
      %286 = vmatpush1.bf16.msra.mxu0 0
      %287 = vmatprep.subr.bf16.mxu0 0
      %288 = vmatpush1.bf16.msra.mxu0 0
      %289 = vmatprep.mubr.bf16.mxu0 0
      %290 = vmatmul.mubr.bf16.gmra.mrb[0].mxu0 %v255
      %v291 = vpop.f32.mrb[0].mxu0
      %v292 = vadd.f32 %v233, %v291
      %v293 = vpop.f32.mrb[0].mxu0
      %v294 = vpop.f32.mrb[0].mxu0
      %v295 = vpop.f32.mrb[0].mxu0
      %296 = vdwg.mxu0
      %v297 = vld [vmem:[%s3] sm:$0x1]
      %v298 = vld [vmem:[%s4] sm:$0x1]
      %vm299 = vcmask 261120
      %v300 = vsel %vm299, %v292, 0.0
      %301 = vadd.xlane.f32.xlu0 %v300
      %v302 = vpop.xlane.xlu0 %301
      %v303 = vrcp.pop 32.0
      %v304 = vmul.f32 %v302, %v303
      %v305 = vsub.f32 %v292, %v304
      %v306 = vmul.f32 %v305, %v305
      %v307 = vsel %vm299, %v306, 0.0
      %308 = vadd.xlane.f32.xlu0 %v307
      %v309 = vpop.xlane.xlu0 %308
      %v310 = vmul.f32 %v309, %v303
      %v311 = vadd.f32 %v310, 1e-05
      %v312 = vrsqrt.pop %v311
      %v313 = vmul.f32 %v305, %v312
      %v315 = vlaneseq
      %v316 = vshrl.u32 %v315, 7
      %v317 = vsub.s32 0, %v316
      %v318 = vrot.slane %v297, %v317
      %v320 = vmul.f32 %v313, %v318
      %v322 = vlaneseq
      %v323 = vshrl.u32 %v322, 7
      %v324 = vsub.s32 0, %v323
      %v325 = vrot.slane %v298, %v324
      %v327 = vadd.f32 %v320, %v325
      %v328 = vpack.c.bf16 %v327, %v327
      %vm329 = vcmask 257024
      %330 = vst.msk [vmem:[%s219] sm:$0xf] %vm329, %v328
      %p331 = scmp.lt.s32.totalorder %s16, 1
      %s332 = scalar_select %p331, %s16, 1
      %s333 = smul.addr %s332, 4
      %s334 = scalar_lea.vmem %s5, %s333
      // Predicated region
      $region41: #{bridger_forward.11} parent=39 // pred_check
        %p335 = pneg %p144
      $region42: #{bridger_forward.11} parent=39 // pred_check_branch
        %337 = sbr.rel (%p335) target = $region44
      $region43: #{bridger_forward.11} parent=39 // pred_region
        _
      $region44: #{bridger_forward.11} parent=39 // pred_fallthru
        _
    $region40: #{bridger_forward.11} parent=5 // pred_fallthru
      _
    %p338 = scmp.le.s32.totalorder 2, %s11
    // Predicated region
    $region45: #{bridger_forward.11} parent=5 // pred_check
      %p339 = pneg %p338
    $region46: #{bridger_forward.11} parent=5 // pred_check_branch
      %341 = sbr.rel (%p339) target = $region48
    $region47: #{bridger_forward.11} parent=5 // pred_region
      %s342 = ssub.s32 %s11, 2
      // Predicated region
      $region49: #{bridger_forward.11} parent=47 // pred_check
        %p343 = pneg %p150
      $region50: #{bridger_forward.11} parent=47 // pred_check_branch
        %345 = sbr.rel (%p343) target = $region52
      $region51: #{bridger_forward.11} parent=47 // pred_region
        %p346 = scmp.lt.s32.totalorder %s17, 1
        %s347 = scalar_select %p346, %s17, 1
        %s348 = smul.addr %s347, 4
        %s349 = scalar_lea.vmem %s5, %s348
      $region52: #{bridger_forward.11} parent=47 // pred_fallthru
        _
    $region48: #{bridger_forward.11} parent=5 // pred_fallthru
      _
  $region6: #{bridger_forward.11} parent=0 // loop_footer
    %s15 = sadd.s32 1, %s11
  $region7: #{bridger_forward.11} parent=0 // loop_footer_branch
    %10 = sbr.rel target = $region3
  $region8: #{bridger_forward.11} parent=0 // loop_exit
    _

// kernel: bridger_forward.10
$region0: #{bridger_forward.10}
  #allocation0 [shape = 'u32[]', space=smem, size = 0x4, offset = 0x4, fixed_abs, tag = 'smem constant byte address 0x4 - core index']
  #allocation1 [shape = 'u32[144,128]{1,0:T(1,128)}', space=vmem, size = 0x12000, scoped, tag = 'internal scratch']
  %s0 = inlined_call_operand.vmem [shape: bf16[128,128], index: 0, kind: input, shape index: {}]
  %s1 = inlined_call_operand.vmem [shape: bf16[128,32], index: 1, kind: input, shape index: {}]
  %s2 = inlined_call_operand.vmem [shape: f32[1,32], index: 2, kind: input, shape index: {}]
  %s3 = inlined_call_operand.vmem [shape: f32[1,32], index: 3, kind: input, shape index: {}]
  %s4 = inlined_call_operand.vmem [shape: f32[1,32], index: 4, kind: input, shape index: {}]
  %s5 = inlined_call_operand.vmem [shape: bf16[128,32], index: 5, kind: output, shape index: {}]
  %s6 = sld [smem:[#allocation0]]
  $region53: #{bridger_forward.10} parent=0
    _
  %s8 = ssub.s32 1, %s6
  %s9 = scalar_select 0, %s8, %s6
  loop: start=0, step=1, limit=4
  $region2: #{bridger_forward.10} parent=0 // loop_pre_header
    _
  $region3: #{bridger_forward.10} parent=0 // loop_header
    %s11 = sphi 0, %s15
    %p12 = scmp.ge.s32.totalorder %s11, 4
    %s21 = sphi 0, %s23
    %s24 = sphi 0, %s21
    %s25 = sphi 0, %s24
    %s41 = sphi 0, %s25
    %s45 = sphi 0, %s45
    %s47 = sphi 0, %s45
    %s48 = sphi 0, %s47
    %s62 = sphi 0, %s48
    %s66 = sphi 0, %s66
    %s68 = sphi 0, %s66
    %s69 = sphi 0, %s68
    %s83 = sphi 0, %s69
    %s87 = sphi 0, %s87
    %s89 = sphi 0, %s87
    %s90 = sphi 0, %s89
    %s104 = sphi 0, %s90
    %s108 = sphi 0, %s108
    %s110 = sphi 0, %s108
    %s111 = sphi 0, %s110
    %s125 = sphi 0, %s111
    %s131 = sphi 0, %s133
    %s134 = sphi 0, %s131
    %s135 = sphi 0, %s134
    %s151 = sphi 0, %s135
  $region4: #{bridger_forward.10} parent=0 // loop_header_branch
    %14 = sbr.rel (%p12) target = $region8
  $region5: #{bridger_forward.10} parent=0 // loop_body
    %s16 = ssub.s32 %s11, 1
    %s17 = ssub.s32 %s11, 2
    %s18 = sadd.s32 %s11, 1
    %s19 = ssub.s32 %s11, %s18
    %p20 = scmp.eq.s32.totalorder %s19, 0
    %s22 = sadd.s32 %s21, 1
    %s23 = scalar_select %p20, %s21, %s22
    %p26 = pneg %p20
    %p27 = scmp.eq.s32.totalorder %s11, 1
    %p28 = por %p26, %p27
    %p29 = scmp.ne.s32.totalorder %s21, %s24
    %p30 = scmp.eq.s32.totalorder %s11, 0
    %p31 = por %p29, %p30
    %p32 = scmp.ne.s32.totalorder %s21, %s24
    %p33 = scmp.eq.s32.totalorder %s16, 1
    %p34 = por %p32, %p33
    %p35 = scmp.ne.s32.totalorder %s24, %s25
    %p36 = scmp.eq.s32.totalorder %s16, 0
    %p37 = por %p35, %p36
    %p38 = scmp.ne.s32.totalorder %s24, %s25
    %p39 = scmp.eq.s32.totalorder %s17, 1
    %p40 = por %p38, %p39
    %p42 = scmp.ne.s32.totalorder %s25, %s41
    %p43 = scmp.eq.s32.totalorder %s17, 0
    %p44 = por %p42, %p43
    %s46 = sadd.s32 %s45, 1
    %p49 = scmp.eq.s32.totalorder %s11, 1
    %p50 = scmp.ne.s32.totalorder %s45, %s47
    %p51 = scmp.eq.s32.totalorder %s11, 0
    %p52 = por %p50, %p51
    %p53 = scmp.ne.s32.totalorder %s45, %s47
    %p54 = scmp.eq.s32.totalorder %s16, 1
    %p55 = por %p53, %p54
    %p56 = scmp.ne.s32.totalorder %s47, %s48
    %p57 = scmp.eq.s32.totalorder %s16, 0
    %p58 = por %p56, %p57
    %p59 = scmp.ne.s32.totalorder %s47, %s48
    %p60 = scmp.eq.s32.totalorder %s17, 1
    %p61 = por %p59, %p60
    %p63 = scmp.ne.s32.totalorder %s48, %s62
    %p64 = scmp.eq.s32.totalorder %s17, 0
    %p65 = por %p63, %p64
    %s67 = sadd.s32 %s66, 1
    %p70 = scmp.eq.s32.totalorder %s11, 1
    %p71 = scmp.ne.s32.totalorder %s66, %s68
    %p72 = scmp.eq.s32.totalorder %s11, 0
    %p73 = por %p71, %p72
    %p74 = scmp.ne.s32.totalorder %s66, %s68
    %p75 = scmp.eq.s32.totalorder %s16, 1
    %p76 = por %p74, %p75
    %p77 = scmp.ne.s32.totalorder %s68, %s69
    %p78 = scmp.eq.s32.totalorder %s16, 0
    %p79 = por %p77, %p78
    %p80 = scmp.ne.s32.totalorder %s68, %s69
    %p81 = scmp.eq.s32.totalorder %s17, 1
    %p82 = por %p80, %p81
    %p84 = scmp.ne.s32.totalorder %s69, %s83
    %p85 = scmp.eq.s32.totalorder %s17, 0
    %p86 = por %p84, %p85
    %s88 = sadd.s32 %s87, 1
    %p91 = scmp.eq.s32.totalorder %s11, 1
    %p92 = scmp.ne.s32.totalorder %s87, %s89
    %p93 = scmp.eq.s32.totalorder %s11, 0
    %p94 = por %p92, %p93
    %p95 = scmp.ne.s32.totalorder %s87, %s89
    %p96 = scmp.eq.s32.totalorder %s16, 1
    %p97 = por %p95, %p96
    %p98 = scmp.ne.s32.totalorder %s89, %s90
    %p99 = scmp.eq.s32.totalorder %s16, 0
    %p100 = por %p98, %p99
    %p101 = scmp.ne.s32.totalorder %s89, %s90
    %p102 = scmp.eq.s32.totalorder %s17, 1
    %p103 = por %p101, %p102
    %p105 = scmp.ne.s32.totalorder %s90, %s104
    %p106 = scmp.eq.s32.totalorder %s17, 0
    %p107 = por %p105, %p106
    %s109 = sadd.s32 %s108, 1
    %p112 = scmp.eq.s32.totalorder %s11, 1
    %p113 = scmp.ne.s32.totalorder %s108, %s110
    %p114 = scmp.eq.s32.totalorder %s11, 0
    %p115 = por %p113, %p114
    %p116 = scmp.ne.s32.totalorder %s108, %s110
    %p117 = scmp.eq.s32.totalorder %s16, 1
    %p118 = por %p116, %p117
    %p119 = scmp.ne.s32.totalorder %s110, %s111
    %p120 = scmp.eq.s32.totalorder %s16, 0
    %p121 = por %p119, %p120
    %p122 = scmp.ne.s32.totalorder %s110, %s111
    %p123 = scmp.eq.s32.totalorder %s17, 1
    %p124 = por %p122, %p123
    %p126 = scmp.ne.s32.totalorder %s111, %s125
    %p127 = scmp.eq.s32.totalorder %s17, 0
    %p128 = por %p126, %p127
    %s129 = ssub.s32 %s11, %s18
    %p130 = scmp.eq.s32.totalorder %s129, 0
    %s132 = sadd.s32 %s131, 1
    %s133 = scalar_select %p130, %s131, %s132
    %p136 = pneg %p130
    %p137 = scmp.eq.s32.totalorder %s11, 1
    %p138 = por %p136, %p137
    %p139 = scmp.ne.s32.totalorder %s131, %s134
    %p140 = scmp.eq.s32.totalorder %s11, 0
    %p141 = por %p139, %p140
    %p142 = scmp.ne.s32.totalorder %s131, %s134
    %p143 = scmp.eq.s32.totalorder %s16, 1
    %p144 = por %p142, %p143
    %p145 = scmp.ne.s32.totalorder %s134, %s135
    %p146 = scmp.eq.s32.totalorder %s16, 0
    %p147 = por %p145, %p146
    %p148 = scmp.ne.s32.totalorder %s134, %s135
    %p149 = scmp.eq.s32.totalorder %s17, 1
    %p150 = por %p148, %p149
    %p152 = scmp.ne.s32.totalorder %s135, %s151
    %p153 = scmp.eq.s32.totalorder %s17, 0
    %p154 = por %p152, %p153
    %p155 = scmp.le.s32.totalorder 1, %s11
    %p156 = scmp.lt.s32.totalorder %s11, 3
    %p157 = pnand %p155, %p156
    %p158 = pneg %p157
    // Predicated region
    $region9: #{bridger_forward.10} parent=5 // pred_check
      _
    $region10: #{bridger_forward.10} parent=5 // pred_check_branch
      %160 = sbr.rel (%p157) target = $region12
    $region11: #{bridger_forward.10} parent=5 // pred_region
      %s161 = ssub.s32 %s11, 1
      // Predicated region
      $region13: #{bridger_forward.10} parent=11 // pred_check
        %p162 = pneg %p58
      $region14: #{bridger_forward.10} parent=11 // pred_check_branch
        %164 = sbr.rel (%p162) target = $region16
      $region15: #{bridger_forward.10} parent=11 // pred_region
        _
      $region16: #{bridger_forward.10} parent=11 // pred_fallthru
        _
      // Predicated region
      $region17: #{bridger_forward.10} parent=11 // pred_check
        %p165 = pneg %p79
      $region18: #{bridger_forward.10} parent=11 // pred_check_branch
        %167 = sbr.rel (%p165) target = $region20
      $region19: #{bridger_forward.10} parent=11 // pred_region
        _
      $region20: #{bridger_forward.10} parent=11 // pred_fallthru
        _
      // Predicated region
      $region21: #{bridger_forward.10} parent=11 // pred_check
        %p168 = pneg %p100
      $region22: #{bridger_forward.10} parent=11 // pred_check_branch
        %170 = sbr.rel (%p168) target = $region24
      $region23: #{bridger_forward.10} parent=11 // pred_region
        _
      $region24: #{bridger_forward.10} parent=11 // pred_fallthru
        _
      // Predicated region
      $region25: #{bridger_forward.10} parent=11 // pred_check
        %p171 = pneg %p121
      $region26: #{bridger_forward.10} parent=11 // pred_check_branch
        %173 = sbr.rel (%p171) target = $region28
      $region27: #{bridger_forward.10} parent=11 // pred_region
        _
      $region28: #{bridger_forward.10} parent=11 // pred_fallthru
        _
    $region12: #{bridger_forward.10} parent=5 // pred_fallthru
      _
    %p174 = scmp.lt.s32.totalorder %s11, 2
    // Predicated region
    $region29: #{bridger_forward.10} parent=5 // pred_check
      %p175 = pneg %p174
    $region30: #{bridger_forward.10} parent=5 // pred_check_branch
      %177 = sbr.rel (%p175) target = $region32
    $region31: #{bridger_forward.10} parent=5 // pred_region
      // Predicated region
      $region33: #{bridger_forward.10} parent=31 // pred_check
        %p178 = pneg %p31
      $region34: #{bridger_forward.10} parent=31 // pred_check_branch
        %180 = sbr.rel (%p178) target = $region36
      $region35: #{bridger_forward.10} parent=31 // pred_region
        %s181 = smul.u32 8, %s11
        %p182 = scmp.lt.s32.totalorder %s181, 15
        %s183 = scalar_select %p182, %s181, 15
        %s184 = smul.addr %s183, 4
        %s185 = scalar_lea.vmem %s0, %s184
        %s186 = smul.u32 8, %s11
      $region36: #{bridger_forward.10} parent=31 // pred_fallthru
        _
    $region32: #{bridger_forward.10} parent=5 // pred_fallthru
      _
    %p187 = scmp.le.s32.totalorder 1, %s11
    %p188 = scmp.lt.s32.totalorder %s11, 3
    %p189 = pnand %p187, %p188
    %p190 = pneg %p189
    // Predicated region
    $region37: #{bridger_forward.10} parent=5 // pred_check
      _
    $region38: #{bridger_forward.10} parent=5 // pred_check_branch
      %192 = sbr.rel (%p189) target = $region40
    $region39: #{bridger_forward.10} parent=5 // pred_region
      %s193 = ssub.s32 %s11, 1
      %s194 = smul.u32 8, %s16
      %p195 = scmp.lt.s32.totalorder %s194, 15
      %s196 = scalar_select %p195, %s194, 15
      %s197 = smul.addr %s196, 4
      %s198 = scalar_lea.vmem %s0, %s197
      %p199 = pneg %p37
      %p200 = pneg %p34
      %p201 = pneg %p58
      %p202 = pneg %p55
      %p203 = pneg %p79
      %p204 = pneg %p76
      %p205 = pneg %p100
      %p206 = pneg %p97
      %p207 = pneg %p121
      %p208 = pneg %p118
      %p209 = pneg %p147
      %p210 = pneg %p144
      %s211 = smul.u32 8, %s16
      %p212 = scmp.lt.s32.totalorder %s211, 15
      %s213 = scalar_select %p212, %s211, 15
      %s214 = smul.addr %s213, 4
      %s215 = scalar_lea.vmem %s5, %s214
      %s216 = smul.u32 8, %s16
      %p217 = scmp.lt.s32.totalorder %s216, 15
      %s218 = scalar_select %p217, %s216, 15
      %s219 = smul.addr %s218, 4
      %s220 = scalar_lea.vmem %s0, %s219
      %s221 = smul.u32 8, %s16
      %s222 = smul.u32 8, %s16
      %p223 = scmp.lt.s32.totalorder %s222, 15
      %s224 = scalar_select %p223, %s222, 15
      %s225 = smul.addr %s224, 4
      %s226 = scalar_lea.vmem %s5, %s225
      %s227 = smul.u32 8, %s16
      %v229 = vld [vmem:[%s220] sm:$0xf]
      %v230 = vld [vmem:[%s220 + $0x4] sm:$0xf]
      %v231 = vld [vmem:[%s220 + $0x8] sm:$0xf]
      %v232 = vld [vmem:[%s220 + $0xc] sm:$0xf]
      %v233 = vld [vmem:[%s220 + $0x10] sm:$0xf]
      %v234 = vld [vmem:[%s220 + $0x14] sm:$0xf]
      %v235 = vld [vmem:[%s220 + $0x18] sm:$0xf]
      %v236 = vld [vmem:[%s220 + $0x1c] sm:$0xf]
      %v237 = vld [vmem:[%s1] sm:$0xf]
      %v238 = vld [vmem:[%s1 + $0x4] sm:$0xf]
      %v239 = vld [vmem:[%s1 + $0x8] sm:$0xf]
      %v240 = vld [vmem:[%s1 + $0xc] sm:$0xf]
      %v241 = vld [vmem:[%s1 + $0x10] sm:$0xf]
      %v242 = vld [vmem:[%s1 + $0x14] sm:$0xf]
      %v243 = vld [vmem:[%s1 + $0x18] sm:$0xf]
      %v244 = vld [vmem:[%s1 + $0x1c] sm:$0xf]
      %v245 = vld [vmem:[%s1 + $0x20] sm:$0xf]
      %v246 = vld [vmem:[%s1 + $0x24] sm:$0xf]
      %v247 = vld [vmem:[%s1 + $0x28] sm:$0xf]
      %v248 = vld [vmem:[%s1 + $0x2c] sm:$0xf]
      %v249 = vld [vmem:[%s1 + $0x30] sm:$0xf]
      %v250 = vld [vmem:[%s1 + $0x34] sm:$0xf]
      %v251 = vld [vmem:[%s1 + $0x38] sm:$0xf]
      %v252 = vld [vmem:[%s1 + $0x3c] sm:$0xf]
      %v253 = vld [vmem:[%s2] sm:$0x1]
      %v255 = vlaneseq
      %v256 = vshrl.u32 %v255, 7
      %v257 = vsub.s32 0, %v256
      %v258 = vrot.slane %v253, %v257
      %v268 = vunpack.c.l.b16 %v229
      %v269 = vunpack.c.l.b16 %v230
      %v270 = vunpack.c.l.b16 %v231
      %v271 = vunpack.c.l.b16 %v232
      %v272 = vunpack.c.l.b16 %v233
      %v273 = vunpack.c.l.b16 %v234
      %v274 = vunpack.c.l.b16 %v235
      %v275 = vunpack.c.l.b16 %v236
      %v276 = vpack.c.b16 %v269, %v268
      %v277 = vpack.c.b16 %v271, %v270
      %v278 = vpack.c.b16 %v273, %v272
      %v279 = vpack.c.b16 %v275, %v274
      %v300 = vunpack.c.l.b16 %v237
      %v301 = vunpack.c.l.b16 %v238
      %v302 = vunpack.c.l.b16 %v239
      %v303 = vunpack.c.l.b16 %v240
      %v304 = vunpack.c.l.b16 %v241
      %v305 = vunpack.c.l.b16 %v242
      %v306 = vunpack.c.l.b16 %v243
      %v307 = vunpack.c.l.b16 %v244
      %v308 = vunpack.c.l.b16 %v245
      %v309 = vunpack.c.l.b16 %v246
      %v310 = vunpack.c.l.b16 %v247
      %v311 = vunpack.c.l.b16 %v248
      %v312 = vunpack.c.l.b16 %v249
      %v313 = vunpack.c.l.b16 %v250
      %v314 = vunpack.c.l.b16 %v251
      %v315 = vunpack.c.l.b16 %v252
      %v316 = vpack.c.b16 %v301, %v300
      %v317 = vpack.c.b16 %v303, %v302
      %v318 = vpack.c.b16 %v305, %v304
      %v319 = vpack.c.b16 %v307, %v306
      %v320 = vpack.c.b16 %v309, %v308
      %v321 = vpack.c.b16 %v311, %v310
      %v322 = vpack.c.b16 %v313, %v312
      %v323 = vpack.c.b16 %v315, %v314
      %332 = vmatprep.subr.bf16.mxu0 0
      %333 = vmatpush1.bf16.msra.mxu0 %v316
      %334 = vmatprep.subr.bf16.mxu0 0
      %335 = vmatpush1.bf16.msra.mxu0 %v317
      %336 = vmatprep.subr.bf16.mxu0 0
      %337 = vmatpush1.bf16.msra.mxu0 %v318
      %338 = vmatprep.subr.bf16.mxu0 0
      %339 = vmatpush1.bf16.msra.mxu0 %v319
      %340 = vmatprep.subr.bf16.mxu0 0
      %341 = vmatpush1.bf16.msra.mxu0 %v320
      %342 = vmatprep.subr.bf16.mxu0 0
      %343 = vmatpush1.bf16.msra.mxu0 %v321
      %344 = vmatprep.subr.bf16.mxu0 0
      %345 = vmatpush1.bf16.msra.mxu0 %v322
      %346 = vmatprep.subr.bf16.mxu0 0
      %347 = vmatpush1.bf16.msra.mxu0 %v323
      %348 = vmatprep.subr.bf16.mxu0 0
      %349 = vmatpush1.bf16.msra.mxu0 0
      %350 = vmatprep.subr.bf16.mxu0 0
      %351 = vmatpush1.bf16.msra.mxu0 0
      %352 = vmatprep.subr.bf16.mxu0 0
      %353 = vmatpush1.bf16.msra.mxu0 0
      %354 = vmatprep.subr.bf16.mxu0 0
      %355 = vmatpush1.bf16.msra.mxu0 0
      %356 = vmatprep.subr.bf16.mxu0 0
      %357 = vmatpush1.bf16.msra.mxu0 0
      %358 = vmatprep.subr.bf16.mxu0 0
      %359 = vmatpush1.bf16.msra.mxu0 0
      %360 = vmatprep.subr.bf16.mxu0 0
      %361 = vmatpush1.bf16.msra.mxu0 0
      %362 = vmatprep.subr.bf16.mxu0 0
      %363 = vmatpush1.bf16.msra.mxu0 0
      %364 = vmatprep.mubr.bf16.mxu0 0
      %365 = vmatmul.mubr.bf16.gmra.mrb[0].mxu0 %v276
      %v366 = vpop.f32.mrb[0].mxu0
      %v367 = vadd.f32 %v258, %v366
      %v368 = vpop.f32.mrb[0].mxu0
      %v369 = vpop.f32.mrb[0].mxu0
      %v370 = vadd.f32 %v258, %v369
      %v371 = vpop.f32.mrb[0].mxu0
      %372 = vmatprep.mubr.bf16.mxu0 0
      %373 = vmatmul.mubr.bf16.gmra.mrb[0].mxu0 %v277
      %v374 = vpop.f32.mrb[0].mxu0
      %v375 = vadd.f32 %v258, %v374
      %v376 = vpop.f32.mrb[0].mxu0
      %v377 = vpop.f32.mrb[0].mxu0
      %v378 = vadd.f32 %v258, %v377
      %v379 = vpop.f32.mrb[0].mxu0
      %380 = vmatprep.mubr.bf16.mxu0 0
      %381 = vmatmul.mubr.bf16.gmra.mrb[0].mxu0 %v278
      %v382 = vpop.f32.mrb[0].mxu0
      %v383 = vadd.f32 %v258, %v382
      %v384 = vpop.f32.mrb[0].mxu0
      %v385 = vpop.f32.mrb[0].mxu0
      %v386 = vadd.f32 %v258, %v385
      %v387 = vpop.f32.mrb[0].mxu0
      %388 = vmatprep.mubr.bf16.mxu0 0
      %389 = vmatmul.mubr.bf16.gmra.mrb[0].mxu0 %v279
      %v390 = vpop.f32.mrb[0].mxu0
      %v391 = vadd.f32 %v258, %v390
      %v392 = vpop.f32.mrb[0].mxu0
      %v393 = vpop.f32.mrb[0].mxu0
      %v394 = vadd.f32 %v258, %v393
      %v395 = vpop.f32.mrb[0].mxu0
      %396 = vdwg.mxu0
      %v397 = vld [vmem:[%s3] sm:$0x1]
      %v398 = vld [vmem:[%s4] sm:$0x1]
      %vm399 = vcmask 261120
      %v400 = vsel %vm399, %v367, 0.0
      %401 = vadd.xlane.f32.xlu0 %v400
      %v402 = vpop.xlane.xlu0 %401
      %v403 = vsel %vm399, %v370, 0.0
      %404 = vadd.xlane.f32.xlu0 %v403
      %v405 = vpop.xlane.xlu0 %404
      %v406 = vsel %vm399, %v375, 0.0
      %407 = vadd.xlane.f32.xlu0 %v406
      %v408 = vpop.xlane.xlu0 %407
      %v409 = vsel %vm399, %v378, 0.0
      %410 = vadd.xlane.f32.xlu0 %v409
      %v411 = vpop.xlane.xlu0 %410
      %v412 = vsel %vm399, %v383, 0.0
      %413 = vadd.xlane.f32.xlu0 %v412
      %v414 = vpop.xlane.xlu0 %413
      %v415 = vsel %vm399, %v386, 0.0
      %416 = vadd.xlane.f32.xlu0 %v415
      %v417 = vpop.xlane.xlu0 %416
      %v418 = vsel %vm399, %v391, 0.0
      %419 = vadd.xlane.f32.xlu0 %v418
      %v420 = vpop.xlane.xlu0 %419
      %v421 = vsel %vm399, %v394, 0.0
      %422 = vadd.xlane.f32.xlu0 %v421
      %v423 = vpop.xlane.xlu0 %422
      %v424 = vrcp.pop 32.0
      %v425 = vmul.f32 %v402, %v424
      %v426 = vmul.f32 %v405, %v424
      %v427 = vmul.f32 %v408, %v424
      %v428 = vmul.f32 %v411, %v424
      %v429 = vmul.f32 %v414, %v424
      %v430 = vmul.f32 %v417, %v424
      %v431 = vmul.f32 %v420, %v424
      %v432 = vmul.f32 %v423, %v424
      %v433 = vsub.f32 %v367, %v425
      %v434 = vsub.f32 %v370, %v426
      %v435 = vsub.f32 %v375, %v427
      %v436 = vsub.f32 %v378, %v428
      %v437 = vsub.f32 %v383, %v429
      %v438 = vsub.f32 %v386, %v430
      %v439 = vsub.f32 %v391, %v431
      %v440 = vsub.f32 %v394, %v432
      %v441 = vmul.f32 %v433, %v433
      %v442 = vmul.f32 %v434, %v434
      %v443 = vmul.f32 %v435, %v435
      %v444 = vmul.f32 %v436, %v436
      %v445 = vmul.f32 %v437, %v437
      %v446 = vmul.f32 %v438, %v438
      %v447 = vmul.f32 %v439, %v439
      %v448 = vmul.f32 %v440, %v440
      %v449 = vsel %vm399, %v441, 0.0
      %450 = vadd.xlane.f32.xlu0 %v449
      %v451 = vpop.xlane.xlu0 %450
      %v452 = vsel %vm399, %v442, 0.0
      %453 = vadd.xlane.f32.xlu0 %v452
      %v454 = vpop.xlane.xlu0 %453
      %v455 = vsel %vm399, %v443, 0.0
      %456 = vadd.xlane.f32.xlu0 %v455
      %v457 = vpop.xlane.xlu0 %456
      %v458 = vsel %vm399, %v444, 0.0
      %459 = vadd.xlane.f32.xlu0 %v458
      %v460 = vpop.xlane.xlu0 %459
      %v461 = vsel %vm399, %v445, 0.0
      %462 = vadd.xlane.f32.xlu0 %v461
      %v463 = vpop.xlane.xlu0 %462
      %v464 = vsel %vm399, %v446, 0.0
      %465 = vadd.xlane.f32.xlu0 %v464
      %v466 = vpop.xlane.xlu0 %465
      %v467 = vsel %vm399, %v447, 0.0
      %468 = vadd.xlane.f32.xlu0 %v467
      %v469 = vpop.xlane.xlu0 %468
      %v470 = vsel %vm399, %v448, 0.0
      %471 = vadd.xlane.f32.xlu0 %v470
      %v472 = vpop.xlane.xlu0 %471
      %v473 = vmul.f32 %v451, %v424
      %v474 = vmul.f32 %v454, %v424
      %v475 = vmul.f32 %v457, %v424
      %v476 = vmul.f32 %v460, %v424
      %v477 = vmul.f32 %v463, %v424
      %v478 = vmul.f32 %v466, %v424
      %v479 = vmul.f32 %v469, %v424
      %v480 = vmul.f32 %v472, %v424
      %v481 = vadd.f32 %v473, 1e-05
      %v482 = vadd.f32 %v474, 1e-05
      %v483 = vadd.f32 %v475, 1e-05
      %v484 = vadd.f32 %v476, 1e-05
      %v485 = vadd.f32 %v477, 1e-05
      %v486 = vadd.f32 %v478, 1e-05
      %v487 = vadd.f32 %v479, 1e-05
      %v488 = vadd.f32 %v480, 1e-05
      %v489 = vrsqrt.pop %v481
      %v490 = vrsqrt.pop %v482
      %v491 = vrsqrt.pop %v483
      %v492 = vrsqrt.pop %v484
      %v493 = vrsqrt.pop %v485
      %v494 = vrsqrt.pop %v486
      %v495 = vrsqrt.pop %v487
      %v496 = vrsqrt.pop %v488
      %v497 = vmul.f32 %v433, %v489
      %v498 = vmul.f32 %v434, %v490
      %v499 = vmul.f32 %v435, %v491
      %v500 = vmul.f32 %v436, %v492
      %v501 = vmul.f32 %v437, %v493
      %v502 = vmul.f32 %v438, %v494
      %v503 = vmul.f32 %v439, %v495
      %v504 = vmul.f32 %v440, %v496
      %v506 = vlaneseq
      %v507 = vshrl.u32 %v506, 7
      %v508 = vsub.s32 0, %v507
      %v509 = vrot.slane %v397, %v508
      %v511 = vmul.f32 %v497, %v509
      %v512 = vmul.f32 %v498, %v509
      %v513 = vmul.f32 %v499, %v509
      %v514 = vmul.f32 %v500, %v509
      %v515 = vmul.f32 %v501, %v509
      %v516 = vmul.f32 %v502, %v509
      %v517 = vmul.f32 %v503, %v509
      %v518 = vmul.f32 %v504, %v509
      %v520 = vlaneseq
      %v521 = vshrl.u32 %v520, 7
      %v522 = vsub.s32 0, %v521
      %v523 = vrot.slane %v398, %v522
      %v525 = vadd.f32 %v511, %v523
      %v526 = vadd.f32 %v512, %v523
      %v527 = vadd.f32 %v513, %v523
      %v528 = vadd.f32 %v514, %v523
      %v529 = vadd.f32 %v515, %v523
      %v530 = vadd.f32 %v516, %v523
      %v531 = vadd.f32 %v517, %v523
      %v532 = vadd.f32 %v518, %v523
      %v533 = vpack.c.bf16 %v526, %v525
      %v534 = vpack.c.bf16 %v528, %v527
      %v535 = vpack.c.bf16 %v530, %v529
      %v536 = vpack.c.bf16 %v532, %v531
      %v541 = vunpack.c.l.b16 %v533
      %v542 = vunpack.c.h.b16 %v533
      %v543 = vunpack.c.l.b16 %v534
      %v544 = vunpack.c.h.b16 %v534
      %v545 = vunpack.c.l.b16 %v535
      %v546 = vunpack.c.h.b16 %v535
      %v547 = vunpack.c.l.b16 %v536
      %v548 = vunpack.c.h.b16 %v536
      %v549 = vpack.c.b16 %v541, %v541
      %v550 = vpack.c.b16 %v542, %v542
      %v551 = vpack.c.b16 %v543, %v543
      %v552 = vpack.c.b16 %v544, %v544
      %v553 = vpack.c.b16 %v545, %v545
      %v554 = vpack.c.b16 %v546, %v546
      %v555 = vpack.c.b16 %v547, %v547
      %v556 = vpack.c.b16 %v548, %v548
      %vm565 = vcmask 257024
      %566 = vst.msk [vmem:[%s226] sm:$0xf] %vm565, %v549
      %567 = vst.msk [vmem:[%s226 + $0x4] sm:$0xf] %vm565, %v550
      %568 = vst.msk [vmem:[%s226 + $0x8] sm:$0xf] %vm565, %v551
      %569 = vst.msk [vmem:[%s226 + $0xc] sm:$0xf] %vm565, %v552
      %570 = vst.msk [vmem:[%s226 + $0x10] sm:$0xf] %vm565, %v553
      %571 = vst.msk [vmem:[%s226 + $0x14] sm:$0xf] %vm565, %v554
      %572 = vst.msk [vmem:[%s226 + $0x18] sm:$0xf] %vm565, %v555
      %573 = vst.msk [vmem:[%s226 + $0x1c] sm:$0xf] %vm565, %v556
      %s574 = smul.u32 8, %s16
      %p575 = scmp.lt.s32.totalorder %s574, 15
      %s576 = scalar_select %p575, %s574, 15
      %s577 = smul.addr %s576, 4
      %s578 = scalar_lea.vmem %s5, %s577
      // Predicated region
      $region41: #{bridger_forward.10} parent=39 // pred_check
        %p579 = pneg %p144
      $region42: #{bridger_forward.10} parent=39 // pred_check_branch
        %581 = sbr.rel (%p579) target = $region44
      $region43: #{bridger_forward.10} parent=39 // pred_region
        %s582 = smul.u32 8, %s16
      $region44: #{bridger_forward.10} parent=39 // pred_fallthru
        _
    $region40: #{bridger_forward.10} parent=5 // pred_fallthru
      _
    %p583 = scmp.le.s32.totalorder 2, %s11
    // Predicated region
    $region45: #{bridger_forward.10} parent=5 // pred_check
      %p584 = pneg %p583
    $region46: #{bridger_forward.10} parent=5 // pred_check_branch
      %586 = sbr.rel (%p584) target = $region48
    $region47: #{bridger_forward.10} parent=5 // pred_region
      %s587 = ssub.s32 %s11, 2
      // Predicated region
      $region49: #{bridger_forward.10} parent=47 // pred_check
        %p588 = pneg %p150
      $region50: #{bridger_forward.10} parent=47 // pred_check_branch
        %590 = sbr.rel (%p588) target = $region52
      $region51: #{bridger_forward.10} parent=47 // pred_region
        %s591 = smul.u32 8, %s17
        %p592 = scmp.lt.s32.totalorder %s591, 15
        %s593 = scalar_select %p592, %s591, 15
        %s594 = smul.addr %s593, 4
        %s595 = scalar_lea.vmem %s5, %s594
      $region52: #{bridger_forward.10} parent=47 // pred_fallthru
        _
    $region48: #{bridger_forward.10} parent=5 // pred_fallthru
      _
  $region6: #{bridger_forward.10} parent=0 // loop_footer
    %s15 = sadd.s32 1, %s11
  $region7: #{bridger_forward.10} parent=0 // loop_footer_branch
    %10 = sbr.rel target = $region3
  $region8: #{bridger_forward.10} parent=0 // loop_exit
    _

// kernel: bridger_forward.16
$region0: #{bridger_forward.16}
  #allocation0 [shape = 'u32[]', space=smem, size = 0x4, offset = 0x4, fixed_abs, tag = 'smem constant byte address 0x4 - core index']
  #allocation1 [shape = 'u32[144,128]{1,0:T(1,128)}', space=vmem, size = 0x12000, scoped, tag = 'internal scratch']
  %s0 = inlined_call_operand.vmem [shape: bf16[16,32], index: 0, kind: input, shape index: {}]
  %s1 = inlined_call_operand.vmem [shape: bf16[128,32], index: 1, kind: input, shape index: {}]
  %s2 = inlined_call_operand.vmem [shape: bf16[32,32], index: 2, kind: input, shape index: {}]
  %s3 = inlined_call_operand.vmem [shape: f32[1,32], index: 3, kind: input, shape index: {}]
  %s4 = inlined_call_operand.vmem [shape: bf16[32,64], index: 4, kind: input, shape index: {}]
  %s5 = inlined_call_operand.vmem [shape: f32[1,64], index: 5, kind: input, shape index: {}]
  %s6 = inlined_call_operand.vmem [shape: bf16[32,32], index: 6, kind: input, shape index: {}]
  %s7 = inlined_call_operand.vmem [shape: f32[1,32], index: 7, kind: input, shape index: {}]
  %s8 = inlined_call_operand.vmem [shape: f32[1,32], index: 8, kind: input, shape index: {}]
  %s9 = inlined_call_operand.vmem [shape: f32[1,32], index: 9, kind: input, shape index: {}]
  %s10 = inlined_call_operand.vmem [shape: bf16[16,32], index: 10, kind: output, shape index: {}]
  %s11 = sld [smem:[#allocation0]]
  $region73: #{bridger_forward.16} parent=0
    _
  %s13 = ssub.s32 1, %s11
  %s14 = scalar_select 0, %s13, %s11
  loop: start=0, step=1, limit=4
  $region2: #{bridger_forward.16} parent=0 // loop_pre_header
    _
  $region3: #{bridger_forward.16} parent=0 // loop_header
    %s16 = sphi 0, %s20
    %p17 = scmp.ge.s32.totalorder %s16, 4
    %s26 = sphi 0, %s28
    %s29 = sphi 0, %s26
    %s30 = sphi 0, %s29
    %s46 = sphi 0, %s30
    %s52 = sphi 0, %s54
    %s55 = sphi 0, %s52
    %s56 = sphi 0, %s55
    %s72 = sphi 0, %s56
    %s76 = sphi 0, %s76
    %s78 = sphi 0, %s76
    %s79 = sphi 0, %s78
    %s93 = sphi 0, %s79
    %s97 = sphi 0, %s97
    %s99 = sphi 0, %s97
    %s100 = sphi 0, %s99
    %s114 = sphi 0, %s100
    %s118 = sphi 0, %s118
    %s120 = sphi 0, %s118
    %s121 = sphi 0, %s120
    %s135 = sphi 0, %s121
    %s139 = sphi 0, %s139
    %s141 = sphi 0, %s139
    %s142 = sphi 0, %s141
    %s156 = sphi 0, %s142
    %s160 = sphi 0, %s160
    %s162 = sphi 0, %s160
    %s163 = sphi 0, %s162
    %s177 = sphi 0, %s163
    %s181 = sphi 0, %s181
    %s183 = sphi 0, %s181
    %s184 = sphi 0, %s183
    %s198 = sphi 0, %s184
    %s202 = sphi 0, %s202
    %s204 = sphi 0, %s202
    %s205 = sphi 0, %s204
    %s219 = sphi 0, %s205
    %s223 = sphi 0, %s223
    %s225 = sphi 0, %s223
    %s226 = sphi 0, %s225
    %s240 = sphi 0, %s226
    %s246 = sphi 0, %s248
    %s249 = sphi 0, %s246
    %s250 = sphi 0, %s249
    %s266 = sphi 0, %s250
  $region4: #{bridger_forward.16} parent=0 // loop_header_branch
    %19 = sbr.rel (%p17) target = $region8
  $region5: #{bridger_forward.16} parent=0 // loop_body
    %s21 = ssub.s32 %s16, 1
    %s22 = ssub.s32 %s16, 2
    %s23 = sadd.s32 %s16, 1
    %s24 = ssub.s32 %s16, %s23
    %p25 = scmp.eq.s32.totalorder %s24, 0
    %s27 = sadd.s32 %s26, 1
    %s28 = scalar_select %p25, %s26, %s27
    %p31 = pneg %p25
    %p32 = scmp.eq.s32.totalorder %s16, 1
    %p33 = por %p31, %p32
    %p34 = scmp.ne.s32.totalorder %s26, %s29
    %p35 = scmp.eq.s32.totalorder %s16, 0
    %p36 = por %p34, %p35
    %p37 = scmp.ne.s32.totalorder %s26, %s29
    %p38 = scmp.eq.s32.totalorder %s21, 1
    %p39 = por %p37, %p38
    %p40 = scmp.ne.s32.totalorder %s29, %s30
    %p41 = scmp.eq.s32.totalorder %s21, 0
    %p42 = por %p40, %p41
    %p43 = scmp.ne.s32.totalorder %s29, %s30
    %p44 = scmp.eq.s32.totalorder %s22, 1
    %p45 = por %p43, %p44
    %p47 = scmp.ne.s32.totalorder %s30, %s46
    %p48 = scmp.eq.s32.totalorder %s22, 0
    %p49 = por %p47, %p48
    %s50 = ssub.s32 %s16, %s23
    %p51 = scmp.eq.s32.totalorder %s50, 0
    %s53 = sadd.s32 %s52, 1
    %s54 = scalar_select %p51, %s52, %s53
    %p57 = pneg %p51
    %p58 = scmp.eq.s32.totalorder %s16, 1
    %p59 = por %p57, %p58
    %p60 = scmp.ne.s32.totalorder %s52, %s55
    %p61 = scmp.eq.s32.totalorder %s16, 0
    %p62 = por %p60, %p61
    %p63 = scmp.ne.s32.totalorder %s52, %s55
    %p64 = scmp.eq.s32.totalorder %s21, 1
    %p65 = por %p63, %p64
    %p66 = scmp.ne.s32.totalorder %s55, %s56
    %p67 = scmp.eq.s32.totalorder %s21, 0
    %p68 = por %p66, %p67
    %p69 = scmp.ne.s32.totalorder %s55, %s56
    %p70 = scmp.eq.s32.totalorder %s22, 1
    %p71 = por %p69, %p70
    %p73 = scmp.ne.s32.totalorder %s56, %s72
    %p74 = scmp.eq.s32.totalorder %s22, 0
    %p75 = por %p73, %p74
    %s77 = sadd.s32 %s76, 1
    %p80 = scmp.eq.s32.totalorder %s16, 1
    %p81 = scmp.ne.s32.totalorder %s76, %s78
    %p82 = scmp.eq.s32.totalorder %s16, 0
    %p83 = por %p81, %p82
    %p84 = scmp.ne.s32.totalorder %s76, %s78
    %p85 = scmp.eq.s32.totalorder %s21, 1
    %p86 = por %p84, %p85
    %p87 = scmp.ne.s32.totalorder %s78, %s79
    %p88 = scmp.eq.s32.totalorder %s21, 0
    %p89 = por %p87, %p88
    %p90 = scmp.ne.s32.totalorder %s78, %s79
    %p91 = scmp.eq.s32.totalorder %s22, 1
    %p92 = por %p90, %p91
    %p94 = scmp.ne.s32.totalorder %s79, %s93
    %p95 = scmp.eq.s32.totalorder %s22, 0
    %p96 = por %p94, %p95
    %s98 = sadd.s32 %s97, 1
    %p101 = scmp.eq.s32.totalorder %s16, 1
    %p102 = scmp.ne.s32.totalorder %s97, %s99
    %p103 = scmp.eq.s32.totalorder %s16, 0
    %p104 = por %p102, %p103
    %p105 = scmp.ne.s32.totalorder %s97, %s99
    %p106 = scmp.eq.s32.totalorder %s21, 1
    %p107 = por %p105, %p106
    %p108 = scmp.ne.s32.totalorder %s99, %s100
    %p109 = scmp.eq.s32.totalorder %s21, 0
    %p110 = por %p108, %p109
    %p111 = scmp.ne.s32.totalorder %s99, %s100
    %p112 = scmp.eq.s32.totalorder %s22, 1
    %p113 = por %p111, %p112
    %p115 = scmp.ne.s32.totalorder %s100, %s114
    %p116 = scmp.eq.s32.totalorder %s22, 0
    %p117 = por %p115, %p116
    %s119 = sadd.s32 %s118, 1
    %p122 = scmp.eq.s32.totalorder %s16, 1
    %p123 = scmp.ne.s32.totalorder %s118, %s120
    %p124 = scmp.eq.s32.totalorder %s16, 0
    %p125 = por %p123, %p124
    %p126 = scmp.ne.s32.totalorder %s118, %s120
    %p127 = scmp.eq.s32.totalorder %s21, 1
    %p128 = por %p126, %p127
    %p129 = scmp.ne.s32.totalorder %s120, %s121
    %p130 = scmp.eq.s32.totalorder %s21, 0
    %p131 = por %p129, %p130
    %p132 = scmp.ne.s32.totalorder %s120, %s121
    %p133 = scmp.eq.s32.totalorder %s22, 1
    %p134 = por %p132, %p133
    %p136 = scmp.ne.s32.totalorder %s121, %s135
    %p137 = scmp.eq.s32.totalorder %s22, 0
    %p138 = por %p136, %p137
    %s140 = sadd.s32 %s139, 1
    %p143 = scmp.eq.s32.totalorder %s16, 1
    %p144 = scmp.ne.s32.totalorder %s139, %s141
    %p145 = scmp.eq.s32.totalorder %s16, 0
    %p146 = por %p144, %p145
    %p147 = scmp.ne.s32.totalorder %s139, %s141
    %p148 = scmp.eq.s32.totalorder %s21, 1
    %p149 = por %p147, %p148
    %p150 = scmp.ne.s32.totalorder %s141, %s142
    %p151 = scmp.eq.s32.totalorder %s21, 0
    %p152 = por %p150, %p151
    %p153 = scmp.ne.s32.totalorder %s141, %s142
    %p154 = scmp.eq.s32.totalorder %s22, 1
    %p155 = por %p153, %p154
    %p157 = scmp.ne.s32.totalorder %s142, %s156
    %p158 = scmp.eq.s32.totalorder %s22, 0
    %p159 = por %p157, %p158
    %s161 = sadd.s32 %s160, 1
    %p164 = scmp.eq.s32.totalorder %s16, 1
    %p165 = scmp.ne.s32.totalorder %s160, %s162
    %p166 = scmp.eq.s32.totalorder %s16, 0
    %p167 = por %p165, %p166
    %p168 = scmp.ne.s32.totalorder %s160, %s162
    %p169 = scmp.eq.s32.totalorder %s21, 1
    %p170 = por %p168, %p169
    %p171 = scmp.ne.s32.totalorder %s162, %s163
    %p172 = scmp.eq.s32.totalorder %s21, 0
    %p173 = por %p171, %p172
    %p174 = scmp.ne.s32.totalorder %s162, %s163
    %p175 = scmp.eq.s32.totalorder %s22, 1
    %p176 = por %p174, %p175
    %p178 = scmp.ne.s32.totalorder %s163, %s177
    %p179 = scmp.eq.s32.totalorder %s22, 0
    %p180 = por %p178, %p179
    %s182 = sadd.s32 %s181, 1
    %p185 = scmp.eq.s32.totalorder %s16, 1
    %p186 = scmp.ne.s32.totalorder %s181, %s183
    %p187 = scmp.eq.s32.totalorder %s16, 0
    %p188 = por %p186, %p187
    %p189 = scmp.ne.s32.totalorder %s181, %s183
    %p190 = scmp.eq.s32.totalorder %s21, 1
    %p191 = por %p189, %p190
    %p192 = scmp.ne.s32.totalorder %s183, %s184
    %p193 = scmp.eq.s32.totalorder %s21, 0
    %p194 = por %p192, %p193
    %p195 = scmp.ne.s32.totalorder %s183, %s184
    %p196 = scmp.eq.s32.totalorder %s22, 1
    %p197 = por %p195, %p196
    %p199 = scmp.ne.s32.totalorder %s184, %s198
    %p200 = scmp.eq.s32.totalorder %s22, 0
    %p201 = por %p199, %p200
    %s203 = sadd.s32 %s202, 1
    %p206 = scmp.eq.s32.totalorder %s16, 1
    %p207 = scmp.ne.s32.totalorder %s202, %s204
    %p208 = scmp.eq.s32.totalorder %s16, 0
    %p209 = por %p207, %p208
    %p210 = scmp.ne.s32.totalorder %s202, %s204
    %p211 = scmp.eq.s32.totalorder %s21, 1
    %p212 = por %p210, %p211
    %p213 = scmp.ne.s32.totalorder %s204, %s205
    %p214 = scmp.eq.s32.totalorder %s21, 0
    %p215 = por %p213, %p214
    %p216 = scmp.ne.s32.totalorder %s204, %s205
    %p217 = scmp.eq.s32.totalorder %s22, 1
    %p218 = por %p216, %p217
    %p220 = scmp.ne.s32.totalorder %s205, %s219
    %p221 = scmp.eq.s32.totalorder %s22, 0
    %p222 = por %p220, %p221
    %s224 = sadd.s32 %s223, 1
    %p227 = scmp.eq.s32.totalorder %s16, 1
    %p228 = scmp.ne.s32.totalorder %s223, %s225
    %p229 = scmp.eq.s32.totalorder %s16, 0
    %p230 = por %p228, %p229
    %p231 = scmp.ne.s32.totalorder %s223, %s225
    %p232 = scmp.eq.s32.totalorder %s21, 1
    %p233 = por %p231, %p232
    %p234 = scmp.ne.s32.totalorder %s225, %s226
    %p235 = scmp.eq.s32.totalorder %s21, 0
    %p236 = por %p234, %p235
    %p237 = scmp.ne.s32.totalorder %s225, %s226
    %p238 = scmp.eq.s32.totalorder %s22, 1
    %p239 = por %p237, %p238
    %p241 = scmp.ne.s32.totalorder %s226, %s240
    %p242 = scmp.eq.s32.totalorder %s22, 0
    %p243 = por %p241, %p242
    %s244 = ssub.s32 %s16, %s23
    %p245 = scmp.eq.s32.totalorder %s244, 0
    %s247 = sadd.s32 %s246, 1
    %s248 = scalar_select %p245, %s246, %s247
    %p251 = pneg %p245
    %p252 = scmp.eq.s32.totalorder %s16, 1
    %p253 = por %p251, %p252
    %p254 = scmp.ne.s32.totalorder %s246, %s249
    %p255 = scmp.eq.s32.totalorder %s16, 0
    %p256 = por %p254, %p255
    %p257 = scmp.ne.s32.totalorder %s246, %s249
    %p258 = scmp.eq.s32.totalorder %s21, 1
    %p259 = por %p257, %p258
    %p260 = scmp.ne.s32.totalorder %s249, %s250
    %p261 = scmp.eq.s32.totalorder %s21, 0
    %p262 = por %p260, %p261
    %p263 = scmp.ne.s32.totalorder %s249, %s250
    %p264 = scmp.eq.s32.totalorder %s22, 1
    %p265 = por %p263, %p264
    %p267 = scmp.ne.s32.totalorder %s250, %s266
    %p268 = scmp.eq.s32.totalorder %s22, 0
    %p269 = por %p267, %p268
    %p270 = scmp.le.s32.totalorder 1, %s16
    %p271 = scmp.lt.s32.totalorder %s16, 3
    %p272 = pnand %p270, %p271
    %p273 = pneg %p272
    // Predicated region
    $region9: #{bridger_forward.16} parent=5 // pred_check
      _
    $region10: #{bridger_forward.16} parent=5 // pred_check_branch
      %275 = sbr.rel (%p272) target = $region12
    $region11: #{bridger_forward.16} parent=5 // pred_region
      %s276 = ssub.s32 %s16, 1
      // Predicated region
      $region13: #{bridger_forward.16} parent=11 // pred_check
        %p277 = pneg %p89
      $region14: #{bridger_forward.16} parent=11 // pred_check_branch
        %279 = sbr.rel (%p277) target = $region16
      $region15: #{bridger_forward.16} parent=11 // pred_region
        _
      $region16: #{bridger_forward.16} parent=11 // pred_fallthru
        _
      // Predicated region
      $region17: #{bridger_forward.16} parent=11 // pred_check
        %p280 = pneg %p110
      $region18: #{bridger_forward.16} parent=11 // pred_check_branch
        %282 = sbr.rel (%p280) target = $region20
      $region19: #{bridger_forward.16} parent=11 // pred_region
        _
      $region20: #{bridger_forward.16} parent=11 // pred_fallthru
        _
      // Predicated region
      $region21: #{bridger_forward.16} parent=11 // pred_check
        %p283 = pneg %p131
      $region22: #{bridger_forward.16} parent=11 // pred_check_branch
        %285 = sbr.rel (%p283) target = $region24
      $region23: #{bridger_forward.16} parent=11 // pred_region
        _
      $region24: #{bridger_forward.16} parent=11 // pred_fallthru
        _
      // Predicated region
      $region25: #{bridger_forward.16} parent=11 // pred_check
        %p286 = pneg %p152
      $region26: #{bridger_forward.16} parent=11 // pred_check_branch
        %288 = sbr.rel (%p286) target = $region28
      $region27: #{bridger_forward.16} parent=11 // pred_region
        _
      $region28: #{bridger_forward.16} parent=11 // pred_fallthru
        _
      // Predicated region
      $region29: #{bridger_forward.16} parent=11 // pred_check
        %p289 = pneg %p173
      $region30: #{bridger_forward.16} parent=11 // pred_check_branch
        %291 = sbr.rel (%p289) target = $region32
      $region31: #{bridger_forward.16} parent=11 // pred_region
        _
      $region32: #{bridger_forward.16} parent=11 // pred_fallthru
        _
      // Predicated region
      $region33: #{bridger_forward.16} parent=11 // pred_check
        %p292 = pneg %p194
      $region34: #{bridger_forward.16} parent=11 // pred_check_branch
        %294 = sbr.rel (%p292) target = $region36
      $region35: #{bridger_forward.16} parent=11 // pred_region
        _
      $region36: #{bridger_forward.16} parent=11 // pred_fallthru
        _
      // Predicated region
      $region37: #{bridger_forward.16} parent=11 // pred_check
        %p295 = pneg %p215
      $region38: #{bridger_forward.16} parent=11 // pred_check_branch
        %297 = sbr.rel (%p295) target = $region40
      $region39: #{bridger_forward.16} parent=11 // pred_region
        _
      $region40: #{bridger_forward.16} parent=11 // pred_fallthru
        _
      // Predicated region
      $region41: #{bridger_forward.16} parent=11 // pred_check
        %p298 = pneg %p236
      $region42: #{bridger_forward.16} parent=11 // pred_check_branch
        %300 = sbr.rel (%p298) target = $region44
      $region43: #{bridger_forward.16} parent=11 // pred_region
        _
      $region44: #{bridger_forward.16} parent=11 // pred_fallthru
        _
    $region12: #{bridger_forward.16} parent=5 // pred_fallthru
      _
    %p301 = scmp.lt.s32.totalorder %s16, 2
    // Predicated region
    $region45: #{bridger_forward.16} parent=5 // pred_check
      %p302 = pneg %p301
    $region46: #{bridger_forward.16} parent=5 // pred_check_branch
      %304 = sbr.rel (%p302) target = $region48
    $region47: #{bridger_forward.16} parent=5 // pred_region
      // Predicated region
      $region49: #{bridger_forward.16} parent=47 // pred_check
        %p305 = pneg %p36
      $region50: #{bridger_forward.16} parent=47 // pred_check_branch
        %307 = sbr.rel (%p305) target = $region52
      $region51: #{bridger_forward.16} parent=47 // pred_region
        %p308 = scmp.lt.s32.totalorder %s16, 1
        %s309 = scalar_select %p308, %s16, 1
        %s310 = smul.addr %s309, 4
        %s311 = scalar_lea.vmem %s0, %s310
      $region52: #{bridger_forward.16} parent=47 // pred_fallthru
        _
      // Predicated region
      $region53: #{bridger_forward.16} parent=47 // pred_check
        %p312 = pneg %p62
      $region54: #{bridger_forward.16} parent=47 // pred_check_branch
        %314 = sbr.rel (%p312) target = $region56
      $region55: #{bridger_forward.16} parent=47 // pred_region
        %s315 = smul.u32 8, %s16
        %p316 = scmp.lt.s32.totalorder %s315, 15
        %s317 = scalar_select %p316, %s315, 15
        %s318 = smul.addr %s317, 4
        %s319 = scalar_lea.vmem %s1, %s318
        %s320 = smul.u32 8, %s16
      $region56: #{bridger_forward.16} parent=47 // pred_fallthru
        _
    $region48: #{bridger_forward.16} parent=5 // pred_fallthru
      _
    %p321 = scmp.le.s32.totalorder 1, %s16
    %p322 = scmp.lt.s32.totalorder %s16, 3
    %p323 = pnand %p321, %p322
    %p324 = pneg %p323
    // Predicated region
    $region57: #{bridger_forward.16} parent=5 // pred_check
      _
    $region58: #{bridger_forward.16} parent=5 // pred_check_branch
      %326 = sbr.rel (%p323) target = $region60
    $region59: #{bridger_forward.16} parent=5 // pred_region
      %s327 = ssub.s32 %s16, 1
      %p328 = scmp.lt.s32.totalorder %s21, 1
      %s329 = scalar_select %p328, %s21, 1
      %s330 = smul.addr %s329, 4
      %s331 = scalar_lea.vmem %s0, %s330
      %p332 = pneg %p42
      %p333 = pneg %p39
      %s334 = smul.u32 8, %s21
      %p335 = scmp.lt.s32.totalorder %s334, 15
      %s336 = scalar_select %p335, %s334, 15
      %s337 = smul.addr %s336, 4
      %s338 = scalar_lea.vmem %s1, %s337
      %p339 = pneg %p68
      %p340 = pneg %p65
      %p341 = pneg %p89
      %p342 = pneg %p86
      %p343 = pneg %p110
      %p344 = pneg %p107
      %p345 = pneg %p131
      %p346 = pneg %p128
      %p347 = pneg %p152
      %p348 = pneg %p149
      %p349 = pneg %p173
      %p350 = pneg %p170
      %p351 = pneg %p194
      %p352 = pneg %p191
      %p353 = pneg %p215
      %p354 = pneg %p212
      %p355 = pneg %p236
      %p356 = pneg %p233
      %p357 = pneg %p262
      %p358 = pneg %p259
      %p359 = scmp.lt.s32.totalorder %s21, 1
      %s360 = scalar_select %p359, %s21, 1
      %s361 = smul.addr %s360, 4
      %s362 = scalar_lea.vmem %s10, %s361
      %p363 = scmp.lt.s32.totalorder %s21, 1
      %s364 = scalar_select %p363, %s21, 1
      %s365 = smul.addr %s364, 4
      %s366 = scalar_lea.vmem %s0, %s365
      %s367 = smul.u32 8, %s21
      %p368 = scmp.lt.s32.totalorder %s367, 15
      %s369 = scalar_select %p368, %s367, 15
      %s370 = smul.addr %s369, 4
      %s371 = scalar_lea.vmem %s1, %s370
      %s372 = smul.u32 8, %s21
      %p373 = scmp.lt.s32.totalorder %s21, 1
      %s374 = scalar_select %p373, %s21, 1
      %s375 = smul.addr %s374, 4
      %s376 = scalar_lea.vmem %s10, %s375
      %v378 = vld [vmem:[%s366] sm:$0xf]
      %v379 = vld [vmem:[%s371] sm:$0xf]
      %v380 = vld [vmem:[%s371 + $0x4] sm:$0xf]
      %v381 = vld [vmem:[%s371 + $0x8] sm:$0xf]
      %v382 = vld [vmem:[%s371 + $0xc] sm:$0xf]
      %v383 = vld [vmem:[%s371 + $0x10] sm:$0xf]
      %v384 = vld [vmem:[%s371 + $0x14] sm:$0xf]
      %v385 = vld [vmem:[%s371 + $0x18] sm:$0xf]
      %v386 = vld [vmem:[%s371 + $0x1c] sm:$0xf]
      %v387 = vld [vmem:[%s2] sm:$0xf]
      %v388 = vld [vmem:[%s2 + $0x4] sm:$0xf]
      %v389 = vld [vmem:[%s2 + $0x8] sm:$0xf]
      %v390 = vld [vmem:[%s2 + $0xc] sm:$0xf]
      %v391 = vld [vmem:[%s3] sm:$0x1]
      %v393 = vlaneseq
      %v394 = vshrl.u32 %v393, 7
      %v395 = vsub.s32 0, %v394
      %v396 = vrot.slane %v391, %v395
      %v402 = vunpack.c.l.b16 %v387
      %v403 = vunpack.c.l.b16 %v388
      %v404 = vunpack.c.l.b16 %v389
      %v405 = vunpack.c.l.b16 %v390
      %v406 = vpack.c.b16 %v403, %v402
      %v407 = vpack.c.b16 %v405, %v404
      %vm410 = vcmask 261120
      %v412 = vsel %vm410, %v378, 0
      %414 = vmatprep.subr.bf16.mxu0 0
      %415 = vmatpush1.bf16.msra.mxu0 %v406
      %416 = vmatprep.subr.bf16.mxu0 0
      %417 = vmatpush1.bf16.msra.mxu0 %v407
      %418 = vmatprep.subr.bf16.mxu0 0
      %419 = vmatpush1.bf16.msra.mxu0 0
      %420 = vmatprep.subr.bf16.mxu0 0
      %421 = vmatpush1.bf16.msra.mxu0 0
      %422 = vmatprep.subr.bf16.mxu0 0
      %423 = vmatpush1.bf16.msra.mxu0 0
      %424 = vmatprep.subr.bf16.mxu0 0
      %425 = vmatpush1.bf16.msra.mxu0 0
      %426 = vmatprep.subr.bf16.mxu0 0
      %427 = vmatpush1.bf16.msra.mxu0 0
      %428 = vmatprep.subr.bf16.mxu0 0
      %429 = vmatpush1.bf16.msra.mxu0 0
      %430 = vmatprep.subr.bf16.mxu0 0
      %431 = vmatpush1.bf16.msra.mxu0 0
      %432 = vmatprep.subr.bf16.mxu0 0
      %433 = vmatpush1.bf16.msra.mxu0 0
      %434 = vmatprep.subr.bf16.mxu0 0
      %435 = vmatpush1.bf16.msra.mxu0 0
      %436 = vmatprep.subr.bf16.mxu0 0
      %437 = vmatpush1.bf16.msra.mxu0 0
      %438 = vmatprep.subr.bf16.mxu0 0
      %439 = vmatpush1.bf16.msra.mxu0 0
      %440 = vmatprep.subr.bf16.mxu0 0
      %441 = vmatpush1.bf16.msra.mxu0 0
      %442 = vmatprep.subr.bf16.mxu0 0
      %443 = vmatpush1.bf16.msra.mxu0 0
      %444 = vmatprep.subr.bf16.mxu0 0
      %445 = vmatpush1.bf16.msra.mxu0 0
      %446 = vmatprep.mubr.bf16.mxu0 0
      %447 = vmatmul.mubr.bf16.gmra.mrb[0].mxu0 %v412
      %v448 = vpop.f32.mrb[0].mxu0
      %v449 = vadd.f32 %v396, %v448
      %v450 = vpop.f32.mrb[0].mxu0
      %v451 = vpop.f32.mrb[0].mxu0
      %v452 = vpop.f32.mrb[0].mxu0
      %453 = vdwg.mxu0
      %v454 = vld [vmem:[%s4] sm:$0xf]
      %v455 = vld [vmem:[%s4 + $0x4] sm:$0xf]
      %v456 = vld [vmem:[%s4 + $0x8] sm:$0xf]
      %v457 = vld [vmem:[%s4 + $0xc] sm:$0xf]
      %v458 = vld [vmem:[%s5] sm:$0x1]
      %v460 = vlaneseq
      %v461 = vshrl.u32 %v460, 7
      %v462 = vsub.s32 0, %v461
      %v463 = vrot.slane %v458, %v462
      %v473 = vunpack.c.l.b16 %v379
      %v474 = vunpack.c.l.b16 %v380
      %v475 = vunpack.c.l.b16 %v381
      %v476 = vunpack.c.l.b16 %v382
      %v477 = vunpack.c.l.b16 %v383
      %v478 = vunpack.c.l.b16 %v384
      %v479 = vunpack.c.l.b16 %v385
      %v480 = vunpack.c.l.b16 %v386
      %v481 = vpack.c.b16 %v474, %v473
      %v482 = vpack.c.b16 %v476, %v475
      %v483 = vpack.c.b16 %v478, %v477
      %v484 = vpack.c.b16 %v480, %v479
      %v489 = vunpack.c.l.b16 %v454
      %v490 = vunpack.c.l.b16 %v455
      %v491 = vunpack.c.l.b16 %v456
      %v492 = vunpack.c.l.b16 %v457
      %v493 = vpack.c.b16 %v490, %v489
      %v494 = vpack.c.b16 %v492, %v491
      %v498 = vsel %vm410, %v481, 0
      %v501 = vsel %vm410, %v482, 0
      %v504 = vsel %vm410, %v483, 0
      %v507 = vsel %vm410, %v484, 0
      %509 = vmatprep.subr.bf16.mxu0 0
      %510 = vmatpush1.bf16.msra.mxu0 %v493
      %511 = vmatprep.subr.bf16.mxu0 0
      %512 = vmatpush1.bf16.msra.mxu0 %v494
      %513 = vmatprep.subr.bf16.mxu0 0
      %514 = vmatpush1.bf16.msra.mxu0 0
      %515 = vmatprep.subr.bf16.mxu0 0
      %516 = vmatpush1.bf16.msra.mxu0 0
      %517 = vmatprep.subr.bf16.mxu0 0
      %518 = vmatpush1.bf16.msra.mxu0 0
      %519 = vmatprep.subr.bf16.mxu0 0
      %520 = vmatpush1.bf16.msra.mxu0 0
      %521 = vmatprep.subr.bf16.mxu0 0
      %522 = vmatpush1.bf16.msra.mxu0 0
      %523 = vmatprep.subr.bf16.mxu0 0
      %524 = vmatpush1.bf16.msra.mxu0 0
      %525 = vmatprep.subr.bf16.mxu0 0
      %526 = vmatpush1.bf16.msra.mxu0 0
      %527 = vmatprep.subr.bf16.mxu0 0
      %528 = vmatpush1.bf16.msra.mxu0 0
      %529 = vmatprep.subr.bf16.mxu0 0
      %530 = vmatpush1.bf16.msra.mxu0 0
      %531 = vmatprep.subr.bf16.mxu0 0
      %532 = vmatpush1.bf16.msra.mxu0 0
      %533 = vmatprep.subr.bf16.mxu0 0
      %534 = vmatpush1.bf16.msra.mxu0 0
      %535 = vmatprep.subr.bf16.mxu0 0
      %536 = vmatpush1.bf16.msra.mxu0 0
      %537 = vmatprep.subr.bf16.mxu0 0
      %538 = vmatpush1.bf16.msra.mxu0 0
      %539 = vmatprep.subr.bf16.mxu0 0
      %540 = vmatpush1.bf16.msra.mxu0 0
      %541 = vmatprep.mubr.bf16.mxu0 0
      %542 = vmatmul.mubr.bf16.gmra.mrb[0].mxu0 %v498
      %v543 = vpop.f32.mrb[0].mxu0
      %v544 = vadd.f32 %v463, %v543
      %v545 = vpop.f32.mrb[0].mxu0
      %v546 = vpop.f32.mrb[0].mxu0
      %v547 = vadd.f32 %v463, %v546
      %v548 = vpop.f32.mrb[0].mxu0
      %549 = vmatprep.mubr.bf16.mxu0 0
      %550 = vmatmul.mubr.bf16.gmra.mrb[0].mxu0 %v501
      %v551 = vpop.f32.mrb[0].mxu0
      %v552 = vadd.f32 %v463, %v551
      %v553 = vpop.f32.mrb[0].mxu0
      %v554 = vpop.f32.mrb[0].mxu0
      %v555 = vadd.f32 %v463, %v554
      %v556 = vpop.f32.mrb[0].mxu0
      %557 = vmatprep.mubr.bf16.mxu0 0
      %558 = vmatmul.mubr.bf16.gmra.mrb[0].mxu0 %v504
      %v559 = vpop.f32.mrb[0].mxu0
      %v560 = vadd.f32 %v463, %v559
      %v561 = vpop.f32.mrb[0].mxu0
      %v562 = vpop.f32.mrb[0].mxu0
      %v563 = vadd.f32 %v463, %v562
      %v564 = vpop.f32.mrb[0].mxu0
      %565 = vmatprep.mubr.bf16.mxu0 0
      %566 = vmatmul.mubr.bf16.gmra.mrb[0].mxu0 %v507
      %v567 = vpop.f32.mrb[0].mxu0
      %v568 = vadd.f32 %v463, %v567
      %v569 = vpop.f32.mrb[0].mxu0
      %v570 = vpop.f32.mrb[0].mxu0
      %v571 = vadd.f32 %v463, %v570
      %v572 = vpop.f32.mrb[0].mxu0
      %573 = vdwg.mxu0
      %v574 = vpack.c.bf16 %v449, %v449
      %v575 = vpack.c.bf16 %v547, %v544
      %v576 = vpack.c.bf16 %v555, %v552
      %v577 = vpack.c.bf16 %v563, %v560
      %v578 = vpack.c.bf16 %v571, %v568
      %vm579 = vcmask 64512
      %v581 = vsel %vm579, %v574, 0
      %v584 = vsel %vm579, %v575, 0
      %v587 = vsel %vm579, %v576, 0
      %v590 = vsel %vm579, %v577, 0
      %v593 = vsel %vm579, %v578, 0
      %595 = vmatprep.subr.bf16.mxu0 0
      %596 = vmatpush1.bf16.xpose.msra.mxu0 %v584
      %597 = vmatprep.subr.bf16.mxu0 0
      %598 = vmatpush1.bf16.xpose.msra.mxu0 %v587
      %599 = vmatprep.subr.bf16.mxu0 0
      %600 = vmatpush1.bf16.xpose.msra.mxu0 %v590
      %601 = vmatprep.subr.bf16.mxu0 0
      %602 = vmatpush1.bf16.xpose.msra.mxu0 %v593
      %603 = vmatprep.subr.bf16.mxu0 0
      %604 = vmatpush1.bf16.xpose.msra.mxu0 0
      %605 = vmatprep.subr.bf16.mxu0 0
      %606 = vmatpush1.bf16.xpose.msra.mxu0 0
      %607 = vmatprep.subr.bf16.mxu0 0
      %608 = vmatpush1.bf16.xpose.msra.mxu0 0
      %609 = vmatprep.subr.bf16.mxu0 0
      %610 = vmatpush1.bf16.xpose.msra.mxu0 0
      %611 = vmatprep.subr.bf16.mxu0 0
      %612 = vmatpush1.bf16.xpose.msra.mxu0 0
      %613 = vmatprep.subr.bf16.mxu0 0
      %614 = vmatpush1.bf16.xpose.msra.mxu0 0
      %615 = vmatprep.subr.bf16.mxu0 0
      %616 = vmatpush1.bf16.xpose.msra.mxu0 0
      %617 = vmatprep.subr.bf16.mxu0 0
      %618 = vmatpush1.bf16.xpose.msra.mxu0 0
      %619 = vmatprep.subr.bf16.mxu0 0
      %620 = vmatpush1.bf16.xpose.msra.mxu0 0
      %621 = vmatprep.subr.bf16.mxu0 0
      %622 = vmatpush1.bf16.xpose.msra.mxu0 0
      %623 = vmatprep.subr.bf16.mxu0 0
      %624 = vmatpush1.bf16.xpose.msra.mxu0 0
      %625 = vmatprep.subr.bf16.mxu0 0
      %626 = vmatpush1.bf16.xpose.msra.mxu0 0
      %627 = vmatprep.mubr.bf16.mxu0 0
      %628 = vmatmul.mubr.bf16.gmra.mrb[0].mxu0 %v581
      %v629 = vpop.f32.mrb[0].mxu0
      %v630 = vadd.f32 0.0, %v629
      %v631 = vpop.f32.mrb[0].mxu0
      %v632 = vpop.f32.mrb[0].mxu0
      %v633 = vpop.f32.mrb[0].mxu0
      %634 = vdwg.mxu0
      %vm635 = vcmask 523264
      %v636 = vsel %vm635, %v630, -inf
      %637 = vmax.xlane.f32.xlu0 %v636
      %v638 = vpop.xlane.xlu0 %637
      %v639 = vsub.f32 %v630, %v638
      %v640 = vmul.f32 %v639, 1.442695
      %v641 = vpow.pop %v640
      %v642 = vsel %vm635, %v641, 0.0
      %643 = vadd.xlane.f32.xlu0 %v642
      %v644 = vpop.xlane.xlu0 %643
      %v645 = vrcp.pop %v644
      %v646 = vmul.f32 %v641, %v645
      %v647 = vpack.c.bf16 %v646, %v646
      %652 = vrot.lane.b32.xlu0 %v575, 96
      %v653 = vpop.permute.xlu0 %652
      %654 = vrot.lane.b32.xlu0 %v576, 96
      %v655 = vpop.permute.xlu0 %654
      %656 = vrot.lane.b32.xlu0 %v577, 96
      %v657 = vpop.permute.xlu0 %656
      %658 = vrot.lane.b32.xlu0 %v578, 96
      %v659 = vpop.permute.xlu0 %658
      %v665 = vsel %vm635, %v647, 0
      %667 = vmatprep.subr.bf16.mxu0 0
      %668 = vmatpush1.bf16.msra.mxu0 %v653
      %669 = vmatprep.subr.bf16.mxu0 0
      %670 = vmatpush1.bf16.msra.mxu0 %v655
      %671 = vmatprep.subr.bf16.mxu0 0
      %672 = vmatpush1.bf16.msra.mxu0 %v657
      %673 = vmatprep.subr.bf16.mxu0 0
      %674 = vmatpush1.bf16.msra.mxu0 %v659
      %675 = vmatprep.subr.bf16.mxu0 0
      %676 = vmatpush1.bf16.msra.mxu0 0
      %677 = vmatprep.subr.bf16.mxu0 0
      %678 = vmatpush1.bf16.msra.mxu0 0
      %679 = vmatprep.subr.bf16.mxu0 0
      %680 = vmatpush1.bf16.msra.mxu0 0
      %681 = vmatprep.subr.bf16.mxu0 0
      %682 = vmatpush1.bf16.msra.mxu0 0
      %683 = vmatprep.subr.bf16.mxu0 0
      %684 = vmatpush1.bf16.msra.mxu0 0
      %685 = vmatprep.subr.bf16.mxu0 0
      %686 = vmatpush1.bf16.msra.mxu0 0
      %687 = vmatprep.subr.bf16.mxu0 0
      %688 = vmatpush1.bf16.msra.mxu0 0
      %689 = vmatprep.subr.bf16.mxu0 0
      %690 = vmatpush1.bf16.msra.mxu0 0
      %691 = vmatprep.subr.bf16.mxu0 0
      %692 = vmatpush1.bf16.msra.mxu0 0
      %693 = vmatprep.subr.bf16.mxu0 0
      %694 = vmatpush1.bf16.msra.mxu0 0
      %695 = vmatprep.subr.bf16.mxu0 0
      %696 = vmatpush1.bf16.msra.mxu0 0
      %697 = vmatprep.subr.bf16.mxu0 0
      %698 = vmatpush1.bf16.msra.mxu0 0
      %699 = vmatprep.mubr.bf16.mxu0 0
      %700 = vmatmul.mubr.bf16.gmra.mrb[0].mxu0 %v665
      %v701 = vpop.f32.mrb[0].mxu0
      %v702 = vadd.f32 0.0, %v701
      %v703 = vpop.f32.mrb[0].mxu0
      %v704 = vpop.f32.mrb[0].mxu0
      %v705 = vpop.f32.mrb[0].mxu0
      %706 = vdwg.mxu0
      %708 = vrot.lane.b32.xlu0 %v574, 120
      %v709 = vpop.permute.xlu0 %708
      %710 = vrot.lane.b32.xlu0 %v575, 120
      %v711 = vpop.permute.xlu0 %710
      %712 = vrot.lane.b32.xlu0 %v576, 120
      %v713 = vpop.permute.xlu0 %712
      %714 = vrot.lane.b32.xlu0 %v577, 120
      %v715 = vpop.permute.xlu0 %714
      %716 = vrot.lane.b32.xlu0 %v578, 120
      %v717 = vpop.permute.xlu0 %716
      %v719 = vsel %vm579, %v709, 0
      %v722 = vsel %vm579, %v711, 0
      %v725 = vsel %vm579, %v713, 0
      %v728 = vsel %vm579, %v715, 0
      %v731 = vsel %vm579, %v717, 0
      %733 = vmatprep.subr.bf16.mxu0 0
      %734 = vmatpush1.bf16.xpose.msra.mxu0 %v722
      %735 = vmatprep.subr.bf16.mxu0 0
      %736 = vmatpush1.bf16.xpose.msra.mxu0 %v725
      %737 = vmatprep.subr.bf16.mxu0 0
      %738 = vmatpush1.bf16.xpose.msra.mxu0 %v728
      %739 = vmatprep.subr.bf16.mxu0 0
      %740 = vmatpush1.bf16.xpose.msra.mxu0 %v731
      %741 = vmatprep.subr.bf16.mxu0 0
      %742 = vmatpush1.bf16.xpose.msra.mxu0 0
      %743 = vmatprep.subr.bf16.mxu0 0
      %744 = vmatpush1.bf16.xpose.msra.mxu0 0
      %745 = vmatprep.subr.bf16.mxu0 0
      %746 = vmatpush1.bf16.xpose.msra.mxu0 0
      %747 = vmatprep.subr.bf16.mxu0 0
      %748 = vmatpush1.bf16.xpose.msra.mxu0 0
      %749 = vmatprep.subr.bf16.mxu0 0
      %750 = vmatpush1.bf16.xpose.msra.mxu0 0
      %751 = vmatprep.subr.bf16.mxu0 0
      %752 = vmatpush1.bf16.xpose.msra.mxu0 0
      %753 = vmatprep.subr.bf16.mxu0 0
      %754 = vmatpush1.bf16.xpose.msra.mxu0 0
      %755 = vmatprep.subr.bf16.mxu0 0
      %756 = vmatpush1.bf16.xpose.msra.mxu0 0
      %757 = vmatprep.subr.bf16.mxu0 0
      %758 = vmatpush1.bf16.xpose.msra.mxu0 0
      %759 = vmatprep.subr.bf16.mxu0 0
      %760 = vmatpush1.bf16.xpose.msra.mxu0 0
      %761 = vmatprep.subr.bf16.mxu0 0
      %762 = vmatpush1.bf16.xpose.msra.mxu0 0
      %763 = vmatprep.subr.bf16.mxu0 0
      %764 = vmatpush1.bf16.xpose.msra.mxu0 0
      %765 = vmatprep.mubr.bf16.mxu0 0
      %766 = vmatmul.mubr.bf16.gmra.mrb[0].mxu0 %v719
      %v767 = vpop.f32.mrb[0].mxu0
      %v768 = vadd.f32 0.0, %v767
      %v769 = vpop.f32.mrb[0].mxu0
      %v770 = vpop.f32.mrb[0].mxu0
      %v771 = vpop.f32.mrb[0].mxu0
      %772 = vdwg.mxu0
      %v773 = vsel %vm635, %v768, -inf
      %774 = vmax.xlane.f32.xlu0 %v773
      %v775 = vpop.xlane.xlu0 %774
      %v776 = vsub.f32 %v768, %v775
      %v777 = vmul.f32 %v776, 1.442695
      %v778 = vpow.pop %v777
      %v779 = vsel %vm635, %v778, 0.0
      %780 = vadd.xlane.f32.xlu0 %v779
      %v781 = vpop.xlane.xlu0 %780
      %v782 = vrcp.pop %v781
      %v783 = vmul.f32 %v778, %v782
      %v784 = vpack.c.bf16 %v783, %v783
      %785 = vrot.lane.b32.xlu0 %v575, 88
      %v786 = vpop.permute.xlu0 %785
      %787 = vrot.lane.b32.xlu0 %v576, 88
      %v788 = vpop.permute.xlu0 %787
      %789 = vrot.lane.b32.xlu0 %v577, 88
      %v790 = vpop.permute.xlu0 %789
      %791 = vrot.lane.b32.xlu0 %v578, 88
      %v792 = vpop.permute.xlu0 %791
      %v798 = vsel %vm635, %v784, 0
      %800 = vmatprep.subr.bf16.mxu0 0
      %801 = vmatpush1.bf16.msra.mxu0 %v786
      %802 = vmatprep.subr.bf16.mxu0 0
      %803 = vmatpush1.bf16.msra.mxu0 %v788
      %804 = vmatprep.subr.bf16.mxu0 0
      %805 = vmatpush1.bf16.msra.mxu0 %v790
      %806 = vmatprep.subr.bf16.mxu0 0
      %807 = vmatpush1.bf16.msra.mxu0 %v792
      %808 = vmatprep.subr.bf16.mxu0 0
      %809 = vmatpush1.bf16.msra.mxu0 0
      %810 = vmatprep.subr.bf16.mxu0 0
      %811 = vmatpush1.bf16.msra.mxu0 0
      %812 = vmatprep.subr.bf16.mxu0 0
      %813 = vmatpush1.bf16.msra.mxu0 0
      %814 = vmatprep.subr.bf16.mxu0 0
      %815 = vmatpush1.bf16.msra.mxu0 0
      %816 = vmatprep.subr.bf16.mxu0 0
      %817 = vmatpush1.bf16.msra.mxu0 0
      %818 = vmatprep.subr.bf16.mxu0 0
      %819 = vmatpush1.bf16.msra.mxu0 0
      %820 = vmatprep.subr.bf16.mxu0 0
      %821 = vmatpush1.bf16.msra.mxu0 0
      %822 = vmatprep.subr.bf16.mxu0 0
      %823 = vmatpush1.bf16.msra.mxu0 0
      %824 = vmatprep.subr.bf16.mxu0 0
      %825 = vmatpush1.bf16.msra.mxu0 0
      %826 = vmatprep.subr.bf16.mxu0 0
      %827 = vmatpush1.bf16.msra.mxu0 0
      %828 = vmatprep.subr.bf16.mxu0 0
      %829 = vmatpush1.bf16.msra.mxu0 0
      %830 = vmatprep.subr.bf16.mxu0 0
      %831 = vmatpush1.bf16.msra.mxu0 0
      %832 = vmatprep.mubr.bf16.mxu0 0
      %833 = vmatmul.mubr.bf16.gmra.mrb[0].mxu0 %v798
      %v834 = vpop.f32.mrb[0].mxu0
      %v835 = vadd.f32 0.0, %v834
      %v836 = vpop.f32.mrb[0].mxu0
      %v837 = vpop.f32.mrb[0].mxu0
      %v838 = vpop.f32.mrb[0].mxu0
      %839 = vdwg.mxu0
      %840 = vrot.lane.b32.xlu0 %v574, 112
      %v841 = vpop.permute.xlu0 %840
      %842 = vrot.lane.b32.xlu0 %v575, 112
      %v843 = vpop.permute.xlu0 %842
      %844 = vrot.lane.b32.xlu0 %v576, 112
      %v845 = vpop.permute.xlu0 %844
      %846 = vrot.lane.b32.xlu0 %v577, 112
      %v847 = vpop.permute.xlu0 %846
      %848 = vrot.lane.b32.xlu0 %v578, 112
      %v849 = vpop.permute.xlu0 %848
      %v851 = vsel %vm579, %v841, 0
      %v854 = vsel %vm579, %v843, 0
      %v857 = vsel %vm579, %v845, 0
      %v860 = vsel %vm579, %v847, 0
      %v863 = vsel %vm579, %v849, 0
      %865 = vmatprep.subr.bf16.mxu0 0
      %866 = vmatpush1.bf16.xpose.msra.mxu0 %v854
      %867 = vmatprep.subr.bf16.mxu0 0
      %868 = vmatpush1.bf16.xpose.msra.mxu0 %v857
      %869 = vmatprep.subr.bf16.mxu0 0
      %870 = vmatpush1.bf16.xpose.msra.mxu0 %v860
      %871 = vmatprep.subr.bf16.mxu0 0
      %872 = vmatpush1.bf16.xpose.msra.mxu0 %v863
      %873 = vmatprep.subr.bf16.mxu0 0
      %874 = vmatpush1.bf16.xpose.msra.mxu0 0
      %875 = vmatprep.subr.bf16.mxu0 0
      %876 = vmatpush1.bf16.xpose.msra.mxu0 0
      %877 = vmatprep.subr.bf16.mxu0 0
      %878 = vmatpush1.bf16.xpose.msra.mxu0 0
      %879 = vmatprep.subr.bf16.mxu0 0
      %880 = vmatpush1.bf16.xpose.msra.mxu0 0
      %881 = vmatprep.subr.bf16.mxu0 0
      %882 = vmatpush1.bf16.xpose.msra.mxu0 0
      %883 = vmatprep.subr.bf16.mxu0 0
      %884 = vmatpush1.bf16.xpose.msra.mxu0 0
      %885 = vmatprep.subr.bf16.mxu0 0
      %886 = vmatpush1.bf16.xpose.msra.mxu0 0
      %887 = vmatprep.subr.bf16.mxu0 0
      %888 = vmatpush1.bf16.xpose.msra.mxu0 0
      %889 = vmatprep.subr.bf16.mxu0 0
      %890 = vmatpush1.bf16.xpose.msra.mxu0 0
      %891 = vmatprep.subr.bf16.mxu0 0
      %892 = vmatpush1.bf16.xpose.msra.mxu0 0
      %893 = vmatprep.subr.bf16.mxu0 0
      %894 = vmatpush1.bf16.xpose.msra.mxu0 0
      %895 = vmatprep.subr.bf16.mxu0 0
      %896 = vmatpush1.bf16.xpose.msra.mxu0 0
      %897 = vmatprep.mubr.bf16.mxu0 0
      %898 = vmatmul.mubr.bf16.gmra.mrb[0].mxu0 %v851
      %v899 = vpop.f32.mrb[0].mxu0
      %v900 = vadd.f32 0.0, %v899
      %v901 = vpop.f32.mrb[0].mxu0
      %v902 = vpop.f32.mrb[0].mxu0
      %v903 = vpop.f32.mrb[0].mxu0
      %904 = vdwg.mxu0
      %v905 = vsel %vm635, %v900, -inf
      %906 = vmax.xlane.f32.xlu0 %v905
      %v907 = vpop.xlane.xlu0 %906
      %v908 = vsub.f32 %v900, %v907
      %v909 = vmul.f32 %v908, 1.442695
      %v910 = vpow.pop %v909
      %v911 = vsel %vm635, %v910, 0.0
      %912 = vadd.xlane.f32.xlu0 %v911
      %v913 = vpop.xlane.xlu0 %912
      %v914 = vrcp.pop %v913
      %v915 = vmul.f32 %v910, %v914
      %v916 = vpack.c.bf16 %v915, %v915
      %917 = vrot.lane.b32.xlu0 %v575, 80
      %v918 = vpop.permute.xlu0 %917
      %919 = vrot.lane.b32.xlu0 %v576, 80
      %v920 = vpop.permute.xlu0 %919
      %921 = vrot.lane.b32.xlu0 %v577, 80
      %v922 = vpop.permute.xlu0 %921
      %923 = vrot.lane.b32.xlu0 %v578, 80
      %v924 = vpop.permute.xlu0 %923
      %v930 = vsel %vm635, %v916, 0
      %932 = vmatprep.subr.bf16.mxu0 0
      %933 = vmatpush1.bf16.msra.mxu0 %v918
      %934 = vmatprep.subr.bf16.mxu0 0
      %935 = vmatpush1.bf16.msra.mxu0 %v920
      %936 = vmatprep.subr.bf16.mxu0 0
      %937 = vmatpush1.bf16.msra.mxu0 %v922
      %938 = vmatprep.subr.bf16.mxu0 0
      %939 = vmatpush1.bf16.msra.mxu0 %v924
      %940 = vmatprep.subr.bf16.mxu0 0
      %941 = vmatpush1.bf16.msra.mxu0 0
      %942 = vmatprep.subr.bf16.mxu0 0
      %943 = vmatpush1.bf16.msra.mxu0 0
      %944 = vmatprep.subr.bf16.mxu0 0
      %945 = vmatpush1.bf16.msra.mxu0 0
      %946 = vmatprep.subr.bf16.mxu0 0
      %947 = vmatpush1.bf16.msra.mxu0 0
      %948 = vmatprep.subr.bf16.mxu0 0
      %949 = vmatpush1.bf16.msra.mxu0 0
      %950 = vmatprep.subr.bf16.mxu0 0
      %951 = vmatpush1.bf16.msra.mxu0 0
      %952 = vmatprep.subr.bf16.mxu0 0
      %953 = vmatpush1.bf16.msra.mxu0 0
      %954 = vmatprep.subr.bf16.mxu0 0
      %955 = vmatpush1.bf16.msra.mxu0 0
      %956 = vmatprep.subr.bf16.mxu0 0
      %957 = vmatpush1.bf16.msra.mxu0 0
      %958 = vmatprep.subr.bf16.mxu0 0
      %959 = vmatpush1.bf16.msra.mxu0 0
      %960 = vmatprep.subr.bf16.mxu0 0
      %961 = vmatpush1.bf16.msra.mxu0 0
      %962 = vmatprep.subr.bf16.mxu0 0
      %963 = vmatpush1.bf16.msra.mxu0 0
      %964 = vmatprep.mubr.bf16.mxu0 0
      %965 = vmatmul.mubr.bf16.gmra.mrb[0].mxu0 %v930
      %v966 = vpop.f32.mrb[0].mxu0
      %v967 = vadd.f32 0.0, %v966
      %v968 = vpop.f32.mrb[0].mxu0
      %v969 = vpop.f32.mrb[0].mxu0
      %v970 = vpop.f32.mrb[0].mxu0
      %971 = vdwg.mxu0
      %972 = vrot.lane.b32.xlu0 %v574, 104
      %v973 = vpop.permute.xlu0 %972
      %974 = vrot.lane.b32.xlu0 %v575, 104
      %v975 = vpop.permute.xlu0 %974
      %976 = vrot.lane.b32.xlu0 %v576, 104
      %v977 = vpop.permute.xlu0 %976
      %978 = vrot.lane.b32.xlu0 %v577, 104
      %v979 = vpop.permute.xlu0 %978
      %980 = vrot.lane.b32.xlu0 %v578, 104
      %v981 = vpop.permute.xlu0 %980
      %v983 = vsel %vm579, %v973, 0
      %v986 = vsel %vm579, %v975, 0
      %v989 = vsel %vm579, %v977, 0
      %v992 = vsel %vm579, %v979, 0
      %v995 = vsel %vm579, %v981, 0
      %997 = vmatprep.subr.bf16.mxu0 0
      %998 = vmatpush1.bf16.xpose.msra.mxu0 %v986
      %999 = vmatprep.subr.bf16.mxu0 0
      %1000 = vmatpush1.bf16.xpose.msra.mxu0 %v989
      %1001 = vmatprep.subr.bf16.mxu0 0
      %1002 = vmatpush1.bf16.xpose.msra.mxu0 %v992
      %1003 = vmatprep.subr.bf16.mxu0 0
      %1004 = vmatpush1.bf16.xpose.msra.mxu0 %v995
      %1005 = vmatprep.subr.bf16.mxu0 0
      %1006 = vmatpush1.bf16.xpose.msra.mxu0 0
      %1007 = vmatprep.subr.bf16.mxu0 0
      %1008 = vmatpush1.bf16.xpose.msra.mxu0 0
      %1009 = vmatprep.subr.bf16.mxu0 0
      %1010 = vmatpush1.bf16.xpose.msra.mxu0 0
      %1011 = vmatprep.subr.bf16.mxu0 0
      %1012 = vmatpush1.bf16.xpose.msra.mxu0 0
      %1013 = vmatprep.subr.bf16.mxu0 0
      %1014 = vmatpush1.bf16.xpose.msra.mxu0 0
      %1015 = vmatprep.subr.bf16.mxu0 0
      %1016 = vmatpush1.bf16.xpose.msra.mxu0 0
      %1017 = vmatprep.subr.bf16.mxu0 0
      %1018 = vmatpush1.bf16.xpose.msra.mxu0 0
      %1019 = vmatprep.subr.bf16.mxu0 0
      %1020 = vmatpush1.bf16.xpose.msra.mxu0 0
      %1021 = vmatprep.subr.bf16.mxu0 0
      %1022 = vmatpush1.bf16.xpose.msra.mxu0 0
      %1023 = vmatprep.subr.bf16.mxu0 0
      %1024 = vmatpush1.bf16.xpose.msra.mxu0 0
      %1025 = vmatprep.subr.bf16.mxu0 0
      %1026 = vmatpush1.bf16.xpose.msra.mxu0 0
      %1027 = vmatprep.subr.bf16.mxu0 0
      %1028 = vmatpush1.bf16.xpose.msra.mxu0 0
      %1029 = vmatprep.mubr.bf16.mxu0 0
      %1030 = vmatmul.mubr.bf16.gmra.mrb[0].mxu0 %v983
      %v1031 = vpop.f32.mrb[0].mxu0
      %v1032 = vadd.f32 0.0, %v1031
      %v1033 = vpop.f32.mrb[0].mxu0
      %v1034 = vpop.f32.mrb[0].mxu0
      %v1035 = vpop.f32.mrb[0].mxu0
      %1036 = vdwg.mxu0
      %v1037 = vsel %vm635, %v1032, -inf
      %1038 = vmax.xlane.f32.xlu0 %v1037
      %v1039 = vpop.xlane.xlu0 %1038
      %v1040 = vsub.f32 %v1032, %v1039
      %v1041 = vmul.f32 %v1040, 1.442695
      %v1042 = vpow.pop %v1041
      %v1043 = vsel %vm635, %v1042, 0.0
      %1044 = vadd.xlane.f32.xlu0 %v1043
      %v1045 = vpop.xlane.xlu0 %1044
      %v1046 = vrcp.pop %v1045
      %v1047 = vmul.f32 %v1042, %v1046
      %v1048 = vpack.c.bf16 %v1047, %v1047
      %1049 = vrot.lane.b32.xlu0 %v575, 72
      %v1050 = vpop.permute.xlu0 %1049
      %1051 = vrot.lane.b32.xlu0 %v576, 72
      %v1052 = vpop.permute.xlu0 %1051
      %1053 = vrot.lane.b32.xlu0 %v577, 72
      %v1054 = vpop.permute.xlu0 %1053
      %1055 = vrot.lane.b32.xlu0 %v578, 72
      %v1056 = vpop.permute.xlu0 %1055
      %v1062 = vsel %vm635, %v1048, 0
      %1064 = vmatprep.subr.bf16.mxu0 0
      %1065 = vmatpush1.bf16.msra.mxu0 %v1050
      %1066 = vmatprep.subr.bf16.mxu0 0
      %1067 = vmatpush1.bf16.msra.mxu0 %v1052
      %1068 = vmatprep.subr.bf16.mxu0 0
      %1069 = vmatpush1.bf16.msra.mxu0 %v1054
      %1070 = vmatprep.subr.bf16.mxu0 0
      %1071 = vmatpush1.bf16.msra.mxu0 %v1056
      %1072 = vmatprep.subr.bf16.mxu0 0
      %1073 = vmatpush1.bf16.msra.mxu0 0
      %1074 = vmatprep.subr.bf16.mxu0 0
      %1075 = vmatpush1.bf16.msra.mxu0 0
      %1076 = vmatprep.subr.bf16.mxu0 0
      %1077 = vmatpush1.bf16.msra.mxu0 0
      %1078 = vmatprep.subr.bf16.mxu0 0
      %1079 = vmatpush1.bf16.msra.mxu0 0
      %1080 = vmatprep.subr.bf16.mxu0 0
      %1081 = vmatpush1.bf16.msra.mxu0 0
      %1082 = vmatprep.subr.bf16.mxu0 0
      %1083 = vmatpush1.bf16.msra.mxu0 0
      %1084 = vmatprep.subr.bf16.mxu0 0
      %1085 = vmatpush1.bf16.msra.mxu0 0
      %1086 = vmatprep.subr.bf16.mxu0 0
      %1087 = vmatpush1.bf16.msra.mxu0 0
      %1088 = vmatprep.subr.bf16.mxu0 0
      %1089 = vmatpush1.bf16.msra.mxu0 0
      %1090 = vmatprep.subr.bf16.mxu0 0
      %1091 = vmatpush1.bf16.msra.mxu0 0
      %1092 = vmatprep.subr.bf16.mxu0 0
      %1093 = vmatpush1.bf16.msra.mxu0 0
      %1094 = vmatprep.subr.bf16.mxu0 0
      %1095 = vmatpush1.bf16.msra.mxu0 0
      %1096 = vmatprep.mubr.bf16.mxu0 0
      %1097 = vmatmul.mubr.bf16.gmra.mrb[0].mxu0 %v1062
      %v1098 = vpop.f32.mrb[0].mxu0
      %v1099 = vadd.f32 0.0, %v1098
      %v1100 = vpop.f32.mrb[0].mxu0
      %v1101 = vpop.f32.mrb[0].mxu0
      %v1102 = vpop.f32.mrb[0].mxu0
      %1103 = vdwg.mxu0
      %1105 = vrot.lane.b32.xlu0 %v835, 8
      %v1106 = vpop.permute.xlu0 %1105
      %1109 = vrot.lane.b32.xlu0 %v967, 16
      %v1110 = vpop.permute.xlu0 %1109
      %1113 = vrot.lane.b32.xlu0 %v1099, 24
      %v1114 = vpop.permute.xlu0 %1113
      %v1116 = vsel %vm579, %v702, %v1106
      %vm1117 = vcmask 130048
      %v1118 = vsel %vm1117, %v1116, %v1110
      %vm1119 = vcmask 195584
      %v1120 = vsel %vm1119, %v1118, %v1114
      %v1121 = vpack.c.bf16 %v1120, %v1120
      %v1122 = vld [vmem:[%s6] sm:$0xf]
      %v1123 = vld [vmem:[%s6 + $0x4] sm:$0xf]
      %v1124 = vld [vmem:[%s6 + $0x8] sm:$0xf]
      %v1125 = vld [vmem:[%s6 + $0xc] sm:$0xf]
      %v1126 = vld [vmem:[%s7] sm:$0x1]
      %v1128 = vlaneseq
      %v1129 = vshrl.u32 %v1128, 7
      %v1130 = vsub.s32 0, %v1129
      %v1131 = vrot.slane %v1126, %v1130
      %v1137 = vunpack.c.l.b16 %v1122
      %v1138 = vunpack.c.l.b16 %v1123
      %v1139 = vunpack.c.l.b16 %v1124
      %v1140 = vunpack.c.l.b16 %v1125
      %v1141 = vpack.c.b16 %v1138, %v1137
      %v1142 = vpack.c.b16 %v1140, %v1139
      %v1146 = vsel %vm410, %v1121, 0
      %1148 = vmatprep.subr.bf16.mxu0 0
      %1149 = vmatpush1.bf16.msra.mxu0 %v1141
      %1150 = vmatprep.subr.bf16.mxu0 0
      %1151 = vmatpush1.bf16.msra.mxu0 %v1142
      %1152 = vmatprep.subr.bf16.mxu0 0
      %1153 = vmatpush1.bf16.msra.mxu0 0
      %1154 = vmatprep.subr.bf16.mxu0 0
      %1155 = vmatpush1.bf16.msra.mxu0 0
      %1156 = vmatprep.subr.bf16.mxu0 0
      %1157 = vmatpush1.bf16.msra.mxu0 0
      %1158 = vmatprep.subr.bf16.mxu0 0
      %1159 = vmatpush1.bf16.msra.mxu0 0
      %1160 = vmatprep.subr.bf16.mxu0 0
      %1161 = vmatpush1.bf16.msra.mxu0 0
      %1162 = vmatprep.subr.bf16.mxu0 0
      %1163 = vmatpush1.bf16.msra.mxu0 0
      %1164 = vmatprep.subr.bf16.mxu0 0
      %1165 = vmatpush1.bf16.msra.mxu0 0
      %1166 = vmatprep.subr.bf16.mxu0 0
      %1167 = vmatpush1.bf16.msra.mxu0 0
      %1168 = vmatprep.subr.bf16.mxu0 0
      %1169 = vmatpush1.bf16.msra.mxu0 0
      %1170 = vmatprep.subr.bf16.mxu0 0
      %1171 = vmatpush1.bf16.msra.mxu0 0
      %1172 = vmatprep.subr.bf16.mxu0 0
      %1173 = vmatpush1.bf16.msra.mxu0 0
      %1174 = vmatprep.subr.bf16.mxu0 0
      %1175 = vmatpush1.bf16.msra.mxu0 0
      %1176 = vmatprep.subr.bf16.mxu0 0
      %1177 = vmatpush1.bf16.msra.mxu0 0
      %1178 = vmatprep.subr.bf16.mxu0 0
      %1179 = vmatpush1.bf16.msra.mxu0 0
      %1180 = vmatprep.mubr.bf16.mxu0 0
      %1181 = vmatmul.mubr.bf16.gmra.mrb[0].mxu0 %v1146
      %v1182 = vpop.f32.mrb[0].mxu0
      %v1183 = vadd.f32 %v1131, %v1182
      %v1184 = vpop.f32.mrb[0].mxu0
      %v1185 = vpop.f32.mrb[0].mxu0
      %v1186 = vpop.f32.mrb[0].mxu0
      %1187 = vdwg.mxu0
      %v1188 = vunpack.c.l.bf16 %v378
      %v1189 = vadd.f32 %v1183, %v1188
      %v1190 = vld [vmem:[%s8] sm:$0x1]
      %v1191 = vld [vmem:[%s9] sm:$0x1]
      %v1192 = vsel %vm410, %v1189, 0.0
      %1193 = vadd.xlane.f32.xlu0 %v1192
      %v1194 = vpop.xlane.xlu0 %1193
      %v1195 = vrcp.pop 32.0
      %v1196 = vmul.f32 %v1194, %v1195
      %v1197 = vsub.f32 %v1189, %v1196
      %v1198 = vmul.f32 %v1197, %v1197
      %v1199 = vsel %vm410, %v1198, 0.0
      %1200 = vadd.xlane.f32.xlu0 %v1199
      %v1201 = vpop.xlane.xlu0 %1200
      %v1202 = vmul.f32 %v1201, %v1195
      %v1203 = vadd.f32 %v1202, 1e-05
      %v1204 = vrsqrt.pop %v1203
      %v1205 = vmul.f32 %v1197, %v1204
      %v1207 = vlaneseq
      %v1208 = vshrl.u32 %v1207, 7
      %v1209 = vsub.s32 0, %v1208
      %v1210 = vrot.slane %v1190, %v1209
      %v1212 = vmul.f32 %v1205, %v1210
      %v1214 = vlaneseq
      %v1215 = vshrl.u32 %v1214, 7
      %v1216 = vsub.s32 0, %v1215
      %v1217 = vrot.slane %v1191, %v1216
      %v1219 = vadd.f32 %v1212, %v1217
      %v1220 = vpack.c.bf16 %v1219, %v1219
      %vm1221 = vcmask 257024
      %1222 = vst.msk [vmem:[%s376] sm:$0xf] %vm1221, %v1220
      %p1223 = scmp.lt.s32.totalorder %s21, 1
      %s1224 = scalar_select %p1223, %s21, 1
      %s1225 = smul.addr %s1224, 4
      %s1226 = scalar_lea.vmem %s10, %s1225
      // Predicated region
      $region61: #{bridger_forward.16} parent=59 // pred_check
        %p1227 = pneg %p259
      $region62: #{bridger_forward.16} parent=59 // pred_check_branch
        %1229 = sbr.rel (%p1227) target = $region64
      $region63: #{bridger_forward.16} parent=59 // pred_region
        _
      $region64: #{bridger_forward.16} parent=59 // pred_fallthru
        _
    $region60: #{bridger_forward.16} parent=5 // pred_fallthru
      _
    %p1230 = scmp.le.s32.totalorder 2, %s16
    // Predicated region
    $region65: #{bridger_forward.16} parent=5 // pred_check
      %p1231 = pneg %p1230
    $region66: #{bridger_forward.16} parent=5 // pred_check_branch
      %1233 = sbr.rel (%p1231) target = $region68
    $region67: #{bridger_forward.16} parent=5 // pred_region
      %s1234 = ssub.s32 %s16, 2
      // Predicated region
      $region69: #{bridger_forward.16} parent=67 // pred_check
        %p1235 = pneg %p265
      $region70: #{bridger_forward.16} parent=67 // pred_check_branch
        %1237 = sbr.rel (%p1235) target = $region72
      $region71: #{bridger_forward.16} parent=67 // pred_region
        %p1238 = scmp.lt.s32.totalorder %s22, 1
        %s1239 = scalar_select %p1238, %s22, 1
        %s1240 = smul.addr %s1239, 4
        %s1241 = scalar_lea.vmem %s10, %s1240
      $region72: #{bridger_forward.16} parent=67 // pred_fallthru
        _
    $region68: #{bridger_forward.16} parent=5 // pred_fallthru
      _
  $region6: #{bridger_forward.16} parent=0 // loop_footer
    %s20 = sadd.s32 1, %s16
  $region7: #{bridger_forward.16} parent=0 // loop_footer_branch
    %15 = sbr.rel target = $region3
  $region8: #{bridger_forward.16} parent=0 // loop_exit
    _

// kernel: bridger_forward.17
$region0: #{bridger_forward.17}
  #allocation0 [shape = 'u32[]', space=smem, size = 0x4, offset = 0x4, fixed_abs, tag = 'smem constant byte address 0x4 - core index']
  #allocation1 [shape = 'u32[144,128]{1,0:T(1,128)}', space=vmem, size = 0x12000, scoped, tag = 'internal scratch']
  %s0 = inlined_call_operand.vmem [shape: bf16[16,32], index: 0, kind: input, shape index: {}]
  %s1 = inlined_call_operand.vmem [shape: bf16[32,128], index: 1, kind: input, shape index: {}]
  %s2 = inlined_call_operand.vmem [shape: f32[1,128], index: 2, kind: input, shape index: {}]
  %s3 = inlined_call_operand.vmem [shape: bf16[128,32], index: 3, kind: input, shape index: {}]
  %s4 = inlined_call_operand.vmem [shape: f32[1,32], index: 4, kind: input, shape index: {}]
  %s5 = inlined_call_operand.vmem [shape: f32[1,32], index: 5, kind: input, shape index: {}]
  %s6 = inlined_call_operand.vmem [shape: f32[1,32], index: 6, kind: input, shape index: {}]
  %s7 = inlined_call_operand.vmem [shape: bf16[16,32], index: 7, kind: output, shape index: {}]
  %s8 = sld [smem:[#allocation0]]
  $region61: #{bridger_forward.17} parent=0
    _
  %s10 = ssub.s32 1, %s8
  %s11 = scalar_select 0, %s10, %s8
  loop: start=0, step=1, limit=4
  $region2: #{bridger_forward.17} parent=0 // loop_pre_header
    _
  $region3: #{bridger_forward.17} parent=0 // loop_header
    %s13 = sphi 0, %s17
    %p14 = scmp.ge.s32.totalorder %s13, 4
    %s23 = sphi 0, %s25
    %s26 = sphi 0, %s23
    %s27 = sphi 0, %s26
    %s43 = sphi 0, %s27
    %s47 = sphi 0, %s47
    %s49 = sphi 0, %s47
    %s50 = sphi 0, %s49
    %s64 = sphi 0, %s50
    %s68 = sphi 0, %s68
    %s70 = sphi 0, %s68
    %s71 = sphi 0, %s70
    %s85 = sphi 0, %s71
    %s89 = sphi 0, %s89
    %s91 = sphi 0, %s89
    %s92 = sphi 0, %s91
    %s106 = sphi 0, %s92
    %s110 = sphi 0, %s110
    %s112 = sphi 0, %s110
    %s113 = sphi 0, %s112
    %s127 = sphi 0, %s113
    %s131 = sphi 0, %s131
    %s133 = sphi 0, %s131
    %s134 = sphi 0, %s133
    %s148 = sphi 0, %s134
    %s152 = sphi 0, %s152
    %s154 = sphi 0, %s152
    %s155 = sphi 0, %s154
    %s169 = sphi 0, %s155
    %s175 = sphi 0, %s177
    %s178 = sphi 0, %s175
    %s179 = sphi 0, %s178
    %s195 = sphi 0, %s179
  $region4: #{bridger_forward.17} parent=0 // loop_header_branch
    %16 = sbr.rel (%p14) target = $region8
  $region5: #{bridger_forward.17} parent=0 // loop_body
    %s18 = ssub.s32 %s13, 1
    %s19 = ssub.s32 %s13, 2
    %s20 = sadd.s32 %s13, 1
    %s21 = ssub.s32 %s13, %s20
    %p22 = scmp.eq.s32.totalorder %s21, 0
    %s24 = sadd.s32 %s23, 1
    %s25 = scalar_select %p22, %s23, %s24
    %p28 = pneg %p22
    %p29 = scmp.eq.s32.totalorder %s13, 1
    %p30 = por %p28, %p29
    %p31 = scmp.ne.s32.totalorder %s23, %s26
    %p32 = scmp.eq.s32.totalorder %s13, 0
    %p33 = por %p31, %p32
    %p34 = scmp.ne.s32.totalorder %s23, %s26
    %p35 = scmp.eq.s32.totalorder %s18, 1
    %p36 = por %p34, %p35
    %p37 = scmp.ne.s32.totalorder %s26, %s27
    %p38 = scmp.eq.s32.totalorder %s18, 0
    %p39 = por %p37, %p38
    %p40 = scmp.ne.s32.totalorder %s26, %s27
    %p41 = scmp.eq.s32.totalorder %s19, 1
    %p42 = por %p40, %p41
    %p44 = scmp.ne.s32.totalorder %s27, %s43
    %p45 = scmp.eq.s32.totalorder %s19, 0
    %p46 = por %p44, %p45
    %s48 = sadd.s32 %s47, 1
    %p51 = scmp.eq.s32.totalorder %s13, 1
    %p52 = scmp.ne.s32.totalorder %s47, %s49
    %p53 = scmp.eq.s32.totalorder %s13, 0
    %p54 = por %p52, %p53
    %p55 = scmp.ne.s32.totalorder %s47, %s49
    %p56 = scmp.eq.s32.totalorder %s18, 1
    %p57 = por %p55, %p56
    %p58 = scmp.ne.s32.totalorder %s49, %s50
    %p59 = scmp.eq.s32.totalorder %s18, 0
    %p60 = por %p58, %p59
    %p61 = scmp.ne.s32.totalorder %s49, %s50
    %p62 = scmp.eq.s32.totalorder %s19, 1
    %p63 = por %p61, %p62
    %p65 = scmp.ne.s32.totalorder %s50, %s64
    %p66 = scmp.eq.s32.totalorder %s19, 0
    %p67 = por %p65, %p66
    %s69 = sadd.s32 %s68, 1
    %p72 = scmp.eq.s32.totalorder %s13, 1
    %p73 = scmp.ne.s32.totalorder %s68, %s70
    %p74 = scmp.eq.s32.totalorder %s13, 0
    %p75 = por %p73, %p74
    %p76 = scmp.ne.s32.totalorder %s68, %s70
    %p77 = scmp.eq.s32.totalorder %s18, 1
    %p78 = por %p76, %p77
    %p79 = scmp.ne.s32.totalorder %s70, %s71
    %p80 = scmp.eq.s32.totalorder %s18, 0
    %p81 = por %p79, %p80
    %p82 = scmp.ne.s32.totalorder %s70, %s71
    %p83 = scmp.eq.s32.totalorder %s19, 1
    %p84 = por %p82, %p83
    %p86 = scmp.ne.s32.totalorder %s71, %s85
    %p87 = scmp.eq.s32.totalorder %s19, 0
    %p88 = por %p86, %p87
    %s90 = sadd.s32 %s89, 1
    %p93 = scmp.eq.s32.totalorder %s13, 1
    %p94 = scmp.ne.s32.totalorder %s89, %s91
    %p95 = scmp.eq.s32.totalorder %s13, 0
    %p96 = por %p94, %p95
    %p97 = scmp.ne.s32.totalorder %s89, %s91
    %p98 = scmp.eq.s32.totalorder %s18, 1
    %p99 = por %p97, %p98
    %p100 = scmp.ne.s32.totalorder %s91, %s92
    %p101 = scmp.eq.s32.totalorder %s18, 0
    %p102 = por %p100, %p101
    %p103 = scmp.ne.s32.totalorder %s91, %s92
    %p104 = scmp.eq.s32.totalorder %s19, 1
    %p105 = por %p103, %p104
    %p107 = scmp.ne.s32.totalorder %s92, %s106
    %p108 = scmp.eq.s32.totalorder %s19, 0
    %p109 = por %p107, %p108
    %s111 = sadd.s32 %s110, 1
    %p114 = scmp.eq.s32.totalorder %s13, 1
    %p115 = scmp.ne.s32.totalorder %s110, %s112
    %p116 = scmp.eq.s32.totalorder %s13, 0
    %p117 = por %p115, %p116
    %p118 = scmp.ne.s32.totalorder %s110, %s112
    %p119 = scmp.eq.s32.totalorder %s18, 1
    %p120 = por %p118, %p119
    %p121 = scmp.ne.s32.totalorder %s112, %s113
    %p122 = scmp.eq.s32.totalorder %s18, 0
    %p123 = por %p121, %p122
    %p124 = scmp.ne.s32.totalorder %s112, %s113
    %p125 = scmp.eq.s32.totalorder %s19, 1
    %p126 = por %p124, %p125
    %p128 = scmp.ne.s32.totalorder %s113, %s127
    %p129 = scmp.eq.s32.totalorder %s19, 0
    %p130 = por %p128, %p129
    %s132 = sadd.s32 %s131, 1
    %p135 = scmp.eq.s32.totalorder %s13, 1
    %p136 = scmp.ne.s32.totalorder %s131, %s133
    %p137 = scmp.eq.s32.totalorder %s13, 0
    %p138 = por %p136, %p137
    %p139 = scmp.ne.s32.totalorder %s131, %s133
    %p140 = scmp.eq.s32.totalorder %s18, 1
    %p141 = por %p139, %p140
    %p142 = scmp.ne.s32.totalorder %s133, %s134
    %p143 = scmp.eq.s32.totalorder %s18, 0
    %p144 = por %p142, %p143
    %p145 = scmp.ne.s32.totalorder %s133, %s134
    %p146 = scmp.eq.s32.totalorder %s19, 1
    %p147 = por %p145, %p146
    %p149 = scmp.ne.s32.totalorder %s134, %s148
    %p150 = scmp.eq.s32.totalorder %s19, 0
    %p151 = por %p149, %p150
    %s153 = sadd.s32 %s152, 1
    %p156 = scmp.eq.s32.totalorder %s13, 1
    %p157 = scmp.ne.s32.totalorder %s152, %s154
    %p158 = scmp.eq.s32.totalorder %s13, 0
    %p159 = por %p157, %p158
    %p160 = scmp.ne.s32.totalorder %s152, %s154
    %p161 = scmp.eq.s32.totalorder %s18, 1
    %p162 = por %p160, %p161
    %p163 = scmp.ne.s32.totalorder %s154, %s155
    %p164 = scmp.eq.s32.totalorder %s18, 0
    %p165 = por %p163, %p164
    %p166 = scmp.ne.s32.totalorder %s154, %s155
    %p167 = scmp.eq.s32.totalorder %s19, 1
    %p168 = por %p166, %p167
    %p170 = scmp.ne.s32.totalorder %s155, %s169
    %p171 = scmp.eq.s32.totalorder %s19, 0
    %p172 = por %p170, %p171
    %s173 = ssub.s32 %s13, %s20
    %p174 = scmp.eq.s32.totalorder %s173, 0
    %s176 = sadd.s32 %s175, 1
    %s177 = scalar_select %p174, %s175, %s176
    %p180 = pneg %p174
    %p181 = scmp.eq.s32.totalorder %s13, 1
    %p182 = por %p180, %p181
    %p183 = scmp.ne.s32.totalorder %s175, %s178
    %p184 = scmp.eq.s32.totalorder %s13, 0
    %p185 = por %p183, %p184
    %p186 = scmp.ne.s32.totalorder %s175, %s178
    %p187 = scmp.eq.s32.totalorder %s18, 1
    %p188 = por %p186, %p187
    %p189 = scmp.ne.s32.totalorder %s178, %s179
    %p190 = scmp.eq.s32.totalorder %s18, 0
    %p191 = por %p189, %p190
    %p192 = scmp.ne.s32.totalorder %s178, %s179
    %p193 = scmp.eq.s32.totalorder %s19, 1
    %p194 = por %p192, %p193
    %p196 = scmp.ne.s32.totalorder %s179, %s195
    %p197 = scmp.eq.s32.totalorder %s19, 0
    %p198 = por %p196, %p197
    %p199 = scmp.le.s32.totalorder 1, %s13
    %p200 = scmp.lt.s32.totalorder %s13, 3
    %p201 = pnand %p199, %p200
    %p202 = pneg %p201
    // Predicated region
    $region9: #{bridger_forward.17} parent=5 // pred_check
      _
    $region10: #{bridger_forward.17} parent=5 // pred_check_branch
      %204 = sbr.rel (%p201) target = $region12
    $region11: #{bridger_forward.17} parent=5 // pred_region
      %s205 = ssub.s32 %s13, 1
      // Predicated region
      $region13: #{bridger_forward.17} parent=11 // pred_check
        %p206 = pneg %p60
      $region14: #{bridger_forward.17} parent=11 // pred_check_branch
        %208 = sbr.rel (%p206) target = $region16
      $region15: #{bridger_forward.17} parent=11 // pred_region
        _
      $region16: #{bridger_forward.17} parent=11 // pred_fallthru
        _
      // Predicated region
      $region17: #{bridger_forward.17} parent=11 // pred_check
        %p209 = pneg %p81
      $region18: #{bridger_forward.17} parent=11 // pred_check_branch
        %211 = sbr.rel (%p209) target = $region20
      $region19: #{bridger_forward.17} parent=11 // pred_region
        _
      $region20: #{bridger_forward.17} parent=11 // pred_fallthru
        _
      // Predicated region
      $region21: #{bridger_forward.17} parent=11 // pred_check
        %p212 = pneg %p102
      $region22: #{bridger_forward.17} parent=11 // pred_check_branch
        %214 = sbr.rel (%p212) target = $region24
      $region23: #{bridger_forward.17} parent=11 // pred_region
        _
      $region24: #{bridger_forward.17} parent=11 // pred_fallthru
        _
      // Predicated region
      $region25: #{bridger_forward.17} parent=11 // pred_check
        %p215 = pneg %p123
      $region26: #{bridger_forward.17} parent=11 // pred_check_branch
        %217 = sbr.rel (%p215) target = $region28
      $region27: #{bridger_forward.17} parent=11 // pred_region
        _
      $region28: #{bridger_forward.17} parent=11 // pred_fallthru
        _
      // Predicated region
      $region29: #{bridger_forward.17} parent=11 // pred_check
        %p218 = pneg %p144
      $region30: #{bridger_forward.17} parent=11 // pred_check_branch
        %220 = sbr.rel (%p218) target = $region32
      $region31: #{bridger_forward.17} parent=11 // pred_region
        _
      $region32: #{bridger_forward.17} parent=11 // pred_fallthru
        _
      // Predicated region
      $region33: #{bridger_forward.17} parent=11 // pred_check
        %p221 = pneg %p165
      $region34: #{bridger_forward.17} parent=11 // pred_check_branch
        %223 = sbr.rel (%p221) target = $region36
      $region35: #{bridger_forward.17} parent=11 // pred_region
        _
      $region36: #{bridger_forward.17} parent=11 // pred_fallthru
        _
    $region12: #{bridger_forward.17} parent=5 // pred_fallthru
      _
    %p224 = scmp.lt.s32.totalorder %s13, 2
    // Predicated region
    $region37: #{bridger_forward.17} parent=5 // pred_check
      %p225 = pneg %p224
    $region38: #{bridger_forward.17} parent=5 // pred_check_branch
      %227 = sbr.rel (%p225) target = $region40
    $region39: #{bridger_forward.17} parent=5 // pred_region
      // Predicated region
      $region41: #{bridger_forward.17} parent=39 // pred_check
        %p228 = pneg %p33
      $region42: #{bridger_forward.17} parent=39 // pred_check_branch
        %230 = sbr.rel (%p228) target = $region44
      $region43: #{bridger_forward.17} parent=39 // pred_region
        %p231 = scmp.lt.s32.totalorder %s13, 1
        %s232 = scalar_select %p231, %s13, 1
        %s233 = smul.addr %s232, 4
        %s234 = scalar_lea.vmem %s0, %s233
      $region44: #{bridger_forward.17} parent=39 // pred_fallthru
        _
    $region40: #{bridger_forward.17} parent=5 // pred_fallthru
      _
    %p235 = scmp.le.s32.totalorder 1, %s13
    %p236 = scmp.lt.s32.totalorder %s13, 3
    %p237 = pnand %p235, %p236
    %p238 = pneg %p237
    // Predicated region
    $region45: #{bridger_forward.17} parent=5 // pred_check
      _
    $region46: #{bridger_forward.17} parent=5 // pred_check_branch
      %240 = sbr.rel (%p237) target = $region48
    $region47: #{bridger_forward.17} parent=5 // pred_region
      %s241 = ssub.s32 %s13, 1
      %p242 = scmp.lt.s32.totalorder %s18, 1
      %s243 = scalar_select %p242, %s18, 1
      %s244 = smul.addr %s243, 4
      %s245 = scalar_lea.vmem %s0, %s244
      %p246 = pneg %p39
      %p247 = pneg %p36
      %p248 = pneg %p60
      %p249 = pneg %p57
      %p250 = pneg %p81
      %p251 = pneg %p78
      %p252 = pneg %p102
      %p253 = pneg %p99
      %p254 = pneg %p123
      %p255 = pneg %p120
      %p256 = pneg %p144
      %p257 = pneg %p141
      %p258 = pneg %p165
      %p259 = pneg %p162
      %p260 = pneg %p191
      %p261 = pneg %p188
      %p262 = scmp.lt.s32.totalorder %s18, 1
      %s263 = scalar_select %p262, %s18, 1
      %s264 = smul.addr %s263, 4
      %s265 = scalar_lea.vmem %s7, %s264
      %p266 = scmp.lt.s32.totalorder %s18, 1
      %s267 = scalar_select %p266, %s18, 1
      %s268 = smul.addr %s267, 4
      %s269 = scalar_lea.vmem %s0, %s268
      %p270 = scmp.lt.s32.totalorder %s18, 1
      %s271 = scalar_select %p270, %s18, 1
      %s272 = smul.addr %s271, 4
      %s273 = scalar_lea.vmem %s7, %s272
      %v275 = vld [vmem:[%s269] sm:$0xf]
      %v276 = vld [vmem:[%s1] sm:$0xf]
      %v277 = vld [vmem:[%s1 + $0x4] sm:$0xf]
      %v278 = vld [vmem:[%s1 + $0x8] sm:$0xf]
      %v279 = vld [vmem:[%s1 + $0xc] sm:$0xf]
      %v280 = vld [vmem:[%s2] sm:$0x1]
      %v282 = vlaneseq
      %v283 = vshrl.u32 %v282, 7
      %v284 = vsub.s32 0, %v283
      %v285 = vrot.slane %v280, %v284
      %v291 = vunpack.c.l.b16 %v276
      %v292 = vunpack.c.l.b16 %v277
      %v293 = vunpack.c.l.b16 %v278
      %v294 = vunpack.c.l.b16 %v279
      %v295 = vpack.c.b16 %v292, %v291
      %v296 = vpack.c.b16 %v294, %v293
      %vm299 = vcmask 261120
      %v301 = vsel %vm299, %v275, 0
      %303 = vmatprep.subr.bf16.mxu0 0
      %304 = vmatpush1.bf16.msra.mxu0 %v295
      %305 = vmatprep.subr.bf16.mxu0 0
      %306 = vmatpush1.bf16.msra.mxu0 %v296
      %307 = vmatprep.subr.bf16.mxu0 0
      %308 = vmatpush1.bf16.msra.mxu0 0
      %309 = vmatprep.subr.bf16.mxu0 0
      %310 = vmatpush1.bf16.msra.mxu0 0
      %311 = vmatprep.subr.bf16.mxu0 0
      %312 = vmatpush1.bf16.msra.mxu0 0
      %313 = vmatprep.subr.bf16.mxu0 0
      %314 = vmatpush1.bf16.msra.mxu0 0
      %315 = vmatprep.subr.bf16.mxu0 0
      %316 = vmatpush1.bf16.msra.mxu0 0
      %317 = vmatprep.subr.bf16.mxu0 0
      %318 = vmatpush1.bf16.msra.mxu0 0
      %319 = vmatprep.subr.bf16.mxu0 0
      %320 = vmatpush1.bf16.msra.mxu0 0
      %321 = vmatprep.subr.bf16.mxu0 0
      %322 = vmatpush1.bf16.msra.mxu0 0
      %323 = vmatprep.subr.bf16.mxu0 0
      %324 = vmatpush1.bf16.msra.mxu0 0
      %325 = vmatprep.subr.bf16.mxu0 0
      %326 = vmatpush1.bf16.msra.mxu0 0
      %327 = vmatprep.subr.bf16.mxu0 0
      %328 = vmatpush1.bf16.msra.mxu0 0
      %329 = vmatprep.subr.bf16.mxu0 0
      %330 = vmatpush1.bf16.msra.mxu0 0
      %331 = vmatprep.subr.bf16.mxu0 0
      %332 = vmatpush1.bf16.msra.mxu0 0
      %333 = vmatprep.subr.bf16.mxu0 0
      %334 = vmatpush1.bf16.msra.mxu0 0
      %335 = vmatprep.mubr.bf16.mxu0 0
      %336 = vmatmul.mubr.bf16.gmra.mrb[0].mxu0 %v301
      %v337 = vpop.f32.mrb[0].mxu0
      %v338 = vadd.f32 %v285, %v337
      %v339 = vpop.f32.mrb[0].mxu0
      %v340 = vpop.f32.mrb[0].mxu0
      %v341 = vpop.f32.mrb[0].mxu0
      %342 = vdwg.mxu0
      %v343 = vmax.f32 %v338, 0.0
      %v344 = vpack.c.bf16 %v343, %v343
      %v345 = vld [vmem:[%s3] sm:$0xf]
      %v346 = vld [vmem:[%s3 + $0x4] sm:$0xf]
      %v347 = vld [vmem:[%s3 + $0x8] sm:$0xf]
      %v348 = vld [vmem:[%s3 + $0xc] sm:$0xf]
      %v349 = vld [vmem:[%s3 + $0x10] sm:$0xf]
      %v350 = vld [vmem:[%s3 + $0x14] sm:$0xf]
      %v351 = vld [vmem:[%s3 + $0x18] sm:$0xf]
      %v352 = vld [vmem:[%s3 + $0x1c] sm:$0xf]
      %v353 = vld [vmem:[%s3 + $0x20] sm:$0xf]
      %v354 = vld [vmem:[%s3 + $0x24] sm:$0xf]
      %v355 = vld [vmem:[%s3 + $0x28] sm:$0xf]
      %v356 = vld [vmem:[%s3 + $0x2c] sm:$0xf]
      %v357 = vld [vmem:[%s3 + $0x30] sm:$0xf]
      %v358 = vld [vmem:[%s3 + $0x34] sm:$0xf]
      %v359 = vld [vmem:[%s3 + $0x38] sm:$0xf]
      %v360 = vld [vmem:[%s3 + $0x3c] sm:$0xf]
      %v361 = vld [vmem:[%s4] sm:$0x1]
      %v363 = vlaneseq
      %v364 = vshrl.u32 %v363, 7
      %v365 = vsub.s32 0, %v364
      %v366 = vrot.slane %v361, %v365
      %v384 = vunpack.c.l.b16 %v345
      %v385 = vunpack.c.l.b16 %v346
      %v386 = vunpack.c.l.b16 %v347
      %v387 = vunpack.c.l.b16 %v348
      %v388 = vunpack.c.l.b16 %v349
      %v389 = vunpack.c.l.b16 %v350
      %v390 = vunpack.c.l.b16 %v351
      %v391 = vunpack.c.l.b16 %v352
      %v392 = vunpack.c.l.b16 %v353
      %v393 = vunpack.c.l.b16 %v354
      %v394 = vunpack.c.l.b16 %v355
      %v395 = vunpack.c.l.b16 %v356
      %v396 = vunpack.c.l.b16 %v357
      %v397 = vunpack.c.l.b16 %v358
      %v398 = vunpack.c.l.b16 %v359
      %v399 = vunpack.c.l.b16 %v360
      %v400 = vpack.c.b16 %v385, %v384
      %v401 = vpack.c.b16 %v387, %v386
      %v402 = vpack.c.b16 %v389, %v388
      %v403 = vpack.c.b16 %v391, %v390
      %v404 = vpack.c.b16 %v393, %v392
      %v405 = vpack.c.b16 %v395, %v394
      %v406 = vpack.c.b16 %v397, %v396
      %v407 = vpack.c.b16 %v399, %v398
      %416 = vmatprep.subr.bf16.mxu0 0
      %417 = vmatpush1.bf16.msra.mxu0 %v400
      %418 = vmatprep.subr.bf16.mxu0 0
      %419 = vmatpush1.bf16.msra.mxu0 %v401
      %420 = vmatprep.subr.bf16.mxu0 0
      %421 = vmatpush1.bf16.msra.mxu0 %v402
      %422 = vmatprep.subr.bf16.mxu0 0
      %423 = vmatpush1.bf16.msra.mxu0 %v403
      %424 = vmatprep.subr.bf16.mxu0 0
      %425 = vmatpush1.bf16.msra.mxu0 %v404
      %426 = vmatprep.subr.bf16.mxu0 0
      %427 = vmatpush1.bf16.msra.mxu0 %v405
      %428 = vmatprep.subr.bf16.mxu0 0
      %429 = vmatpush1.bf16.msra.mxu0 %v406
      %430 = vmatprep.subr.bf16.mxu0 0
      %431 = vmatpush1.bf16.msra.mxu0 %v407
      %432 = vmatprep.subr.bf16.mxu0 0
      %433 = vmatpush1.bf16.msra.mxu0 0
      %434 = vmatprep.subr.bf16.mxu0 0
      %435 = vmatpush1.bf16.msra.mxu0 0
      %436 = vmatprep.subr.bf16.mxu0 0
      %437 = vmatpush1.bf16.msra.mxu0 0
      %438 = vmatprep.subr.bf16.mxu0 0
      %439 = vmatpush1.bf16.msra.mxu0 0
      %440 = vmatprep.subr.bf16.mxu0 0
      %441 = vmatpush1.bf16.msra.mxu0 0
      %442 = vmatprep.subr.bf16.mxu0 0
      %443 = vmatpush1.bf16.msra.mxu0 0
      %444 = vmatprep.subr.bf16.mxu0 0
      %445 = vmatpush1.bf16.msra.mxu0 0
      %446 = vmatprep.subr.bf16.mxu0 0
      %447 = vmatpush1.bf16.msra.mxu0 0
      %448 = vmatprep.mubr.bf16.mxu0 0
      %449 = vmatmul.mubr.bf16.gmra.mrb[0].mxu0 %v344
      %v450 = vpop.f32.mrb[0].mxu0
      %v451 = vadd.f32 %v366, %v450
      %v452 = vpop.f32.mrb[0].mxu0
      %v453 = vpop.f32.mrb[0].mxu0
      %v454 = vpop.f32.mrb[0].mxu0
      %455 = vdwg.mxu0
      %v456 = vunpack.c.l.bf16 %v275
      %v457 = vadd.f32 %v456, %v451
      %v458 = vld [vmem:[%s5] sm:$0x1]
      %v459 = vld [vmem:[%s6] sm:$0x1]
      %v460 = vsel %vm299, %v457, 0.0
      %461 = vadd.xlane.f32.xlu0 %v460
      %v462 = vpop.xlane.xlu0 %461
      %v463 = vrcp.pop 32.0
      %v464 = vmul.f32 %v462, %v463
      %v465 = vsub.f32 %v457, %v464
      %v466 = vmul.f32 %v465, %v465
      %v467 = vsel %vm299, %v466, 0.0
      %468 = vadd.xlane.f32.xlu0 %v467
      %v469 = vpop.xlane.xlu0 %468
      %v470 = vmul.f32 %v469, %v463
      %v471 = vadd.f32 %v470, 1e-05
      %v472 = vrsqrt.pop %v471
      %v473 = vmul.f32 %v465, %v472
      %v475 = vlaneseq
      %v476 = vshrl.u32 %v475, 7
      %v477 = vsub.s32 0, %v476
      %v478 = vrot.slane %v458, %v477
      %v480 = vmul.f32 %v473, %v478
      %v482 = vlaneseq
      %v483 = vshrl.u32 %v482, 7
      %v484 = vsub.s32 0, %v483
      %v485 = vrot.slane %v459, %v484
      %v487 = vadd.f32 %v480, %v485
      %v488 = vpack.c.bf16 %v487, %v487
      %vm489 = vcmask 257024
      %490 = vst.msk [vmem:[%s273] sm:$0xf] %vm489, %v488
      %p491 = scmp.lt.s32.totalorder %s18, 1
      %s492 = scalar_select %p491, %s18, 1
      %s493 = smul.addr %s492, 4
      %s494 = scalar_lea.vmem %s7, %s493
      // Predicated region
      $region49: #{bridger_forward.17} parent=47 // pred_check
        %p495 = pneg %p188
      $region50: #{bridger_forward.17} parent=47 // pred_check_branch
        %497 = sbr.rel (%p495) target = $region52
      $region51: #{bridger_forward.17} parent=47 // pred_region
        _
      $region52: #{bridger_forward.17} parent=47 // pred_fallthru
        _
    $region48: #{bridger_forward.17} parent=5 // pred_fallthru
      _
    %p498 = scmp.le.s32.totalorder 2, %s13
    // Predicated region
    $region53: #{bridger_forward.17} parent=5 // pred_check
      %p499 = pneg %p498
    $region54: #{bridger_forward.17} parent=5 // pred_check_branch
      %501 = sbr.rel (%p499) target = $region56
    $region55: #{bridger_forward.17} parent=5 // pred_region
      %s502 = ssub.s32 %s13, 2
      // Predicated region
      $region57: #{bridger_forward.17} parent=55 // pred_check
        %p503 = pneg %p194
      $region58: #{bridger_forward.17} parent=55 // pred_check_branch
        %505 = sbr.rel (%p503) target = $region60
      $region59: #{bridger_forward.17} parent=55 // pred_region
        %p506 = scmp.lt.s32.totalorder %s19, 1
        %s507 = scalar_select %p506, %s19, 1
        %s508 = smul.addr %s507, 4
        %s509 = scalar_lea.vmem %s7, %s508
      $region60: #{bridger_forward.17} parent=55 // pred_fallthru
        _
    $region56: #{bridger_forward.17} parent=5 // pred_fallthru
      _
  $region6: #{bridger_forward.17} parent=0 // loop_footer
    %s17 = sadd.s32 1, %s13
  $region7: #{bridger_forward.17} parent=0 // loop_footer_branch
    %12 = sbr.rel target = $region3
  $region8: #{bridger_forward.17} parent=0 // loop_exit
    _

// kernel: bridger_forward.12
$region0: #{bridger_forward.12}
  #allocation0 [shape = 'u32[]', space=smem, size = 0x4, offset = 0x4, fixed_abs, tag = 'smem constant byte address 0x4 - core index']
  #allocation1 [shape = 'u32[144,128]{1,0:T(1,128)}', space=vmem, size = 0x12000, scoped, tag = 'internal scratch']
  %s0 = inlined_call_operand.vmem [shape: bf16[128,32], index: 0, kind: input, shape index: {}]
  %s1 = inlined_call_operand.vmem [shape: bf16[32,96], index: 1, kind: input, shape index: {}]
  %s2 = inlined_call_operand.vmem [shape: f32[1,96], index: 2, kind: input, shape index: {}]
  %s3 = inlined_call_operand.vmem [shape: bf16[32,32], index: 3, kind: input, shape index: {}]
  %s4 = inlined_call_operand.vmem [shape: f32[1,32], index: 4, kind: input, shape index: {}]
  %s5 = inlined_call_operand.vmem [shape: f32[1,32], index: 5, kind: input, shape index: {}]
  %s6 = inlined_call_operand.vmem [shape: f32[1,32], index: 6, kind: input, shape index: {}]
  %s7 = inlined_call_operand.vmem [shape: bf16[128,32], index: 7, kind: output, shape index: {}]
  %s8 = sld [smem:[#allocation0]]
  $region61: #{bridger_forward.12} parent=0
    _
  %s10 = ssub.s32 1, %s8
  %s11 = scalar_select 0, %s10, %s8
  loop: start=0, step=1, limit=4
  $region2: #{bridger_forward.12} parent=0 // loop_pre_header
    _
  $region3: #{bridger_forward.12} parent=0 // loop_header
    %s13 = sphi 0, %s17
    %p14 = scmp.ge.s32.totalorder %s13, 4
    %s23 = sphi 0, %s25
    %s26 = sphi 0, %s23
    %s27 = sphi 0, %s26
    %s43 = sphi 0, %s27
    %s47 = sphi 0, %s47
    %s49 = sphi 0, %s47
    %s50 = sphi 0, %s49
    %s64 = sphi 0, %s50
    %s68 = sphi 0, %s68
    %s70 = sphi 0, %s68
    %s71 = sphi 0, %s70
    %s85 = sphi 0, %s71
    %s89 = sphi 0, %s89
    %s91 = sphi 0, %s89
    %s92 = sphi 0, %s91
    %s106 = sphi 0, %s92
    %s110 = sphi 0, %s110
    %s112 = sphi 0, %s110
    %s113 = sphi 0, %s112
    %s127 = sphi 0, %s113
    %s131 = sphi 0, %s131
    %s133 = sphi 0, %s131
    %s134 = sphi 0, %s133
    %s148 = sphi 0, %s134
    %s152 = sphi 0, %s152
    %s154 = sphi 0, %s152
    %s155 = sphi 0, %s154
    %s169 = sphi 0, %s155
    %s175 = sphi 0, %s177
    %s178 = sphi 0, %s175
    %s179 = sphi 0, %s178
    %s195 = sphi 0, %s179
  $region4: #{bridger_forward.12} parent=0 // loop_header_branch
    %16 = sbr.rel (%p14) target = $region8
  $region5: #{bridger_forward.12} parent=0 // loop_body
    %s18 = ssub.s32 %s13, 1
    %s19 = ssub.s32 %s13, 2
    %s20 = sadd.s32 %s13, 1
    %s21 = ssub.s32 %s13, %s20
    %p22 = scmp.eq.s32.totalorder %s21, 0
    %s24 = sadd.s32 %s23, 1
    %s25 = scalar_select %p22, %s23, %s24
    %p28 = pneg %p22
    %p29 = scmp.eq.s32.totalorder %s13, 1
    %p30 = por %p28, %p29
    %p31 = scmp.ne.s32.totalorder %s23, %s26
    %p32 = scmp.eq.s32.totalorder %s13, 0
    %p33 = por %p31, %p32
    %p34 = scmp.ne.s32.totalorder %s23, %s26
    %p35 = scmp.eq.s32.totalorder %s18, 1
    %p36 = por %p34, %p35
    %p37 = scmp.ne.s32.totalorder %s26, %s27
    %p38 = scmp.eq.s32.totalorder %s18, 0
    %p39 = por %p37, %p38
    %p40 = scmp.ne.s32.totalorder %s26, %s27
    %p41 = scmp.eq.s32.totalorder %s19, 1
    %p42 = por %p40, %p41
    %p44 = scmp.ne.s32.totalorder %s27, %s43
    %p45 = scmp.eq.s32.totalorder %s19, 0
    %p46 = por %p44, %p45
    %s48 = sadd.s32 %s47, 1
    %p51 = scmp.eq.s32.totalorder %s13, 1
    %p52 = scmp.ne.s32.totalorder %s47, %s49
    %p53 = scmp.eq.s32.totalorder %s13, 0
    %p54 = por %p52, %p53
    %p55 = scmp.ne.s32.totalorder %s47, %s49
    %p56 = scmp.eq.s32.totalorder %s18, 1
    %p57 = por %p55, %p56
    %p58 = scmp.ne.s32.totalorder %s49, %s50
    %p59 = scmp.eq.s32.totalorder %s18, 0
    %p60 = por %p58, %p59
    %p61 = scmp.ne.s32.totalorder %s49, %s50
    %p62 = scmp.eq.s32.totalorder %s19, 1
    %p63 = por %p61, %p62
    %p65 = scmp.ne.s32.totalorder %s50, %s64
    %p66 = scmp.eq.s32.totalorder %s19, 0
    %p67 = por %p65, %p66
    %s69 = sadd.s32 %s68, 1
    %p72 = scmp.eq.s32.totalorder %s13, 1
    %p73 = scmp.ne.s32.totalorder %s68, %s70
    %p74 = scmp.eq.s32.totalorder %s13, 0
    %p75 = por %p73, %p74
    %p76 = scmp.ne.s32.totalorder %s68, %s70
    %p77 = scmp.eq.s32.totalorder %s18, 1
    %p78 = por %p76, %p77
    %p79 = scmp.ne.s32.totalorder %s70, %s71
    %p80 = scmp.eq.s32.totalorder %s18, 0
    %p81 = por %p79, %p80
    %p82 = scmp.ne.s32.totalorder %s70, %s71
    %p83 = scmp.eq.s32.totalorder %s19, 1
    %p84 = por %p82, %p83
    %p86 = scmp.ne.s32.totalorder %s71, %s85
    %p87 = scmp.eq.s32.totalorder %s19, 0
    %p88 = por %p86, %p87
    %s90 = sadd.s32 %s89, 1
    %p93 = scmp.eq.s32.totalorder %s13, 1
    %p94 = scmp.ne.s32.totalorder %s89, %s91
    %p95 = scmp.eq.s32.totalorder %s13, 0
    %p96 = por %p94, %p95
    %p97 = scmp.ne.s32.totalorder %s89, %s91
    %p98 = scmp.eq.s32.totalorder %s18, 1
    %p99 = por %p97, %p98
    %p100 = scmp.ne.s32.totalorder %s91, %s92
    %p101 = scmp.eq.s32.totalorder %s18, 0
    %p102 = por %p100, %p101
    %p103 = scmp.ne.s32.totalorder %s91, %s92
    %p104 = scmp.eq.s32.totalorder %s19, 1
    %p105 = por %p103, %p104
    %p107 = scmp.ne.s32.totalorder %s92, %s106
    %p108 = scmp.eq.s32.totalorder %s19, 0
    %p109 = por %p107, %p108
    %s111 = sadd.s32 %s110, 1
    %p114 = scmp.eq.s32.totalorder %s13, 1
    %p115 = scmp.ne.s32.totalorder %s110, %s112
    %p116 = scmp.eq.s32.totalorder %s13, 0
    %p117 = por %p115, %p116
    %p118 = scmp.ne.s32.totalorder %s110, %s112
    %p119 = scmp.eq.s32.totalorder %s18, 1
    %p120 = por %p118, %p119
    %p121 = scmp.ne.s32.totalorder %s112, %s113
    %p122 = scmp.eq.s32.totalorder %s18, 0
    %p123 = por %p121, %p122
    %p124 = scmp.ne.s32.totalorder %s112, %s113
    %p125 = scmp.eq.s32.totalorder %s19, 1
    %p126 = por %p124, %p125
    %p128 = scmp.ne.s32.totalorder %s113, %s127
    %p129 = scmp.eq.s32.totalorder %s19, 0
    %p130 = por %p128, %p129
    %s132 = sadd.s32 %s131, 1
    %p135 = scmp.eq.s32.totalorder %s13, 1
    %p136 = scmp.ne.s32.totalorder %s131, %s133
    %p137 = scmp.eq.s32.totalorder %s13, 0
    %p138 = por %p136, %p137
    %p139 = scmp.ne.s32.totalorder %s131, %s133
    %p140 = scmp.eq.s32.totalorder %s18, 1
    %p141 = por %p139, %p140
    %p142 = scmp.ne.s32.totalorder %s133, %s134
    %p143 = scmp.eq.s32.totalorder %s18, 0
    %p144 = por %p142, %p143
    %p145 = scmp.ne.s32.totalorder %s133, %s134
    %p146 = scmp.eq.s32.totalorder %s19, 1
    %p147 = por %p145, %p146
    %p149 = scmp.ne.s32.totalorder %s134, %s148
    %p150 = scmp.eq.s32.totalorder %s19, 0
    %p151 = por %p149, %p150
    %s153 = sadd.s32 %s152, 1
    %p156 = scmp.eq.s32.totalorder %s13, 1
    %p157 = scmp.ne.s32.totalorder %s152, %s154
    %p158 = scmp.eq.s32.totalorder %s13, 0
    %p159 = por %p157, %p158
    %p160 = scmp.ne.s32.totalorder %s152, %s154
    %p161 = scmp.eq.s32.totalorder %s18, 1
    %p162 = por %p160, %p161
    %p163 = scmp.ne.s32.totalorder %s154, %s155
    %p164 = scmp.eq.s32.totalorder %s18, 0
    %p165 = por %p163, %p164
    %p166 = scmp.ne.s32.totalorder %s154, %s155
    %p167 = scmp.eq.s32.totalorder %s19, 1
    %p168 = por %p166, %p167
    %p170 = scmp.ne.s32.totalorder %s155, %s169
    %p171 = scmp.eq.s32.totalorder %s19, 0
    %p172 = por %p170, %p171
    %s173 = ssub.s32 %s13, %s20
    %p174 = scmp.eq.s32.totalorder %s173, 0
    %s176 = sadd.s32 %s175, 1
    %s177 = scalar_select %p174, %s175, %s176
    %p180 = pneg %p174
    %p181 = scmp.eq.s32.totalorder %s13, 1
    %p182 = por %p180, %p181
    %p183 = scmp.ne.s32.totalorder %s175, %s178
    %p184 = scmp.eq.s32.totalorder %s13, 0
    %p185 = por %p183, %p184
    %p186 = scmp.ne.s32.totalorder %s175, %s178
    %p187 = scmp.eq.s32.totalorder %s18, 1
    %p188 = por %p186, %p187
    %p189 = scmp.ne.s32.totalorder %s178, %s179
    %p190 = scmp.eq.s32.totalorder %s18, 0
    %p191 = por %p189, %p190
    %p192 = scmp.ne.s32.totalorder %s178, %s179
    %p193 = scmp.eq.s32.totalorder %s19, 1
    %p194 = por %p192, %p193
    %p196 = scmp.ne.s32.totalorder %s179, %s195
    %p197 = scmp.eq.s32.totalorder %s19, 0
    %p198 = por %p196, %p197
    %p199 = scmp.le.s32.totalorder 1, %s13
    %p200 = scmp.lt.s32.totalorder %s13, 3
    %p201 = pnand %p199, %p200
    %p202 = pneg %p201
    // Predicated region
    $region9: #{bridger_forward.12} parent=5 // pred_check
      _
    $region10: #{bridger_forward.12} parent=5 // pred_check_branch
      %204 = sbr.rel (%p201) target = $region12
    $region11: #{bridger_forward.12} parent=5 // pred_region
      %s205 = ssub.s32 %s13, 1
      // Predicated region
      $region13: #{bridger_forward.12} parent=11 // pred_check
        %p206 = pneg %p60
      $region14: #{bridger_forward.12} parent=11 // pred_check_branch
        %208 = sbr.rel (%p206) target = $region16
      $region15: #{bridger_forward.12} parent=11 // pred_region
        _
      $region16: #{bridger_forward.12} parent=11 // pred_fallthru
        _
      // Predicated region
      $region17: #{bridger_forward.12} parent=11 // pred_check
        %p209 = pneg %p81
      $region18: #{bridger_forward.12} parent=11 // pred_check_branch
        %211 = sbr.rel (%p209) target = $region20
      $region19: #{bridger_forward.12} parent=11 // pred_region
        _
      $region20: #{bridger_forward.12} parent=11 // pred_fallthru
        _
      // Predicated region
      $region21: #{bridger_forward.12} parent=11 // pred_check
        %p212 = pneg %p102
      $region22: #{bridger_forward.12} parent=11 // pred_check_branch
        %214 = sbr.rel (%p212) target = $region24
      $region23: #{bridger_forward.12} parent=11 // pred_region
        _
      $region24: #{bridger_forward.12} parent=11 // pred_fallthru
        _
      // Predicated region
      $region25: #{bridger_forward.12} parent=11 // pred_check
        %p215 = pneg %p123
      $region26: #{bridger_forward.12} parent=11 // pred_check_branch
        %217 = sbr.rel (%p215) target = $region28
      $region27: #{bridger_forward.12} parent=11 // pred_region
        _
      $region28: #{bridger_forward.12} parent=11 // pred_fallthru
        _
      // Predicated region
      $region29: #{bridger_forward.12} parent=11 // pred_check
        %p218 = pneg %p144
      $region30: #{bridger_forward.12} parent=11 // pred_check_branch
        %220 = sbr.rel (%p218) target = $region32
      $region31: #{bridger_forward.12} parent=11 // pred_region
        _
      $region32: #{bridger_forward.12} parent=11 // pred_fallthru
        _
      // Predicated region
      $region33: #{bridger_forward.12} parent=11 // pred_check
        %p221 = pneg %p165
      $region34: #{bridger_forward.12} parent=11 // pred_check_branch
        %223 = sbr.rel (%p221) target = $region36
      $region35: #{bridger_forward.12} parent=11 // pred_region
        _
      $region36: #{bridger_forward.12} parent=11 // pred_fallthru
        _
    $region12: #{bridger_forward.12} parent=5 // pred_fallthru
      _
    %p224 = scmp.lt.s32.totalorder %s13, 2
    // Predicated region
    $region37: #{bridger_forward.12} parent=5 // pred_check
      %p225 = pneg %p224
    $region38: #{bridger_forward.12} parent=5 // pred_check_branch
      %227 = sbr.rel (%p225) target = $region40
    $region39: #{bridger_forward.12} parent=5 // pred_region
      // Predicated region
      $region41: #{bridger_forward.12} parent=39 // pred_check
        %p228 = pneg %p33
      $region42: #{bridger_forward.12} parent=39 // pred_check_branch
        %230 = sbr.rel (%p228) target = $region44
      $region43: #{bridger_forward.12} parent=39 // pred_region
        %s231 = smul.u32 8, %s13
        %p232 = scmp.lt.s32.totalorder %s231, 15
        %s233 = scalar_select %p232, %s231, 15
        %s234 = smul.addr %s233, 4
        %s235 = scalar_lea.vmem %s0, %s234
        %s236 = smul.u32 8, %s13
      $region44: #{bridger_forward.12} parent=39 // pred_fallthru
        _
    $region40: #{bridger_forward.12} parent=5 // pred_fallthru
      _
    %p237 = scmp.le.s32.totalorder 1, %s13
    %p238 = scmp.lt.s32.totalorder %s13, 3
    %p239 = pnand %p237, %p238
    %p240 = pneg %p239
    // Predicated region
    $region45: #{bridger_forward.12} parent=5 // pred_check
      _
    $region46: #{bridger_forward.12} parent=5 // pred_check_branch
      %242 = sbr.rel (%p239) target = $region48
    $region47: #{bridger_forward.12} parent=5 // pred_region
      %s243 = ssub.s32 %s13, 1
      %s244 = smul.u32 8, %s18
      %p245 = scmp.lt.s32.totalorder %s244, 15
      %s246 = scalar_select %p245, %s244, 15
      %s247 = smul.addr %s246, 4
      %s248 = scalar_lea.vmem %s0, %s247
      %p249 = pneg %p39
      %p250 = pneg %p36
      %p251 = pneg %p60
      %p252 = pneg %p57
      %p253 = pneg %p81
      %p254 = pneg %p78
      %p255 = pneg %p102
      %p256 = pneg %p99
      %p257 = pneg %p123
      %p258 = pneg %p120
      %p259 = pneg %p144
      %p260 = pneg %p141
      %p261 = pneg %p165
      %p262 = pneg %p162
      %p263 = pneg %p191
      %p264 = pneg %p188
      %s265 = smul.u32 8, %s18
      %p266 = scmp.lt.s32.totalorder %s265, 15
      %s267 = scalar_select %p266, %s265, 15
      %s268 = smul.addr %s267, 4
      %s269 = scalar_lea.vmem %s7, %s268
      %s270 = smul.u32 8, %s18
      %p271 = scmp.lt.s32.totalorder %s270, 15
      %s272 = scalar_select %p271, %s270, 15
      %s273 = smul.addr %s272, 4
      %s274 = scalar_lea.vmem %s0, %s273
      %s275 = smul.u32 8, %s18
      %s276 = smul.u32 8, %s18
      %p277 = scmp.lt.s32.totalorder %s276, 15
      %s278 = scalar_select %p277, %s276, 15
      %s279 = smul.addr %s278, 4
      %s280 = scalar_lea.vmem %s7, %s279
      %s281 = smul.u32 8, %s18
      %v283 = vld [vmem:[%s274] sm:$0xf]
      %v284 = vld [vmem:[%s274 + $0x4] sm:$0xf]
      %v285 = vld [vmem:[%s274 + $0x8] sm:$0xf]
      %v286 = vld [vmem:[%s274 + $0xc] sm:$0xf]
      %v287 = vld [vmem:[%s274 + $0x10] sm:$0xf]
      %v288 = vld [vmem:[%s274 + $0x14] sm:$0xf]
      %v289 = vld [vmem:[%s274 + $0x18] sm:$0xf]
      %v290 = vld [vmem:[%s274 + $0x1c] sm:$0xf]
      %v291 = vld [vmem:[%s1] sm:$0xf]
      %v292 = vld [vmem:[%s1 + $0x4] sm:$0xf]
      %v293 = vld [vmem:[%s1 + $0x8] sm:$0xf]
      %v294 = vld [vmem:[%s1 + $0xc] sm:$0xf]
      %v295 = vld [vmem:[%s2] sm:$0x1]
      %v297 = vlaneseq
      %v298 = vshrl.u32 %v297, 7
      %v299 = vsub.s32 0, %v298
      %v300 = vrot.slane %v295, %v299
      %v310 = vunpack.c.l.b16 %v283
      %v311 = vunpack.c.l.b16 %v284
      %v312 = vunpack.c.l.b16 %v285
      %v313 = vunpack.c.l.b16 %v286
      %v314 = vunpack.c.l.b16 %v287
      %v315 = vunpack.c.l.b16 %v288
      %v316 = vunpack.c.l.b16 %v289
      %v317 = vunpack.c.l.b16 %v290
      %v318 = vpack.c.b16 %v311, %v310
      %v319 = vpack.c.b16 %v313, %v312
      %v320 = vpack.c.b16 %v315, %v314
      %v321 = vpack.c.b16 %v317, %v316
      %v326 = vunpack.c.l.b16 %v291
      %v327 = vunpack.c.l.b16 %v292
      %v328 = vunpack.c.l.b16 %v293
      %v329 = vunpack.c.l.b16 %v294
      %v330 = vpack.c.b16 %v327, %v326
      %v331 = vpack.c.b16 %v329, %v328
      %vm334 = vcmask 261120
      %v336 = vsel %vm334, %v318, 0
      %v339 = vsel %vm334, %v319, 0
      %v342 = vsel %vm334, %v320, 0
      %v345 = vsel %vm334, %v321, 0
      %347 = vmatprep.subr.bf16.mxu0 0
      %348 = vmatpush1.bf16.msra.mxu0 %v330
      %349 = vmatprep.subr.bf16.mxu0 0
      %350 = vmatpush1.bf16.msra.mxu0 %v331
      %351 = vmatprep.subr.bf16.mxu0 0
      %352 = vmatpush1.bf16.msra.mxu0 0
      %353 = vmatprep.subr.bf16.mxu0 0
      %354 = vmatpush1.bf16.msra.mxu0 0
      %355 = vmatprep.subr.bf16.mxu0 0
      %356 = vmatpush1.bf16.msra.mxu0 0
      %357 = vmatprep.subr.bf16.mxu0 0
      %358 = vmatpush1.bf16.msra.mxu0 0
      %359 = vmatprep.subr.bf16.mxu0 0
      %360 = vmatpush1.bf16.msra.mxu0 0
      %361 = vmatprep.subr.bf16.mxu0 0
      %362 = vmatpush1.bf16.msra.mxu0 0
      %363 = vmatprep.subr.bf16.mxu0 0
      %364 = vmatpush1.bf16.msra.mxu0 0
      %365 = vmatprep.subr.bf16.mxu0 0
      %366 = vmatpush1.bf16.msra.mxu0 0
      %367 = vmatprep.subr.bf16.mxu0 0
      %368 = vmatpush1.bf16.msra.mxu0 0
      %369 = vmatprep.subr.bf16.mxu0 0
      %370 = vmatpush1.bf16.msra.mxu0 0
      %371 = vmatprep.subr.bf16.mxu0 0
      %372 = vmatpush1.bf16.msra.mxu0 0
      %373 = vmatprep.subr.bf16.mxu0 0
      %374 = vmatpush1.bf16.msra.mxu0 0
      %375 = vmatprep.subr.bf16.mxu0 0
      %376 = vmatpush1.bf16.msra.mxu0 0
      %377 = vmatprep.subr.bf16.mxu0 0
      %378 = vmatpush1.bf16.msra.mxu0 0
      %379 = vmatprep.mubr.bf16.mxu0 0
      %380 = vmatmul.mubr.bf16.gmra.mrb[0].mxu0 %v336
      %v381 = vpop.f32.mrb[0].mxu0
      %v382 = vadd.f32 %v300, %v381
      %v383 = vpop.f32.mrb[0].mxu0
      %v384 = vpop.f32.mrb[0].mxu0
      %v385 = vadd.f32 %v300, %v384
      %v386 = vpop.f32.mrb[0].mxu0
      %387 = vmatprep.mubr.bf16.mxu0 0
      %388 = vmatmul.mubr.bf16.gmra.mrb[0].mxu0 %v339
      %v389 = vpop.f32.mrb[0].mxu0
      %v390 = vadd.f32 %v300, %v389
      %v391 = vpop.f32.mrb[0].mxu0
      %v392 = vpop.f32.mrb[0].mxu0
      %v393 = vadd.f32 %v300, %v392
      %v394 = vpop.f32.mrb[0].mxu0
      %395 = vmatprep.mubr.bf16.mxu0 0
      %396 = vmatmul.mubr.bf16.gmra.mrb[0].mxu0 %v342
      %v397 = vpop.f32.mrb[0].mxu0
      %v398 = vadd.f32 %v300, %v397
      %v399 = vpop.f32.mrb[0].mxu0
      %v400 = vpop.f32.mrb[0].mxu0
      %v401 = vadd.f32 %v300, %v400
      %v402 = vpop.f32.mrb[0].mxu0
      %403 = vmatprep.mubr.bf16.mxu0 0
      %404 = vmatmul.mubr.bf16.gmra.mrb[0].mxu0 %v345
      %v405 = vpop.f32.mrb[0].mxu0
      %v406 = vadd.f32 %v300, %v405
      %v407 = vpop.f32.mrb[0].mxu0
      %v408 = vpop.f32.mrb[0].mxu0
      %v409 = vadd.f32 %v300, %v408
      %v410 = vpop.f32.mrb[0].mxu0
      %411 = vdwg.mxu0
      %v412 = vpack.c.bf16 %v385, %v382
      %v413 = vpack.c.bf16 %v393, %v390
      %v414 = vpack.c.bf16 %v401, %v398
      %v415 = vpack.c.bf16 %v409, %v406
      %420 = vrot.lane.b32.xlu0 %v412, 96
      %v421 = vpop.permute.xlu0 %420
      %422 = vrot.lane.b32.xlu0 %v413, 96
      %v423 = vpop.permute.xlu0 %422
      %424 = vrot.lane.b32.xlu0 %v414, 96
      %v425 = vpop.permute.xlu0 %424
      %426 = vrot.lane.b32.xlu0 %v415, 96
      %v427 = vpop.permute.xlu0 %426
      %vm428 = vcmask 64512
      %v430 = vsel %vm428, %v412, 0
      %v433 = vsel %vm428, %v413, 0
      %v436 = vsel %vm428, %v414, 0
      %v439 = vsel %vm428, %v415, 0
      %v442 = vsel %vm428, %v421, 0
      %v445 = vsel %vm428, %v423, 0
      %v448 = vsel %vm428, %v425, 0
      %v451 = vsel %vm428, %v427, 0
      %453 = vmatprep.subr.bf16.mxu0 0
      %454 = vmatpush1.bf16.xpose.msra.mxu0 %v442
      %455 = vmatprep.subr.bf16.mxu0 0
      %456 = vmatpush1.bf16.xpose.msra.mxu0 %v445
      %457 = vmatprep.subr.bf16.mxu0 0
      %458 = vmatpush1.bf16.xpose.msra.mxu0 %v448
      %459 = vmatprep.subr.bf16.mxu0 0
      %460 = vmatpush1.bf16.xpose.msra.mxu0 %v451
      %461 = vmatprep.subr.bf16.mxu0 0
      %462 = vmatpush1.bf16.xpose.msra.mxu0 0
      %463 = vmatprep.subr.bf16.mxu0 0
      %464 = vmatpush1.bf16.xpose.msra.mxu0 0
      %465 = vmatprep.subr.bf16.mxu0 0
      %466 = vmatpush1.bf16.xpose.msra.mxu0 0
      %467 = vmatprep.subr.bf16.mxu0 0
      %468 = vmatpush1.bf16.xpose.msra.mxu0 0
      %469 = vmatprep.subr.bf16.mxu0 0
      %470 = vmatpush1.bf16.xpose.msra.mxu0 0
      %471 = vmatprep.subr.bf16.mxu0 0
      %472 = vmatpush1.bf16.xpose.msra.mxu0 0
      %473 = vmatprep.subr.bf16.mxu0 0
      %474 = vmatpush1.bf16.xpose.msra.mxu0 0
      %475 = vmatprep.subr.bf16.mxu0 0
      %476 = vmatpush1.bf16.xpose.msra.mxu0 0
      %477 = vmatprep.subr.bf16.mxu0 0
      %478 = vmatpush1.bf16.xpose.msra.mxu0 0
      %479 = vmatprep.subr.bf16.mxu0 0
      %480 = vmatpush1.bf16.xpose.msra.mxu0 0
      %481 = vmatprep.subr.bf16.mxu0 0
      %482 = vmatpush1.bf16.xpose.msra.mxu0 0
      %483 = vmatprep.subr.bf16.mxu0 0
      %484 = vmatpush1.bf16.xpose.msra.mxu0 0
      %485 = vmatprep.mubr.bf16.mxu0 0
      %486 = vmatmul.mubr.bf16.gmra.mrb[0].mxu0 %v430
      %v487 = vpop.f32.mrb[0].mxu0
      %v488 = vadd.f32 0.0, %v487
      %v489 = vpop.f32.mrb[0].mxu0
      %v490 = vpop.f32.mrb[0].mxu0
      %v491 = vadd.f32 0.0, %v490
      %v492 = vpop.f32.mrb[0].mxu0
      %493 = vmatprep.mubr.bf16.mxu0 0
      %494 = vmatmul.mubr.bf16.gmra.mrb[0].mxu0 %v433
      %v495 = vpop.f32.mrb[0].mxu0
      %v496 = vadd.f32 0.0, %v495
      %v497 = vpop.f32.mrb[0].mxu0
      %v498 = vpop.f32.mrb[0].mxu0
      %v499 = vadd.f32 0.0, %v498
      %v500 = vpop.f32.mrb[0].mxu0
      %501 = vmatprep.mubr.bf16.mxu0 0
      %502 = vmatmul.mubr.bf16.gmra.mrb[0].mxu0 %v436
      %v503 = vpop.f32.mrb[0].mxu0
      %v504 = vadd.f32 0.0, %v503
      %v505 = vpop.f32.mrb[0].mxu0
      %v506 = vpop.f32.mrb[0].mxu0
      %v507 = vadd.f32 0.0, %v506
      %v508 = vpop.f32.mrb[0].mxu0
      %509 = vmatprep.mubr.bf16.mxu0 0
      %510 = vmatmul.mubr.bf16.gmra.mrb[0].mxu0 %v439
      %v511 = vpop.f32.mrb[0].mxu0
      %v512 = vadd.f32 0.0, %v511
      %v513 = vpop.f32.mrb[0].mxu0
      %v514 = vpop.f32.mrb[0].mxu0
      %v515 = vadd.f32 0.0, %v514
      %v516 = vpop.f32.mrb[0].mxu0
      %517 = vdwg.mxu0
      %vm518 = vcmask 523264
      %v519 = vsel %vm518, %v488, -inf
      %520 = vmax.xlane.f32.xlu0 %v519
      %v521 = vpop.xlane.xlu0 %520
      %v522 = vsel %vm518, %v491, -inf
      %523 = vmax.xlane.f32.xlu0 %v522
      %v524 = vpop.xlane.xlu0 %523
      %v525 = vsel %vm518, %v496, -inf
      %526 = vmax.xlane.f32.xlu0 %v525
      %v527 = vpop.xlane.xlu0 %526
      %v528 = vsel %vm518, %v499, -inf
      %529 = vmax.xlane.f32.xlu0 %v528
      %v530 = vpop.xlane.xlu0 %529
      %v531 = vsel %vm518, %v504, -inf
      %532 = vmax.xlane.f32.xlu0 %v531
      %v533 = vpop.xlane.xlu0 %532
      %v534 = vsel %vm518, %v507, -inf
      %535 = vmax.xlane.f32.xlu0 %v534
      %v536 = vpop.xlane.xlu0 %535
      %v537 = vsel %vm518, %v512, -inf
      %538 = vmax.xlane.f32.xlu0 %v537
      %v539 = vpop.xlane.xlu0 %538
      %v540 = vsel %vm518, %v515, -inf
      %541 = vmax.xlane.f32.xlu0 %v540
      %v542 = vpop.xlane.xlu0 %541
      %v543 = vsub.f32 %v488, %v521
      %v544 = vsub.f32 %v491, %v524
      %v545 = vsub.f32 %v496, %v527
      %v546 = vsub.f32 %v499, %v530
      %v547 = vsub.f32 %v504, %v533
      %v548 = vsub.f32 %v507, %v536
      %v549 = vsub.f32 %v512, %v539
      %v550 = vsub.f32 %v515, %v542
      %v551 = vmul.f32 %v543, 1.442695
      %v552 = vpow.pop %v551
      %v553 = vmul.f32 %v544, 1.442695
      %v554 = vpow.pop %v553
      %v555 = vmul.f32 %v545, 1.442695
      %v556 = vpow.pop %v555
      %v557 = vmul.f32 %v546, 1.442695
      %v558 = vpow.pop %v557
      %v559 = vmul.f32 %v547, 1.442695
      %v560 = vpow.pop %v559
      %v561 = vmul.f32 %v548, 1.442695
      %v562 = vpow.pop %v561
      %v563 = vmul.f32 %v549, 1.442695
      %v564 = vpow.pop %v563
      %v565 = vmul.f32 %v550, 1.442695
      %v566 = vpow.pop %v565
      %v567 = vsel %vm518, %v552, 0.0
      %568 = vadd.xlane.f32.xlu0 %v567
      %v569 = vpop.xlane.xlu0 %568
      %v570 = vsel %vm518, %v554, 0.0
      %571 = vadd.xlane.f32.xlu0 %v570
      %v572 = vpop.xlane.xlu0 %571
      %v573 = vsel %vm518, %v556, 0.0
      %574 = vadd.xlane.f32.xlu0 %v573
      %v575 = vpop.xlane.xlu0 %574
      %v576 = vsel %vm518, %v558, 0.0
      %577 = vadd.xlane.f32.xlu0 %v576
      %v578 = vpop.xlane.xlu0 %577
      %v579 = vsel %vm518, %v560, 0.0
      %580 = vadd.xlane.f32.xlu0 %v579
      %v581 = vpop.xlane.xlu0 %580
      %v582 = vsel %vm518, %v562, 0.0
      %583 = vadd.xlane.f32.xlu0 %v582
      %v584 = vpop.xlane.xlu0 %583
      %v585 = vsel %vm518, %v564, 0.0
      %586 = vadd.xlane.f32.xlu0 %v585
      %v587 = vpop.xlane.xlu0 %586
      %v588 = vsel %vm518, %v566, 0.0
      %589 = vadd.xlane.f32.xlu0 %v588
      %v590 = vpop.xlane.xlu0 %589
      %v591 = vrcp.pop %v569
      %v592 = vmul.f32 %v552, %v591
      %v593 = vrcp.pop %v572
      %v594 = vmul.f32 %v554, %v593
      %v595 = vrcp.pop %v575
      %v596 = vmul.f32 %v556, %v595
      %v597 = vrcp.pop %v578
      %v598 = vmul.f32 %v558, %v597
      %v599 = vrcp.pop %v581
      %v600 = vmul.f32 %v560, %v599
      %v601 = vrcp.pop %v584
      %v602 = vmul.f32 %v562, %v601
      %v603 = vrcp.pop %v587
      %v604 = vmul.f32 %v564, %v603
      %v605 = vrcp.pop %v590
      %v606 = vmul.f32 %v566, %v605
      %v607 = vpack.c.bf16 %v594, %v592
      %v608 = vpack.c.bf16 %v598, %v596
      %v609 = vpack.c.bf16 %v602, %v600
      %v610 = vpack.c.bf16 %v606, %v604
      %611 = vrot.lane.b32.xlu0 %v412, 64
      %v612 = vpop.permute.xlu0 %611
      %613 = vrot.lane.b32.xlu0 %v413, 64
      %v614 = vpop.permute.xlu0 %613
      %615 = vrot.lane.b32.xlu0 %v414, 64
      %v616 = vpop.permute.xlu0 %615
      %617 = vrot.lane.b32.xlu0 %v415, 64
      %v618 = vpop.permute.xlu0 %617
      %v624 = vsel %vm518, %v607, 0
      %v627 = vsel %vm518, %v608, 0
      %v630 = vsel %vm518, %v609, 0
      %v633 = vsel %vm518, %v610, 0
      %635 = vmatprep.subr.bf16.mxu0 0
      %636 = vmatpush1.bf16.msra.mxu0 %v612
      %637 = vmatprep.subr.bf16.mxu0 0
      %638 = vmatpush1.bf16.msra.mxu0 %v614
      %639 = vmatprep.subr.bf16.mxu0 0
      %640 = vmatpush1.bf16.msra.mxu0 %v616
      %641 = vmatprep.subr.bf16.mxu0 0
      %642 = vmatpush1.bf16.msra.mxu0 %v618
      %643 = vmatprep.subr.bf16.mxu0 0
      %644 = vmatpush1.bf16.msra.mxu0 0
      %645 = vmatprep.subr.bf16.mxu0 0
      %646 = vmatpush1.bf16.msra.mxu0 0
      %647 = vmatprep.subr.bf16.mxu0 0
      %648 = vmatpush1.bf16.msra.mxu0 0
      %649 = vmatprep.subr.bf16.mxu0 0
      %650 = vmatpush1.bf16.msra.mxu0 0
      %651 = vmatprep.subr.bf16.mxu0 0
      %652 = vmatpush1.bf16.msra.mxu0 0
      %653 = vmatprep.subr.bf16.mxu0 0
      %654 = vmatpush1.bf16.msra.mxu0 0
      %655 = vmatprep.subr.bf16.mxu0 0
      %656 = vmatpush1.bf16.msra.mxu0 0
      %657 = vmatprep.subr.bf16.mxu0 0
      %658 = vmatpush1.bf16.msra.mxu0 0
      %659 = vmatprep.subr.bf16.mxu0 0
      %660 = vmatpush1.bf16.msra.mxu0 0
      %661 = vmatprep.subr.bf16.mxu0 0
      %662 = vmatpush1.bf16.msra.mxu0 0
      %663 = vmatprep.subr.bf16.mxu0 0
      %664 = vmatpush1.bf16.msra.mxu0 0
      %665 = vmatprep.subr.bf16.mxu0 0
      %666 = vmatpush1.bf16.msra.mxu0 0
      %667 = vmatprep.mubr.bf16.mxu0 0
      %668 = vmatmul.mubr.bf16.gmra.mrb[0].mxu0 %v624
      %v669 = vpop.f32.mrb[0].mxu0
      %v670 = vadd.f32 0.0, %v669
      %v671 = vpop.f32.mrb[0].mxu0
      %v672 = vpop.f32.mrb[0].mxu0
      %v673 = vadd.f32 0.0, %v672
      %v674 = vpop.f32.mrb[0].mxu0
      %675 = vmatprep.mubr.bf16.mxu0 0
      %676 = vmatmul.mubr.bf16.gmra.mrb[0].mxu0 %v627
      %v677 = vpop.f32.mrb[0].mxu0
      %v678 = vadd.f32 0.0, %v677
      %v679 = vpop.f32.mrb[0].mxu0
      %v680 = vpop.f32.mrb[0].mxu0
      %v681 = vadd.f32 0.0, %v680
      %v682 = vpop.f32.mrb[0].mxu0
      %683 = vmatprep.mubr.bf16.mxu0 0
      %684 = vmatmul.mubr.bf16.gmra.mrb[0].mxu0 %v630
      %v685 = vpop.f32.mrb[0].mxu0
      %v686 = vadd.f32 0.0, %v685
      %v687 = vpop.f32.mrb[0].mxu0
      %v688 = vpop.f32.mrb[0].mxu0
      %v689 = vadd.f32 0.0, %v688
      %v690 = vpop.f32.mrb[0].mxu0
      %691 = vmatprep.mubr.bf16.mxu0 0
      %692 = vmatmul.mubr.bf16.gmra.mrb[0].mxu0 %v633
      %v693 = vpop.f32.mrb[0].mxu0
      %v694 = vadd.f32 0.0, %v693
      %v695 = vpop.f32.mrb[0].mxu0
      %v696 = vpop.f32.mrb[0].mxu0
      %v697 = vadd.f32 0.0, %v696
      %v698 = vpop.f32.mrb[0].mxu0
      %699 = vdwg.mxu0
      %700 = vrot.lane.b32.xlu0 %v412, 120
      %v701 = vpop.permute.xlu0 %700
      %702 = vrot.lane.b32.xlu0 %v413, 120
      %v703 = vpop.permute.xlu0 %702
      %704 = vrot.lane.b32.xlu0 %v414, 120
      %v705 = vpop.permute.xlu0 %704
      %706 = vrot.lane.b32.xlu0 %v415, 120
      %v707 = vpop.permute.xlu0 %706
      %708 = vrot.lane.b32.xlu0 %v412, 88
      %v709 = vpop.permute.xlu0 %708
      %710 = vrot.lane.b32.xlu0 %v413, 88
      %v711 = vpop.permute.xlu0 %710
      %712 = vrot.lane.b32.xlu0 %v414, 88
      %v713 = vpop.permute.xlu0 %712
      %714 = vrot.lane.b32.xlu0 %v415, 88
      %v715 = vpop.permute.xlu0 %714
      %v717 = vsel %vm428, %v701, 0
      %v720 = vsel %vm428, %v703, 0
      %v723 = vsel %vm428, %v705, 0
      %v726 = vsel %vm428, %v707, 0
      %v729 = vsel %vm428, %v709, 0
      %v732 = vsel %vm428, %v711, 0
      %v735 = vsel %vm428, %v713, 0
      %v738 = vsel %vm428, %v715, 0
      %740 = vmatprep.subr.bf16.mxu0 0
      %741 = vmatpush1.bf16.xpose.msra.mxu0 %v729
      %742 = vmatprep.subr.bf16.mxu0 0
      %743 = vmatpush1.bf16.xpose.msra.mxu0 %v732
      %744 = vmatprep.subr.bf16.mxu0 0
      %745 = vmatpush1.bf16.xpose.msra.mxu0 %v735
      %746 = vmatprep.subr.bf16.mxu0 0
      %747 = vmatpush1.bf16.xpose.msra.mxu0 %v738
      %748 = vmatprep.subr.bf16.mxu0 0
      %749 = vmatpush1.bf16.xpose.msra.mxu0 0
      %750 = vmatprep.subr.bf16.mxu0 0
      %751 = vmatpush1.bf16.xpose.msra.mxu0 0
      %752 = vmatprep.subr.bf16.mxu0 0
      %753 = vmatpush1.bf16.xpose.msra.mxu0 0
      %754 = vmatprep.subr.bf16.mxu0 0
      %755 = vmatpush1.bf16.xpose.msra.mxu0 0
      %756 = vmatprep.subr.bf16.mxu0 0
      %757 = vmatpush1.bf16.xpose.msra.mxu0 0
      %758 = vmatprep.subr.bf16.mxu0 0
      %759 = vmatpush1.bf16.xpose.msra.mxu0 0
      %760 = vmatprep.subr.bf16.mxu0 0
      %761 = vmatpush1.bf16.xpose.msra.mxu0 0
      %762 = vmatprep.subr.bf16.mxu0 0
      %763 = vmatpush1.bf16.xpose.msra.mxu0 0
      %764 = vmatprep.subr.bf16.mxu0 0
      %765 = vmatpush1.bf16.xpose.msra.mxu0 0
      %766 = vmatprep.subr.bf16.mxu0 0
      %767 = vmatpush1.bf16.xpose.msra.mxu0 0
      %768 = vmatprep.subr.bf16.mxu0 0
      %769 = vmatpush1.bf16.xpose.msra.mxu0 0
      %770 = vmatprep.subr.bf16.mxu0 0
      %771 = vmatpush1.bf16.xpose.msra.mxu0 0
      %772 = vmatprep.mubr.bf16.mxu0 0
      %773 = vmatmul.mubr.bf16.gmra.mrb[0].mxu0 %v717
      %v774 = vpop.f32.mrb[0].mxu0
      %v775 = vadd.f32 0.0, %v774
      %v776 = vpop.f32.mrb[0].mxu0
      %v777 = vpop.f32.mrb[0].mxu0
      %v778 = vadd.f32 0.0, %v777
      %v779 = vpop.f32.mrb[0].mxu0
      %780 = vmatprep.mubr.bf16.mxu0 0
      %781 = vmatmul.mubr.bf16.gmra.mrb[0].mxu0 %v720
      %v782 = vpop.f32.mrb[0].mxu0
      %v783 = vadd.f32 0.0, %v782
      %v784 = vpop.f32.mrb[0].mxu0
      %v785 = vpop.f32.mrb[0].mxu0
      %v786 = vadd.f32 0.0, %v785
      %v787 = vpop.f32.mrb[0].mxu0
      %788 = vmatprep.mubr.bf16.mxu0 0
      %789 = vmatmul.mubr.bf16.gmra.mrb[0].mxu0 %v723
      %v790 = vpop.f32.mrb[0].mxu0
      %v791 = vadd.f32 0.0, %v790
      %v792 = vpop.f32.mrb[0].mxu0
      %v793 = vpop.f32.mrb[0].mxu0
      %v794 = vadd.f32 0.0, %v793
      %v795 = vpop.f32.mrb[0].mxu0
      %796 = vmatprep.mubr.bf16.mxu0 0
      %797 = vmatmul.mubr.bf16.gmra.mrb[0].mxu0 %v726
      %v798 = vpop.f32.mrb[0].mxu0
      %v799 = vadd.f32 0.0, %v798
      %v800 = vpop.f32.mrb[0].mxu0
      %v801 = vpop.f32.mrb[0].mxu0
      %v802 = vadd.f32 0.0, %v801
      %v803 = vpop.f32.mrb[0].mxu0
      %804 = vdwg.mxu0
      %v805 = vsel %vm518, %v775, -inf
      %806 = vmax.xlane.f32.xlu0 %v805
      %v807 = vpop.xlane.xlu0 %806
      %v808 = vsel %vm518, %v778, -inf
      %809 = vmax.xlane.f32.xlu0 %v808
      %v810 = vpop.xlane.xlu0 %809
      %v811 = vsel %vm518, %v783, -inf
      %812 = vmax.xlane.f32.xlu0 %v811
      %v813 = vpop.xlane.xlu0 %812
      %v814 = vsel %vm518, %v786, -inf
      %815 = vmax.xlane.f32.xlu0 %v814
      %v816 = vpop.xlane.xlu0 %815
      %v817 = vsel %vm518, %v791, -inf
      %818 = vmax.xlane.f32.xlu0 %v817
      %v819 = vpop.xlane.xlu0 %818
      %v820 = vsel %vm518, %v794, -inf
      %821 = vmax.xlane.f32.xlu0 %v820
      %v822 = vpop.xlane.xlu0 %821
      %v823 = vsel %vm518, %v799, -inf
      %824 = vmax.xlane.f32.xlu0 %v823
      %v825 = vpop.xlane.xlu0 %824
      %v826 = vsel %vm518, %v802, -inf
      %827 = vmax.xlane.f32.xlu0 %v826
      %v828 = vpop.xlane.xlu0 %827
      %v829 = vsub.f32 %v775, %v807
      %v830 = vsub.f32 %v778, %v810
      %v831 = vsub.f32 %v783, %v813
      %v832 = vsub.f32 %v786, %v816
      %v833 = vsub.f32 %v791, %v819
      %v834 = vsub.f32 %v794, %v822
      %v835 = vsub.f32 %v799, %v825
      %v836 = vsub.f32 %v802, %v828
      %v837 = vmul.f32 %v829, 1.442695
      %v838 = vpow.pop %v837
      %v839 = vmul.f32 %v830, 1.442695
      %v840 = vpow.pop %v839
      %v841 = vmul.f32 %v831, 1.442695
      %v842 = vpow.pop %v841
      %v843 = vmul.f32 %v832, 1.442695
      %v844 = vpow.pop %v843
      %v845 = vmul.f32 %v833, 1.442695
      %v846 = vpow.pop %v845
      %v847 = vmul.f32 %v834, 1.442695
      %v848 = vpow.pop %v847
      %v849 = vmul.f32 %v835, 1.442695
      %v850 = vpow.pop %v849
      %v851 = vmul.f32 %v836, 1.442695
      %v852 = vpow.pop %v851
      %v853 = vsel %vm518, %v838, 0.0
      %854 = vadd.xlane.f32.xlu0 %v853
      %v855 = vpop.xlane.xlu0 %854
      %v856 = vsel %vm518, %v840, 0.0
      %857 = vadd.xlane.f32.xlu0 %v856
      %v858 = vpop.xlane.xlu0 %857
      %v859 = vsel %vm518, %v842, 0.0
      %860 = vadd.xlane.f32.xlu0 %v859
      %v861 = vpop.xlane.xlu0 %860
      %v862 = vsel %vm518, %v844, 0.0
      %863 = vadd.xlane.f32.xlu0 %v862
      %v864 = vpop.xlane.xlu0 %863
      %v865 = vsel %vm518, %v846, 0.0
      %866 = vadd.xlane.f32.xlu0 %v865
      %v867 = vpop.xlane.xlu0 %866
      %v868 = vsel %vm518, %v848, 0.0
      %869 = vadd.xlane.f32.xlu0 %v868
      %v870 = vpop.xlane.xlu0 %869
      %v871 = vsel %vm518, %v850, 0.0
      %872 = vadd.xlane.f32.xlu0 %v871
      %v873 = vpop.xlane.xlu0 %872
      %v874 = vsel %vm518, %v852, 0.0
      %875 = vadd.xlane.f32.xlu0 %v874
      %v876 = vpop.xlane.xlu0 %875
      %v877 = vrcp.pop %v855
      %v878 = vmul.f32 %v838, %v877
      %v879 = vrcp.pop %v858
      %v880 = vmul.f32 %v840, %v879
      %v881 = vrcp.pop %v861
      %v882 = vmul.f32 %v842, %v881
      %v883 = vrcp.pop %v864
      %v884 = vmul.f32 %v844, %v883
      %v885 = vrcp.pop %v867
      %v886 = vmul.f32 %v846, %v885
      %v887 = vrcp.pop %v870
      %v888 = vmul.f32 %v848, %v887
      %v889 = vrcp.pop %v873
      %v890 = vmul.f32 %v850, %v889
      %v891 = vrcp.pop %v876
      %v892 = vmul.f32 %v852, %v891
      %v893 = vpack.c.bf16 %v880, %v878
      %v894 = vpack.c.bf16 %v884, %v882
      %v895 = vpack.c.bf16 %v888, %v886
      %v896 = vpack.c.bf16 %v892, %v890
      %897 = vrot.lane.b32.xlu0 %v412, 56
      %v898 = vpop.permute.xlu0 %897
      %899 = vrot.lane.b32.xlu0 %v413, 56
      %v900 = vpop.permute.xlu0 %899
      %901 = vrot.lane.b32.xlu0 %v414, 56
      %v902 = vpop.permute.xlu0 %901
      %903 = vrot.lane.b32.xlu0 %v415, 56
      %v904 = vpop.permute.xlu0 %903
      %v910 = vsel %vm518, %v893, 0
      %v913 = vsel %vm518, %v894, 0
      %v916 = vsel %vm518, %v895, 0
      %v919 = vsel %vm518, %v896, 0
      %921 = vmatprep.subr.bf16.mxu0 0
      %922 = vmatpush1.bf16.msra.mxu0 %v898
      %923 = vmatprep.subr.bf16.mxu0 0
      %924 = vmatpush1.bf16.msra.mxu0 %v900
      %925 = vmatprep.subr.bf16.mxu0 0
      %926 = vmatpush1.bf16.msra.mxu0 %v902
      %927 = vmatprep.subr.bf16.mxu0 0
      %928 = vmatpush1.bf16.msra.mxu0 %v904
      %929 = vmatprep.subr.bf16.mxu0 0
      %930 = vmatpush1.bf16.msra.mxu0 0
      %931 = vmatprep.subr.bf16.mxu0 0
      %932 = vmatpush1.bf16.msra.mxu0 0
      %933 = vmatprep.subr.bf16.mxu0 0
      %934 = vmatpush1.bf16.msra.mxu0 0
      %935 = vmatprep.subr.bf16.mxu0 0
      %936 = vmatpush1.bf16.msra.mxu0 0
      %937 = vmatprep.subr.bf16.mxu0 0
      %938 = vmatpush1.bf16.msra.mxu0 0
      %939 = vmatprep.subr.bf16.mxu0 0
      %940 = vmatpush1.bf16.msra.mxu0 0
      %941 = vmatprep.subr.bf16.mxu0 0
      %942 = vmatpush1.bf16.msra.mxu0 0
      %943 = vmatprep.subr.bf16.mxu0 0
      %944 = vmatpush1.bf16.msra.mxu0 0
      %945 = vmatprep.subr.bf16.mxu0 0
      %946 = vmatpush1.bf16.msra.mxu0 0
      %947 = vmatprep.subr.bf16.mxu0 0
      %948 = vmatpush1.bf16.msra.mxu0 0
      %949 = vmatprep.subr.bf16.mxu0 0
      %950 = vmatpush1.bf16.msra.mxu0 0
      %951 = vmatprep.subr.bf16.mxu0 0
      %952 = vmatpush1.bf16.msra.mxu0 0
      %953 = vmatprep.mubr.bf16.mxu0 0
      %954 = vmatmul.mubr.bf16.gmra.mrb[0].mxu0 %v910
      %v955 = vpop.f32.mrb[0].mxu0
      %v956 = vadd.f32 0.0, %v955
      %v957 = vpop.f32.mrb[0].mxu0
      %v958 = vpop.f32.mrb[0].mxu0
      %v959 = vadd.f32 0.0, %v958
      %v960 = vpop.f32.mrb[0].mxu0
      %961 = vmatprep.mubr.bf16.mxu0 0
      %962 = vmatmul.mubr.bf16.gmra.mrb[0].mxu0 %v913
      %v963 = vpop.f32.mrb[0].mxu0
      %v964 = vadd.f32 0.0, %v963
      %v965 = vpop.f32.mrb[0].mxu0
      %v966 = vpop.f32.mrb[0].mxu0
      %v967 = vadd.f32 0.0, %v966
      %v968 = vpop.f32.mrb[0].mxu0
      %969 = vmatprep.mubr.bf16.mxu0 0
      %970 = vmatmul.mubr.bf16.gmra.mrb[0].mxu0 %v916
      %v971 = vpop.f32.mrb[0].mxu0
      %v972 = vadd.f32 0.0, %v971
      %v973 = vpop.f32.mrb[0].mxu0
      %v974 = vpop.f32.mrb[0].mxu0
      %v975 = vadd.f32 0.0, %v974
      %v976 = vpop.f32.mrb[0].mxu0
      %977 = vmatprep.mubr.bf16.mxu0 0
      %978 = vmatmul.mubr.bf16.gmra.mrb[0].mxu0 %v919
      %v979 = vpop.f32.mrb[0].mxu0
      %v980 = vadd.f32 0.0, %v979
      %v981 = vpop.f32.mrb[0].mxu0
      %v982 = vpop.f32.mrb[0].mxu0
      %v983 = vadd.f32 0.0, %v982
      %v984 = vpop.f32.mrb[0].mxu0
      %985 = vdwg.mxu0
      %986 = vrot.lane.b32.xlu0 %v412, 112
      %v987 = vpop.permute.xlu0 %986
      %988 = vrot.lane.b32.xlu0 %v413, 112
      %v989 = vpop.permute.xlu0 %988
      %990 = vrot.lane.b32.xlu0 %v414, 112
      %v991 = vpop.permute.xlu0 %990
      %992 = vrot.lane.b32.xlu0 %v415, 112
      %v993 = vpop.permute.xlu0 %992
      %994 = vrot.lane.b32.xlu0 %v412, 80
      %v995 = vpop.permute.xlu0 %994
      %996 = vrot.lane.b32.xlu0 %v413, 80
      %v997 = vpop.permute.xlu0 %996
      %998 = vrot.lane.b32.xlu0 %v414, 80
      %v999 = vpop.permute.xlu0 %998
      %1000 = vrot.lane.b32.xlu0 %v415, 80
      %v1001 = vpop.permute.xlu0 %1000
      %v1003 = vsel %vm428, %v987, 0
      %v1006 = vsel %vm428, %v989, 0
      %v1009 = vsel %vm428, %v991, 0
      %v1012 = vsel %vm428, %v993, 0
      %v1015 = vsel %vm428, %v995, 0
      %v1018 = vsel %vm428, %v997, 0
      %v1021 = vsel %vm428, %v999, 0
      %v1024 = vsel %vm428, %v1001, 0
      %1026 = vmatprep.subr.bf16.mxu0 0
      %1027 = vmatpush1.bf16.xpose.msra.mxu0 %v1015
      %1028 = vmatprep.subr.bf16.mxu0 0
      %1029 = vmatpush1.bf16.xpose.msra.mxu0 %v1018
      %1030 = vmatprep.subr.bf16.mxu0 0
      %1031 = vmatpush1.bf16.xpose.msra.mxu0 %v1021
      %1032 = vmatprep.subr.bf16.mxu0 0
      %1033 = vmatpush1.bf16.xpose.msra.mxu0 %v1024
      %1034 = vmatprep.subr.bf16.mxu0 0
      %1035 = vmatpush1.bf16.xpose.msra.mxu0 0
      %1036 = vmatprep.subr.bf16.mxu0 0
      %1037 = vmatpush1.bf16.xpose.msra.mxu0 0
      %1038 = vmatprep.subr.bf16.mxu0 0
      %1039 = vmatpush1.bf16.xpose.msra.mxu0 0
      %1040 = vmatprep.subr.bf16.mxu0 0
      %1041 = vmatpush1.bf16.xpose.msra.mxu0 0
      %1042 = vmatprep.subr.bf16.mxu0 0
      %1043 = vmatpush1.bf16.xpose.msra.mxu0 0
      %1044 = vmatprep.subr.bf16.mxu0 0
      %1045 = vmatpush1.bf16.xpose.msra.mxu0 0
      %1046 = vmatprep.subr.bf16.mxu0 0
      %1047 = vmatpush1.bf16.xpose.msra.mxu0 0
      %1048 = vmatprep.subr.bf16.mxu0 0
      %1049 = vmatpush1.bf16.xpose.msra.mxu0 0
      %1050 = vmatprep.subr.bf16.mxu0 0
      %1051 = vmatpush1.bf16.xpose.msra.mxu0 0
      %1052 = vmatprep.subr.bf16.mxu0 0
      %1053 = vmatpush1.bf16.xpose.msra.mxu0 0
      %1054 = vmatprep.subr.bf16.mxu0 0
      %1055 = vmatpush1.bf16.xpose.msra.mxu0 0
      %1056 = vmatprep.subr.bf16.mxu0 0
      %1057 = vmatpush1.bf16.xpose.msra.mxu0 0
      %1058 = vmatprep.mubr.bf16.mxu0 0
      %1059 = vmatmul.mubr.bf16.gmra.mrb[0].mxu0 %v1003
      %v1060 = vpop.f32.mrb[0].mxu0
      %v1061 = vadd.f32 0.0, %v1060
      %v1062 = vpop.f32.mrb[0].mxu0
      %v1063 = vpop.f32.mrb[0].mxu0
      %v1064 = vadd.f32 0.0, %v1063
      %v1065 = vpop.f32.mrb[0].mxu0
      %1066 = vmatprep.mubr.bf16.mxu0 0
      %1067 = vmatmul.mubr.bf16.gmra.mrb[0].mxu0 %v1006
      %v1068 = vpop.f32.mrb[0].mxu0
      %v1069 = vadd.f32 0.0, %v1068
      %v1070 = vpop.f32.mrb[0].mxu0
      %v1071 = vpop.f32.mrb[0].mxu0
      %v1072 = vadd.f32 0.0, %v1071
      %v1073 = vpop.f32.mrb[0].mxu0
      %1074 = vmatprep.mubr.bf16.mxu0 0
      %1075 = vmatmul.mubr.bf16.gmra.mrb[0].mxu0 %v1009
      %v1076 = vpop.f32.mrb[0].mxu0
      %v1077 = vadd.f32 0.0, %v1076
      %v1078 = vpop.f32.mrb[0].mxu0
      %v1079 = vpop.f32.mrb[0].mxu0
      %v1080 = vadd.f32 0.0, %v1079
      %v1081 = vpop.f32.mrb[0].mxu0
      %1082 = vmatprep.mubr.bf16.mxu0 0
      %1083 = vmatmul.mubr.bf16.gmra.mrb[0].mxu0 %v1012
      %v1084 = vpop.f32.mrb[0].mxu0
      %v1085 = vadd.f32 0.0, %v1084
      %v1086 = vpop.f32.mrb[0].mxu0
      %v1087 = vpop.f32.mrb[0].mxu0
      %v1088 = vadd.f32 0.0, %v1087
      %v1089 = vpop.f32.mrb[0].mxu0
      %1090 = vdwg.mxu0
      %v1091 = vsel %vm518, %v1061, -inf
      %1092 = vmax.xlane.f32.xlu0 %v1091
      %v1093 = vpop.xlane.xlu0 %1092
      %v1094 = vsel %vm518, %v1064, -inf
      %1095 = vmax.xlane.f32.xlu0 %v1094
      %v1096 = vpop.xlane.xlu0 %1095
      %v1097 = vsel %vm518, %v1069, -inf
      %1098 = vmax.xlane.f32.xlu0 %v1097
      %v1099 = vpop.xlane.xlu0 %1098
      %v1100 = vsel %vm518, %v1072, -inf
      %1101 = vmax.xlane.f32.xlu0 %v1100
      %v1102 = vpop.xlane.xlu0 %1101
      %v1103 = vsel %vm518, %v1077, -inf
      %1104 = vmax.xlane.f32.xlu0 %v1103
      %v1105 = vpop.xlane.xlu0 %1104
      %v1106 = vsel %vm518, %v1080, -inf
      %1107 = vmax.xlane.f32.xlu0 %v1106
      %v1108 = vpop.xlane.xlu0 %1107
      %v1109 = vsel %vm518, %v1085, -inf
      %1110 = vmax.xlane.f32.xlu0 %v1109
      %v1111 = vpop.xlane.xlu0 %1110
      %v1112 = vsel %vm518, %v1088, -inf
      %1113 = vmax.xlane.f32.xlu0 %v1112
      %v1114 = vpop.xlane.xlu0 %1113
      %v1115 = vsub.f32 %v1061, %v1093
      %v1116 = vsub.f32 %v1064, %v1096
      %v1117 = vsub.f32 %v1069, %v1099
      %v1118 = vsub.f32 %v1072, %v1102
      %v1119 = vsub.f32 %v1077, %v1105
      %v1120 = vsub.f32 %v1080, %v1108
      %v1121 = vsub.f32 %v1085, %v1111
      %v1122 = vsub.f32 %v1088, %v1114
      %v1123 = vmul.f32 %v1115, 1.442695
      %v1124 = vpow.pop %v1123
      %v1125 = vmul.f32 %v1116, 1.442695
      %v1126 = vpow.pop %v1125
      %v1127 = vmul.f32 %v1117, 1.442695
      %v1128 = vpow.pop %v1127
      %v1129 = vmul.f32 %v1118, 1.442695
      %v1130 = vpow.pop %v1129
      %v1131 = vmul.f32 %v1119, 1.442695
      %v1132 = vpow.pop %v1131
      %v1133 = vmul.f32 %v1120, 1.442695
      %v1134 = vpow.pop %v1133
      %v1135 = vmul.f32 %v1121, 1.442695
      %v1136 = vpow.pop %v1135
      %v1137 = vmul.f32 %v1122, 1.442695
      %v1138 = vpow.pop %v1137
      %v1139 = vsel %vm518, %v1124, 0.0
      %1140 = vadd.xlane.f32.xlu0 %v1139
      %v1141 = vpop.xlane.xlu0 %1140
      %v1142 = vsel %vm518, %v1126, 0.0
      %1143 = vadd.xlane.f32.xlu0 %v1142
      %v1144 = vpop.xlane.xlu0 %1143
      %v1145 = vsel %vm518, %v1128, 0.0
      %1146 = vadd.xlane.f32.xlu0 %v1145
      %v1147 = vpop.xlane.xlu0 %1146
      %v1148 = vsel %vm518, %v1130, 0.0
      %1149 = vadd.xlane.f32.xlu0 %v1148
      %v1150 = vpop.xlane.xlu0 %1149
      %v1151 = vsel %vm518, %v1132, 0.0
      %1152 = vadd.xlane.f32.xlu0 %v1151
      %v1153 = vpop.xlane.xlu0 %1152
      %v1154 = vsel %vm518, %v1134, 0.0
      %1155 = vadd.xlane.f32.xlu0 %v1154
      %v1156 = vpop.xlane.xlu0 %1155
      %v1157 = vsel %vm518, %v1136, 0.0
      %1158 = vadd.xlane.f32.xlu0 %v1157
      %v1159 = vpop.xlane.xlu0 %1158
      %v1160 = vsel %vm518, %v1138, 0.0
      %1161 = vadd.xlane.f32.xlu0 %v1160
      %v1162 = vpop.xlane.xlu0 %1161
      %v1163 = vrcp.pop %v1141
      %v1164 = vmul.f32 %v1124, %v1163
      %v1165 = vrcp.pop %v1144
      %v1166 = vmul.f32 %v1126, %v1165
      %v1167 = vrcp.pop %v1147
      %v1168 = vmul.f32 %v1128, %v1167
      %v1169 = vrcp.pop %v1150
      %v1170 = vmul.f32 %v1130, %v1169
      %v1171 = vrcp.pop %v1153
      %v1172 = vmul.f32 %v1132, %v1171
      %v1173 = vrcp.pop %v1156
      %v1174 = vmul.f32 %v1134, %v1173
      %v1175 = vrcp.pop %v1159
      %v1176 = vmul.f32 %v1136, %v1175
      %v1177 = vrcp.pop %v1162
      %v1178 = vmul.f32 %v1138, %v1177
      %v1179 = vpack.c.bf16 %v1166, %v1164
      %v1180 = vpack.c.bf16 %v1170, %v1168
      %v1181 = vpack.c.bf16 %v1174, %v1172
      %v1182 = vpack.c.bf16 %v1178, %v1176
      %1183 = vrot.lane.b32.xlu0 %v412, 48
      %v1184 = vpop.permute.xlu0 %1183
      %1185 = vrot.lane.b32.xlu0 %v413, 48
      %v1186 = vpop.permute.xlu0 %1185
      %1187 = vrot.lane.b32.xlu0 %v414, 48
      %v1188 = vpop.permute.xlu0 %1187
      %1189 = vrot.lane.b32.xlu0 %v415, 48
      %v1190 = vpop.permute.xlu0 %1189
      %v1196 = vsel %vm518, %v1179, 0
      %v1199 = vsel %vm518, %v1180, 0
      %v1202 = vsel %vm518, %v1181, 0
      %v1205 = vsel %vm518, %v1182, 0
      %1207 = vmatprep.subr.bf16.mxu0 0
      %1208 = vmatpush1.bf16.msra.mxu0 %v1184
      %1209 = vmatprep.subr.bf16.mxu0 0
      %1210 = vmatpush1.bf16.msra.mxu0 %v1186
      %1211 = vmatprep.subr.bf16.mxu0 0
      %1212 = vmatpush1.bf16.msra.mxu0 %v1188
      %1213 = vmatprep.subr.bf16.mxu0 0
      %1214 = vmatpush1.bf16.msra.mxu0 %v1190
      %1215 = vmatprep.subr.bf16.mxu0 0
      %1216 = vmatpush1.bf16.msra.mxu0 0
      %1217 = vmatprep.subr.bf16.mxu0 0
      %1218 = vmatpush1.bf16.msra.mxu0 0
      %1219 = vmatprep.subr.bf16.mxu0 0
      %1220 = vmatpush1.bf16.msra.mxu0 0
      %1221 = vmatprep.subr.bf16.mxu0 0
      %1222 = vmatpush1.bf16.msra.mxu0 0
      %1223 = vmatprep.subr.bf16.mxu0 0
      %1224 = vmatpush1.bf16.msra.mxu0 0
      %1225 = vmatprep.subr.bf16.mxu0 0
      %1226 = vmatpush1.bf16.msra.mxu0 0
      %1227 = vmatprep.subr.bf16.mxu0 0
      %1228 = vmatpush1.bf16.msra.mxu0 0
      %1229 = vmatprep.subr.bf16.mxu0 0
      %1230 = vmatpush1.bf16.msra.mxu0 0
      %1231 = vmatprep.subr.bf16.mxu0 0
      %1232 = vmatpush1.bf16.msra.mxu0 0
      %1233 = vmatprep.subr.bf16.mxu0 0
      %1234 = vmatpush1.bf16.msra.mxu0 0
      %1235 = vmatprep.subr.bf16.mxu0 0
      %1236 = vmatpush1.bf16.msra.mxu0 0
      %1237 = vmatprep.subr.bf16.mxu0 0
      %1238 = vmatpush1.bf16.msra.mxu0 0
      %1239 = vmatprep.mubr.bf16.mxu0 0
      %1240 = vmatmul.mubr.bf16.gmra.mrb[0].mxu0 %v1196
      %v1241 = vpop.f32.mrb[0].mxu0
      %v1242 = vadd.f32 0.0, %v1241
      %v1243 = vpop.f32.mrb[0].mxu0
      %v1244 = vpop.f32.mrb[0].mxu0
      %v1245 = vadd.f32 0.0, %v1244
      %v1246 = vpop.f32.mrb[0].mxu0
      %1247 = vmatprep.mubr.bf16.mxu0 0
      %1248 = vmatmul.mubr.bf16.gmra.mrb[0].mxu0 %v1199
      %v1249 = vpop.f32.mrb[0].mxu0
      %v1250 = vadd.f32 0.0, %v1249
      %v1251 = vpop.f32.mrb[0].mxu0
      %v1252 = vpop.f32.mrb[0].mxu0
      %v1253 = vadd.f32 0.0, %v1252
      %v1254 = vpop.f32.mrb[0].mxu0
      %1255 = vmatprep.mubr.bf16.mxu0 0
      %1256 = vmatmul.mubr.bf16.gmra.mrb[0].mxu0 %v1202
      %v1257 = vpop.f32.mrb[0].mxu0
      %v1258 = vadd.f32 0.0, %v1257
      %v1259 = vpop.f32.mrb[0].mxu0
      %v1260 = vpop.f32.mrb[0].mxu0
      %v1261 = vadd.f32 0.0, %v1260
      %v1262 = vpop.f32.mrb[0].mxu0
      %1263 = vmatprep.mubr.bf16.mxu0 0
      %1264 = vmatmul.mubr.bf16.gmra.mrb[0].mxu0 %v1205
      %v1265 = vpop.f32.mrb[0].mxu0
      %v1266 = vadd.f32 0.0, %v1265
      %v1267 = vpop.f32.mrb[0].mxu0
      %v1268 = vpop.f32.mrb[0].mxu0
      %v1269 = vadd.f32 0.0, %v1268
      %v1270 = vpop.f32.mrb[0].mxu0
      %1271 = vdwg.mxu0
      %1272 = vrot.lane.b32.xlu0 %v412, 104
      %v1273 = vpop.permute.xlu0 %1272
      %1274 = vrot.lane.b32.xlu0 %v413, 104
      %v1275 = vpop.permute.xlu0 %1274
      %1276 = vrot.lane.b32.xlu0 %v414, 104
      %v1277 = vpop.permute.xlu0 %1276
      %1278 = vrot.lane.b32.xlu0 %v415, 104
      %v1279 = vpop.permute.xlu0 %1278
      %1280 = vrot.lane.b32.xlu0 %v412, 72
      %v1281 = vpop.permute.xlu0 %1280
      %1282 = vrot.lane.b32.xlu0 %v413, 72
      %v1283 = vpop.permute.xlu0 %1282
      %1284 = vrot.lane.b32.xlu0 %v414, 72
      %v1285 = vpop.permute.xlu0 %1284
      %1286 = vrot.lane.b32.xlu0 %v415, 72
      %v1287 = vpop.permute.xlu0 %1286
      %v1289 = vsel %vm428, %v1273, 0
      %v1292 = vsel %vm428, %v1275, 0
      %v1295 = vsel %vm428, %v1277, 0
      %v1298 = vsel %vm428, %v1279, 0
      %v1301 = vsel %vm428, %v1281, 0
      %v1304 = vsel %vm428, %v1283, 0
      %v1307 = vsel %vm428, %v1285, 0
      %v1310 = vsel %vm428, %v1287, 0
      %1312 = vmatprep.subr.bf16.mxu0 0
      %1313 = vmatpush1.bf16.xpose.msra.mxu0 %v1301
      %1314 = vmatprep.subr.bf16.mxu0 0
      %1315 = vmatpush1.bf16.xpose.msra.mxu0 %v1304
      %1316 = vmatprep.subr.bf16.mxu0 0
      %1317 = vmatpush1.bf16.xpose.msra.mxu0 %v1307
      %1318 = vmatprep.subr.bf16.mxu0 0
      %1319 = vmatpush1.bf16.xpose.msra.mxu0 %v1310
      %1320 = vmatprep.subr.bf16.mxu0 0
      %1321 = vmatpush1.bf16.xpose.msra.mxu0 0
      %1322 = vmatprep.subr.bf16.mxu0 0
      %1323 = vmatpush1.bf16.xpose.msra.mxu0 0
      %1324 = vmatprep.subr.bf16.mxu0 0
      %1325 = vmatpush1.bf16.xpose.msra.mxu0 0
      %1326 = vmatprep.subr.bf16.mxu0 0
      %1327 = vmatpush1.bf16.xpose.msra.mxu0 0
      %1328 = vmatprep.subr.bf16.mxu0 0
      %1329 = vmatpush1.bf16.xpose.msra.mxu0 0
      %1330 = vmatprep.subr.bf16.mxu0 0
      %1331 = vmatpush1.bf16.xpose.msra.mxu0 0
      %1332 = vmatprep.subr.bf16.mxu0 0
      %1333 = vmatpush1.bf16.xpose.msra.mxu0 0
      %1334 = vmatprep.subr.bf16.mxu0 0
      %1335 = vmatpush1.bf16.xpose.msra.mxu0 0
      %1336 = vmatprep.subr.bf16.mxu0 0
      %1337 = vmatpush1.bf16.xpose.msra.mxu0 0
      %1338 = vmatprep.subr.bf16.mxu0 0
      %1339 = vmatpush1.bf16.xpose.msra.mxu0 0
      %1340 = vmatprep.subr.bf16.mxu0 0
      %1341 = vmatpush1.bf16.xpose.msra.mxu0 0
      %1342 = vmatprep.subr.bf16.mxu0 0
      %1343 = vmatpush1.bf16.xpose.msra.mxu0 0
      %1344 = vmatprep.mubr.bf16.mxu0 0
      %1345 = vmatmul.mubr.bf16.gmra.mrb[0].mxu0 %v1289
      %v1346 = vpop.f32.mrb[0].mxu0
      %v1347 = vadd.f32 0.0, %v1346
      %v1348 = vpop.f32.mrb[0].mxu0
      %v1349 = vpop.f32.mrb[0].mxu0
      %v1350 = vadd.f32 0.0, %v1349
      %v1351 = vpop.f32.mrb[0].mxu0
      %1352 = vmatprep.mubr.bf16.mxu0 0
      %1353 = vmatmul.mubr.bf16.gmra.mrb[0].mxu0 %v1292
      %v1354 = vpop.f32.mrb[0].mxu0
      %v1355 = vadd.f32 0.0, %v1354
      %v1356 = vpop.f32.mrb[0].mxu0
      %v1357 = vpop.f32.mrb[0].mxu0
      %v1358 = vadd.f32 0.0, %v1357
      %v1359 = vpop.f32.mrb[0].mxu0
      %1360 = vmatprep.mubr.bf16.mxu0 0
      %1361 = vmatmul.mubr.bf16.gmra.mrb[0].mxu0 %v1295
      %v1362 = vpop.f32.mrb[0].mxu0
      %v1363 = vadd.f32 0.0, %v1362
      %v1364 = vpop.f32.mrb[0].mxu0
      %v1365 = vpop.f32.mrb[0].mxu0
      %v1366 = vadd.f32 0.0, %v1365
      %v1367 = vpop.f32.mrb[0].mxu0
      %1368 = vmatprep.mubr.bf16.mxu0 0
      %1369 = vmatmul.mubr.bf16.gmra.mrb[0].mxu0 %v1298
      %v1370 = vpop.f32.mrb[0].mxu0
      %v1371 = vadd.f32 0.0, %v1370
      %v1372 = vpop.f32.mrb[0].mxu0
      %v1373 = vpop.f32.mrb[0].mxu0
      %v1374 = vadd.f32 0.0, %v1373
      %v1375 = vpop.f32.mrb[0].mxu0
      %1376 = vdwg.mxu0
      %v1377 = vsel %vm518, %v1347, -inf
      %1378 = vmax.xlane.f32.xlu0 %v1377
      %v1379 = vpop.xlane.xlu0 %1378
      %v1380 = vsel %vm518, %v1350, -inf
      %1381 = vmax.xlane.f32.xlu0 %v1380
      %v1382 = vpop.xlane.xlu0 %1381
      %v1383 = vsel %vm518, %v1355, -inf
      %1384 = vmax.xlane.f32.xlu0 %v1383
      %v1385 = vpop.xlane.xlu0 %1384
      %v1386 = vsel %vm518, %v1358, -inf
      %1387 = vmax.xlane.f32.xlu0 %v1386
      %v1388 = vpop.xlane.xlu0 %1387
      %v1389 = vsel %vm518, %v1363, -inf
      %1390 = vmax.xlane.f32.xlu0 %v1389
      %v1391 = vpop.xlane.xlu0 %1390
      %v1392 = vsel %vm518, %v1366, -inf
      %1393 = vmax.xlane.f32.xlu0 %v1392
      %v1394 = vpop.xlane.xlu0 %1393
      %v1395 = vsel %vm518, %v1371, -inf
      %1396 = vmax.xlane.f32.xlu0 %v1395
      %v1397 = vpop.xlane.xlu0 %1396
      %v1398 = vsel %vm518, %v1374, -inf
      %1399 = vmax.xlane.f32.xlu0 %v1398
      %v1400 = vpop.xlane.xlu0 %1399
      %v1401 = vsub.f32 %v1347, %v1379
      %v1402 = vsub.f32 %v1350, %v1382
      %v1403 = vsub.f32 %v1355, %v1385
      %v1404 = vsub.f32 %v1358, %v1388
      %v1405 = vsub.f32 %v1363, %v1391
      %v1406 = vsub.f32 %v1366, %v1394
      %v1407 = vsub.f32 %v1371, %v1397
      %v1408 = vsub.f32 %v1374, %v1400
      %v1409 = vmul.f32 %v1401, 1.442695
      %v1410 = vpow.pop %v1409
      %v1411 = vmul.f32 %v1402, 1.442695
      %v1412 = vpow.pop %v1411
      %v1413 = vmul.f32 %v1403, 1.442695
      %v1414 = vpow.pop %v1413
      %v1415 = vmul.f32 %v1404, 1.442695
      %v1416 = vpow.pop %v1415
      %v1417 = vmul.f32 %v1405, 1.442695
      %v1418 = vpow.pop %v1417
      %v1419 = vmul.f32 %v1406, 1.442695
      %v1420 = vpow.pop %v1419
      %v1421 = vmul.f32 %v1407, 1.442695
      %v1422 = vpow.pop %v1421
      %v1423 = vmul.f32 %v1408, 1.442695
      %v1424 = vpow.pop %v1423
      %v1425 = vsel %vm518, %v1410, 0.0
      %1426 = vadd.xlane.f32.xlu0 %v1425
      %v1427 = vpop.xlane.xlu0 %1426
      %v1428 = vsel %vm518, %v1412, 0.0
      %1429 = vadd.xlane.f32.xlu0 %v1428
      %v1430 = vpop.xlane.xlu0 %1429
      %v1431 = vsel %vm518, %v1414, 0.0
      %1432 = vadd.xlane.f32.xlu0 %v1431
      %v1433 = vpop.xlane.xlu0 %1432
      %v1434 = vsel %vm518, %v1416, 0.0
      %1435 = vadd.xlane.f32.xlu0 %v1434
      %v1436 = vpop.xlane.xlu0 %1435
      %v1437 = vsel %vm518, %v1418, 0.0
      %1438 = vadd.xlane.f32.xlu0 %v1437
      %v1439 = vpop.xlane.xlu0 %1438
      %v1440 = vsel %vm518, %v1420, 0.0
      %1441 = vadd.xlane.f32.xlu0 %v1440
      %v1442 = vpop.xlane.xlu0 %1441
      %v1443 = vsel %vm518, %v1422, 0.0
      %1444 = vadd.xlane.f32.xlu0 %v1443
      %v1445 = vpop.xlane.xlu0 %1444
      %v1446 = vsel %vm518, %v1424, 0.0
      %1447 = vadd.xlane.f32.xlu0 %v1446
      %v1448 = vpop.xlane.xlu0 %1447
      %v1449 = vrcp.pop %v1427
      %v1450 = vmul.f32 %v1410, %v1449
      %v1451 = vrcp.pop %v1430
      %v1452 = vmul.f32 %v1412, %v1451
      %v1453 = vrcp.pop %v1433
      %v1454 = vmul.f32 %v1414, %v1453
      %v1455 = vrcp.pop %v1436
      %v1456 = vmul.f32 %v1416, %v1455
      %v1457 = vrcp.pop %v1439
      %v1458 = vmul.f32 %v1418, %v1457
      %v1459 = vrcp.pop %v1442
      %v1460 = vmul.f32 %v1420, %v1459
      %v1461 = vrcp.pop %v1445
      %v1462 = vmul.f32 %v1422, %v1461
      %v1463 = vrcp.pop %v1448
      %v1464 = vmul.f32 %v1424, %v1463
      %v1465 = vpack.c.bf16 %v1452, %v1450
      %v1466 = vpack.c.bf16 %v1456, %v1454
      %v1467 = vpack.c.bf16 %v1460, %v1458
      %v1468 = vpack.c.bf16 %v1464, %v1462
      %1469 = vrot.lane.b32.xlu0 %v412, 40
      %v1470 = vpop.permute.xlu0 %1469
      %1471 = vrot.lane.b32.xlu0 %v413, 40
      %v1472 = vpop.permute.xlu0 %1471
      %1473 = vrot.lane.b32.xlu0 %v414, 40
      %v1474 = vpop.permute.xlu0 %1473
      %1475 = vrot.lane.b32.xlu0 %v415, 40
      %v1476 = vpop.permute.xlu0 %1475
      %v1482 = vsel %vm518, %v1465, 0
      %v1485 = vsel %vm518, %v1466, 0
      %v1488 = vsel %vm518, %v1467, 0
      %v1491 = vsel %vm518, %v1468, 0
      %1493 = vmatprep.subr.bf16.mxu0 0
      %1494 = vmatpush1.bf16.msra.mxu0 %v1470
      %1495 = vmatprep.subr.bf16.mxu0 0
      %1496 = vmatpush1.bf16.msra.mxu0 %v1472
      %1497 = vmatprep.subr.bf16.mxu0 0
      %1498 = vmatpush1.bf16.msra.mxu0 %v1474
      %1499 = vmatprep.subr.bf16.mxu0 0
      %1500 = vmatpush1.bf16.msra.mxu0 %v1476
      %1501 = vmatprep.subr.bf16.mxu0 0
      %1502 = vmatpush1.bf16.msra.mxu0 0
      %1503 = vmatprep.subr.bf16.mxu0 0
      %1504 = vmatpush1.bf16.msra.mxu0 0
      %1505 = vmatprep.subr.bf16.mxu0 0
      %1506 = vmatpush1.bf16.msra.mxu0 0
      %1507 = vmatprep.subr.bf16.mxu0 0
      %1508 = vmatpush1.bf16.msra.mxu0 0
      %1509 = vmatprep.subr.bf16.mxu0 0
      %1510 = vmatpush1.bf16.msra.mxu0 0
      %1511 = vmatprep.subr.bf16.mxu0 0
      %1512 = vmatpush1.bf16.msra.mxu0 0
      %1513 = vmatprep.subr.bf16.mxu0 0
      %1514 = vmatpush1.bf16.msra.mxu0 0
      %1515 = vmatprep.subr.bf16.mxu0 0
      %1516 = vmatpush1.bf16.msra.mxu0 0
      %1517 = vmatprep.subr.bf16.mxu0 0
      %1518 = vmatpush1.bf16.msra.mxu0 0
      %1519 = vmatprep.subr.bf16.mxu0 0
      %1520 = vmatpush1.bf16.msra.mxu0 0
      %1521 = vmatprep.subr.bf16.mxu0 0
      %1522 = vmatpush1.bf16.msra.mxu0 0
      %1523 = vmatprep.subr.bf16.mxu0 0
      %1524 = vmatpush1.bf16.msra.mxu0 0
      %1525 = vmatprep.mubr.bf16.mxu0 0
      %1526 = vmatmul.mubr.bf16.gmra.mrb[0].mxu0 %v1482
      %v1527 = vpop.f32.mrb[0].mxu0
      %v1528 = vadd.f32 0.0, %v1527
      %v1529 = vpop.f32.mrb[0].mxu0
      %v1530 = vpop.f32.mrb[0].mxu0
      %v1531 = vadd.f32 0.0, %v1530
      %v1532 = vpop.f32.mrb[0].mxu0
      %1533 = vmatprep.mubr.bf16.mxu0 0
      %1534 = vmatmul.mubr.bf16.gmra.mrb[0].mxu0 %v1485
      %v1535 = vpop.f32.mrb[0].mxu0
      %v1536 = vadd.f32 0.0, %v1535
      %v1537 = vpop.f32.mrb[0].mxu0
      %v1538 = vpop.f32.mrb[0].mxu0
      %v1539 = vadd.f32 0.0, %v1538
      %v1540 = vpop.f32.mrb[0].mxu0
      %1541 = vmatprep.mubr.bf16.mxu0 0
      %1542 = vmatmul.mubr.bf16.gmra.mrb[0].mxu0 %v1488
      %v1543 = vpop.f32.mrb[0].mxu0
      %v1544 = vadd.f32 0.0, %v1543
      %v1545 = vpop.f32.mrb[0].mxu0
      %v1546 = vpop.f32.mrb[0].mxu0
      %v1547 = vadd.f32 0.0, %v1546
      %v1548 = vpop.f32.mrb[0].mxu0
      %1549 = vmatprep.mubr.bf16.mxu0 0
      %1550 = vmatmul.mubr.bf16.gmra.mrb[0].mxu0 %v1491
      %v1551 = vpop.f32.mrb[0].mxu0
      %v1552 = vadd.f32 0.0, %v1551
      %v1553 = vpop.f32.mrb[0].mxu0
      %v1554 = vpop.f32.mrb[0].mxu0
      %v1555 = vadd.f32 0.0, %v1554
      %v1556 = vpop.f32.mrb[0].mxu0
      %1557 = vdwg.mxu0
      %1566 = vrot.lane.b32.xlu0 %v956, 8
      %v1567 = vpop.permute.xlu0 %1566
      %1568 = vrot.lane.b32.xlu0 %v959, 8
      %v1569 = vpop.permute.xlu0 %1568
      %1570 = vrot.lane.b32.xlu0 %v964, 8
      %v1571 = vpop.permute.xlu0 %1570
      %1572 = vrot.lane.b32.xlu0 %v967, 8
      %v1573 = vpop.permute.xlu0 %1572
      %1574 = vrot.lane.b32.xlu0 %v972, 8
      %v1575 = vpop.permute.xlu0 %1574
      %1576 = vrot.lane.b32.xlu0 %v975, 8
      %v1577 = vpop.permute.xlu0 %1576
      %1578 = vrot.lane.b32.xlu0 %v980, 8
      %v1579 = vpop.permute.xlu0 %1578
      %1580 = vrot.lane.b32.xlu0 %v983, 8
      %v1581 = vpop.permute.xlu0 %1580
      %1598 = vrot.lane.b32.xlu0 %v1242, 16
      %v1599 = vpop.permute.xlu0 %1598
      %1600 = vrot.lane.b32.xlu0 %v1245, 16
      %v1601 = vpop.permute.xlu0 %1600
      %1602 = vrot.lane.b32.xlu0 %v1250, 16
      %v1603 = vpop.permute.xlu0 %1602
      %1604 = vrot.lane.b32.xlu0 %v1253, 16
      %v1605 = vpop.permute.xlu0 %1604
      %1606 = vrot.lane.b32.xlu0 %v1258, 16
      %v1607 = vpop.permute.xlu0 %1606
      %1608 = vrot.lane.b32.xlu0 %v1261, 16
      %v1609 = vpop.permute.xlu0 %1608
      %1610 = vrot.lane.b32.xlu0 %v1266, 16
      %v1611 = vpop.permute.xlu0 %1610
      %1612 = vrot.lane.b32.xlu0 %v1269, 16
      %v1613 = vpop.permute.xlu0 %1612
      %1630 = vrot.lane.b32.xlu0 %v1528, 24
      %v1631 = vpop.permute.xlu0 %1630
      %1632 = vrot.lane.b32.xlu0 %v1531, 24
      %v1633 = vpop.permute.xlu0 %1632
      %1634 = vrot.lane.b32.xlu0 %v1536, 24
      %v1635 = vpop.permute.xlu0 %1634
      %1636 = vrot.lane.b32.xlu0 %v1539, 24
      %v1637 = vpop.permute.xlu0 %1636
      %1638 = vrot.lane.b32.xlu0 %v1544, 24
      %v1639 = vpop.permute.xlu0 %1638
      %1640 = vrot.lane.b32.xlu0 %v1547, 24
      %v1641 = vpop.permute.xlu0 %1640
      %1642 = vrot.lane.b32.xlu0 %v1552, 24
      %v1643 = vpop.permute.xlu0 %1642
      %1644 = vrot.lane.b32.xlu0 %v1555, 24
      %v1645 = vpop.permute.xlu0 %1644
      %v1654 = vsel %vm428, %v670, %v1567
      %v1655 = vsel %vm428, %v673, %v1569
      %v1656 = vsel %vm428, %v678, %v1571
      %v1657 = vsel %vm428, %v681, %v1573
      %v1658 = vsel %vm428, %v686, %v1575
      %v1659 = vsel %vm428, %v689, %v1577
      %v1660 = vsel %vm428, %v694, %v1579
      %v1661 = vsel %vm428, %v697, %v1581
      %vm1662 = vcmask 130048
      %v1663 = vsel %vm1662, %v1654, %v1599
      %v1664 = vsel %vm1662, %v1655, %v1601
      %v1665 = vsel %vm1662, %v1656, %v1603
      %v1666 = vsel %vm1662, %v1657, %v1605
      %v1667 = vsel %vm1662, %v1658, %v1607
      %v1668 = vsel %vm1662, %v1659, %v1609
      %v1669 = vsel %vm1662, %v1660, %v1611
      %v1670 = vsel %vm1662, %v1661, %v1613
      %vm1671 = vcmask 195584
      %v1672 = vsel %vm1671, %v1663, %v1631
      %v1673 = vsel %vm1671, %v1664, %v1633
      %v1674 = vsel %vm1671, %v1665, %v1635
      %v1675 = vsel %vm1671, %v1666, %v1637
      %v1676 = vsel %vm1671, %v1667, %v1639
      %v1677 = vsel %vm1671, %v1668, %v1641
      %v1678 = vsel %vm1671, %v1669, %v1643
      %v1679 = vsel %vm1671, %v1670, %v1645
      %v1680 = vpack.c.bf16 %v1673, %v1672
      %v1681 = vpack.c.bf16 %v1675, %v1674
      %v1682 = vpack.c.bf16 %v1677, %v1676
      %v1683 = vpack.c.bf16 %v1679, %v1678
      %v1684 = vld [vmem:[%s3] sm:$0xf]
      %v1685 = vld [vmem:[%s3 + $0x4] sm:$0xf]
      %v1686 = vld [vmem:[%s3 + $0x8] sm:$0xf]
      %v1687 = vld [vmem:[%s3 + $0xc] sm:$0xf]
      %v1688 = vld [vmem:[%s4] sm:$0x1]
      %v1690 = vlaneseq
      %v1691 = vshrl.u32 %v1690, 7
      %v1692 = vsub.s32 0, %v1691
      %v1693 = vrot.slane %v1688, %v1692
      %v1699 = vunpack.c.l.b16 %v1684
      %v1700 = vunpack.c.l.b16 %v1685
      %v1701 = vunpack.c.l.b16 %v1686
      %v1702 = vunpack.c.l.b16 %v1687
      %v1703 = vpack.c.b16 %v1700, %v1699
      %v1704 = vpack.c.b16 %v1702, %v1701
      %v1708 = vsel %vm334, %v1680, 0
      %v1711 = vsel %vm334, %v1681, 0
      %v1714 = vsel %vm334, %v1682, 0
      %v1717 = vsel %vm334, %v1683, 0
      %1719 = vmatprep.subr.bf16.mxu0 0
      %1720 = vmatpush1.bf16.msra.mxu0 %v1703
      %1721 = vmatprep.subr.bf16.mxu0 0
      %1722 = vmatpush1.bf16.msra.mxu0 %v1704
      %1723 = vmatprep.subr.bf16.mxu0 0
      %1724 = vmatpush1.bf16.msra.mxu0 0
      %1725 = vmatprep.subr.bf16.mxu0 0
      %1726 = vmatpush1.bf16.msra.mxu0 0
      %1727 = vmatprep.subr.bf16.mxu0 0
      %1728 = vmatpush1.bf16.msra.mxu0 0
      %1729 = vmatprep.subr.bf16.mxu0 0
      %1730 = vmatpush1.bf16.msra.mxu0 0
      %1731 = vmatprep.subr.bf16.mxu0 0
      %1732 = vmatpush1.bf16.msra.mxu0 0
      %1733 = vmatprep.subr.bf16.mxu0 0
      %1734 = vmatpush1.bf16.msra.mxu0 0
      %1735 = vmatprep.subr.bf16.mxu0 0
      %1736 = vmatpush1.bf16.msra.mxu0 0
      %1737 = vmatprep.subr.bf16.mxu0 0
      %1738 = vmatpush1.bf16.msra.mxu0 0
      %1739 = vmatprep.subr.bf16.mxu0 0
      %1740 = vmatpush1.bf16.msra.mxu0 0
      %1741 = vmatprep.subr.bf16.mxu0 0
      %1742 = vmatpush1.bf16.msra.mxu0 0
      %1743 = vmatprep.subr.bf16.mxu0 0
      %1744 = vmatpush1.bf16.msra.mxu0 0
      %1745 = vmatprep.subr.bf16.mxu0 0
      %1746 = vmatpush1.bf16.msra.mxu0 0
      %1747 = vmatprep.subr.bf16.mxu0 0
      %1748 = vmatpush1.bf16.msra.mxu0 0
      %1749 = vmatprep.subr.bf16.mxu0 0
      %1750 = vmatpush1.bf16.msra.mxu0 0
      %1751 = vmatprep.mubr.bf16.mxu0 0
      %1752 = vmatmul.mubr.bf16.gmra.mrb[0].mxu0 %v1708
      %v1753 = vpop.f32.mrb[0].mxu0
      %v1754 = vadd.f32 %v1693, %v1753
      %v1755 = vpop.f32.mrb[0].mxu0
      %v1756 = vpop.f32.mrb[0].mxu0
      %v1757 = vadd.f32 %v1693, %v1756
      %v1758 = vpop.f32.mrb[0].mxu0
      %1759 = vmatprep.mubr.bf16.mxu0 0
      %1760 = vmatmul.mubr.bf16.gmra.mrb[0].mxu0 %v1711
      %v1761 = vpop.f32.mrb[0].mxu0
      %v1762 = vadd.f32 %v1693, %v1761
      %v1763 = vpop.f32.mrb[0].mxu0
      %v1764 = vpop.f32.mrb[0].mxu0
      %v1765 = vadd.f32 %v1693, %v1764
      %v1766 = vpop.f32.mrb[0].mxu0
      %1767 = vmatprep.mubr.bf16.mxu0 0
      %1768 = vmatmul.mubr.bf16.gmra.mrb[0].mxu0 %v1714
      %v1769 = vpop.f32.mrb[0].mxu0
      %v1770 = vadd.f32 %v1693, %v1769
      %v1771 = vpop.f32.mrb[0].mxu0
      %v1772 = vpop.f32.mrb[0].mxu0
      %v1773 = vadd.f32 %v1693, %v1772
      %v1774 = vpop.f32.mrb[0].mxu0
      %1775 = vmatprep.mubr.bf16.mxu0 0
      %1776 = vmatmul.mubr.bf16.gmra.mrb[0].mxu0 %v1717
      %v1777 = vpop.f32.mrb[0].mxu0
      %v1778 = vadd.f32 %v1693, %v1777
      %v1779 = vpop.f32.mrb[0].mxu0
      %v1780 = vpop.f32.mrb[0].mxu0
      %v1781 = vadd.f32 %v1693, %v1780
      %v1782 = vpop.f32.mrb[0].mxu0
      %1783 = vdwg.mxu0
      %v1784 = vunpack.c.l.bf16 %v283
      %v1785 = vunpack.c.l.bf16 %v284
      %v1786 = vunpack.c.l.bf16 %v285
      %v1787 = vunpack.c.l.bf16 %v286
      %v1788 = vunpack.c.l.bf16 %v287
      %v1789 = vunpack.c.l.bf16 %v288
      %v1790 = vunpack.c.l.bf16 %v289
      %v1791 = vunpack.c.l.bf16 %v290
      %v1792 = vadd.f32 %v1754, %v1784
      %v1793 = vadd.f32 %v1757, %v1785
      %v1794 = vadd.f32 %v1762, %v1786
      %v1795 = vadd.f32 %v1765, %v1787
      %v1796 = vadd.f32 %v1770, %v1788
      %v1797 = vadd.f32 %v1773, %v1789
      %v1798 = vadd.f32 %v1778, %v1790
      %v1799 = vadd.f32 %v1781, %v1791
      %v1800 = vld [vmem:[%s5] sm:$0x1]
      %v1801 = vld [vmem:[%s6] sm:$0x1]
      %v1802 = vsel %vm334, %v1792, 0.0
      %1803 = vadd.xlane.f32.xlu0 %v1802
      %v1804 = vpop.xlane.xlu0 %1803
      %v1805 = vsel %vm334, %v1793, 0.0
      %1806 = vadd.xlane.f32.xlu0 %v1805
      %v1807 = vpop.xlane.xlu0 %1806
      %v1808 = vsel %vm334, %v1794, 0.0
      %1809 = vadd.xlane.f32.xlu0 %v1808
      %v1810 = vpop.xlane.xlu0 %1809
      %v1811 = vsel %vm334, %v1795, 0.0
      %1812 = vadd.xlane.f32.xlu0 %v1811
      %v1813 = vpop.xlane.xlu0 %1812
      %v1814 = vsel %vm334, %v1796, 0.0
      %1815 = vadd.xlane.f32.xlu0 %v1814
      %v1816 = vpop.xlane.xlu0 %1815
      %v1817 = vsel %vm334, %v1797, 0.0
      %1818 = vadd.xlane.f32.xlu0 %v1817
      %v1819 = vpop.xlane.xlu0 %1818
      %v1820 = vsel %vm334, %v1798, 0.0
      %1821 = vadd.xlane.f32.xlu0 %v1820
      %v1822 = vpop.xlane.xlu0 %1821
      %v1823 = vsel %vm334, %v1799, 0.0
      %1824 = vadd.xlane.f32.xlu0 %v1823
      %v1825 = vpop.xlane.xlu0 %1824
      %v1826 = vrcp.pop 32.0
      %v1827 = vmul.f32 %v1804, %v1826
      %v1828 = vmul.f32 %v1807, %v1826
      %v1829 = vmul.f32 %v1810, %v1826
      %v1830 = vmul.f32 %v1813, %v1826
      %v1831 = vmul.f32 %v1816, %v1826
      %v1832 = vmul.f32 %v1819, %v1826
      %v1833 = vmul.f32 %v1822, %v1826
      %v1834 = vmul.f32 %v1825, %v1826
      %v1835 = vsub.f32 %v1792, %v1827
      %v1836 = vsub.f32 %v1793, %v1828
      %v1837 = vsub.f32 %v1794, %v1829
      %v1838 = vsub.f32 %v1795, %v1830
      %v1839 = vsub.f32 %v1796, %v1831
      %v1840 = vsub.f32 %v1797, %v1832
      %v1841 = vsub.f32 %v1798, %v1833
      %v1842 = vsub.f32 %v1799, %v1834
      %v1843 = vmul.f32 %v1835, %v1835
      %v1844 = vmul.f32 %v1836, %v1836
      %v1845 = vmul.f32 %v1837, %v1837
      %v1846 = vmul.f32 %v1838, %v1838
      %v1847 = vmul.f32 %v1839, %v1839
      %v1848 = vmul.f32 %v1840, %v1840
      %v1849 = vmul.f32 %v1841, %v1841
      %v1850 = vmul.f32 %v1842, %v1842
      %v1851 = vsel %vm334, %v1843, 0.0
      %1852 = vadd.xlane.f32.xlu0 %v1851
      %v1853 = vpop.xlane.xlu0 %1852
      %v1854 = vsel %vm334, %v1844, 0.0
      %1855 = vadd.xlane.f32.xlu0 %v1854
      %v1856 = vpop.xlane.xlu0 %1855
      %v1857 = vsel %vm334, %v1845, 0.0
      %1858 = vadd.xlane.f32.xlu0 %v1857
      %v1859 = vpop.xlane.xlu0 %1858
      %v1860 = vsel %vm334, %v1846, 0.0
      %1861 = vadd.xlane.f32.xlu0 %v1860
      %v1862 = vpop.xlane.xlu0 %1861
      %v1863 = vsel %vm334, %v1847, 0.0
      %1864 = vadd.xlane.f32.xlu0 %v1863
      %v1865 = vpop.xlane.xlu0 %1864
      %v1866 = vsel %vm334, %v1848, 0.0
      %1867 = vadd.xlane.f32.xlu0 %v1866
      %v1868 = vpop.xlane.xlu0 %1867
      %v1869 = vsel %vm334, %v1849, 0.0
      %1870 = vadd.xlane.f32.xlu0 %v1869
      %v1871 = vpop.xlane.xlu0 %1870
      %v1872 = vsel %vm334, %v1850, 0.0
      %1873 = vadd.xlane.f32.xlu0 %v1872
      %v1874 = vpop.xlane.xlu0 %1873
      %v1875 = vmul.f32 %v1853, %v1826
      %v1876 = vmul.f32 %v1856, %v1826
      %v1877 = vmul.f32 %v1859, %v1826
      %v1878 = vmul.f32 %v1862, %v1826
      %v1879 = vmul.f32 %v1865, %v1826
      %v1880 = vmul.f32 %v1868, %v1826
      %v1881 = vmul.f32 %v1871, %v1826
      %v1882 = vmul.f32 %v1874, %v1826
      %v1883 = vadd.f32 %v1875, 1e-05
      %v1884 = vadd.f32 %v1876, 1e-05
      %v1885 = vadd.f32 %v1877, 1e-05
      %v1886 = vadd.f32 %v1878, 1e-05
      %v1887 = vadd.f32 %v1879, 1e-05
      %v1888 = vadd.f32 %v1880, 1e-05
      %v1889 = vadd.f32 %v1881, 1e-05
      %v1890 = vadd.f32 %v1882, 1e-05
      %v1891 = vrsqrt.pop %v1883
      %v1892 = vrsqrt.pop %v1884
      %v1893 = vrsqrt.pop %v1885
      %v1894 = vrsqrt.pop %v1886
      %v1895 = vrsqrt.pop %v1887
      %v1896 = vrsqrt.pop %v1888
      %v1897 = vrsqrt.pop %v1889
      %v1898 = vrsqrt.pop %v1890
      %v1899 = vmul.f32 %v1835, %v1891
      %v1900 = vmul.f32 %v1836, %v1892
      %v1901 = vmul.f32 %v1837, %v1893
      %v1902 = vmul.f32 %v1838, %v1894
      %v1903 = vmul.f32 %v1839, %v1895
      %v1904 = vmul.f32 %v1840, %v1896
      %v1905 = vmul.f32 %v1841, %v1897
      %v1906 = vmul.f32 %v1842, %v1898
      %v1908 = vlaneseq
      %v1909 = vshrl.u32 %v1908, 7
      %v1910 = vsub.s32 0, %v1909
      %v1911 = vrot.slane %v1800, %v1910
      %v1913 = vmul.f32 %v1899, %v1911
      %v1914 = vmul.f32 %v1900, %v1911
      %v1915 = vmul.f32 %v1901, %v1911
      %v1916 = vmul.f32 %v1902, %v1911
      %v1917 = vmul.f32 %v1903, %v1911
      %v1918 = vmul.f32 %v1904, %v1911
      %v1919 = vmul.f32 %v1905, %v1911
      %v1920 = vmul.f32 %v1906, %v1911
      %v1922 = vlaneseq
      %v1923 = vshrl.u32 %v1922, 7
      %v1924 = vsub.s32 0, %v1923
      %v1925 = vrot.slane %v1801, %v1924
      %v1927 = vadd.f32 %v1913, %v1925
      %v1928 = vadd.f32 %v1914, %v1925
      %v1929 = vadd.f32 %v1915, %v1925
      %v1930 = vadd.f32 %v1916, %v1925
      %v1931 = vadd.f32 %v1917, %v1925
      %v1932 = vadd.f32 %v1918, %v1925
      %v1933 = vadd.f32 %v1919, %v1925
      %v1934 = vadd.f32 %v1920, %v1925
      %v1935 = vpack.c.bf16 %v1928, %v1927
      %v1936 = vpack.c.bf16 %v1930, %v1929
      %v1937 = vpack.c.bf16 %v1932, %v1931
      %v1938 = vpack.c.bf16 %v1934, %v1933
      %v1943 = vunpack.c.l.b16 %v1935
      %v1944 = vunpack.c.h.b16 %v1935
      %v1945 = vunpack.c.l.b16 %v1936
      %v1946 = vunpack.c.h.b16 %v1936
      %v1947 = vunpack.c.l.b16 %v1937
      %v1948 = vunpack.c.h.b16 %v1937
      %v1949 = vunpack.c.l.b16 %v1938
      %v1950 = vunpack.c.h.b16 %v1938
      %v1951 = vpack.c.b16 %v1943, %v1943
      %v1952 = vpack.c.b16 %v1944, %v1944
      %v1953 = vpack.c.b16 %v1945, %v1945
      %v1954 = vpack.c.b16 %v1946, %v1946
      %v1955 = vpack.c.b16 %v1947, %v1947
      %v1956 = vpack.c.b16 %v1948, %v1948
      %v1957 = vpack.c.b16 %v1949, %v1949
      %v1958 = vpack.c.b16 %v1950, %v1950
      %vm1967 = vcmask 257024
      %1968 = vst.msk [vmem:[%s280] sm:$0xf] %vm1967, %v1951
      %1969 = vst.msk [vmem:[%s280 + $0x4] sm:$0xf] %vm1967, %v1952
      %1970 = vst.msk [vmem:[%s280 + $0x8] sm:$0xf] %vm1967, %v1953
      %1971 = vst.msk [vmem:[%s280 + $0xc] sm:$0xf] %vm1967, %v1954
      %1972 = vst.msk [vmem:[%s280 + $0x10] sm:$0xf] %vm1967, %v1955
      %1973 = vst.msk [vmem:[%s280 + $0x14] sm:$0xf] %vm1967, %v1956
      %1974 = vst.msk [vmem:[%s280 + $0x18] sm:$0xf] %vm1967, %v1957
      %1975 = vst.msk [vmem:[%s280 + $0x1c] sm:$0xf] %vm1967, %v1958
      %s1976 = smul.u32 8, %s18
      %p1977 = scmp.lt.s32.totalorder %s1976, 15
      %s1978 = scalar_select %p1977, %s1976, 15
      %s1979 = smul.addr %s1978, 4
      %s1980 = scalar_lea.vmem %s7, %s1979
      // Predicated region
      $region49: #{bridger_forward.12} parent=47 // pred_check
        %p1981 = pneg %p188
      $region50: #{bridger_forward.12} parent=47 // pred_check_branch
        %1983 = sbr.rel (%p1981) target = $region52
      $region51: #{bridger_forward.12} parent=47 // pred_region
        %s1984 = smul.u32 8, %s18
      $region52: #{bridger_forward.12} parent=47 // pred_fallthru
        _
    $region48: #{bridger_forward.12} parent=5 // pred_fallthru
      _
    %p1985 = scmp.le.s32.totalorder 2, %s13
    // Predicated region
    $region53: #{bridger_forward.12} parent=5 // pred_check
      %p1986 = pneg %p1985
    $region54: #{bridger_forward.12} parent=5 // pred_check_branch
      %1988 = sbr.rel (%p1986) target = $region56
    $region55: #{bridger_forward.12} parent=5 // pred_region
      %s1989 = ssub.s32 %s13, 2
      // Predicated region
      $region57: #{bridger_forward.12} parent=55 // pred_check
        %p1990 = pneg %p194
      $region58: #{bridger_forward.12} parent=55 // pred_check_branch
        %1992 = sbr.rel (%p1990) target = $region60
      $region59: #{bridger_forward.12} parent=55 // pred_region
        %s1993 = smul.u32 8, %s19
        %p1994 = scmp.lt.s32.totalorder %s1993, 15
        %s1995 = scalar_select %p1994, %s1993, 15
        %s1996 = smul.addr %s1995, 4
        %s1997 = scalar_lea.vmem %s7, %s1996
      $region60: #{bridger_forward.12} parent=55 // pred_fallthru
        _
    $region56: #{bridger_forward.12} parent=5 // pred_fallthru
      _
  $region6: #{bridger_forward.12} parent=0 // loop_footer
    %s17 = sadd.s32 1, %s13
  $region7: #{bridger_forward.12} parent=0 // loop_footer_branch
    %12 = sbr.rel target = $region3
  $region8: #{bridger_forward.12} parent=0 // loop_exit
    _

// kernel: bridger_forward.13
$region0: #{bridger_forward.13}
  #allocation0 [shape = 'u32[]', space=smem, size = 0x4, offset = 0x4, fixed_abs, tag = 'smem constant byte address 0x4 - core index']
  #allocation1 [shape = 'u32[144,128]{1,0:T(1,128)}', space=vmem, size = 0x12000, scoped, tag = 'internal scratch']
  %s0 = inlined_call_operand.vmem [shape: bf16[128,32], index: 0, kind: input, shape index: {}]
  %s1 = inlined_call_operand.vmem [shape: bf16[16,32], index: 1, kind: input, shape index: {}]
  %s2 = inlined_call_operand.vmem [shape: bf16[32,32], index: 2, kind: input, shape index: {}]
  %s3 = inlined_call_operand.vmem [shape: f32[1,32], index: 3, kind: input, shape index: {}]
  %s4 = inlined_call_operand.vmem [shape: bf16[32,64], index: 4, kind: input, shape index: {}]
  %s5 = inlined_call_operand.vmem [shape: f32[1,64], index: 5, kind: input, shape index: {}]
  %s6 = inlined_call_operand.vmem [shape: bf16[32,32], index: 6, kind: input, shape index: {}]
  %s7 = inlined_call_operand.vmem [shape: f32[1,32], index: 7, kind: input, shape index: {}]
  %s8 = inlined_call_operand.vmem [shape: f32[1,32], index: 8, kind: input, shape index: {}]
  %s9 = inlined_call_operand.vmem [shape: f32[1,32], index: 9, kind: input, shape index: {}]
  %s10 = inlined_call_operand.vmem [shape: bf16[128,32], index: 10, kind: output, shape index: {}]
  %s11 = sld [smem:[#allocation0]]
  $region73: #{bridger_forward.13} parent=0
    _
  %s13 = ssub.s32 1, %s11
  %s14 = scalar_select 0, %s13, %s11
  loop: start=0, step=1, limit=4
  $region2: #{bridger_forward.13} parent=0 // loop_pre_header
    _
  $region3: #{bridger_forward.13} parent=0 // loop_header
    %s16 = sphi 0, %s20
    %p17 = scmp.ge.s32.totalorder %s16, 4
    %s26 = sphi 0, %s28
    %s29 = sphi 0, %s26
    %s30 = sphi 0, %s29
    %s46 = sphi 0, %s30
    %s52 = sphi 0, %s54
    %s55 = sphi 0, %s52
    %s56 = sphi 0, %s55
    %s72 = sphi 0, %s56
    %s76 = sphi 0, %s76
    %s78 = sphi 0, %s76
    %s79 = sphi 0, %s78
    %s93 = sphi 0, %s79
    %s97 = sphi 0, %s97
    %s99 = sphi 0, %s97
    %s100 = sphi 0, %s99
    %s114 = sphi 0, %s100
    %s118 = sphi 0, %s118
    %s120 = sphi 0, %s118
    %s121 = sphi 0, %s120
    %s135 = sphi 0, %s121
    %s139 = sphi 0, %s139
    %s141 = sphi 0, %s139
    %s142 = sphi 0, %s141
    %s156 = sphi 0, %s142
    %s160 = sphi 0, %s160
    %s162 = sphi 0, %s160
    %s163 = sphi 0, %s162
    %s177 = sphi 0, %s163
    %s181 = sphi 0, %s181
    %s183 = sphi 0, %s181
    %s184 = sphi 0, %s183
    %s198 = sphi 0, %s184
    %s202 = sphi 0, %s202
    %s204 = sphi 0, %s202
    %s205 = sphi 0, %s204
    %s219 = sphi 0, %s205
    %s223 = sphi 0, %s223
    %s225 = sphi 0, %s223
    %s226 = sphi 0, %s225
    %s240 = sphi 0, %s226
    %s246 = sphi 0, %s248
    %s249 = sphi 0, %s246
    %s250 = sphi 0, %s249
    %s266 = sphi 0, %s250
  $region4: #{bridger_forward.13} parent=0 // loop_header_branch
    %19 = sbr.rel (%p17) target = $region8
  $region5: #{bridger_forward.13} parent=0 // loop_body
    %s21 = ssub.s32 %s16, 1
    %s22 = ssub.s32 %s16, 2
    %s23 = sadd.s32 %s16, 1
    %s24 = ssub.s32 %s16, %s23
    %p25 = scmp.eq.s32.totalorder %s24, 0
    %s27 = sadd.s32 %s26, 1
    %s28 = scalar_select %p25, %s26, %s27
    %p31 = pneg %p25
    %p32 = scmp.eq.s32.totalorder %s16, 1
    %p33 = por %p31, %p32
    %p34 = scmp.ne.s32.totalorder %s26, %s29
    %p35 = scmp.eq.s32.totalorder %s16, 0
    %p36 = por %p34, %p35
    %p37 = scmp.ne.s32.totalorder %s26, %s29
    %p38 = scmp.eq.s32.totalorder %s21, 1
    %p39 = por %p37, %p38
    %p40 = scmp.ne.s32.totalorder %s29, %s30
    %p41 = scmp.eq.s32.totalorder %s21, 0
    %p42 = por %p40, %p41
    %p43 = scmp.ne.s32.totalorder %s29, %s30
    %p44 = scmp.eq.s32.totalorder %s22, 1
    %p45 = por %p43, %p44
    %p47 = scmp.ne.s32.totalorder %s30, %s46
    %p48 = scmp.eq.s32.totalorder %s22, 0
    %p49 = por %p47, %p48
    %s50 = ssub.s32 %s16, %s23
    %p51 = scmp.eq.s32.totalorder %s50, 0
    %s53 = sadd.s32 %s52, 1
    %s54 = scalar_select %p51, %s52, %s53
    %p57 = pneg %p51
    %p58 = scmp.eq.s32.totalorder %s16, 1
    %p59 = por %p57, %p58
    %p60 = scmp.ne.s32.totalorder %s52, %s55
    %p61 = scmp.eq.s32.totalorder %s16, 0
    %p62 = por %p60, %p61
    %p63 = scmp.ne.s32.totalorder %s52, %s55
    %p64 = scmp.eq.s32.totalorder %s21, 1
    %p65 = por %p63, %p64
    %p66 = scmp.ne.s32.totalorder %s55, %s56
    %p67 = scmp.eq.s32.totalorder %s21, 0
    %p68 = por %p66, %p67
    %p69 = scmp.ne.s32.totalorder %s55, %s56
    %p70 = scmp.eq.s32.totalorder %s22, 1
    %p71 = por %p69, %p70
    %p73 = scmp.ne.s32.totalorder %s56, %s72
    %p74 = scmp.eq.s32.totalorder %s22, 0
    %p75 = por %p73, %p74
    %s77 = sadd.s32 %s76, 1
    %p80 = scmp.eq.s32.totalorder %s16, 1
    %p81 = scmp.ne.s32.totalorder %s76, %s78
    %p82 = scmp.eq.s32.totalorder %s16, 0
    %p83 = por %p81, %p82
    %p84 = scmp.ne.s32.totalorder %s76, %s78
    %p85 = scmp.eq.s32.totalorder %s21, 1
    %p86 = por %p84, %p85
    %p87 = scmp.ne.s32.totalorder %s78, %s79
    %p88 = scmp.eq.s32.totalorder %s21, 0
    %p89 = por %p87, %p88
    %p90 = scmp.ne.s32.totalorder %s78, %s79
    %p91 = scmp.eq.s32.totalorder %s22, 1
    %p92 = por %p90, %p91
    %p94 = scmp.ne.s32.totalorder %s79, %s93
    %p95 = scmp.eq.s32.totalorder %s22, 0
    %p96 = por %p94, %p95
    %s98 = sadd.s32 %s97, 1
    %p101 = scmp.eq.s32.totalorder %s16, 1
    %p102 = scmp.ne.s32.totalorder %s97, %s99
    %p103 = scmp.eq.s32.totalorder %s16, 0
    %p104 = por %p102, %p103
    %p105 = scmp.ne.s32.totalorder %s97, %s99
    %p106 = scmp.eq.s32.totalorder %s21, 1
    %p107 = por %p105, %p106
    %p108 = scmp.ne.s32.totalorder %s99, %s100
    %p109 = scmp.eq.s32.totalorder %s21, 0
    %p110 = por %p108, %p109
    %p111 = scmp.ne.s32.totalorder %s99, %s100
    %p112 = scmp.eq.s32.totalorder %s22, 1
    %p113 = por %p111, %p112
    %p115 = scmp.ne.s32.totalorder %s100, %s114
    %p116 = scmp.eq.s32.totalorder %s22, 0
    %p117 = por %p115, %p116
    %s119 = sadd.s32 %s118, 1
    %p122 = scmp.eq.s32.totalorder %s16, 1
    %p123 = scmp.ne.s32.totalorder %s118, %s120
    %p124 = scmp.eq.s32.totalorder %s16, 0
    %p125 = por %p123, %p124
    %p126 = scmp.ne.s32.totalorder %s118, %s120
    %p127 = scmp.eq.s32.totalorder %s21, 1
    %p128 = por %p126, %p127
    %p129 = scmp.ne.s32.totalorder %s120, %s121
    %p130 = scmp.eq.s32.totalorder %s21, 0
    %p131 = por %p129, %p130
    %p132 = scmp.ne.s32.totalorder %s120, %s121
    %p133 = scmp.eq.s32.totalorder %s22, 1
    %p134 = por %p132, %p133
    %p136 = scmp.ne.s32.totalorder %s121, %s135
    %p137 = scmp.eq.s32.totalorder %s22, 0
    %p138 = por %p136, %p137
    %s140 = sadd.s32 %s139, 1
    %p143 = scmp.eq.s32.totalorder %s16, 1
    %p144 = scmp.ne.s32.totalorder %s139, %s141
    %p145 = scmp.eq.s32.totalorder %s16, 0
    %p146 = por %p144, %p145
    %p147 = scmp.ne.s32.totalorder %s139, %s141
    %p148 = scmp.eq.s32.totalorder %s21, 1
    %p149 = por %p147, %p148
    %p150 = scmp.ne.s32.totalorder %s141, %s142
    %p151 = scmp.eq.s32.totalorder %s21, 0
    %p152 = por %p150, %p151
    %p153 = scmp.ne.s32.totalorder %s141, %s142
    %p154 = scmp.eq.s32.totalorder %s22, 1
    %p155 = por %p153, %p154
    %p157 = scmp.ne.s32.totalorder %s142, %s156
    %p158 = scmp.eq.s32.totalorder %s22, 0
    %p159 = por %p157, %p158
    %s161 = sadd.s32 %s160, 1
    %p164 = scmp.eq.s32.totalorder %s16, 1
    %p165 = scmp.ne.s32.totalorder %s160, %s162
    %p166 = scmp.eq.s32.totalorder %s16, 0
    %p167 = por %p165, %p166
    %p168 = scmp.ne.s32.totalorder %s160, %s162
    %p169 = scmp.eq.s32.totalorder %s21, 1
    %p170 = por %p168, %p169
    %p171 = scmp.ne.s32.totalorder %s162, %s163
    %p172 = scmp.eq.s32.totalorder %s21, 0
    %p173 = por %p171, %p172
    %p174 = scmp.ne.s32.totalorder %s162, %s163
    %p175 = scmp.eq.s32.totalorder %s22, 1
    %p176 = por %p174, %p175
    %p178 = scmp.ne.s32.totalorder %s163, %s177
    %p179 = scmp.eq.s32.totalorder %s22, 0
    %p180 = por %p178, %p179
    %s182 = sadd.s32 %s181, 1
    %p185 = scmp.eq.s32.totalorder %s16, 1
    %p186 = scmp.ne.s32.totalorder %s181, %s183
    %p187 = scmp.eq.s32.totalorder %s16, 0
    %p188 = por %p186, %p187
    %p189 = scmp.ne.s32.totalorder %s181, %s183
    %p190 = scmp.eq.s32.totalorder %s21, 1
    %p191 = por %p189, %p190
    %p192 = scmp.ne.s32.totalorder %s183, %s184
    %p193 = scmp.eq.s32.totalorder %s21, 0
    %p194 = por %p192, %p193
    %p195 = scmp.ne.s32.totalorder %s183, %s184
    %p196 = scmp.eq.s32.totalorder %s22, 1
    %p197 = por %p195, %p196
    %p199 = scmp.ne.s32.totalorder %s184, %s198
    %p200 = scmp.eq.s32.totalorder %s22, 0
    %p201 = por %p199, %p200
    %s203 = sadd.s32 %s202, 1
    %p206 = scmp.eq.s32.totalorder %s16, 1
    %p207 = scmp.ne.s32.totalorder %s202, %s204
    %p208 = scmp.eq.s32.totalorder %s16, 0
    %p209 = por %p207, %p208
    %p210 = scmp.ne.s32.totalorder %s202, %s204
    %p211 = scmp.eq.s32.totalorder %s21, 1
    %p212 = por %p210, %p211
    %p213 = scmp.ne.s32.totalorder %s204, %s205
    %p214 = scmp.eq.s32.totalorder %s21, 0
    %p215 = por %p213, %p214
    %p216 = scmp.ne.s32.totalorder %s204, %s205
    %p217 = scmp.eq.s32.totalorder %s22, 1
    %p218 = por %p216, %p217
    %p220 = scmp.ne.s32.totalorder %s205, %s219
    %p221 = scmp.eq.s32.totalorder %s22, 0
    %p222 = por %p220, %p221
    %s224 = sadd.s32 %s223, 1
    %p227 = scmp.eq.s32.totalorder %s16, 1
    %p228 = scmp.ne.s32.totalorder %s223, %s225
    %p229 = scmp.eq.s32.totalorder %s16, 0
    %p230 = por %p228, %p229
    %p231 = scmp.ne.s32.totalorder %s223, %s225
    %p232 = scmp.eq.s32.totalorder %s21, 1
    %p233 = por %p231, %p232
    %p234 = scmp.ne.s32.totalorder %s225, %s226
    %p235 = scmp.eq.s32.totalorder %s21, 0
    %p236 = por %p234, %p235
    %p237 = scmp.ne.s32.totalorder %s225, %s226
    %p238 = scmp.eq.s32.totalorder %s22, 1
    %p239 = por %p237, %p238
    %p241 = scmp.ne.s32.totalorder %s226, %s240
    %p242 = scmp.eq.s32.totalorder %s22, 0
    %p243 = por %p241, %p242
    %s244 = ssub.s32 %s16, %s23
    %p245 = scmp.eq.s32.totalorder %s244, 0
    %s247 = sadd.s32 %s246, 1
    %s248 = scalar_select %p245, %s246, %s247
    %p251 = pneg %p245
    %p252 = scmp.eq.s32.totalorder %s16, 1
    %p253 = por %p251, %p252
    %p254 = scmp.ne.s32.totalorder %s246, %s249
    %p255 = scmp.eq.s32.totalorder %s16, 0
    %p256 = por %p254, %p255
    %p257 = scmp.ne.s32.totalorder %s246, %s249
    %p258 = scmp.eq.s32.totalorder %s21, 1
    %p259 = por %p257, %p258
    %p260 = scmp.ne.s32.totalorder %s249, %s250
    %p261 = scmp.eq.s32.totalorder %s21, 0
    %p262 = por %p260, %p261
    %p263 = scmp.ne.s32.totalorder %s249, %s250
    %p264 = scmp.eq.s32.totalorder %s22, 1
    %p265 = por %p263, %p264
    %p267 = scmp.ne.s32.totalorder %s250, %s266
    %p268 = scmp.eq.s32.totalorder %s22, 0
    %p269 = por %p267, %p268
    %p270 = scmp.le.s32.totalorder 1, %s16
    %p271 = scmp.lt.s32.totalorder %s16, 3
    %p272 = pnand %p270, %p271
    %p273 = pneg %p272
    // Predicated region
    $region9: #{bridger_forward.13} parent=5 // pred_check
      _
    $region10: #{bridger_forward.13} parent=5 // pred_check_branch
      %275 = sbr.rel (%p272) target = $region12
    $region11: #{bridger_forward.13} parent=5 // pred_region
      %s276 = ssub.s32 %s16, 1
      // Predicated region
      $region13: #{bridger_forward.13} parent=11 // pred_check
        %p277 = pneg %p89
      $region14: #{bridger_forward.13} parent=11 // pred_check_branch
        %279 = sbr.rel (%p277) target = $region16
      $region15: #{bridger_forward.13} parent=11 // pred_region
        _
      $region16: #{bridger_forward.13} parent=11 // pred_fallthru
        _
      // Predicated region
      $region17: #{bridger_forward.13} parent=11 // pred_check
        %p280 = pneg %p110
      $region18: #{bridger_forward.13} parent=11 // pred_check_branch
        %282 = sbr.rel (%p280) target = $region20
      $region19: #{bridger_forward.13} parent=11 // pred_region
        _
      $region20: #{bridger_forward.13} parent=11 // pred_fallthru
        _
      // Predicated region
      $region21: #{bridger_forward.13} parent=11 // pred_check
        %p283 = pneg %p131
      $region22: #{bridger_forward.13} parent=11 // pred_check_branch
        %285 = sbr.rel (%p283) target = $region24
      $region23: #{bridger_forward.13} parent=11 // pred_region
        _
      $region24: #{bridger_forward.13} parent=11 // pred_fallthru
        _
      // Predicated region
      $region25: #{bridger_forward.13} parent=11 // pred_check
        %p286 = pneg %p152
      $region26: #{bridger_forward.13} parent=11 // pred_check_branch
        %288 = sbr.rel (%p286) target = $region28
      $region27: #{bridger_forward.13} parent=11 // pred_region
        _
      $region28: #{bridger_forward.13} parent=11 // pred_fallthru
        _
      // Predicated region
      $region29: #{bridger_forward.13} parent=11 // pred_check
        %p289 = pneg %p173
      $region30: #{bridger_forward.13} parent=11 // pred_check_branch
        %291 = sbr.rel (%p289) target = $region32
      $region31: #{bridger_forward.13} parent=11 // pred_region
        _
      $region32: #{bridger_forward.13} parent=11 // pred_fallthru
        _
      // Predicated region
      $region33: #{bridger_forward.13} parent=11 // pred_check
        %p292 = pneg %p194
      $region34: #{bridger_forward.13} parent=11 // pred_check_branch
        %294 = sbr.rel (%p292) target = $region36
      $region35: #{bridger_forward.13} parent=11 // pred_region
        _
      $region36: #{bridger_forward.13} parent=11 // pred_fallthru
        _
      // Predicated region
      $region37: #{bridger_forward.13} parent=11 // pred_check
        %p295 = pneg %p215
      $region38: #{bridger_forward.13} parent=11 // pred_check_branch
        %297 = sbr.rel (%p295) target = $region40
      $region39: #{bridger_forward.13} parent=11 // pred_region
        _
      $region40: #{bridger_forward.13} parent=11 // pred_fallthru
        _
      // Predicated region
      $region41: #{bridger_forward.13} parent=11 // pred_check
        %p298 = pneg %p236
      $region42: #{bridger_forward.13} parent=11 // pred_check_branch
        %300 = sbr.rel (%p298) target = $region44
      $region43: #{bridger_forward.13} parent=11 // pred_region
        _
      $region44: #{bridger_forward.13} parent=11 // pred_fallthru
        _
    $region12: #{bridger_forward.13} parent=5 // pred_fallthru
      _
    %p301 = scmp.lt.s32.totalorder %s16, 2
    // Predicated region
    $region45: #{bridger_forward.13} parent=5 // pred_check
      %p302 = pneg %p301
    $region46: #{bridger_forward.13} parent=5 // pred_check_branch
      %304 = sbr.rel (%p302) target = $region48
    $region47: #{bridger_forward.13} parent=5 // pred_region
      // Predicated region
      $region49: #{bridger_forward.13} parent=47 // pred_check
        %p305 = pneg %p36
      $region50: #{bridger_forward.13} parent=47 // pred_check_branch
        %307 = sbr.rel (%p305) target = $region52
      $region51: #{bridger_forward.13} parent=47 // pred_region
        %s308 = smul.u32 8, %s16
        %p309 = scmp.lt.s32.totalorder %s308, 15
        %s310 = scalar_select %p309, %s308, 15
        %s311 = smul.addr %s310, 4
        %s312 = scalar_lea.vmem %s0, %s311
        %s313 = smul.u32 8, %s16
      $region52: #{bridger_forward.13} parent=47 // pred_fallthru
        _
      // Predicated region
      $region53: #{bridger_forward.13} parent=47 // pred_check
        %p314 = pneg %p62
      $region54: #{bridger_forward.13} parent=47 // pred_check_branch
        %316 = sbr.rel (%p314) target = $region56
      $region55: #{bridger_forward.13} parent=47 // pred_region
        %p317 = scmp.lt.s32.totalorder %s16, 1
        %s318 = scalar_select %p317, %s16, 1
        %s319 = smul.addr %s318, 4
        %s320 = scalar_lea.vmem %s1, %s319
      $region56: #{bridger_forward.13} parent=47 // pred_fallthru
        _
    $region48: #{bridger_forward.13} parent=5 // pred_fallthru
      _
    %p321 = scmp.le.s32.totalorder 1, %s16
    %p322 = scmp.lt.s32.totalorder %s16, 3
    %p323 = pnand %p321, %p322
    %p324 = pneg %p323
    // Predicated region
    $region57: #{bridger_forward.13} parent=5 // pred_check
      _
    $region58: #{bridger_forward.13} parent=5 // pred_check_branch
      %326 = sbr.rel (%p323) target = $region60
    $region59: #{bridger_forward.13} parent=5 // pred_region
      %s327 = ssub.s32 %s16, 1
      %s328 = smul.u32 8, %s21
      %p329 = scmp.lt.s32.totalorder %s328, 15
      %s330 = scalar_select %p329, %s328, 15
      %s331 = smul.addr %s330, 4
      %s332 = scalar_lea.vmem %s0, %s331
      %p333 = pneg %p42
      %p334 = pneg %p39
      %p335 = scmp.lt.s32.totalorder %s21, 1
      %s336 = scalar_select %p335, %s21, 1
      %s337 = smul.addr %s336, 4
      %s338 = scalar_lea.vmem %s1, %s337
      %p339 = pneg %p68
      %p340 = pneg %p65
      %p341 = pneg %p89
      %p342 = pneg %p86
      %p343 = pneg %p110
      %p344 = pneg %p107
      %p345 = pneg %p131
      %p346 = pneg %p128
      %p347 = pneg %p152
      %p348 = pneg %p149
      %p349 = pneg %p173
      %p350 = pneg %p170
      %p351 = pneg %p194
      %p352 = pneg %p191
      %p353 = pneg %p215
      %p354 = pneg %p212
      %p355 = pneg %p236
      %p356 = pneg %p233
      %p357 = pneg %p262
      %p358 = pneg %p259
      %s359 = smul.u32 8, %s21
      %p360 = scmp.lt.s32.totalorder %s359, 15
      %s361 = scalar_select %p360, %s359, 15
      %s362 = smul.addr %s361, 4
      %s363 = scalar_lea.vmem %s10, %s362
      %s364 = smul.u32 8, %s21
      %p365 = scmp.lt.s32.totalorder %s364, 15
      %s366 = scalar_select %p365, %s364, 15
      %s367 = smul.addr %s366, 4
      %s368 = scalar_lea.vmem %s0, %s367
      %s369 = smul.u32 8, %s21
      %p370 = scmp.lt.s32.totalorder %s21, 1
      %s371 = scalar_select %p370, %s21, 1
      %s372 = smul.addr %s371, 4
      %s373 = scalar_lea.vmem %s1, %s372
      %s374 = smul.u32 8, %s21
      %p375 = scmp.lt.s32.totalorder %s374, 15
      %s376 = scalar_select %p375, %s374, 15
      %s377 = smul.addr %s376, 4
      %s378 = scalar_lea.vmem %s10, %s377
      %s379 = smul.u32 8, %s21
      %v381 = vld [vmem:[%s368] sm:$0xf]
      %v382 = vld [vmem:[%s368 + $0x4] sm:$0xf]
      %v383 = vld [vmem:[%s368 + $0x8] sm:$0xf]
      %v384 = vld [vmem:[%s368 + $0xc] sm:$0xf]
      %v385 = vld [vmem:[%s368 + $0x10] sm:$0xf]
      %v386 = vld [vmem:[%s368 + $0x14] sm:$0xf]
      %v387 = vld [vmem:[%s368 + $0x18] sm:$0xf]
      %v388 = vld [vmem:[%s368 + $0x1c] sm:$0xf]
      %v389 = vld [vmem:[%s373] sm:$0xf]
      %v390 = vld [vmem:[%s2] sm:$0xf]
      %v391 = vld [vmem:[%s2 + $0x4] sm:$0xf]
      %v392 = vld [vmem:[%s2 + $0x8] sm:$0xf]
      %v393 = vld [vmem:[%s2 + $0xc] sm:$0xf]
      %v394 = vld [vmem:[%s3] sm:$0x1]
      %v396 = vlaneseq
      %v397 = vshrl.u32 %v396, 7
      %v398 = vsub.s32 0, %v397
      %v399 = vrot.slane %v394, %v398
      %v409 = vunpack.c.l.b16 %v381
      %v410 = vunpack.c.l.b16 %v382
      %v411 = vunpack.c.l.b16 %v383
      %v412 = vunpack.c.l.b16 %v384
      %v413 = vunpack.c.l.b16 %v385
      %v414 = vunpack.c.l.b16 %v386
      %v415 = vunpack.c.l.b16 %v387
      %v416 = vunpack.c.l.b16 %v388
      %v417 = vpack.c.b16 %v410, %v409
      %v418 = vpack.c.b16 %v412, %v411
      %v419 = vpack.c.b16 %v414, %v413
      %v420 = vpack.c.b16 %v416, %v415
      %v425 = vunpack.c.l.b16 %v390
      %v426 = vunpack.c.l.b16 %v391
      %v427 = vunpack.c.l.b16 %v392
      %v428 = vunpack.c.l.b16 %v393
      %v429 = vpack.c.b16 %v426, %v425
      %v430 = vpack.c.b16 %v428, %v427
      %vm433 = vcmask 261120
      %v435 = vsel %vm433, %v417, 0
      %v438 = vsel %vm433, %v418, 0
      %v441 = vsel %vm433, %v419, 0
      %v444 = vsel %vm433, %v420, 0
      %446 = vmatprep.subr.bf16.mxu0 0
      %447 = vmatpush1.bf16.msra.mxu0 %v429
      %448 = vmatprep.subr.bf16.mxu0 0
      %449 = vmatpush1.bf16.msra.mxu0 %v430
      %450 = vmatprep.subr.bf16.mxu0 0
      %451 = vmatpush1.bf16.msra.mxu0 0
      %452 = vmatprep.subr.bf16.mxu0 0
      %453 = vmatpush1.bf16.msra.mxu0 0
      %454 = vmatprep.subr.bf16.mxu0 0
      %455 = vmatpush1.bf16.msra.mxu0 0
      %456 = vmatprep.subr.bf16.mxu0 0
      %457 = vmatpush1.bf16.msra.mxu0 0
      %458 = vmatprep.subr.bf16.mxu0 0
      %459 = vmatpush1.bf16.msra.mxu0 0
      %460 = vmatprep.subr.bf16.mxu0 0
      %461 = vmatpush1.bf16.msra.mxu0 0
      %462 = vmatprep.subr.bf16.mxu0 0
      %463 = vmatpush1.bf16.msra.mxu0 0
      %464 = vmatprep.subr.bf16.mxu0 0
      %465 = vmatpush1.bf16.msra.mxu0 0
      %466 = vmatprep.subr.bf16.mxu0 0
      %467 = vmatpush1.bf16.msra.mxu0 0
      %468 = vmatprep.subr.bf16.mxu0 0
      %469 = vmatpush1.bf16.msra.mxu0 0
      %470 = vmatprep.subr.bf16.mxu0 0
      %471 = vmatpush1.bf16.msra.mxu0 0
      %472 = vmatprep.subr.bf16.mxu0 0
      %473 = vmatpush1.bf16.msra.mxu0 0
      %474 = vmatprep.subr.bf16.mxu0 0
      %475 = vmatpush1.bf16.msra.mxu0 0
      %476 = vmatprep.subr.bf16.mxu0 0
      %477 = vmatpush1.bf16.msra.mxu0 0
      %478 = vmatprep.mubr.bf16.mxu0 0
      %479 = vmatmul.mubr.bf16.gmra.mrb[0].mxu0 %v435
      %v480 = vpop.f32.mrb[0].mxu0
      %v481 = vadd.f32 %v399, %v480
      %v482 = vpop.f32.mrb[0].mxu0
      %v483 = vpop.f32.mrb[0].mxu0
      %v484 = vadd.f32 %v399, %v483
      %v485 = vpop.f32.mrb[0].mxu0
      %486 = vmatprep.mubr.bf16.mxu0 0
      %487 = vmatmul.mubr.bf16.gmra.mrb[0].mxu0 %v438
      %v488 = vpop.f32.mrb[0].mxu0
      %v489 = vadd.f32 %v399, %v488
      %v490 = vpop.f32.mrb[0].mxu0
      %v491 = vpop.f32.mrb[0].mxu0
      %v492 = vadd.f32 %v399, %v491
      %v493 = vpop.f32.mrb[0].mxu0
      %494 = vmatprep.mubr.bf16.mxu0 0
      %495 = vmatmul.mubr.bf16.gmra.mrb[0].mxu0 %v441
      %v496 = vpop.f32.mrb[0].mxu0
      %v497 = vadd.f32 %v399, %v496
      %v498 = vpop.f32.mrb[0].mxu0
      %v499 = vpop.f32.mrb[0].mxu0
      %v500 = vadd.f32 %v399, %v499
      %v501 = vpop.f32.mrb[0].mxu0
      %502 = vmatprep.mubr.bf16.mxu0 0
      %503 = vmatmul.mubr.bf16.gmra.mrb[0].mxu0 %v444
      %v504 = vpop.f32.mrb[0].mxu0
      %v505 = vadd.f32 %v399, %v504
      %v506 = vpop.f32.mrb[0].mxu0
      %v507 = vpop.f32.mrb[0].mxu0
      %v508 = vadd.f32 %v399, %v507
      %v509 = vpop.f32.mrb[0].mxu0
      %510 = vdwg.mxu0
      %v511 = vld [vmem:[%s4] sm:$0xf]
      %v512 = vld [vmem:[%s4 + $0x4] sm:$0xf]
      %v513 = vld [vmem:[%s4 + $0x8] sm:$0xf]
      %v514 = vld [vmem:[%s4 + $0xc] sm:$0xf]
      %v515 = vld [vmem:[%s5] sm:$0x1]
      %v517 = vlaneseq
      %v518 = vshrl.u32 %v517, 7
      %v519 = vsub.s32 0, %v518
      %v520 = vrot.slane %v515, %v519
      %v526 = vunpack.c.l.b16 %v511
      %v527 = vunpack.c.l.b16 %v512
      %v528 = vunpack.c.l.b16 %v513
      %v529 = vunpack.c.l.b16 %v514
      %v530 = vpack.c.b16 %v527, %v526
      %v531 = vpack.c.b16 %v529, %v528
      %v535 = vsel %vm433, %v389, 0
      %537 = vmatprep.subr.bf16.mxu0 0
      %538 = vmatpush1.bf16.msra.mxu0 %v530
      %539 = vmatprep.subr.bf16.mxu0 0
      %540 = vmatpush1.bf16.msra.mxu0 %v531
      %541 = vmatprep.subr.bf16.mxu0 0
      %542 = vmatpush1.bf16.msra.mxu0 0
      %543 = vmatprep.subr.bf16.mxu0 0
      %544 = vmatpush1.bf16.msra.mxu0 0
      %545 = vmatprep.subr.bf16.mxu0 0
      %546 = vmatpush1.bf16.msra.mxu0 0
      %547 = vmatprep.subr.bf16.mxu0 0
      %548 = vmatpush1.bf16.msra.mxu0 0
      %549 = vmatprep.subr.bf16.mxu0 0
      %550 = vmatpush1.bf16.msra.mxu0 0
      %551 = vmatprep.subr.bf16.mxu0 0
      %552 = vmatpush1.bf16.msra.mxu0 0
      %553 = vmatprep.subr.bf16.mxu0 0
      %554 = vmatpush1.bf16.msra.mxu0 0
      %555 = vmatprep.subr.bf16.mxu0 0
      %556 = vmatpush1.bf16.msra.mxu0 0
      %557 = vmatprep.subr.bf16.mxu0 0
      %558 = vmatpush1.bf16.msra.mxu0 0
      %559 = vmatprep.subr.bf16.mxu0 0
      %560 = vmatpush1.bf16.msra.mxu0 0
      %561 = vmatprep.subr.bf16.mxu0 0
      %562 = vmatpush1.bf16.msra.mxu0 0
      %563 = vmatprep.subr.bf16.mxu0 0
      %564 = vmatpush1.bf16.msra.mxu0 0
      %565 = vmatprep.subr.bf16.mxu0 0
      %566 = vmatpush1.bf16.msra.mxu0 0
      %567 = vmatprep.subr.bf16.mxu0 0
      %568 = vmatpush1.bf16.msra.mxu0 0
      %569 = vmatprep.mubr.bf16.mxu0 0
      %570 = vmatmul.mubr.bf16.gmra.mrb[0].mxu0 %v535
      %v571 = vpop.f32.mrb[0].mxu0
      %v572 = vadd.f32 %v520, %v571
      %v573 = vpop.f32.mrb[0].mxu0
      %v574 = vpop.f32.mrb[0].mxu0
      %v575 = vpop.f32.mrb[0].mxu0
      %576 = vdwg.mxu0
      %v577 = vpack.c.bf16 %v484, %v481
      %v578 = vpack.c.bf16 %v492, %v489
      %v579 = vpack.c.bf16 %v500, %v497
      %v580 = vpack.c.bf16 %v508, %v505
      %v581 = vpack.c.bf16 %v572, %v572
      %vm582 = vcmask 64512
      %v584 = vsel %vm582, %v577, 0
      %v587 = vsel %vm582, %v578, 0
      %v590 = vsel %vm582, %v579, 0
      %v593 = vsel %vm582, %v580, 0
      %v596 = vsel %vm582, %v581, 0
      %598 = vmatprep.subr.bf16.mxu0 0
      %599 = vmatpush1.bf16.xpose.msra.mxu0 %v596
      %600 = vmatprep.subr.bf16.mxu0 0
      %601 = vmatpush1.bf16.xpose.msra.mxu0 0
      %602 = vmatprep.subr.bf16.mxu0 0
      %603 = vmatpush1.bf16.xpose.msra.mxu0 0
      %604 = vmatprep.subr.bf16.mxu0 0
      %605 = vmatpush1.bf16.xpose.msra.mxu0 0
      %606 = vmatprep.subr.bf16.mxu0 0
      %607 = vmatpush1.bf16.xpose.msra.mxu0 0
      %608 = vmatprep.subr.bf16.mxu0 0
      %609 = vmatpush1.bf16.xpose.msra.mxu0 0
      %610 = vmatprep.subr.bf16.mxu0 0
      %611 = vmatpush1.bf16.xpose.msra.mxu0 0
      %612 = vmatprep.subr.bf16.mxu0 0
      %613 = vmatpush1.bf16.xpose.msra.mxu0 0
      %614 = vmatprep.subr.bf16.mxu0 0
      %615 = vmatpush1.bf16.xpose.msra.mxu0 0
      %616 = vmatprep.subr.bf16.mxu0 0
      %617 = vmatpush1.bf16.xpose.msra.mxu0 0
      %618 = vmatprep.subr.bf16.mxu0 0
      %619 = vmatpush1.bf16.xpose.msra.mxu0 0
      %620 = vmatprep.subr.bf16.mxu0 0
      %621 = vmatpush1.bf16.xpose.msra.mxu0 0
      %622 = vmatprep.subr.bf16.mxu0 0
      %623 = vmatpush1.bf16.xpose.msra.mxu0 0
      %624 = vmatprep.subr.bf16.mxu0 0
      %625 = vmatpush1.bf16.xpose.msra.mxu0 0
      %626 = vmatprep.subr.bf16.mxu0 0
      %627 = vmatpush1.bf16.xpose.msra.mxu0 0
      %628 = vmatprep.subr.bf16.mxu0 0
      %629 = vmatpush1.bf16.xpose.msra.mxu0 0
      %630 = vmatprep.mubr.bf16.mxu0 0
      %631 = vmatmul.mubr.bf16.gmra.mrb[0].mxu0 %v584
      %v632 = vpop.f32.mrb[0].mxu0
      %v633 = vadd.f32 0.0, %v632
      %v634 = vpop.f32.mrb[0].mxu0
      %v635 = vpop.f32.mrb[0].mxu0
      %v636 = vadd.f32 0.0, %v635
      %v637 = vpop.f32.mrb[0].mxu0
      %638 = vmatprep.mubr.bf16.mxu0 0
      %639 = vmatmul.mubr.bf16.gmra.mrb[0].mxu0 %v587
      %v640 = vpop.f32.mrb[0].mxu0
      %v641 = vadd.f32 0.0, %v640
      %v642 = vpop.f32.mrb[0].mxu0
      %v643 = vpop.f32.mrb[0].mxu0
      %v644 = vadd.f32 0.0, %v643
      %v645 = vpop.f32.mrb[0].mxu0
      %646 = vmatprep.mubr.bf16.mxu0 0
      %647 = vmatmul.mubr.bf16.gmra.mrb[0].mxu0 %v590
      %v648 = vpop.f32.mrb[0].mxu0
      %v649 = vadd.f32 0.0, %v648
      %v650 = vpop.f32.mrb[0].mxu0
      %v651 = vpop.f32.mrb[0].mxu0
      %v652 = vadd.f32 0.0, %v651
      %v653 = vpop.f32.mrb[0].mxu0
      %654 = vmatprep.mubr.bf16.mxu0 0
      %655 = vmatmul.mubr.bf16.gmra.mrb[0].mxu0 %v593
      %v656 = vpop.f32.mrb[0].mxu0
      %v657 = vadd.f32 0.0, %v656
      %v658 = vpop.f32.mrb[0].mxu0
      %v659 = vpop.f32.mrb[0].mxu0
      %v660 = vadd.f32 0.0, %v659
      %v661 = vpop.f32.mrb[0].mxu0
      %662 = vdwg.mxu0
      %v663 = vsel %vm582, %v633, -inf
      %664 = vmax.xlane.f32.xlu0 %v663
      %v665 = vpop.xlane.xlu0 %664
      %v666 = vsel %vm582, %v636, -inf
      %667 = vmax.xlane.f32.xlu0 %v666
      %v668 = vpop.xlane.xlu0 %667
      %v669 = vsel %vm582, %v641, -inf
      %670 = vmax.xlane.f32.xlu0 %v669
      %v671 = vpop.xlane.xlu0 %670
      %v672 = vsel %vm582, %v644, -inf
      %673 = vmax.xlane.f32.xlu0 %v672
      %v674 = vpop.xlane.xlu0 %673
      %v675 = vsel %vm582, %v649, -inf
      %676 = vmax.xlane.f32.xlu0 %v675
      %v677 = vpop.xlane.xlu0 %676
      %v678 = vsel %vm582, %v652, -inf
      %679 = vmax.xlane.f32.xlu0 %v678
      %v680 = vpop.xlane.xlu0 %679
      %v681 = vsel %vm582, %v657, -inf
      %682 = vmax.xlane.f32.xlu0 %v681
      %v683 = vpop.xlane.xlu0 %682
      %v684 = vsel %vm582, %v660, -inf
      %685 = vmax.xlane.f32.xlu0 %v684
      %v686 = vpop.xlane.xlu0 %685
      %v687 = vsub.f32 %v633, %v665
      %v688 = vsub.f32 %v636, %v668
      %v689 = vsub.f32 %v641, %v671
      %v690 = vsub.f32 %v644, %v674
      %v691 = vsub.f32 %v649, %v677
      %v692 = vsub.f32 %v652, %v680
      %v693 = vsub.f32 %v657, %v683
      %v694 = vsub.f32 %v660, %v686
      %v695 = vmul.f32 %v687, 1.442695
      %v696 = vpow.pop %v695
      %v697 = vmul.f32 %v688, 1.442695
      %v698 = vpow.pop %v697
      %v699 = vmul.f32 %v689, 1.442695
      %v700 = vpow.pop %v699
      %v701 = vmul.f32 %v690, 1.442695
      %v702 = vpow.pop %v701
      %v703 = vmul.f32 %v691, 1.442695
      %v704 = vpow.pop %v703
      %v705 = vmul.f32 %v692, 1.442695
      %v706 = vpow.pop %v705
      %v707 = vmul.f32 %v693, 1.442695
      %v708 = vpow.pop %v707
      %v709 = vmul.f32 %v694, 1.442695
      %v710 = vpow.pop %v709
      %v711 = vsel %vm582, %v696, 0.0
      %712 = vadd.xlane.f32.xlu0 %v711
      %v713 = vpop.xlane.xlu0 %712
      %v714 = vsel %vm582, %v698, 0.0
      %715 = vadd.xlane.f32.xlu0 %v714
      %v716 = vpop.xlane.xlu0 %715
      %v717 = vsel %vm582, %v700, 0.0
      %718 = vadd.xlane.f32.xlu0 %v717
      %v719 = vpop.xlane.xlu0 %718
      %v720 = vsel %vm582, %v702, 0.0
      %721 = vadd.xlane.f32.xlu0 %v720
      %v722 = vpop.xlane.xlu0 %721
      %v723 = vsel %vm582, %v704, 0.0
      %724 = vadd.xlane.f32.xlu0 %v723
      %v725 = vpop.xlane.xlu0 %724
      %v726 = vsel %vm582, %v706, 0.0
      %727 = vadd.xlane.f32.xlu0 %v726
      %v728 = vpop.xlane.xlu0 %727
      %v729 = vsel %vm582, %v708, 0.0
      %730 = vadd.xlane.f32.xlu0 %v729
      %v731 = vpop.xlane.xlu0 %730
      %v732 = vsel %vm582, %v710, 0.0
      %733 = vadd.xlane.f32.xlu0 %v732
      %v734 = vpop.xlane.xlu0 %733
      %v735 = vrcp.pop %v713
      %v736 = vmul.f32 %v696, %v735
      %v737 = vrcp.pop %v716
      %v738 = vmul.f32 %v698, %v737
      %v739 = vrcp.pop %v719
      %v740 = vmul.f32 %v700, %v739
      %v741 = vrcp.pop %v722
      %v742 = vmul.f32 %v702, %v741
      %v743 = vrcp.pop %v725
      %v744 = vmul.f32 %v704, %v743
      %v745 = vrcp.pop %v728
      %v746 = vmul.f32 %v706, %v745
      %v747 = vrcp.pop %v731
      %v748 = vmul.f32 %v708, %v747
      %v749 = vrcp.pop %v734
      %v750 = vmul.f32 %v710, %v749
      %v751 = vpack.c.bf16 %v738, %v736
      %v752 = vpack.c.bf16 %v742, %v740
      %v753 = vpack.c.bf16 %v746, %v744
      %v754 = vpack.c.bf16 %v750, %v748
      %756 = vrot.lane.b32.xlu0 %v581, 96
      %v757 = vpop.permute.xlu0 %756
      %v759 = vsel %vm582, %v751, 0
      %v762 = vsel %vm582, %v752, 0
      %v765 = vsel %vm582, %v753, 0
      %v768 = vsel %vm582, %v754, 0
      %vm770 = vcmask 1043456
      %v772 = vsel %vm770, %v757, 0
      %774 = vmatprep.subr.bf16.mxu0 0
      %775 = vmatpush1.bf16.msra.mxu0 %v772
      %776 = vmatprep.subr.bf16.mxu0 0
      %777 = vmatpush1.bf16.msra.mxu0 0
      %778 = vmatprep.subr.bf16.mxu0 0
      %779 = vmatpush1.bf16.msra.mxu0 0
      %780 = vmatprep.subr.bf16.mxu0 0
      %781 = vmatpush1.bf16.msra.mxu0 0
      %782 = vmatprep.subr.bf16.mxu0 0
      %783 = vmatpush1.bf16.msra.mxu0 0
      %784 = vmatprep.subr.bf16.mxu0 0
      %785 = vmatpush1.bf16.msra.mxu0 0
      %786 = vmatprep.subr.bf16.mxu0 0
      %787 = vmatpush1.bf16.msra.mxu0 0
      %788 = vmatprep.subr.bf16.mxu0 0
      %789 = vmatpush1.bf16.msra.mxu0 0
      %790 = vmatprep.subr.bf16.mxu0 0
      %791 = vmatpush1.bf16.msra.mxu0 0
      %792 = vmatprep.subr.bf16.mxu0 0
      %793 = vmatpush1.bf16.msra.mxu0 0
      %794 = vmatprep.subr.bf16.mxu0 0
      %795 = vmatpush1.bf16.msra.mxu0 0
      %796 = vmatprep.subr.bf16.mxu0 0
      %797 = vmatpush1.bf16.msra.mxu0 0
      %798 = vmatprep.subr.bf16.mxu0 0
      %799 = vmatpush1.bf16.msra.mxu0 0
      %800 = vmatprep.subr.bf16.mxu0 0
      %801 = vmatpush1.bf16.msra.mxu0 0
      %802 = vmatprep.subr.bf16.mxu0 0
      %803 = vmatpush1.bf16.msra.mxu0 0
      %804 = vmatprep.subr.bf16.mxu0 0
      %805 = vmatpush1.bf16.msra.mxu0 0
      %806 = vmatprep.mubr.bf16.mxu0 0
      %807 = vmatmul.mubr.bf16.gmra.mrb[0].mxu0 %v759
      %v808 = vpop.f32.mrb[0].mxu0
      %v809 = vadd.f32 0.0, %v808
      %v810 = vpop.f32.mrb[0].mxu0
      %v811 = vpop.f32.mrb[0].mxu0
      %v812 = vadd.f32 0.0, %v811
      %v813 = vpop.f32.mrb[0].mxu0
      %814 = vmatprep.mubr.bf16.mxu0 0
      %815 = vmatmul.mubr.bf16.gmra.mrb[0].mxu0 %v762
      %v816 = vpop.f32.mrb[0].mxu0
      %v817 = vadd.f32 0.0, %v816
      %v818 = vpop.f32.mrb[0].mxu0
      %v819 = vpop.f32.mrb[0].mxu0
      %v820 = vadd.f32 0.0, %v819
      %v821 = vpop.f32.mrb[0].mxu0
      %822 = vmatprep.mubr.bf16.mxu0 0
      %823 = vmatmul.mubr.bf16.gmra.mrb[0].mxu0 %v765
      %v824 = vpop.f32.mrb[0].mxu0
      %v825 = vadd.f32 0.0, %v824
      %v826 = vpop.f32.mrb[0].mxu0
      %v827 = vpop.f32.mrb[0].mxu0
      %v828 = vadd.f32 0.0, %v827
      %v829 = vpop.f32.mrb[0].mxu0
      %830 = vmatprep.mubr.bf16.mxu0 0
      %831 = vmatmul.mubr.bf16.gmra.mrb[0].mxu0 %v768
      %v832 = vpop.f32.mrb[0].mxu0
      %v833 = vadd.f32 0.0, %v832
      %v834 = vpop.f32.mrb[0].mxu0
      %v835 = vpop.f32.mrb[0].mxu0
      %v836 = vadd.f32 0.0, %v835
      %v837 = vpop.f32.mrb[0].mxu0
      %838 = vdwg.mxu0
      %843 = vrot.lane.b32.xlu0 %v577, 120
      %v844 = vpop.permute.xlu0 %843
      %845 = vrot.lane.b32.xlu0 %v578, 120
      %v846 = vpop.permute.xlu0 %845
      %847 = vrot.lane.b32.xlu0 %v579, 120
      %v848 = vpop.permute.xlu0 %847
      %849 = vrot.lane.b32.xlu0 %v580, 120
      %v850 = vpop.permute.xlu0 %849
      %851 = vrot.lane.b32.xlu0 %v581, 120
      %v852 = vpop.permute.xlu0 %851
      %v854 = vsel %vm582, %v844, 0
      %v857 = vsel %vm582, %v846, 0
      %v860 = vsel %vm582, %v848, 0
      %v863 = vsel %vm582, %v850, 0
      %v866 = vsel %vm582, %v852, 0
      %868 = vmatprep.subr.bf16.mxu0 0
      %869 = vmatpush1.bf16.xpose.msra.mxu0 %v866
      %870 = vmatprep.subr.bf16.mxu0 0
      %871 = vmatpush1.bf16.xpose.msra.mxu0 0
      %872 = vmatprep.subr.bf16.mxu0 0
      %873 = vmatpush1.bf16.xpose.msra.mxu0 0
      %874 = vmatprep.subr.bf16.mxu0 0
      %875 = vmatpush1.bf16.xpose.msra.mxu0 0
      %876 = vmatprep.subr.bf16.mxu0 0
      %877 = vmatpush1.bf16.xpose.msra.mxu0 0
      %878 = vmatprep.subr.bf16.mxu0 0
      %879 = vmatpush1.bf16.xpose.msra.mxu0 0
      %880 = vmatprep.subr.bf16.mxu0 0
      %881 = vmatpush1.bf16.xpose.msra.mxu0 0
      %882 = vmatprep.subr.bf16.mxu0 0
      %883 = vmatpush1.bf16.xpose.msra.mxu0 0
      %884 = vmatprep.subr.bf16.mxu0 0
      %885 = vmatpush1.bf16.xpose.msra.mxu0 0
      %886 = vmatprep.subr.bf16.mxu0 0
      %887 = vmatpush1.bf16.xpose.msra.mxu0 0
      %888 = vmatprep.subr.bf16.mxu0 0
      %889 = vmatpush1.bf16.xpose.msra.mxu0 0
      %890 = vmatprep.subr.bf16.mxu0 0
      %891 = vmatpush1.bf16.xpose.msra.mxu0 0
      %892 = vmatprep.subr.bf16.mxu0 0
      %893 = vmatpush1.bf16.xpose.msra.mxu0 0
      %894 = vmatprep.subr.bf16.mxu0 0
      %895 = vmatpush1.bf16.xpose.msra.mxu0 0
      %896 = vmatprep.subr.bf16.mxu0 0
      %897 = vmatpush1.bf16.xpose.msra.mxu0 0
      %898 = vmatprep.subr.bf16.mxu0 0
      %899 = vmatpush1.bf16.xpose.msra.mxu0 0
      %900 = vmatprep.mubr.bf16.mxu0 0
      %901 = vmatmul.mubr.bf16.gmra.mrb[0].mxu0 %v854
      %v902 = vpop.f32.mrb[0].mxu0
      %v903 = vadd.f32 0.0, %v902
      %v904 = vpop.f32.mrb[0].mxu0
      %v905 = vpop.f32.mrb[0].mxu0
      %v906 = vadd.f32 0.0, %v905
      %v907 = vpop.f32.mrb[0].mxu0
      %908 = vmatprep.mubr.bf16.mxu0 0
      %909 = vmatmul.mubr.bf16.gmra.mrb[0].mxu0 %v857
      %v910 = vpop.f32.mrb[0].mxu0
      %v911 = vadd.f32 0.0, %v910
      %v912 = vpop.f32.mrb[0].mxu0
      %v913 = vpop.f32.mrb[0].mxu0
      %v914 = vadd.f32 0.0, %v913
      %v915 = vpop.f32.mrb[0].mxu0
      %916 = vmatprep.mubr.bf16.mxu0 0
      %917 = vmatmul.mubr.bf16.gmra.mrb[0].mxu0 %v860
      %v918 = vpop.f32.mrb[0].mxu0
      %v919 = vadd.f32 0.0, %v918
      %v920 = vpop.f32.mrb[0].mxu0
      %v921 = vpop.f32.mrb[0].mxu0
      %v922 = vadd.f32 0.0, %v921
      %v923 = vpop.f32.mrb[0].mxu0
      %924 = vmatprep.mubr.bf16.mxu0 0
      %925 = vmatmul.mubr.bf16.gmra.mrb[0].mxu0 %v863
      %v926 = vpop.f32.mrb[0].mxu0
      %v927 = vadd.f32 0.0, %v926
      %v928 = vpop.f32.mrb[0].mxu0
      %v929 = vpop.f32.mrb[0].mxu0
      %v930 = vadd.f32 0.0, %v929
      %v931 = vpop.f32.mrb[0].mxu0
      %932 = vdwg.mxu0
      %v933 = vsel %vm582, %v903, -inf
      %934 = vmax.xlane.f32.xlu0 %v933
      %v935 = vpop.xlane.xlu0 %934
      %v936 = vsel %vm582, %v906, -inf
      %937 = vmax.xlane.f32.xlu0 %v936
      %v938 = vpop.xlane.xlu0 %937
      %v939 = vsel %vm582, %v911, -inf
      %940 = vmax.xlane.f32.xlu0 %v939
      %v941 = vpop.xlane.xlu0 %940
      %v942 = vsel %vm582, %v914, -inf
      %943 = vmax.xlane.f32.xlu0 %v942
      %v944 = vpop.xlane.xlu0 %943
      %v945 = vsel %vm582, %v919, -inf
      %946 = vmax.xlane.f32.xlu0 %v945
      %v947 = vpop.xlane.xlu0 %946
      %v948 = vsel %vm582, %v922, -inf
      %949 = vmax.xlane.f32.xlu0 %v948
      %v950 = vpop.xlane.xlu0 %949
      %v951 = vsel %vm582, %v927, -inf
      %952 = vmax.xlane.f32.xlu0 %v951
      %v953 = vpop.xlane.xlu0 %952
      %v954 = vsel %vm582, %v930, -inf
      %955 = vmax.xlane.f32.xlu0 %v954
      %v956 = vpop.xlane.xlu0 %955
      %v957 = vsub.f32 %v903, %v935
      %v958 = vsub.f32 %v906, %v938
      %v959 = vsub.f32 %v911, %v941
      %v960 = vsub.f32 %v914, %v944
      %v961 = vsub.f32 %v919, %v947
      %v962 = vsub.f32 %v922, %v950
      %v963 = vsub.f32 %v927, %v953
      %v964 = vsub.f32 %v930, %v956
      %v965 = vmul.f32 %v957, 1.442695
      %v966 = vpow.pop %v965
      %v967 = vmul.f32 %v958, 1.442695
      %v968 = vpow.pop %v967
      %v969 = vmul.f32 %v959, 1.442695
      %v970 = vpow.pop %v969
      %v971 = vmul.f32 %v960, 1.442695
      %v972 = vpow.pop %v971
      %v973 = vmul.f32 %v961, 1.442695
      %v974 = vpow.pop %v973
      %v975 = vmul.f32 %v962, 1.442695
      %v976 = vpow.pop %v975
      %v977 = vmul.f32 %v963, 1.442695
      %v978 = vpow.pop %v977
      %v979 = vmul.f32 %v964, 1.442695
      %v980 = vpow.pop %v979
      %v981 = vsel %vm582, %v966, 0.0
      %982 = vadd.xlane.f32.xlu0 %v981
      %v983 = vpop.xlane.xlu0 %982
      %v984 = vsel %vm582, %v968, 0.0
      %985 = vadd.xlane.f32.xlu0 %v984
      %v986 = vpop.xlane.xlu0 %985
      %v987 = vsel %vm582, %v970, 0.0
      %988 = vadd.xlane.f32.xlu0 %v987
      %v989 = vpop.xlane.xlu0 %988
      %v990 = vsel %vm582, %v972, 0.0
      %991 = vadd.xlane.f32.xlu0 %v990
      %v992 = vpop.xlane.xlu0 %991
      %v993 = vsel %vm582, %v974, 0.0
      %994 = vadd.xlane.f32.xlu0 %v993
      %v995 = vpop.xlane.xlu0 %994
      %v996 = vsel %vm582, %v976, 0.0
      %997 = vadd.xlane.f32.xlu0 %v996
      %v998 = vpop.xlane.xlu0 %997
      %v999 = vsel %vm582, %v978, 0.0
      %1000 = vadd.xlane.f32.xlu0 %v999
      %v1001 = vpop.xlane.xlu0 %1000
      %v1002 = vsel %vm582, %v980, 0.0
      %1003 = vadd.xlane.f32.xlu0 %v1002
      %v1004 = vpop.xlane.xlu0 %1003
      %v1005 = vrcp.pop %v983
      %v1006 = vmul.f32 %v966, %v1005
      %v1007 = vrcp.pop %v986
      %v1008 = vmul.f32 %v968, %v1007
      %v1009 = vrcp.pop %v989
      %v1010 = vmul.f32 %v970, %v1009
      %v1011 = vrcp.pop %v992
      %v1012 = vmul.f32 %v972, %v1011
      %v1013 = vrcp.pop %v995
      %v1014 = vmul.f32 %v974, %v1013
      %v1015 = vrcp.pop %v998
      %v1016 = vmul.f32 %v976, %v1015
      %v1017 = vrcp.pop %v1001
      %v1018 = vmul.f32 %v978, %v1017
      %v1019 = vrcp.pop %v1004
      %v1020 = vmul.f32 %v980, %v1019
      %v1021 = vpack.c.bf16 %v1008, %v1006
      %v1022 = vpack.c.bf16 %v1012, %v1010
      %v1023 = vpack.c.bf16 %v1016, %v1014
      %v1024 = vpack.c.bf16 %v1020, %v1018
      %1025 = vrot.lane.b32.xlu0 %v581, 88
      %v1026 = vpop.permute.xlu0 %1025
      %v1028 = vsel %vm582, %v1021, 0
      %v1031 = vsel %vm582, %v1022, 0
      %v1034 = vsel %vm582, %v1023, 0
      %v1037 = vsel %vm582, %v1024, 0
      %v1040 = vsel %vm770, %v1026, 0
      %1042 = vmatprep.subr.bf16.mxu0 0
      %1043 = vmatpush1.bf16.msra.mxu0 %v1040
      %1044 = vmatprep.subr.bf16.mxu0 0
      %1045 = vmatpush1.bf16.msra.mxu0 0
      %1046 = vmatprep.subr.bf16.mxu0 0
      %1047 = vmatpush1.bf16.msra.mxu0 0
      %1048 = vmatprep.subr.bf16.mxu0 0
      %1049 = vmatpush1.bf16.msra.mxu0 0
      %1050 = vmatprep.subr.bf16.mxu0 0
      %1051 = vmatpush1.bf16.msra.mxu0 0
      %1052 = vmatprep.subr.bf16.mxu0 0
      %1053 = vmatpush1.bf16.msra.mxu0 0
      %1054 = vmatprep.subr.bf16.mxu0 0
      %1055 = vmatpush1.bf16.msra.mxu0 0
      %1056 = vmatprep.subr.bf16.mxu0 0
      %1057 = vmatpush1.bf16.msra.mxu0 0
      %1058 = vmatprep.subr.bf16.mxu0 0
      %1059 = vmatpush1.bf16.msra.mxu0 0
      %1060 = vmatprep.subr.bf16.mxu0 0
      %1061 = vmatpush1.bf16.msra.mxu0 0
      %1062 = vmatprep.subr.bf16.mxu0 0
      %1063 = vmatpush1.bf16.msra.mxu0 0
      %1064 = vmatprep.subr.bf16.mxu0 0
      %1065 = vmatpush1.bf16.msra.mxu0 0
      %1066 = vmatprep.subr.bf16.mxu0 0
      %1067 = vmatpush1.bf16.msra.mxu0 0
      %1068 = vmatprep.subr.bf16.mxu0 0
      %1069 = vmatpush1.bf16.msra.mxu0 0
      %1070 = vmatprep.subr.bf16.mxu0 0
      %1071 = vmatpush1.bf16.msra.mxu0 0
      %1072 = vmatprep.subr.bf16.mxu0 0
      %1073 = vmatpush1.bf16.msra.mxu0 0
      %1074 = vmatprep.mubr.bf16.mxu0 0
      %1075 = vmatmul.mubr.bf16.gmra.mrb[0].mxu0 %v1028
      %v1076 = vpop.f32.mrb[0].mxu0
      %v1077 = vadd.f32 0.0, %v1076
      %v1078 = vpop.f32.mrb[0].mxu0
      %v1079 = vpop.f32.mrb[0].mxu0
      %v1080 = vadd.f32 0.0, %v1079
      %v1081 = vpop.f32.mrb[0].mxu0
      %1082 = vmatprep.mubr.bf16.mxu0 0
      %1083 = vmatmul.mubr.bf16.gmra.mrb[0].mxu0 %v1031
      %v1084 = vpop.f32.mrb[0].mxu0
      %v1085 = vadd.f32 0.0, %v1084
      %v1086 = vpop.f32.mrb[0].mxu0
      %v1087 = vpop.f32.mrb[0].mxu0
      %v1088 = vadd.f32 0.0, %v1087
      %v1089 = vpop.f32.mrb[0].mxu0
      %1090 = vmatprep.mubr.bf16.mxu0 0
      %1091 = vmatmul.mubr.bf16.gmra.mrb[0].mxu0 %v1034
      %v1092 = vpop.f32.mrb[0].mxu0
      %v1093 = vadd.f32 0.0, %v1092
      %v1094 = vpop.f32.mrb[0].mxu0
      %v1095 = vpop.f32.mrb[0].mxu0
      %v1096 = vadd.f32 0.0, %v1095
      %v1097 = vpop.f32.mrb[0].mxu0
      %1098 = vmatprep.mubr.bf16.mxu0 0
      %1099 = vmatmul.mubr.bf16.gmra.mrb[0].mxu0 %v1037
      %v1100 = vpop.f32.mrb[0].mxu0
      %v1101 = vadd.f32 0.0, %v1100
      %v1102 = vpop.f32.mrb[0].mxu0
      %v1103 = vpop.f32.mrb[0].mxu0
      %v1104 = vadd.f32 0.0, %v1103
      %v1105 = vpop.f32.mrb[0].mxu0
      %1106 = vdwg.mxu0
      %1107 = vrot.lane.b32.xlu0 %v577, 112
      %v1108 = vpop.permute.xlu0 %1107
      %1109 = vrot.lane.b32.xlu0 %v578, 112
      %v1110 = vpop.permute.xlu0 %1109
      %1111 = vrot.lane.b32.xlu0 %v579, 112
      %v1112 = vpop.permute.xlu0 %1111
      %1113 = vrot.lane.b32.xlu0 %v580, 112
      %v1114 = vpop.permute.xlu0 %1113
      %1115 = vrot.lane.b32.xlu0 %v581, 112
      %v1116 = vpop.permute.xlu0 %1115
      %v1118 = vsel %vm582, %v1108, 0
      %v1121 = vsel %vm582, %v1110, 0
      %v1124 = vsel %vm582, %v1112, 0
      %v1127 = vsel %vm582, %v1114, 0
      %v1130 = vsel %vm582, %v1116, 0
      %1132 = vmatprep.subr.bf16.mxu0 0
      %1133 = vmatpush1.bf16.xpose.msra.mxu0 %v1130
      %1134 = vmatprep.subr.bf16.mxu0 0
      %1135 = vmatpush1.bf16.xpose.msra.mxu0 0
      %1136 = vmatprep.subr.bf16.mxu0 0
      %1137 = vmatpush1.bf16.xpose.msra.mxu0 0
      %1138 = vmatprep.subr.bf16.mxu0 0
      %1139 = vmatpush1.bf16.xpose.msra.mxu0 0
      %1140 = vmatprep.subr.bf16.mxu0 0
      %1141 = vmatpush1.bf16.xpose.msra.mxu0 0
      %1142 = vmatprep.subr.bf16.mxu0 0
      %1143 = vmatpush1.bf16.xpose.msra.mxu0 0
      %1144 = vmatprep.subr.bf16.mxu0 0
      %1145 = vmatpush1.bf16.xpose.msra.mxu0 0
      %1146 = vmatprep.subr.bf16.mxu0 0
      %1147 = vmatpush1.bf16.xpose.msra.mxu0 0
      %1148 = vmatprep.subr.bf16.mxu0 0
      %1149 = vmatpush1.bf16.xpose.msra.mxu0 0
      %1150 = vmatprep.subr.bf16.mxu0 0
      %1151 = vmatpush1.bf16.xpose.msra.mxu0 0
      %1152 = vmatprep.subr.bf16.mxu0 0
      %1153 = vmatpush1.bf16.xpose.msra.mxu0 0
      %1154 = vmatprep.subr.bf16.mxu0 0
      %1155 = vmatpush1.bf16.xpose.msra.mxu0 0
      %1156 = vmatprep.subr.bf16.mxu0 0
      %1157 = vmatpush1.bf16.xpose.msra.mxu0 0
      %1158 = vmatprep.subr.bf16.mxu0 0
      %1159 = vmatpush1.bf16.xpose.msra.mxu0 0
      %1160 = vmatprep.subr.bf16.mxu0 0
      %1161 = vmatpush1.bf16.xpose.msra.mxu0 0
      %1162 = vmatprep.subr.bf16.mxu0 0
      %1163 = vmatpush1.bf16.xpose.msra.mxu0 0
      %1164 = vmatprep.mubr.bf16.mxu0 0
      %1165 = vmatmul.mubr.bf16.gmra.mrb[0].mxu0 %v1118
      %v1166 = vpop.f32.mrb[0].mxu0
      %v1167 = vadd.f32 0.0, %v1166
      %v1168 = vpop.f32.mrb[0].mxu0
      %v1169 = vpop.f32.mrb[0].mxu0
      %v1170 = vadd.f32 0.0, %v1169
      %v1171 = vpop.f32.mrb[0].mxu0
      %1172 = vmatprep.mubr.bf16.mxu0 0
      %1173 = vmatmul.mubr.bf16.gmra.mrb[0].mxu0 %v1121
      %v1174 = vpop.f32.mrb[0].mxu0
      %v1175 = vadd.f32 0.0, %v1174
      %v1176 = vpop.f32.mrb[0].mxu0
      %v1177 = vpop.f32.mrb[0].mxu0
      %v1178 = vadd.f32 0.0, %v1177
      %v1179 = vpop.f32.mrb[0].mxu0
      %1180 = vmatprep.mubr.bf16.mxu0 0
      %1181 = vmatmul.mubr.bf16.gmra.mrb[0].mxu0 %v1124
      %v1182 = vpop.f32.mrb[0].mxu0
      %v1183 = vadd.f32 0.0, %v1182
      %v1184 = vpop.f32.mrb[0].mxu0
      %v1185 = vpop.f32.mrb[0].mxu0
      %v1186 = vadd.f32 0.0, %v1185
      %v1187 = vpop.f32.mrb[0].mxu0
      %1188 = vmatprep.mubr.bf16.mxu0 0
      %1189 = vmatmul.mubr.bf16.gmra.mrb[0].mxu0 %v1127
      %v1190 = vpop.f32.mrb[0].mxu0
      %v1191 = vadd.f32 0.0, %v1190
      %v1192 = vpop.f32.mrb[0].mxu0
      %v1193 = vpop.f32.mrb[0].mxu0
      %v1194 = vadd.f32 0.0, %v1193
      %v1195 = vpop.f32.mrb[0].mxu0
      %1196 = vdwg.mxu0
      %v1197 = vsel %vm582, %v1167, -inf
      %1198 = vmax.xlane.f32.xlu0 %v1197
      %v1199 = vpop.xlane.xlu0 %1198
      %v1200 = vsel %vm582, %v1170, -inf
      %1201 = vmax.xlane.f32.xlu0 %v1200
      %v1202 = vpop.xlane.xlu0 %1201
      %v1203 = vsel %vm582, %v1175, -inf
      %1204 = vmax.xlane.f32.xlu0 %v1203
      %v1205 = vpop.xlane.xlu0 %1204
      %v1206 = vsel %vm582, %v1178, -inf
      %1207 = vmax.xlane.f32.xlu0 %v1206
      %v1208 = vpop.xlane.xlu0 %1207
      %v1209 = vsel %vm582, %v1183, -inf
      %1210 = vmax.xlane.f32.xlu0 %v1209
      %v1211 = vpop.xlane.xlu0 %1210
      %v1212 = vsel %vm582, %v1186, -inf
      %1213 = vmax.xlane.f32.xlu0 %v1212
      %v1214 = vpop.xlane.xlu0 %1213
      %v1215 = vsel %vm582, %v1191, -inf
      %1216 = vmax.xlane.f32.xlu0 %v1215
      %v1217 = vpop.xlane.xlu0 %1216
      %v1218 = vsel %vm582, %v1194, -inf
      %1219 = vmax.xlane.f32.xlu0 %v1218
      %v1220 = vpop.xlane.xlu0 %1219
      %v1221 = vsub.f32 %v1167, %v1199
      %v1222 = vsub.f32 %v1170, %v1202
      %v1223 = vsub.f32 %v1175, %v1205
      %v1224 = vsub.f32 %v1178, %v1208
      %v1225 = vsub.f32 %v1183, %v1211
      %v1226 = vsub.f32 %v1186, %v1214
      %v1227 = vsub.f32 %v1191, %v1217
      %v1228 = vsub.f32 %v1194, %v1220
      %v1229 = vmul.f32 %v1221, 1.442695
      %v1230 = vpow.pop %v1229
      %v1231 = vmul.f32 %v1222, 1.442695
      %v1232 = vpow.pop %v1231
      %v1233 = vmul.f32 %v1223, 1.442695
      %v1234 = vpow.pop %v1233
      %v1235 = vmul.f32 %v1224, 1.442695
      %v1236 = vpow.pop %v1235
      %v1237 = vmul.f32 %v1225, 1.442695
      %v1238 = vpow.pop %v1237
      %v1239 = vmul.f32 %v1226, 1.442695
      %v1240 = vpow.pop %v1239
      %v1241 = vmul.f32 %v1227, 1.442695
      %v1242 = vpow.pop %v1241
      %v1243 = vmul.f32 %v1228, 1.442695
      %v1244 = vpow.pop %v1243
      %v1245 = vsel %vm582, %v1230, 0.0
      %1246 = vadd.xlane.f32.xlu0 %v1245
      %v1247 = vpop.xlane.xlu0 %1246
      %v1248 = vsel %vm582, %v1232, 0.0
      %1249 = vadd.xlane.f32.xlu0 %v1248
      %v1250 = vpop.xlane.xlu0 %1249
      %v1251 = vsel %vm582, %v1234, 0.0
      %1252 = vadd.xlane.f32.xlu0 %v1251
      %v1253 = vpop.xlane.xlu0 %1252
      %v1254 = vsel %vm582, %v1236, 0.0
      %1255 = vadd.xlane.f32.xlu0 %v1254
      %v1256 = vpop.xlane.xlu0 %1255
      %v1257 = vsel %vm582, %v1238, 0.0
      %1258 = vadd.xlane.f32.xlu0 %v1257
      %v1259 = vpop.xlane.xlu0 %1258
      %v1260 = vsel %vm582, %v1240, 0.0
      %1261 = vadd.xlane.f32.xlu0 %v1260
      %v1262 = vpop.xlane.xlu0 %1261
      %v1263 = vsel %vm582, %v1242, 0.0
      %1264 = vadd.xlane.f32.xlu0 %v1263
      %v1265 = vpop.xlane.xlu0 %1264
      %v1266 = vsel %vm582, %v1244, 0.0
      %1267 = vadd.xlane.f32.xlu0 %v1266
      %v1268 = vpop.xlane.xlu0 %1267
      %v1269 = vrcp.pop %v1247
      %v1270 = vmul.f32 %v1230, %v1269
      %v1271 = vrcp.pop %v1250
      %v1272 = vmul.f32 %v1232, %v1271
      %v1273 = vrcp.pop %v1253
      %v1274 = vmul.f32 %v1234, %v1273
      %v1275 = vrcp.pop %v1256
      %v1276 = vmul.f32 %v1236, %v1275
      %v1277 = vrcp.pop %v1259
      %v1278 = vmul.f32 %v1238, %v1277
      %v1279 = vrcp.pop %v1262
      %v1280 = vmul.f32 %v1240, %v1279
      %v1281 = vrcp.pop %v1265
      %v1282 = vmul.f32 %v1242, %v1281
      %v1283 = vrcp.pop %v1268
      %v1284 = vmul.f32 %v1244, %v1283
      %v1285 = vpack.c.bf16 %v1272, %v1270
      %v1286 = vpack.c.bf16 %v1276, %v1274
      %v1287 = vpack.c.bf16 %v1280, %v1278
      %v1288 = vpack.c.bf16 %v1284, %v1282
      %1289 = vrot.lane.b32.xlu0 %v581, 80
      %v1290 = vpop.permute.xlu0 %1289
      %v1292 = vsel %vm582, %v1285, 0
      %v1295 = vsel %vm582, %v1286, 0
      %v1298 = vsel %vm582, %v1287, 0
      %v1301 = vsel %vm582, %v1288, 0
      %v1304 = vsel %vm770, %v1290, 0
      %1306 = vmatprep.subr.bf16.mxu0 0
      %1307 = vmatpush1.bf16.msra.mxu0 %v1304
      %1308 = vmatprep.subr.bf16.mxu0 0
      %1309 = vmatpush1.bf16.msra.mxu0 0
      %1310 = vmatprep.subr.bf16.mxu0 0
      %1311 = vmatpush1.bf16.msra.mxu0 0
      %1312 = vmatprep.subr.bf16.mxu0 0
      %1313 = vmatpush1.bf16.msra.mxu0 0
      %1314 = vmatprep.subr.bf16.mxu0 0
      %1315 = vmatpush1.bf16.msra.mxu0 0
      %1316 = vmatprep.subr.bf16.mxu0 0
      %1317 = vmatpush1.bf16.msra.mxu0 0
      %1318 = vmatprep.subr.bf16.mxu0 0
      %1319 = vmatpush1.bf16.msra.mxu0 0
      %1320 = vmatprep.subr.bf16.mxu0 0
      %1321 = vmatpush1.bf16.msra.mxu0 0
      %1322 = vmatprep.subr.bf16.mxu0 0
      %1323 = vmatpush1.bf16.msra.mxu0 0
      %1324 = vmatprep.subr.bf16.mxu0 0
      %1325 = vmatpush1.bf16.msra.mxu0 0
      %1326 = vmatprep.subr.bf16.mxu0 0
      %1327 = vmatpush1.bf16.msra.mxu0 0
      %1328 = vmatprep.subr.bf16.mxu0 0
      %1329 = vmatpush1.bf16.msra.mxu0 0
      %1330 = vmatprep.subr.bf16.mxu0 0
      %1331 = vmatpush1.bf16.msra.mxu0 0
      %1332 = vmatprep.subr.bf16.mxu0 0
      %1333 = vmatpush1.bf16.msra.mxu0 0
      %1334 = vmatprep.subr.bf16.mxu0 0
      %1335 = vmatpush1.bf16.msra.mxu0 0
      %1336 = vmatprep.subr.bf16.mxu0 0
      %1337 = vmatpush1.bf16.msra.mxu0 0
      %1338 = vmatprep.mubr.bf16.mxu0 0
      %1339 = vmatmul.mubr.bf16.gmra.mrb[0].mxu0 %v1292
      %v1340 = vpop.f32.mrb[0].mxu0
      %v1341 = vadd.f32 0.0, %v1340
      %v1342 = vpop.f32.mrb[0].mxu0
      %v1343 = vpop.f32.mrb[0].mxu0
      %v1344 = vadd.f32 0.0, %v1343
      %v1345 = vpop.f32.mrb[0].mxu0
      %1346 = vmatprep.mubr.bf16.mxu0 0
      %1347 = vmatmul.mubr.bf16.gmra.mrb[0].mxu0 %v1295
      %v1348 = vpop.f32.mrb[0].mxu0
      %v1349 = vadd.f32 0.0, %v1348
      %v1350 = vpop.f32.mrb[0].mxu0
      %v1351 = vpop.f32.mrb[0].mxu0
      %v1352 = vadd.f32 0.0, %v1351
      %v1353 = vpop.f32.mrb[0].mxu0
      %1354 = vmatprep.mubr.bf16.mxu0 0
      %1355 = vmatmul.mubr.bf16.gmra.mrb[0].mxu0 %v1298
      %v1356 = vpop.f32.mrb[0].mxu0
      %v1357 = vadd.f32 0.0, %v1356
      %v1358 = vpop.f32.mrb[0].mxu0
      %v1359 = vpop.f32.mrb[0].mxu0
      %v1360 = vadd.f32 0.0, %v1359
      %v1361 = vpop.f32.mrb[0].mxu0
      %1362 = vmatprep.mubr.bf16.mxu0 0
      %1363 = vmatmul.mubr.bf16.gmra.mrb[0].mxu0 %v1301
      %v1364 = vpop.f32.mrb[0].mxu0
      %v1365 = vadd.f32 0.0, %v1364
      %v1366 = vpop.f32.mrb[0].mxu0
      %v1367 = vpop.f32.mrb[0].mxu0
      %v1368 = vadd.f32 0.0, %v1367
      %v1369 = vpop.f32.mrb[0].mxu0
      %1370 = vdwg.mxu0
      %1371 = vrot.lane.b32.xlu0 %v577, 104
      %v1372 = vpop.permute.xlu0 %1371
      %1373 = vrot.lane.b32.xlu0 %v578, 104
      %v1374 = vpop.permute.xlu0 %1373
      %1375 = vrot.lane.b32.xlu0 %v579, 104
      %v1376 = vpop.permute.xlu0 %1375
      %1377 = vrot.lane.b32.xlu0 %v580, 104
      %v1378 = vpop.permute.xlu0 %1377
      %1379 = vrot.lane.b32.xlu0 %v581, 104
      %v1380 = vpop.permute.xlu0 %1379
      %v1382 = vsel %vm582, %v1372, 0
      %v1385 = vsel %vm582, %v1374, 0
      %v1388 = vsel %vm582, %v1376, 0
      %v1391 = vsel %vm582, %v1378, 0
      %v1394 = vsel %vm582, %v1380, 0
      %1396 = vmatprep.subr.bf16.mxu0 0
      %1397 = vmatpush1.bf16.xpose.msra.mxu0 %v1394
      %1398 = vmatprep.subr.bf16.mxu0 0
      %1399 = vmatpush1.bf16.xpose.msra.mxu0 0
      %1400 = vmatprep.subr.bf16.mxu0 0
      %1401 = vmatpush1.bf16.xpose.msra.mxu0 0
      %1402 = vmatprep.subr.bf16.mxu0 0
      %1403 = vmatpush1.bf16.xpose.msra.mxu0 0
      %1404 = vmatprep.subr.bf16.mxu0 0
      %1405 = vmatpush1.bf16.xpose.msra.mxu0 0
      %1406 = vmatprep.subr.bf16.mxu0 0
      %1407 = vmatpush1.bf16.xpose.msra.mxu0 0
      %1408 = vmatprep.subr.bf16.mxu0 0
      %1409 = vmatpush1.bf16.xpose.msra.mxu0 0
      %1410 = vmatprep.subr.bf16.mxu0 0
      %1411 = vmatpush1.bf16.xpose.msra.mxu0 0
      %1412 = vmatprep.subr.bf16.mxu0 0
      %1413 = vmatpush1.bf16.xpose.msra.mxu0 0
      %1414 = vmatprep.subr.bf16.mxu0 0
      %1415 = vmatpush1.bf16.xpose.msra.mxu0 0
      %1416 = vmatprep.subr.bf16.mxu0 0
      %1417 = vmatpush1.bf16.xpose.msra.mxu0 0
      %1418 = vmatprep.subr.bf16.mxu0 0
      %1419 = vmatpush1.bf16.xpose.msra.mxu0 0
      %1420 = vmatprep.subr.bf16.mxu0 0
      %1421 = vmatpush1.bf16.xpose.msra.mxu0 0
      %1422 = vmatprep.subr.bf16.mxu0 0
      %1423 = vmatpush1.bf16.xpose.msra.mxu0 0
      %1424 = vmatprep.subr.bf16.mxu0 0
      %1425 = vmatpush1.bf16.xpose.msra.mxu0 0
      %1426 = vmatprep.subr.bf16.mxu0 0
      %1427 = vmatpush1.bf16.xpose.msra.mxu0 0
      %1428 = vmatprep.mubr.bf16.mxu0 0
      %1429 = vmatmul.mubr.bf16.gmra.mrb[0].mxu0 %v1382
      %v1430 = vpop.f32.mrb[0].mxu0
      %v1431 = vadd.f32 0.0, %v1430
      %v1432 = vpop.f32.mrb[0].mxu0
      %v1433 = vpop.f32.mrb[0].mxu0
      %v1434 = vadd.f32 0.0, %v1433
      %v1435 = vpop.f32.mrb[0].mxu0
      %1436 = vmatprep.mubr.bf16.mxu0 0
      %1437 = vmatmul.mubr.bf16.gmra.mrb[0].mxu0 %v1385
      %v1438 = vpop.f32.mrb[0].mxu0
      %v1439 = vadd.f32 0.0, %v1438
      %v1440 = vpop.f32.mrb[0].mxu0
      %v1441 = vpop.f32.mrb[0].mxu0
      %v1442 = vadd.f32 0.0, %v1441
      %v1443 = vpop.f32.mrb[0].mxu0
      %1444 = vmatprep.mubr.bf16.mxu0 0
      %1445 = vmatmul.mubr.bf16.gmra.mrb[0].mxu0 %v1388
      %v1446 = vpop.f32.mrb[0].mxu0
      %v1447 = vadd.f32 0.0, %v1446
      %v1448 = vpop.f32.mrb[0].mxu0
      %v1449 = vpop.f32.mrb[0].mxu0
      %v1450 = vadd.f32 0.0, %v1449
      %v1451 = vpop.f32.mrb[0].mxu0
      %1452 = vmatprep.mubr.bf16.mxu0 0
      %1453 = vmatmul.mubr.bf16.gmra.mrb[0].mxu0 %v1391
      %v1454 = vpop.f32.mrb[0].mxu0
      %v1455 = vadd.f32 0.0, %v1454
      %v1456 = vpop.f32.mrb[0].mxu0
      %v1457 = vpop.f32.mrb[0].mxu0
      %v1458 = vadd.f32 0.0, %v1457
      %v1459 = vpop.f32.mrb[0].mxu0
      %1460 = vdwg.mxu0
      %v1461 = vsel %vm582, %v1431, -inf
      %1462 = vmax.xlane.f32.xlu0 %v1461
      %v1463 = vpop.xlane.xlu0 %1462
      %v1464 = vsel %vm582, %v1434, -inf
      %1465 = vmax.xlane.f32.xlu0 %v1464
      %v1466 = vpop.xlane.xlu0 %1465
      %v1467 = vsel %vm582, %v1439, -inf
      %1468 = vmax.xlane.f32.xlu0 %v1467
      %v1469 = vpop.xlane.xlu0 %1468
      %v1470 = vsel %vm582, %v1442, -inf
      %1471 = vmax.xlane.f32.xlu0 %v1470
      %v1472 = vpop.xlane.xlu0 %1471
      %v1473 = vsel %vm582, %v1447, -inf
      %1474 = vmax.xlane.f32.xlu0 %v1473
      %v1475 = vpop.xlane.xlu0 %1474
      %v1476 = vsel %vm582, %v1450, -inf
      %1477 = vmax.xlane.f32.xlu0 %v1476
      %v1478 = vpop.xlane.xlu0 %1477
      %v1479 = vsel %vm582, %v1455, -inf
      %1480 = vmax.xlane.f32.xlu0 %v1479
      %v1481 = vpop.xlane.xlu0 %1480
      %v1482 = vsel %vm582, %v1458, -inf
      %1483 = vmax.xlane.f32.xlu0 %v1482
      %v1484 = vpop.xlane.xlu0 %1483
      %v1485 = vsub.f32 %v1431, %v1463
      %v1486 = vsub.f32 %v1434, %v1466
      %v1487 = vsub.f32 %v1439, %v1469
      %v1488 = vsub.f32 %v1442, %v1472
      %v1489 = vsub.f32 %v1447, %v1475
      %v1490 = vsub.f32 %v1450, %v1478
      %v1491 = vsub.f32 %v1455, %v1481
      %v1492 = vsub.f32 %v1458, %v1484
      %v1493 = vmul.f32 %v1485, 1.442695
      %v1494 = vpow.pop %v1493
      %v1495 = vmul.f32 %v1486, 1.442695
      %v1496 = vpow.pop %v1495
      %v1497 = vmul.f32 %v1487, 1.442695
      %v1498 = vpow.pop %v1497
      %v1499 = vmul.f32 %v1488, 1.442695
      %v1500 = vpow.pop %v1499
      %v1501 = vmul.f32 %v1489, 1.442695
      %v1502 = vpow.pop %v1501
      %v1503 = vmul.f32 %v1490, 1.442695
      %v1504 = vpow.pop %v1503
      %v1505 = vmul.f32 %v1491, 1.442695
      %v1506 = vpow.pop %v1505
      %v1507 = vmul.f32 %v1492, 1.442695
      %v1508 = vpow.pop %v1507
      %v1509 = vsel %vm582, %v1494, 0.0
      %1510 = vadd.xlane.f32.xlu0 %v1509
      %v1511 = vpop.xlane.xlu0 %1510
      %v1512 = vsel %vm582, %v1496, 0.0
      %1513 = vadd.xlane.f32.xlu0 %v1512
      %v1514 = vpop.xlane.xlu0 %1513
      %v1515 = vsel %vm582, %v1498, 0.0
      %1516 = vadd.xlane.f32.xlu0 %v1515
      %v1517 = vpop.xlane.xlu0 %1516
      %v1518 = vsel %vm582, %v1500, 0.0
      %1519 = vadd.xlane.f32.xlu0 %v1518
      %v1520 = vpop.xlane.xlu0 %1519
      %v1521 = vsel %vm582, %v1502, 0.0
      %1522 = vadd.xlane.f32.xlu0 %v1521
      %v1523 = vpop.xlane.xlu0 %1522
      %v1524 = vsel %vm582, %v1504, 0.0
      %1525 = vadd.xlane.f32.xlu0 %v1524
      %v1526 = vpop.xlane.xlu0 %1525
      %v1527 = vsel %vm582, %v1506, 0.0
      %1528 = vadd.xlane.f32.xlu0 %v1527
      %v1529 = vpop.xlane.xlu0 %1528
      %v1530 = vsel %vm582, %v1508, 0.0
      %1531 = vadd.xlane.f32.xlu0 %v1530
      %v1532 = vpop.xlane.xlu0 %1531
      %v1533 = vrcp.pop %v1511
      %v1534 = vmul.f32 %v1494, %v1533
      %v1535 = vrcp.pop %v1514
      %v1536 = vmul.f32 %v1496, %v1535
      %v1537 = vrcp.pop %v1517
      %v1538 = vmul.f32 %v1498, %v1537
      %v1539 = vrcp.pop %v1520
      %v1540 = vmul.f32 %v1500, %v1539
      %v1541 = vrcp.pop %v1523
      %v1542 = vmul.f32 %v1502, %v1541
      %v1543 = vrcp.pop %v1526
      %v1544 = vmul.f32 %v1504, %v1543
      %v1545 = vrcp.pop %v1529
      %v1546 = vmul.f32 %v1506, %v1545
      %v1547 = vrcp.pop %v1532
      %v1548 = vmul.f32 %v1508, %v1547
      %v1549 = vpack.c.bf16 %v1536, %v1534
      %v1550 = vpack.c.bf16 %v1540, %v1538
      %v1551 = vpack.c.bf16 %v1544, %v1542
      %v1552 = vpack.c.bf16 %v1548, %v1546
      %1553 = vrot.lane.b32.xlu0 %v581, 72
      %v1554 = vpop.permute.xlu0 %1553
      %v1556 = vsel %vm582, %v1549, 0
      %v1559 = vsel %vm582, %v1550, 0
      %v1562 = vsel %vm582, %v1551, 0
      %v1565 = vsel %vm582, %v1552, 0
      %v1568 = vsel %vm770, %v1554, 0
      %1570 = vmatprep.subr.bf16.mxu0 0
      %1571 = vmatpush1.bf16.msra.mxu0 %v1568
      %1572 = vmatprep.subr.bf16.mxu0 0
      %1573 = vmatpush1.bf16.msra.mxu0 0
      %1574 = vmatprep.subr.bf16.mxu0 0
      %1575 = vmatpush1.bf16.msra.mxu0 0
      %1576 = vmatprep.subr.bf16.mxu0 0
      %1577 = vmatpush1.bf16.msra.mxu0 0
      %1578 = vmatprep.subr.bf16.mxu0 0
      %1579 = vmatpush1.bf16.msra.mxu0 0
      %1580 = vmatprep.subr.bf16.mxu0 0
      %1581 = vmatpush1.bf16.msra.mxu0 0
      %1582 = vmatprep.subr.bf16.mxu0 0
      %1583 = vmatpush1.bf16.msra.mxu0 0
      %1584 = vmatprep.subr.bf16.mxu0 0
      %1585 = vmatpush1.bf16.msra.mxu0 0
      %1586 = vmatprep.subr.bf16.mxu0 0
      %1587 = vmatpush1.bf16.msra.mxu0 0
      %1588 = vmatprep.subr.bf16.mxu0 0
      %1589 = vmatpush1.bf16.msra.mxu0 0
      %1590 = vmatprep.subr.bf16.mxu0 0
      %1591 = vmatpush1.bf16.msra.mxu0 0
      %1592 = vmatprep.subr.bf16.mxu0 0
      %1593 = vmatpush1.bf16.msra.mxu0 0
      %1594 = vmatprep.subr.bf16.mxu0 0
      %1595 = vmatpush1.bf16.msra.mxu0 0
      %1596 = vmatprep.subr.bf16.mxu0 0
      %1597 = vmatpush1.bf16.msra.mxu0 0
      %1598 = vmatprep.subr.bf16.mxu0 0
      %1599 = vmatpush1.bf16.msra.mxu0 0
      %1600 = vmatprep.subr.bf16.mxu0 0
      %1601 = vmatpush1.bf16.msra.mxu0 0
      %1602 = vmatprep.mubr.bf16.mxu0 0
      %1603 = vmatmul.mubr.bf16.gmra.mrb[0].mxu0 %v1556
      %v1604 = vpop.f32.mrb[0].mxu0
      %v1605 = vadd.f32 0.0, %v1604
      %v1606 = vpop.f32.mrb[0].mxu0
      %v1607 = vpop.f32.mrb[0].mxu0
      %v1608 = vadd.f32 0.0, %v1607
      %v1609 = vpop.f32.mrb[0].mxu0
      %1610 = vmatprep.mubr.bf16.mxu0 0
      %1611 = vmatmul.mubr.bf16.gmra.mrb[0].mxu0 %v1559
      %v1612 = vpop.f32.mrb[0].mxu0
      %v1613 = vadd.f32 0.0, %v1612
      %v1614 = vpop.f32.mrb[0].mxu0
      %v1615 = vpop.f32.mrb[0].mxu0
      %v1616 = vadd.f32 0.0, %v1615
      %v1617 = vpop.f32.mrb[0].mxu0
      %1618 = vmatprep.mubr.bf16.mxu0 0
      %1619 = vmatmul.mubr.bf16.gmra.mrb[0].mxu0 %v1562
      %v1620 = vpop.f32.mrb[0].mxu0
      %v1621 = vadd.f32 0.0, %v1620
      %v1622 = vpop.f32.mrb[0].mxu0
      %v1623 = vpop.f32.mrb[0].mxu0
      %v1624 = vadd.f32 0.0, %v1623
      %v1625 = vpop.f32.mrb[0].mxu0
      %1626 = vmatprep.mubr.bf16.mxu0 0
      %1627 = vmatmul.mubr.bf16.gmra.mrb[0].mxu0 %v1565
      %v1628 = vpop.f32.mrb[0].mxu0
      %v1629 = vadd.f32 0.0, %v1628
      %v1630 = vpop.f32.mrb[0].mxu0
      %v1631 = vpop.f32.mrb[0].mxu0
      %v1632 = vadd.f32 0.0, %v1631
      %v1633 = vpop.f32.mrb[0].mxu0
      %1634 = vdwg.mxu0
      %1643 = vrot.lane.b32.xlu0 %v1077, 8
      %v1644 = vpop.permute.xlu0 %1643
      %1645 = vrot.lane.b32.xlu0 %v1080, 8
      %v1646 = vpop.permute.xlu0 %1645
      %1647 = vrot.lane.b32.xlu0 %v1085, 8
      %v1648 = vpop.permute.xlu0 %1647
      %1649 = vrot.lane.b32.xlu0 %v1088, 8
      %v1650 = vpop.permute.xlu0 %1649
      %1651 = vrot.lane.b32.xlu0 %v1093, 8
      %v1652 = vpop.permute.xlu0 %1651
      %1653 = vrot.lane.b32.xlu0 %v1096, 8
      %v1654 = vpop.permute.xlu0 %1653
      %1655 = vrot.lane.b32.xlu0 %v1101, 8
      %v1656 = vpop.permute.xlu0 %1655
      %1657 = vrot.lane.b32.xlu0 %v1104, 8
      %v1658 = vpop.permute.xlu0 %1657
      %1675 = vrot.lane.b32.xlu0 %v1341, 16
      %v1676 = vpop.permute.xlu0 %1675
      %1677 = vrot.lane.b32.xlu0 %v1344, 16
      %v1678 = vpop.permute.xlu0 %1677
      %1679 = vrot.lane.b32.xlu0 %v1349, 16
      %v1680 = vpop.permute.xlu0 %1679
      %1681 = vrot.lane.b32.xlu0 %v1352, 16
      %v1682 = vpop.permute.xlu0 %1681
      %1683 = vrot.lane.b32.xlu0 %v1357, 16
      %v1684 = vpop.permute.xlu0 %1683
      %1685 = vrot.lane.b32.xlu0 %v1360, 16
      %v1686 = vpop.permute.xlu0 %1685
      %1687 = vrot.lane.b32.xlu0 %v1365, 16
      %v1688 = vpop.permute.xlu0 %1687
      %1689 = vrot.lane.b32.xlu0 %v1368, 16
      %v1690 = vpop.permute.xlu0 %1689
      %1707 = vrot.lane.b32.xlu0 %v1605, 24
      %v1708 = vpop.permute.xlu0 %1707
      %1709 = vrot.lane.b32.xlu0 %v1608, 24
      %v1710 = vpop.permute.xlu0 %1709
      %1711 = vrot.lane.b32.xlu0 %v1613, 24
      %v1712 = vpop.permute.xlu0 %1711
      %1713 = vrot.lane.b32.xlu0 %v1616, 24
      %v1714 = vpop.permute.xlu0 %1713
      %1715 = vrot.lane.b32.xlu0 %v1621, 24
      %v1716 = vpop.permute.xlu0 %1715
      %1717 = vrot.lane.b32.xlu0 %v1624, 24
      %v1718 = vpop.permute.xlu0 %1717
      %1719 = vrot.lane.b32.xlu0 %v1629, 24
      %v1720 = vpop.permute.xlu0 %1719
      %1721 = vrot.lane.b32.xlu0 %v1632, 24
      %v1722 = vpop.permute.xlu0 %1721
      %v1731 = vsel %vm582, %v809, %v1644
      %v1732 = vsel %vm582, %v812, %v1646
      %v1733 = vsel %vm582, %v817, %v1648
      %v1734 = vsel %vm582, %v820, %v1650
      %v1735 = vsel %vm582, %v825, %v1652
      %v1736 = vsel %vm582, %v828, %v1654
      %v1737 = vsel %vm582, %v833, %v1656
      %v1738 = vsel %vm582, %v836, %v1658
      %vm1739 = vcmask 130048
      %v1740 = vsel %vm1739, %v1731, %v1676
      %v1741 = vsel %vm1739, %v1732, %v1678
      %v1742 = vsel %vm1739, %v1733, %v1680
      %v1743 = vsel %vm1739, %v1734, %v1682
      %v1744 = vsel %vm1739, %v1735, %v1684
      %v1745 = vsel %vm1739, %v1736, %v1686
      %v1746 = vsel %vm1739, %v1737, %v1688
      %v1747 = vsel %vm1739, %v1738, %v1690
      %vm1748 = vcmask 195584
      %v1749 = vsel %vm1748, %v1740, %v1708
      %v1750 = vsel %vm1748, %v1741, %v1710
      %v1751 = vsel %vm1748, %v1742, %v1712
      %v1752 = vsel %vm1748, %v1743, %v1714
      %v1753 = vsel %vm1748, %v1744, %v1716
      %v1754 = vsel %vm1748, %v1745, %v1718
      %v1755 = vsel %vm1748, %v1746, %v1720
      %v1756 = vsel %vm1748, %v1747, %v1722
      %v1757 = vpack.c.bf16 %v1750, %v1749
      %v1758 = vpack.c.bf16 %v1752, %v1751
      %v1759 = vpack.c.bf16 %v1754, %v1753
      %v1760 = vpack.c.bf16 %v1756, %v1755
      %v1761 = vld [vmem:[%s6] sm:$0xf]
      %v1762 = vld [vmem:[%s6 + $0x4] sm:$0xf]
      %v1763 = vld [vmem:[%s6 + $0x8] sm:$0xf]
      %v1764 = vld [vmem:[%s6 + $0xc] sm:$0xf]
      %v1765 = vld [vmem:[%s7] sm:$0x1]
      %v1767 = vlaneseq
      %v1768 = vshrl.u32 %v1767, 7
      %v1769 = vsub.s32 0, %v1768
      %v1770 = vrot.slane %v1765, %v1769
      %v1776 = vunpack.c.l.b16 %v1761
      %v1777 = vunpack.c.l.b16 %v1762
      %v1778 = vunpack.c.l.b16 %v1763
      %v1779 = vunpack.c.l.b16 %v1764
      %v1780 = vpack.c.b16 %v1777, %v1776
      %v1781 = vpack.c.b16 %v1779, %v1778
      %v1785 = vsel %vm433, %v1757, 0
      %v1788 = vsel %vm433, %v1758, 0
      %v1791 = vsel %vm433, %v1759, 0
      %v1794 = vsel %vm433, %v1760, 0
      %1796 = vmatprep.subr.bf16.mxu0 0
      %1797 = vmatpush1.bf16.msra.mxu0 %v1780
      %1798 = vmatprep.subr.bf16.mxu0 0
      %1799 = vmatpush1.bf16.msra.mxu0 %v1781
      %1800 = vmatprep.subr.bf16.mxu0 0
      %1801 = vmatpush1.bf16.msra.mxu0 0
      %1802 = vmatprep.subr.bf16.mxu0 0
      %1803 = vmatpush1.bf16.msra.mxu0 0
      %1804 = vmatprep.subr.bf16.mxu0 0
      %1805 = vmatpush1.bf16.msra.mxu0 0
      %1806 = vmatprep.subr.bf16.mxu0 0
      %1807 = vmatpush1.bf16.msra.mxu0 0
      %1808 = vmatprep.subr.bf16.mxu0 0
      %1809 = vmatpush1.bf16.msra.mxu0 0
      %1810 = vmatprep.subr.bf16.mxu0 0
      %1811 = vmatpush1.bf16.msra.mxu0 0
      %1812 = vmatprep.subr.bf16.mxu0 0
      %1813 = vmatpush1.bf16.msra.mxu0 0
      %1814 = vmatprep.subr.bf16.mxu0 0
      %1815 = vmatpush1.bf16.msra.mxu0 0
      %1816 = vmatprep.subr.bf16.mxu0 0
      %1817 = vmatpush1.bf16.msra.mxu0 0
      %1818 = vmatprep.subr.bf16.mxu0 0
      %1819 = vmatpush1.bf16.msra.mxu0 0
      %1820 = vmatprep.subr.bf16.mxu0 0
      %1821 = vmatpush1.bf16.msra.mxu0 0
      %1822 = vmatprep.subr.bf16.mxu0 0
      %1823 = vmatpush1.bf16.msra.mxu0 0
      %1824 = vmatprep.subr.bf16.mxu0 0
      %1825 = vmatpush1.bf16.msra.mxu0 0
      %1826 = vmatprep.subr.bf16.mxu0 0
      %1827 = vmatpush1.bf16.msra.mxu0 0
      %1828 = vmatprep.mubr.bf16.mxu0 0
      %1829 = vmatmul.mubr.bf16.gmra.mrb[0].mxu0 %v1785
      %v1830 = vpop.f32.mrb[0].mxu0
      %v1831 = vadd.f32 %v1770, %v1830
      %v1832 = vpop.f32.mrb[0].mxu0
      %v1833 = vpop.f32.mrb[0].mxu0
      %v1834 = vadd.f32 %v1770, %v1833
      %v1835 = vpop.f32.mrb[0].mxu0
      %1836 = vmatprep.mubr.bf16.mxu0 0
      %1837 = vmatmul.mubr.bf16.gmra.mrb[0].mxu0 %v1788
      %v1838 = vpop.f32.mrb[0].mxu0
      %v1839 = vadd.f32 %v1770, %v1838
      %v1840 = vpop.f32.mrb[0].mxu0
      %v1841 = vpop.f32.mrb[0].mxu0
      %v1842 = vadd.f32 %v1770, %v1841
      %v1843 = vpop.f32.mrb[0].mxu0
      %1844 = vmatprep.mubr.bf16.mxu0 0
      %1845 = vmatmul.mubr.bf16.gmra.mrb[0].mxu0 %v1791
      %v1846 = vpop.f32.mrb[0].mxu0
      %v1847 = vadd.f32 %v1770, %v1846
      %v1848 = vpop.f32.mrb[0].mxu0
      %v1849 = vpop.f32.mrb[0].mxu0
      %v1850 = vadd.f32 %v1770, %v1849
      %v1851 = vpop.f32.mrb[0].mxu0
      %1852 = vmatprep.mubr.bf16.mxu0 0
      %1853 = vmatmul.mubr.bf16.gmra.mrb[0].mxu0 %v1794
      %v1854 = vpop.f32.mrb[0].mxu0
      %v1855 = vadd.f32 %v1770, %v1854
      %v1856 = vpop.f32.mrb[0].mxu0
      %v1857 = vpop.f32.mrb[0].mxu0
      %v1858 = vadd.f32 %v1770, %v1857
      %v1859 = vpop.f32.mrb[0].mxu0
      %1860 = vdwg.mxu0
      %v1861 = vunpack.c.l.bf16 %v381
      %v1862 = vunpack.c.l.bf16 %v382
      %v1863 = vunpack.c.l.bf16 %v383
      %v1864 = vunpack.c.l.bf16 %v384
      %v1865 = vunpack.c.l.bf16 %v385
      %v1866 = vunpack.c.l.bf16 %v386
      %v1867 = vunpack.c.l.bf16 %v387
      %v1868 = vunpack.c.l.bf16 %v388
      %v1869 = vadd.f32 %v1831, %v1861
      %v1870 = vadd.f32 %v1834, %v1862
      %v1871 = vadd.f32 %v1839, %v1863
      %v1872 = vadd.f32 %v1842, %v1864
      %v1873 = vadd.f32 %v1847, %v1865
      %v1874 = vadd.f32 %v1850, %v1866
      %v1875 = vadd.f32 %v1855, %v1867
      %v1876 = vadd.f32 %v1858, %v1868
      %v1877 = vld [vmem:[%s8] sm:$0x1]
      %v1878 = vld [vmem:[%s9] sm:$0x1]
      %v1879 = vsel %vm433, %v1869, 0.0
      %1880 = vadd.xlane.f32.xlu0 %v1879
      %v1881 = vpop.xlane.xlu0 %1880
      %v1882 = vsel %vm433, %v1870, 0.0
      %1883 = vadd.xlane.f32.xlu0 %v1882
      %v1884 = vpop.xlane.xlu0 %1883
      %v1885 = vsel %vm433, %v1871, 0.0
      %1886 = vadd.xlane.f32.xlu0 %v1885
      %v1887 = vpop.xlane.xlu0 %1886
      %v1888 = vsel %vm433, %v1872, 0.0
      %1889 = vadd.xlane.f32.xlu0 %v1888
      %v1890 = vpop.xlane.xlu0 %1889
      %v1891 = vsel %vm433, %v1873, 0.0
      %1892 = vadd.xlane.f32.xlu0 %v1891
      %v1893 = vpop.xlane.xlu0 %1892
      %v1894 = vsel %vm433, %v1874, 0.0
      %1895 = vadd.xlane.f32.xlu0 %v1894
      %v1896 = vpop.xlane.xlu0 %1895
      %v1897 = vsel %vm433, %v1875, 0.0
      %1898 = vadd.xlane.f32.xlu0 %v1897
      %v1899 = vpop.xlane.xlu0 %1898
      %v1900 = vsel %vm433, %v1876, 0.0
      %1901 = vadd.xlane.f32.xlu0 %v1900
      %v1902 = vpop.xlane.xlu0 %1901
      %v1903 = vrcp.pop 32.0
      %v1904 = vmul.f32 %v1881, %v1903
      %v1905 = vmul.f32 %v1884, %v1903
      %v1906 = vmul.f32 %v1887, %v1903
      %v1907 = vmul.f32 %v1890, %v1903
      %v1908 = vmul.f32 %v1893, %v1903
      %v1909 = vmul.f32 %v1896, %v1903
      %v1910 = vmul.f32 %v1899, %v1903
      %v1911 = vmul.f32 %v1902, %v1903
      %v1912 = vsub.f32 %v1869, %v1904
      %v1913 = vsub.f32 %v1870, %v1905
      %v1914 = vsub.f32 %v1871, %v1906
      %v1915 = vsub.f32 %v1872, %v1907
      %v1916 = vsub.f32 %v1873, %v1908
      %v1917 = vsub.f32 %v1874, %v1909
      %v1918 = vsub.f32 %v1875, %v1910
      %v1919 = vsub.f32 %v1876, %v1911
      %v1920 = vmul.f32 %v1912, %v1912
      %v1921 = vmul.f32 %v1913, %v1913
      %v1922 = vmul.f32 %v1914, %v1914
      %v1923 = vmul.f32 %v1915, %v1915
      %v1924 = vmul.f32 %v1916, %v1916
      %v1925 = vmul.f32 %v1917, %v1917
      %v1926 = vmul.f32 %v1918, %v1918
      %v1927 = vmul.f32 %v1919, %v1919
      %v1928 = vsel %vm433, %v1920, 0.0
      %1929 = vadd.xlane.f32.xlu0 %v1928
      %v1930 = vpop.xlane.xlu0 %1929
      %v1931 = vsel %vm433, %v1921, 0.0
      %1932 = vadd.xlane.f32.xlu0 %v1931
      %v1933 = vpop.xlane.xlu0 %1932
      %v1934 = vsel %vm433, %v1922, 0.0
      %1935 = vadd.xlane.f32.xlu0 %v1934
      %v1936 = vpop.xlane.xlu0 %1935
      %v1937 = vsel %vm433, %v1923, 0.0
      %1938 = vadd.xlane.f32.xlu0 %v1937
      %v1939 = vpop.xlane.xlu0 %1938
      %v1940 = vsel %vm433, %v1924, 0.0
      %1941 = vadd.xlane.f32.xlu0 %v1940
      %v1942 = vpop.xlane.xlu0 %1941
      %v1943 = vsel %vm433, %v1925, 0.0
      %1944 = vadd.xlane.f32.xlu0 %v1943
      %v1945 = vpop.xlane.xlu0 %1944
      %v1946 = vsel %vm433, %v1926, 0.0
      %1947 = vadd.xlane.f32.xlu0 %v1946
      %v1948 = vpop.xlane.xlu0 %1947
      %v1949 = vsel %vm433, %v1927, 0.0
      %1950 = vadd.xlane.f32.xlu0 %v1949
      %v1951 = vpop.xlane.xlu0 %1950
      %v1952 = vmul.f32 %v1930, %v1903
      %v1953 = vmul.f32 %v1933, %v1903
      %v1954 = vmul.f32 %v1936, %v1903
      %v1955 = vmul.f32 %v1939, %v1903
      %v1956 = vmul.f32 %v1942, %v1903
      %v1957 = vmul.f32 %v1945, %v1903
      %v1958 = vmul.f32 %v1948, %v1903
      %v1959 = vmul.f32 %v1951, %v1903
      %v1960 = vadd.f32 %v1952, 1e-05
      %v1961 = vadd.f32 %v1953, 1e-05
      %v1962 = vadd.f32 %v1954, 1e-05
      %v1963 = vadd.f32 %v1955, 1e-05
      %v1964 = vadd.f32 %v1956, 1e-05
      %v1965 = vadd.f32 %v1957, 1e-05
      %v1966 = vadd.f32 %v1958, 1e-05
      %v1967 = vadd.f32 %v1959, 1e-05
      %v1968 = vrsqrt.pop %v1960
      %v1969 = vrsqrt.pop %v1961
      %v1970 = vrsqrt.pop %v1962
      %v1971 = vrsqrt.pop %v1963
      %v1972 = vrsqrt.pop %v1964
      %v1973 = vrsqrt.pop %v1965
      %v1974 = vrsqrt.pop %v1966
      %v1975 = vrsqrt.pop %v1967
      %v1976 = vmul.f32 %v1912, %v1968
      %v1977 = vmul.f32 %v1913, %v1969
      %v1978 = vmul.f32 %v1914, %v1970
      %v1979 = vmul.f32 %v1915, %v1971
      %v1980 = vmul.f32 %v1916, %v1972
      %v1981 = vmul.f32 %v1917, %v1973
      %v1982 = vmul.f32 %v1918, %v1974
      %v1983 = vmul.f32 %v1919, %v1975
      %v1985 = vlaneseq
      %v1986 = vshrl.u32 %v1985, 7
      %v1987 = vsub.s32 0, %v1986
      %v1988 = vrot.slane %v1877, %v1987
      %v1990 = vmul.f32 %v1976, %v1988
      %v1991 = vmul.f32 %v1977, %v1988
      %v1992 = vmul.f32 %v1978, %v1988
      %v1993 = vmul.f32 %v1979, %v1988
      %v1994 = vmul.f32 %v1980, %v1988
      %v1995 = vmul.f32 %v1981, %v1988
      %v1996 = vmul.f32 %v1982, %v1988
      %v1997 = vmul.f32 %v1983, %v1988
      %v1999 = vlaneseq
      %v2000 = vshrl.u32 %v1999, 7
      %v2001 = vsub.s32 0, %v2000
      %v2002 = vrot.slane %v1878, %v2001
      %v2004 = vadd.f32 %v1990, %v2002
      %v2005 = vadd.f32 %v1991, %v2002
      %v2006 = vadd.f32 %v1992, %v2002
      %v2007 = vadd.f32 %v1993, %v2002
      %v2008 = vadd.f32 %v1994, %v2002
      %v2009 = vadd.f32 %v1995, %v2002
      %v2010 = vadd.f32 %v1996, %v2002
      %v2011 = vadd.f32 %v1997, %v2002
      %v2012 = vpack.c.bf16 %v2005, %v2004
      %v2013 = vpack.c.bf16 %v2007, %v2006
      %v2014 = vpack.c.bf16 %v2009, %v2008
      %v2015 = vpack.c.bf16 %v2011, %v2010
      %v2020 = vunpack.c.l.b16 %v2012
      %v2021 = vunpack.c.h.b16 %v2012
      %v2022 = vunpack.c.l.b16 %v2013
      %v2023 = vunpack.c.h.b16 %v2013
      %v2024 = vunpack.c.l.b16 %v2014
      %v2025 = vunpack.c.h.b16 %v2014
      %v2026 = vunpack.c.l.b16 %v2015
      %v2027 = vunpack.c.h.b16 %v2015
      %v2028 = vpack.c.b16 %v2020, %v2020
      %v2029 = vpack.c.b16 %v2021, %v2021
      %v2030 = vpack.c.b16 %v2022, %v2022
      %v2031 = vpack.c.b16 %v2023, %v2023
      %v2032 = vpack.c.b16 %v2024, %v2024
      %v2033 = vpack.c.b16 %v2025, %v2025
      %v2034 = vpack.c.b16 %v2026, %v2026
      %v2035 = vpack.c.b16 %v2027, %v2027
      %vm2044 = vcmask 257024
      %2045 = vst.msk [vmem:[%s378] sm:$0xf] %vm2044, %v2028
      %2046 = vst.msk [vmem:[%s378 + $0x4] sm:$0xf] %vm2044, %v2029
      %2047 = vst.msk [vmem:[%s378 + $0x8] sm:$0xf] %vm2044, %v2030
      %2048 = vst.msk [vmem:[%s378 + $0xc] sm:$0xf] %vm2044, %v2031
      %2049 = vst.msk [vmem:[%s378 + $0x10] sm:$0xf] %vm2044, %v2032
      %2050 = vst.msk [vmem:[%s378 + $0x14] sm:$0xf] %vm2044, %v2033
      %2051 = vst.msk [vmem:[%s378 + $0x18] sm:$0xf] %vm2044, %v2034
      %2052 = vst.msk [vmem:[%s378 + $0x1c] sm:$0xf] %vm2044, %v2035
      %s2053 = smul.u32 8, %s21
      %p2054 = scmp.lt.s32.totalorder %s2053, 15
      %s2055 = scalar_select %p2054, %s2053, 15
      %s2056 = smul.addr %s2055, 4
      %s2057 = scalar_lea.vmem %s10, %s2056
      // Predicated region
      $region61: #{bridger_forward.13} parent=59 // pred_check
        %p2058 = pneg %p259
      $region62: #{bridger_forward.13} parent=59 // pred_check_branch
        %2060 = sbr.rel (%p2058) target = $region64
      $region63: #{bridger_forward.13} parent=59 // pred_region
        %s2061 = smul.u32 8, %s21
      $region64: #{bridger_forward.13} parent=59 // pred_fallthru
        _
    $region60: #{bridger_forward.13} parent=5 // pred_fallthru
      _
    %p2062 = scmp.le.s32.totalorder 2, %s16
    // Predicated region
    $region65: #{bridger_forward.13} parent=5 // pred_check
      %p2063 = pneg %p2062
    $region66: #{bridger_forward.13} parent=5 // pred_check_branch
      %2065 = sbr.rel (%p2063) target = $region68
    $region67: #{bridger_forward.13} parent=5 // pred_region
      %s2066 = ssub.s32 %s16, 2
      // Predicated region
      $region69: #{bridger_forward.13} parent=67 // pred_check
        %p2067 = pneg %p265
      $region70: #{bridger_forward.13} parent=67 // pred_check_branch
        %2069 = sbr.rel (%p2067) target = $region72
      $region71: #{bridger_forward.13} parent=67 // pred_region
        %s2070 = smul.u32 8, %s22
        %p2071 = scmp.lt.s32.totalorder %s2070, 15
        %s2072 = scalar_select %p2071, %s2070, 15
        %s2073 = smul.addr %s2072, 4
        %s2074 = scalar_lea.vmem %s10, %s2073
      $region72: #{bridger_forward.13} parent=67 // pred_fallthru
        _
    $region68: #{bridger_forward.13} parent=5 // pred_fallthru
      _
  $region6: #{bridger_forward.13} parent=0 // loop_footer
    %s20 = sadd.s32 1, %s16
  $region7: #{bridger_forward.13} parent=0 // loop_footer_branch
    %15 = sbr.rel target = $region3
  $region8: #{bridger_forward.13} parent=0 // loop_exit
    _

// kernel: bridger_forward.18
$region0: #{bridger_forward.18}
  #allocation0 [shape = 'u32[]', space=smem, size = 0x4, offset = 0x4, fixed_abs, tag = 'smem constant byte address 0x4 - core index']
  #allocation1 [shape = 'u32[144,128]{1,0:T(1,128)}', space=vmem, size = 0x12000, scoped, tag = 'internal scratch']
  %s0 = inlined_call_operand.vmem [shape: bf16[128,32], index: 0, kind: input, shape index: {}]
  %s1 = inlined_call_operand.vmem [shape: bf16[32,128], index: 1, kind: input, shape index: {}]
  %s2 = inlined_call_operand.vmem [shape: f32[1,128], index: 2, kind: input, shape index: {}]
  %s3 = inlined_call_operand.vmem [shape: bf16[128,128], index: 3, kind: input, shape index: {}]
  %s4 = inlined_call_operand.vmem [shape: f32[128,128], index: 4, kind: output, shape index: {}]
  %s5 = sld [smem:[#allocation0]]
  $region49: #{bridger_forward.18} parent=0
    _
  %s7 = ssub.s32 1, %s5
  %s8 = scalar_select 0, %s7, %s5
  loop: start=0, step=1, limit=4
  $region2: #{bridger_forward.18} parent=0 // loop_pre_header
    _
  $region3: #{bridger_forward.18} parent=0 // loop_header
    %s10 = sphi 0, %s14
    %p11 = scmp.ge.s32.totalorder %s10, 4
    %s20 = sphi 0, %s22
    %s23 = sphi 0, %s20
    %s24 = sphi 0, %s23
    %s40 = sphi 0, %s24
    %s44 = sphi 0, %s44
    %s46 = sphi 0, %s44
    %s47 = sphi 0, %s46
    %s61 = sphi 0, %s47
    %s65 = sphi 0, %s65
    %s67 = sphi 0, %s65
    %s68 = sphi 0, %s67
    %s82 = sphi 0, %s68
    %s88 = sphi 0, %s90
    %s91 = sphi 0, %s88
    %s92 = sphi 0, %s91
    %s108 = sphi 0, %s92
    %s114 = sphi 0, %s116
    %s117 = sphi 0, %s114
    %s118 = sphi 0, %s117
    %s134 = sphi 0, %s118
  $region4: #{bridger_forward.18} parent=0 // loop_header_branch
    %13 = sbr.rel (%p11) target = $region8
  $region5: #{bridger_forward.18} parent=0 // loop_body
    %s15 = ssub.s32 %s10, 1
    %s16 = ssub.s32 %s10, 2
    %s17 = sadd.s32 %s10, 1
    %s18 = ssub.s32 %s10, %s17
    %p19 = scmp.eq.s32.totalorder %s18, 0
    %s21 = sadd.s32 %s20, 1
    %s22 = scalar_select %p19, %s20, %s21
    %p25 = pneg %p19
    %p26 = scmp.eq.s32.totalorder %s10, 1
    %p27 = por %p25, %p26
    %p28 = scmp.ne.s32.totalorder %s20, %s23
    %p29 = scmp.eq.s32.totalorder %s10, 0
    %p30 = por %p28, %p29
    %p31 = scmp.ne.s32.totalorder %s20, %s23
    %p32 = scmp.eq.s32.totalorder %s15, 1
    %p33 = por %p31, %p32
    %p34 = scmp.ne.s32.totalorder %s23, %s24
    %p35 = scmp.eq.s32.totalorder %s15, 0
    %p36 = por %p34, %p35
    %p37 = scmp.ne.s32.totalorder %s23, %s24
    %p38 = scmp.eq.s32.totalorder %s16, 1
    %p39 = por %p37, %p38
    %p41 = scmp.ne.s32.totalorder %s24, %s40
    %p42 = scmp.eq.s32.totalorder %s16, 0
    %p43 = por %p41, %p42
    %s45 = sadd.s32 %s44, 1
    %p48 = scmp.eq.s32.totalorder %s10, 1
    %p49 = scmp.ne.s32.totalorder %s44, %s46
    %p50 = scmp.eq.s32.totalorder %s10, 0
    %p51 = por %p49, %p50
    %p52 = scmp.ne.s32.totalorder %s44, %s46
    %p53 = scmp.eq.s32.totalorder %s15, 1
    %p54 = por %p52, %p53
    %p55 = scmp.ne.s32.totalorder %s46, %s47
    %p56 = scmp.eq.s32.totalorder %s15, 0
    %p57 = por %p55, %p56
    %p58 = scmp.ne.s32.totalorder %s46, %s47
    %p59 = scmp.eq.s32.totalorder %s16, 1
    %p60 = por %p58, %p59
    %p62 = scmp.ne.s32.totalorder %s47, %s61
    %p63 = scmp.eq.s32.totalorder %s16, 0
    %p64 = por %p62, %p63
    %s66 = sadd.s32 %s65, 1
    %p69 = scmp.eq.s32.totalorder %s10, 1
    %p70 = scmp.ne.s32.totalorder %s65, %s67
    %p71 = scmp.eq.s32.totalorder %s10, 0
    %p72 = por %p70, %p71
    %p73 = scmp.ne.s32.totalorder %s65, %s67
    %p74 = scmp.eq.s32.totalorder %s15, 1
    %p75 = por %p73, %p74
    %p76 = scmp.ne.s32.totalorder %s67, %s68
    %p77 = scmp.eq.s32.totalorder %s15, 0
    %p78 = por %p76, %p77
    %p79 = scmp.ne.s32.totalorder %s67, %s68
    %p80 = scmp.eq.s32.totalorder %s16, 1
    %p81 = por %p79, %p80
    %p83 = scmp.ne.s32.totalorder %s68, %s82
    %p84 = scmp.eq.s32.totalorder %s16, 0
    %p85 = por %p83, %p84
    %s86 = ssub.s32 %s10, %s17
    %p87 = scmp.eq.s32.totalorder %s86, 0
    %s89 = sadd.s32 %s88, 1
    %s90 = scalar_select %p87, %s88, %s89
    %p93 = pneg %p87
    %p94 = scmp.eq.s32.totalorder %s10, 1
    %p95 = por %p93, %p94
    %p96 = scmp.ne.s32.totalorder %s88, %s91
    %p97 = scmp.eq.s32.totalorder %s10, 0
    %p98 = por %p96, %p97
    %p99 = scmp.ne.s32.totalorder %s88, %s91
    %p100 = scmp.eq.s32.totalorder %s15, 1
    %p101 = por %p99, %p100
    %p102 = scmp.ne.s32.totalorder %s91, %s92
    %p103 = scmp.eq.s32.totalorder %s15, 0
    %p104 = por %p102, %p103
    %p105 = scmp.ne.s32.totalorder %s91, %s92
    %p106 = scmp.eq.s32.totalorder %s16, 1
    %p107 = por %p105, %p106
    %p109 = scmp.ne.s32.totalorder %s92, %s108
    %p110 = scmp.eq.s32.totalorder %s16, 0
    %p111 = por %p109, %p110
    %s112 = ssub.s32 %s10, %s17
    %p113 = scmp.eq.s32.totalorder %s112, 0
    %s115 = sadd.s32 %s114, 1
    %s116 = scalar_select %p113, %s114, %s115
    %p119 = pneg %p113
    %p120 = scmp.eq.s32.totalorder %s10, 1
    %p121 = por %p119, %p120
    %p122 = scmp.ne.s32.totalorder %s114, %s117
    %p123 = scmp.eq.s32.totalorder %s10, 0
    %p124 = por %p122, %p123
    %p125 = scmp.ne.s32.totalorder %s114, %s117
    %p126 = scmp.eq.s32.totalorder %s15, 1
    %p127 = por %p125, %p126
    %p128 = scmp.ne.s32.totalorder %s117, %s118
    %p129 = scmp.eq.s32.totalorder %s15, 0
    %p130 = por %p128, %p129
    %p131 = scmp.ne.s32.totalorder %s117, %s118
    %p132 = scmp.eq.s32.totalorder %s16, 1
    %p133 = por %p131, %p132
    %p135 = scmp.ne.s32.totalorder %s118, %s134
    %p136 = scmp.eq.s32.totalorder %s16, 0
    %p137 = por %p135, %p136
    %p138 = scmp.le.s32.totalorder 1, %s10
    %p139 = scmp.lt.s32.totalorder %s10, 3
    %p140 = pnand %p138, %p139
    %p141 = pneg %p140
    // Predicated region
    $region9: #{bridger_forward.18} parent=5 // pred_check
      _
    $region10: #{bridger_forward.18} parent=5 // pred_check_branch
      %143 = sbr.rel (%p140) target = $region12
    $region11: #{bridger_forward.18} parent=5 // pred_region
      %s144 = ssub.s32 %s10, 1
      // Predicated region
      $region13: #{bridger_forward.18} parent=11 // pred_check
        %p145 = pneg %p57
      $region14: #{bridger_forward.18} parent=11 // pred_check_branch
        %147 = sbr.rel (%p145) target = $region16
      $region15: #{bridger_forward.18} parent=11 // pred_region
        _
      $region16: #{bridger_forward.18} parent=11 // pred_fallthru
        _
      // Predicated region
      $region17: #{bridger_forward.18} parent=11 // pred_check
        %p148 = pneg %p78
      $region18: #{bridger_forward.18} parent=11 // pred_check_branch
        %150 = sbr.rel (%p148) target = $region20
      $region19: #{bridger_forward.18} parent=11 // pred_region
        _
      $region20: #{bridger_forward.18} parent=11 // pred_fallthru
        _
    $region12: #{bridger_forward.18} parent=5 // pred_fallthru
      _
    %p151 = scmp.lt.s32.totalorder %s10, 2
    // Predicated region
    $region21: #{bridger_forward.18} parent=5 // pred_check
      %p152 = pneg %p151
    $region22: #{bridger_forward.18} parent=5 // pred_check_branch
      %154 = sbr.rel (%p152) target = $region24
    $region23: #{bridger_forward.18} parent=5 // pred_region
      // Predicated region
      $region25: #{bridger_forward.18} parent=23 // pred_check
        %p155 = pneg %p30
      $region26: #{bridger_forward.18} parent=23 // pred_check_branch
        %157 = sbr.rel (%p155) target = $region28
      $region27: #{bridger_forward.18} parent=23 // pred_region
        %s158 = smul.u32 8, %s10
        %p159 = scmp.lt.s32.totalorder %s158, 15
        %s160 = scalar_select %p159, %s158, 15
        %s161 = smul.addr %s160, 4
        %s162 = scalar_lea.vmem %s0, %s161
        %s163 = smul.u32 8, %s10
      $region28: #{bridger_forward.18} parent=23 // pred_fallthru
        _
      // Predicated region
      $region29: #{bridger_forward.18} parent=23 // pred_check
        %p164 = pneg %p98
      $region30: #{bridger_forward.18} parent=23 // pred_check_branch
        %166 = sbr.rel (%p164) target = $region32
      $region31: #{bridger_forward.18} parent=23 // pred_region
        %s167 = smul.u32 8, %s10
        %p168 = scmp.lt.s32.totalorder %s167, 15
        %s169 = scalar_select %p168, %s167, 15
        %s170 = smul.addr %s169, 4
        %s171 = scalar_lea.vmem %s3, %s170
        %s172 = smul.u32 8, %s10
      $region32: #{bridger_forward.18} parent=23 // pred_fallthru
        _
    $region24: #{bridger_forward.18} parent=5 // pred_fallthru
      _
    %p173 = scmp.le.s32.totalorder 1, %s10
    %p174 = scmp.lt.s32.totalorder %s10, 3
    %p175 = pnand %p173, %p174
    %p176 = pneg %p175
    // Predicated region
    $region33: #{bridger_forward.18} parent=5 // pred_check
      _
    $region34: #{bridger_forward.18} parent=5 // pred_check_branch
      %178 = sbr.rel (%p175) target = $region36
    $region35: #{bridger_forward.18} parent=5 // pred_region
      %s179 = ssub.s32 %s10, 1
      %s180 = smul.u32 8, %s15
      %p181 = scmp.lt.s32.totalorder %s180, 15
      %s182 = scalar_select %p181, %s180, 15
      %s183 = smul.addr %s182, 4
      %s184 = scalar_lea.vmem %s0, %s183
      %p185 = pneg %p36
      %p186 = pneg %p33
      %p187 = pneg %p57
      %p188 = pneg %p54
      %p189 = pneg %p78
      %p190 = pneg %p75
      %s191 = smul.u32 8, %s15
      %p192 = scmp.lt.s32.totalorder %s191, 15
      %s193 = scalar_select %p192, %s191, 15
      %s194 = smul.addr %s193, 4
      %s195 = scalar_lea.vmem %s3, %s194
      %p196 = pneg %p104
      %p197 = pneg %p101
      %p198 = pneg %p130
      %p199 = pneg %p127
      %s200 = smul.u32 8, %s15
      %p201 = scmp.lt.s32.totalorder %s200, 15
      %s202 = scalar_select %p201, %s200, 15
      %s203 = smul.addr %s202, 8
      %s204 = scalar_lea.vmem %s4, %s203
      %s205 = smul.u32 8, %s15
      %p206 = scmp.lt.s32.totalorder %s205, 15
      %s207 = scalar_select %p206, %s205, 15
      %s208 = smul.addr %s207, 4
      %s209 = scalar_lea.vmem %s0, %s208
      %s210 = smul.u32 8, %s15
      %s211 = smul.u32 8, %s15
      %p212 = scmp.lt.s32.totalorder %s211, 15
      %s213 = scalar_select %p212, %s211, 15
      %s214 = smul.addr %s213, 4
      %s215 = scalar_lea.vmem %s3, %s214
      %s216 = smul.u32 8, %s15
      %s217 = smul.u32 8, %s15
      %p218 = scmp.lt.s32.totalorder %s217, 15
      %s219 = scalar_select %p218, %s217, 15
      %s220 = smul.addr %s219, 8
      %s221 = scalar_lea.vmem %s4, %s220
      %s222 = smul.u32 8, %s15
      %v224 = vld [vmem:[%s209] sm:$0xf]
      %v225 = vld [vmem:[%s209 + $0x4] sm:$0xf]
      %v226 = vld [vmem:[%s209 + $0x8] sm:$0xf]
      %v227 = vld [vmem:[%s209 + $0xc] sm:$0xf]
      %v228 = vld [vmem:[%s209 + $0x10] sm:$0xf]
      %v229 = vld [vmem:[%s209 + $0x14] sm:$0xf]
      %v230 = vld [vmem:[%s209 + $0x18] sm:$0xf]
      %v231 = vld [vmem:[%s209 + $0x1c] sm:$0xf]
      %v232 = vld [vmem:[%s1] sm:$0xf]
      %v233 = vld [vmem:[%s1 + $0x4] sm:$0xf]
      %v234 = vld [vmem:[%s1 + $0x8] sm:$0xf]
      %v235 = vld [vmem:[%s1 + $0xc] sm:$0xf]
      %v236 = vld [vmem:[%s2] sm:$0x1]
      %v238 = vlaneseq
      %v239 = vshrl.u32 %v238, 7
      %v240 = vsub.s32 0, %v239
      %v241 = vrot.slane %v236, %v240
      %v251 = vunpack.c.l.b16 %v224
      %v252 = vunpack.c.l.b16 %v225
      %v253 = vunpack.c.l.b16 %v226
      %v254 = vunpack.c.l.b16 %v227
      %v255 = vunpack.c.l.b16 %v228
      %v256 = vunpack.c.l.b16 %v229
      %v257 = vunpack.c.l.b16 %v230
      %v258 = vunpack.c.l.b16 %v231
      %v259 = vpack.c.b16 %v252, %v251
      %v260 = vpack.c.b16 %v254, %v253
      %v261 = vpack.c.b16 %v256, %v255
      %v262 = vpack.c.b16 %v258, %v257
      %v267 = vunpack.c.l.b16 %v232
      %v268 = vunpack.c.l.b16 %v233
      %v269 = vunpack.c.l.b16 %v234
      %v270 = vunpack.c.l.b16 %v235
      %v271 = vpack.c.b16 %v268, %v267
      %v272 = vpack.c.b16 %v270, %v269
      %vm275 = vcmask 261120
      %v277 = vsel %vm275, %v259, 0
      %v280 = vsel %vm275, %v260, 0
      %v283 = vsel %vm275, %v261, 0
      %v286 = vsel %vm275, %v262, 0
      %288 = vmatprep.subr.bf16.mxu0 0
      %289 = vmatpush1.bf16.msra.mxu0 %v271
      %290 = vmatprep.subr.bf16.mxu0 0
      %291 = vmatpush1.bf16.msra.mxu0 %v272
      %292 = vmatprep.subr.bf16.mxu0 0
      %293 = vmatpush1.bf16.msra.mxu0 0
      %294 = vmatprep.subr.bf16.mxu0 0
      %295 = vmatpush1.bf16.msra.mxu0 0
      %296 = vmatprep.subr.bf16.mxu0 0
      %297 = vmatpush1.bf16.msra.mxu0 0
      %298 = vmatprep.subr.bf16.mxu0 0
      %299 = vmatpush1.bf16.msra.mxu0 0
      %300 = vmatprep.subr.bf16.mxu0 0
      %301 = vmatpush1.bf16.msra.mxu0 0
      %302 = vmatprep.subr.bf16.mxu0 0
      %303 = vmatpush1.bf16.msra.mxu0 0
      %304 = vmatprep.subr.bf16.mxu0 0
      %305 = vmatpush1.bf16.msra.mxu0 0
      %306 = vmatprep.subr.bf16.mxu0 0
      %307 = vmatpush1.bf16.msra.mxu0 0
      %308 = vmatprep.subr.bf16.mxu0 0
      %309 = vmatpush1.bf16.msra.mxu0 0
      %310 = vmatprep.subr.bf16.mxu0 0
      %311 = vmatpush1.bf16.msra.mxu0 0
      %312 = vmatprep.subr.bf16.mxu0 0
      %313 = vmatpush1.bf16.msra.mxu0 0
      %314 = vmatprep.subr.bf16.mxu0 0
      %315 = vmatpush1.bf16.msra.mxu0 0
      %316 = vmatprep.subr.bf16.mxu0 0
      %317 = vmatpush1.bf16.msra.mxu0 0
      %318 = vmatprep.subr.bf16.mxu0 0
      %319 = vmatpush1.bf16.msra.mxu0 0
      %320 = vmatprep.mubr.bf16.mxu0 0
      %321 = vmatmul.mubr.bf16.gmra.mrb[0].mxu0 %v277
      %v322 = vpop.f32.mrb[0].mxu0
      %v323 = vadd.f32 %v241, %v322
      %v324 = vpop.f32.mrb[0].mxu0
      %v325 = vpop.f32.mrb[0].mxu0
      %v326 = vadd.f32 %v241, %v325
      %v327 = vpop.f32.mrb[0].mxu0
      %328 = vmatprep.mubr.bf16.mxu0 0
      %329 = vmatmul.mubr.bf16.gmra.mrb[0].mxu0 %v280
      %v330 = vpop.f32.mrb[0].mxu0
      %v331 = vadd.f32 %v241, %v330
      %v332 = vpop.f32.mrb[0].mxu0
      %v333 = vpop.f32.mrb[0].mxu0
      %v334 = vadd.f32 %v241, %v333
      %v335 = vpop.f32.mrb[0].mxu0
      %336 = vmatprep.mubr.bf16.mxu0 0
      %337 = vmatmul.mubr.bf16.gmra.mrb[0].mxu0 %v283
      %v338 = vpop.f32.mrb[0].mxu0
      %v339 = vadd.f32 %v241, %v338
      %v340 = vpop.f32.mrb[0].mxu0
      %v341 = vpop.f32.mrb[0].mxu0
      %v342 = vadd.f32 %v241, %v341
      %v343 = vpop.f32.mrb[0].mxu0
      %344 = vmatprep.mubr.bf16.mxu0 0
      %345 = vmatmul.mubr.bf16.gmra.mrb[0].mxu0 %v286
      %v346 = vpop.f32.mrb[0].mxu0
      %v347 = vadd.f32 %v241, %v346
      %v348 = vpop.f32.mrb[0].mxu0
      %v349 = vpop.f32.mrb[0].mxu0
      %v350 = vadd.f32 %v241, %v349
      %v351 = vpop.f32.mrb[0].mxu0
      %352 = vdwg.mxu0
      %v353 = vld [vmem:[%s215] sm:$0xf]
      %v354 = vld [vmem:[%s215 + $0x4] sm:$0xf]
      %v355 = vld [vmem:[%s215 + $0x8] sm:$0xf]
      %v356 = vld [vmem:[%s215 + $0xc] sm:$0xf]
      %v357 = vld [vmem:[%s215 + $0x10] sm:$0xf]
      %v358 = vld [vmem:[%s215 + $0x14] sm:$0xf]
      %v359 = vld [vmem:[%s215 + $0x18] sm:$0xf]
      %v360 = vld [vmem:[%s215 + $0x1c] sm:$0xf]
      %v361 = vunpack.c.l.bf16 %v353
      %v362 = vunpack.c.l.bf16 %v354
      %v363 = vunpack.c.l.bf16 %v355
      %v364 = vunpack.c.l.bf16 %v356
      %v365 = vunpack.c.l.bf16 %v357
      %v366 = vunpack.c.l.bf16 %v358
      %v367 = vunpack.c.l.bf16 %v359
      %v368 = vunpack.c.l.bf16 %v360
      %v369 = vadd.f32 %v323, %v361
      %v370 = vadd.f32 %v326, %v362
      %v371 = vadd.f32 %v331, %v363
      %v372 = vadd.f32 %v334, %v364
      %v373 = vadd.f32 %v339, %v365
      %v374 = vadd.f32 %v342, %v366
      %v375 = vadd.f32 %v347, %v367
      %v376 = vadd.f32 %v350, %v368
      %377 = vst [vmem:[%s221] sm:$0xff] %v369
      %378 = vst [vmem:[%s221 + $0x8] sm:$0xff] %v370
      %379 = vst [vmem:[%s221 + $0x10] sm:$0xff] %v371
      %380 = vst [vmem:[%s221 + $0x18] sm:$0xff] %v372
      %381 = vst [vmem:[%s221 + $0x20] sm:$0xff] %v373
      %382 = vst [vmem:[%s221 + $0x28] sm:$0xff] %v374
      %383 = vst [vmem:[%s221 + $0x30] sm:$0xff] %v375
      %384 = vst [vmem:[%s221 + $0x38] sm:$0xff] %v376
      %s385 = smul.u32 8, %s15
      %p386 = scmp.lt.s32.totalorder %s385, 15
      %s387 = scalar_select %p386, %s385, 15
      %s388 = smul.addr %s387, 8
      %s389 = scalar_lea.vmem %s4, %s388
      // Predicated region
      $region37: #{bridger_forward.18} parent=35 // pred_check
        %p390 = pneg %p127
      $region38: #{bridger_forward.18} parent=35 // pred_check_branch
        %392 = sbr.rel (%p390) target = $region40
      $region39: #{bridger_forward.18} parent=35 // pred_region
        %s393 = smul.u32 8, %s15
      $region40: #{bridger_forward.18} parent=35 // pred_fallthru
        _
    $region36: #{bridger_forward.18} parent=5 // pred_fallthru
      _
    %p394 = scmp.le.s32.totalorder 2, %s10
    // Predicated region
    $region41: #{bridger_forward.18} parent=5 // pred_check
      %p395 = pneg %p394
    $region42: #{bridger_forward.18} parent=5 // pred_check_branch
      %397 = sbr.rel (%p395) target = $region44
    $region43: #{bridger_forward.18} parent=5 // pred_region
      %s398 = ssub.s32 %s10, 2
      // Predicated region
      $region45: #{bridger_forward.18} parent=43 // pred_check
        %p399 = pneg %p133
      $region46: #{bridger_forward.18} parent=43 // pred_check_branch
        %401 = sbr.rel (%p399) target = $region48
      $region47: #{bridger_forward.18} parent=43 // pred_region
        %s402 = smul.u32 8, %s16
        %p403 = scmp.lt.s32.totalorder %s402, 15
        %s404 = scalar_select %p403, %s402, 15
        %s405 = smul.addr %s404, 8
        %s406 = scalar_lea.vmem %s4, %s405
      $region48: #{bridger_forward.18} parent=43 // pred_fallthru
        _
    $region44: #{bridger_forward.18} parent=5 // pred_fallthru
      _
  $region6: #{bridger_forward.18} parent=0 // loop_footer
    %s14 = sadd.s32 1, %s10
  $region7: #{bridger_forward.18} parent=0 // loop_footer_branch
    %9 = sbr.rel target = $region3
  $region8: #{bridger_forward.18} parent=0 // loop_exit
    _

// kernel: bridger_forward.14
$region0: #{bridger_forward.14}
  #allocation0 [shape = 'u32[]', space=smem, size = 0x4, offset = 0x4, fixed_abs, tag = 'smem constant byte address 0x4 - core index']
  #allocation1 [shape = 'u32[144,128]{1,0:T(1,128)}', space=vmem, size = 0x12000, scoped, tag = 'internal scratch']
  %s0 = inlined_call_operand.vmem [shape: bf16[128,32], index: 0, kind: input, shape index: {}]
  %s1 = inlined_call_operand.vmem [shape: bf16[32,128], index: 1, kind: input, shape index: {}]
  %s2 = inlined_call_operand.vmem [shape: f32[1,128], index: 2, kind: input, shape index: {}]
  %s3 = inlined_call_operand.vmem [shape: bf16[128,32], index: 3, kind: input, shape index: {}]
  %s4 = inlined_call_operand.vmem [shape: f32[1,32], index: 4, kind: input, shape index: {}]
  %s5 = inlined_call_operand.vmem [shape: f32[1,32], index: 5, kind: input, shape index: {}]
  %s6 = inlined_call_operand.vmem [shape: f32[1,32], index: 6, kind: input, shape index: {}]
  %s7 = inlined_call_operand.vmem [shape: bf16[128,32], index: 7, kind: output, shape index: {}]
  %s8 = sld [smem:[#allocation0]]
  $region61: #{bridger_forward.14} parent=0
    _
  %s10 = ssub.s32 1, %s8
  %s11 = scalar_select 0, %s10, %s8
  loop: start=0, step=1, limit=4
  $region2: #{bridger_forward.14} parent=0 // loop_pre_header
    _
  $region3: #{bridger_forward.14} parent=0 // loop_header
    %s13 = sphi 0, %s17
    %p14 = scmp.ge.s32.totalorder %s13, 4
    %s23 = sphi 0, %s25
    %s26 = sphi 0, %s23
    %s27 = sphi 0, %s26
    %s43 = sphi 0, %s27
    %s47 = sphi 0, %s47
    %s49 = sphi 0, %s47
    %s50 = sphi 0, %s49
    %s64 = sphi 0, %s50
    %s68 = sphi 0, %s68
    %s70 = sphi 0, %s68
    %s71 = sphi 0, %s70
    %s85 = sphi 0, %s71
    %s89 = sphi 0, %s89
    %s91 = sphi 0, %s89
    %s92 = sphi 0, %s91
    %s106 = sphi 0, %s92
    %s110 = sphi 0, %s110
    %s112 = sphi 0, %s110
    %s113 = sphi 0, %s112
    %s127 = sphi 0, %s113
    %s131 = sphi 0, %s131
    %s133 = sphi 0, %s131
    %s134 = sphi 0, %s133
    %s148 = sphi 0, %s134
    %s152 = sphi 0, %s152
    %s154 = sphi 0, %s152
    %s155 = sphi 0, %s154
    %s169 = sphi 0, %s155
    %s175 = sphi 0, %s177
    %s178 = sphi 0, %s175
    %s179 = sphi 0, %s178
    %s195 = sphi 0, %s179
  $region4: #{bridger_forward.14} parent=0 // loop_header_branch
    %16 = sbr.rel (%p14) target = $region8
  $region5: #{bridger_forward.14} parent=0 // loop_body
    %s18 = ssub.s32 %s13, 1
    %s19 = ssub.s32 %s13, 2
    %s20 = sadd.s32 %s13, 1
    %s21 = ssub.s32 %s13, %s20
    %p22 = scmp.eq.s32.totalorder %s21, 0
    %s24 = sadd.s32 %s23, 1
    %s25 = scalar_select %p22, %s23, %s24
    %p28 = pneg %p22
    %p29 = scmp.eq.s32.totalorder %s13, 1
    %p30 = por %p28, %p29
    %p31 = scmp.ne.s32.totalorder %s23, %s26
    %p32 = scmp.eq.s32.totalorder %s13, 0
    %p33 = por %p31, %p32
    %p34 = scmp.ne.s32.totalorder %s23, %s26
    %p35 = scmp.eq.s32.totalorder %s18, 1
    %p36 = por %p34, %p35
    %p37 = scmp.ne.s32.totalorder %s26, %s27
    %p38 = scmp.eq.s32.totalorder %s18, 0
    %p39 = por %p37, %p38
    %p40 = scmp.ne.s32.totalorder %s26, %s27
    %p41 = scmp.eq.s32.totalorder %s19, 1
    %p42 = por %p40, %p41
    %p44 = scmp.ne.s32.totalorder %s27, %s43
    %p45 = scmp.eq.s32.totalorder %s19, 0
    %p46 = por %p44, %p45
    %s48 = sadd.s32 %s47, 1
    %p51 = scmp.eq.s32.totalorder %s13, 1
    %p52 = scmp.ne.s32.totalorder %s47, %s49
    %p53 = scmp.eq.s32.totalorder %s13, 0
    %p54 = por %p52, %p53
    %p55 = scmp.ne.s32.totalorder %s47, %s49
    %p56 = scmp.eq.s32.totalorder %s18, 1
    %p57 = por %p55, %p56
    %p58 = scmp.ne.s32.totalorder %s49, %s50
    %p59 = scmp.eq.s32.totalorder %s18, 0
    %p60 = por %p58, %p59
    %p61 = scmp.ne.s32.totalorder %s49, %s50
    %p62 = scmp.eq.s32.totalorder %s19, 1
    %p63 = por %p61, %p62
    %p65 = scmp.ne.s32.totalorder %s50, %s64
    %p66 = scmp.eq.s32.totalorder %s19, 0
    %p67 = por %p65, %p66
    %s69 = sadd.s32 %s68, 1
    %p72 = scmp.eq.s32.totalorder %s13, 1
    %p73 = scmp.ne.s32.totalorder %s68, %s70
    %p74 = scmp.eq.s32.totalorder %s13, 0
    %p75 = por %p73, %p74
    %p76 = scmp.ne.s32.totalorder %s68, %s70
    %p77 = scmp.eq.s32.totalorder %s18, 1
    %p78 = por %p76, %p77
    %p79 = scmp.ne.s32.totalorder %s70, %s71
    %p80 = scmp.eq.s32.totalorder %s18, 0
    %p81 = por %p79, %p80
    %p82 = scmp.ne.s32.totalorder %s70, %s71
    %p83 = scmp.eq.s32.totalorder %s19, 1
    %p84 = por %p82, %p83
    %p86 = scmp.ne.s32.totalorder %s71, %s85
    %p87 = scmp.eq.s32.totalorder %s19, 0
    %p88 = por %p86, %p87
    %s90 = sadd.s32 %s89, 1
    %p93 = scmp.eq.s32.totalorder %s13, 1
    %p94 = scmp.ne.s32.totalorder %s89, %s91
    %p95 = scmp.eq.s32.totalorder %s13, 0
    %p96 = por %p94, %p95
    %p97 = scmp.ne.s32.totalorder %s89, %s91
    %p98 = scmp.eq.s32.totalorder %s18, 1
    %p99 = por %p97, %p98
    %p100 = scmp.ne.s32.totalorder %s91, %s92
    %p101 = scmp.eq.s32.totalorder %s18, 0
    %p102 = por %p100, %p101
    %p103 = scmp.ne.s32.totalorder %s91, %s92
    %p104 = scmp.eq.s32.totalorder %s19, 1
    %p105 = por %p103, %p104
    %p107 = scmp.ne.s32.totalorder %s92, %s106
    %p108 = scmp.eq.s32.totalorder %s19, 0
    %p109 = por %p107, %p108
    %s111 = sadd.s32 %s110, 1
    %p114 = scmp.eq.s32.totalorder %s13, 1
    %p115 = scmp.ne.s32.totalorder %s110, %s112
    %p116 = scmp.eq.s32.totalorder %s13, 0
    %p117 = por %p115, %p116
    %p118 = scmp.ne.s32.totalorder %s110, %s112
    %p119 = scmp.eq.s32.totalorder %s18, 1
    %p120 = por %p118, %p119
    %p121 = scmp.ne.s32.totalorder %s112, %s113
    %p122 = scmp.eq.s32.totalorder %s18, 0
    %p123 = por %p121, %p122
    %p124 = scmp.ne.s32.totalorder %s112, %s113
    %p125 = scmp.eq.s32.totalorder %s19, 1
    %p126 = por %p124, %p125
    %p128 = scmp.ne.s32.totalorder %s113, %s127
    %p129 = scmp.eq.s32.totalorder %s19, 0
    %p130 = por %p128, %p129
    %s132 = sadd.s32 %s131, 1
    %p135 = scmp.eq.s32.totalorder %s13, 1
    %p136 = scmp.ne.s32.totalorder %s131, %s133
    %p137 = scmp.eq.s32.totalorder %s13, 0
    %p138 = por %p136, %p137
    %p139 = scmp.ne.s32.totalorder %s131, %s133
    %p140 = scmp.eq.s32.totalorder %s18, 1
    %p141 = por %p139, %p140
    %p142 = scmp.ne.s32.totalorder %s133, %s134
    %p143 = scmp.eq.s32.totalorder %s18, 0
    %p144 = por %p142, %p143
    %p145 = scmp.ne.s32.totalorder %s133, %s134
    %p146 = scmp.eq.s32.totalorder %s19, 1
    %p147 = por %p145, %p146
    %p149 = scmp.ne.s32.totalorder %s134, %s148
    %p150 = scmp.eq.s32.totalorder %s19, 0
    %p151 = por %p149, %p150
    %s153 = sadd.s32 %s152, 1
    %p156 = scmp.eq.s32.totalorder %s13, 1
    %p157 = scmp.ne.s32.totalorder %s152, %s154
    %p158 = scmp.eq.s32.totalorder %s13, 0
    %p159 = por %p157, %p158
    %p160 = scmp.ne.s32.totalorder %s152, %s154
    %p161 = scmp.eq.s32.totalorder %s18, 1
    %p162 = por %p160, %p161
    %p163 = scmp.ne.s32.totalorder %s154, %s155
    %p164 = scmp.eq.s32.totalorder %s18, 0
    %p165 = por %p163, %p164
    %p166 = scmp.ne.s32.totalorder %s154, %s155
    %p167 = scmp.eq.s32.totalorder %s19, 1
    %p168 = por %p166, %p167
    %p170 = scmp.ne.s32.totalorder %s155, %s169
    %p171 = scmp.eq.s32.totalorder %s19, 0
    %p172 = por %p170, %p171
    %s173 = ssub.s32 %s13, %s20
    %p174 = scmp.eq.s32.totalorder %s173, 0
    %s176 = sadd.s32 %s175, 1
    %s177 = scalar_select %p174, %s175, %s176
    %p180 = pneg %p174
    %p181 = scmp.eq.s32.totalorder %s13, 1
    %p182 = por %p180, %p181
    %p183 = scmp.ne.s32.totalorder %s175, %s178
    %p184 = scmp.eq.s32.totalorder %s13, 0
    %p185 = por %p183, %p184
    %p186 = scmp.ne.s32.totalorder %s175, %s178
    %p187 = scmp.eq.s32.totalorder %s18, 1
    %p188 = por %p186, %p187
    %p189 = scmp.ne.s32.totalorder %s178, %s179
    %p190 = scmp.eq.s32.totalorder %s18, 0
    %p191 = por %p189, %p190
    %p192 = scmp.ne.s32.totalorder %s178, %s179
    %p193 = scmp.eq.s32.totalorder %s19, 1
    %p194 = por %p192, %p193
    %p196 = scmp.ne.s32.totalorder %s179, %s195
    %p197 = scmp.eq.s32.totalorder %s19, 0
    %p198 = por %p196, %p197
    %p199 = scmp.le.s32.totalorder 1, %s13
    %p200 = scmp.lt.s32.totalorder %s13, 3
    %p201 = pnand %p199, %p200
    %p202 = pneg %p201
    // Predicated region
    $region9: #{bridger_forward.14} parent=5 // pred_check
      _
    $region10: #{bridger_forward.14} parent=5 // pred_check_branch
      %204 = sbr.rel (%p201) target = $region12
    $region11: #{bridger_forward.14} parent=5 // pred_region
      %s205 = ssub.s32 %s13, 1
      // Predicated region
      $region13: #{bridger_forward.14} parent=11 // pred_check
        %p206 = pneg %p60
      $region14: #{bridger_forward.14} parent=11 // pred_check_branch
        %208 = sbr.rel (%p206) target = $region16
      $region15: #{bridger_forward.14} parent=11 // pred_region
        _
      $region16: #{bridger_forward.14} parent=11 // pred_fallthru
        _
      // Predicated region
      $region17: #{bridger_forward.14} parent=11 // pred_check
        %p209 = pneg %p81
      $region18: #{bridger_forward.14} parent=11 // pred_check_branch
        %211 = sbr.rel (%p209) target = $region20
      $region19: #{bridger_forward.14} parent=11 // pred_region
        _
      $region20: #{bridger_forward.14} parent=11 // pred_fallthru
        _
      // Predicated region
      $region21: #{bridger_forward.14} parent=11 // pred_check
        %p212 = pneg %p102
      $region22: #{bridger_forward.14} parent=11 // pred_check_branch
        %214 = sbr.rel (%p212) target = $region24
      $region23: #{bridger_forward.14} parent=11 // pred_region
        _
      $region24: #{bridger_forward.14} parent=11 // pred_fallthru
        _
      // Predicated region
      $region25: #{bridger_forward.14} parent=11 // pred_check
        %p215 = pneg %p123
      $region26: #{bridger_forward.14} parent=11 // pred_check_branch
        %217 = sbr.rel (%p215) target = $region28
      $region27: #{bridger_forward.14} parent=11 // pred_region
        _
      $region28: #{bridger_forward.14} parent=11 // pred_fallthru
        _
      // Predicated region
      $region29: #{bridger_forward.14} parent=11 // pred_check
        %p218 = pneg %p144
      $region30: #{bridger_forward.14} parent=11 // pred_check_branch
        %220 = sbr.rel (%p218) target = $region32
      $region31: #{bridger_forward.14} parent=11 // pred_region
        _
      $region32: #{bridger_forward.14} parent=11 // pred_fallthru
        _
      // Predicated region
      $region33: #{bridger_forward.14} parent=11 // pred_check
        %p221 = pneg %p165
      $region34: #{bridger_forward.14} parent=11 // pred_check_branch
        %223 = sbr.rel (%p221) target = $region36
      $region35: #{bridger_forward.14} parent=11 // pred_region
        _
      $region36: #{bridger_forward.14} parent=11 // pred_fallthru
        _
    $region12: #{bridger_forward.14} parent=5 // pred_fallthru
      _
    %p224 = scmp.lt.s32.totalorder %s13, 2
    // Predicated region
    $region37: #{bridger_forward.14} parent=5 // pred_check
      %p225 = pneg %p224
    $region38: #{bridger_forward.14} parent=5 // pred_check_branch
      %227 = sbr.rel (%p225) target = $region40
    $region39: #{bridger_forward.14} parent=5 // pred_region
      // Predicated region
      $region41: #{bridger_forward.14} parent=39 // pred_check
        %p228 = pneg %p33
      $region42: #{bridger_forward.14} parent=39 // pred_check_branch
        %230 = sbr.rel (%p228) target = $region44
      $region43: #{bridger_forward.14} parent=39 // pred_region
        %s231 = smul.u32 8, %s13
        %p232 = scmp.lt.s32.totalorder %s231, 15
        %s233 = scalar_select %p232, %s231, 15
        %s234 = smul.addr %s233, 4
        %s235 = scalar_lea.vmem %s0, %s234
        %s236 = smul.u32 8, %s13
      $region44: #{bridger_forward.14} parent=39 // pred_fallthru
        _
    $region40: #{bridger_forward.14} parent=5 // pred_fallthru
      _
    %p237 = scmp.le.s32.totalorder 1, %s13
    %p238 = scmp.lt.s32.totalorder %s13, 3
    %p239 = pnand %p237, %p238
    %p240 = pneg %p239
    // Predicated region
    $region45: #{bridger_forward.14} parent=5 // pred_check
      _
    $region46: #{bridger_forward.14} parent=5 // pred_check_branch
      %242 = sbr.rel (%p239) target = $region48
    $region47: #{bridger_forward.14} parent=5 // pred_region
      %s243 = ssub.s32 %s13, 1
      %s244 = smul.u32 8, %s18
      %p245 = scmp.lt.s32.totalorder %s244, 15
      %s246 = scalar_select %p245, %s244, 15
      %s247 = smul.addr %s246, 4
      %s248 = scalar_lea.vmem %s0, %s247
      %p249 = pneg %p39
      %p250 = pneg %p36
      %p251 = pneg %p60
      %p252 = pneg %p57
      %p253 = pneg %p81
      %p254 = pneg %p78
      %p255 = pneg %p102
      %p256 = pneg %p99
      %p257 = pneg %p123
      %p258 = pneg %p120
      %p259 = pneg %p144
      %p260 = pneg %p141
      %p261 = pneg %p165
      %p262 = pneg %p162
      %p263 = pneg %p191
      %p264 = pneg %p188
      %s265 = smul.u32 8, %s18
      %p266 = scmp.lt.s32.totalorder %s265, 15
      %s267 = scalar_select %p266, %s265, 15
      %s268 = smul.addr %s267, 4
      %s269 = scalar_lea.vmem %s7, %s268
      %s270 = smul.u32 8, %s18
      %p271 = scmp.lt.s32.totalorder %s270, 15
      %s272 = scalar_select %p271, %s270, 15
      %s273 = smul.addr %s272, 4
      %s274 = scalar_lea.vmem %s0, %s273
      %s275 = smul.u32 8, %s18
      %s276 = smul.u32 8, %s18
      %p277 = scmp.lt.s32.totalorder %s276, 15
      %s278 = scalar_select %p277, %s276, 15
      %s279 = smul.addr %s278, 4
      %s280 = scalar_lea.vmem %s7, %s279
      %s281 = smul.u32 8, %s18
      %v283 = vld [vmem:[%s274] sm:$0xf]
      %v284 = vld [vmem:[%s274 + $0x4] sm:$0xf]
      %v285 = vld [vmem:[%s274 + $0x8] sm:$0xf]
      %v286 = vld [vmem:[%s274 + $0xc] sm:$0xf]
      %v287 = vld [vmem:[%s274 + $0x10] sm:$0xf]
      %v288 = vld [vmem:[%s274 + $0x14] sm:$0xf]
      %v289 = vld [vmem:[%s274 + $0x18] sm:$0xf]
      %v290 = vld [vmem:[%s274 + $0x1c] sm:$0xf]
      %v291 = vld [vmem:[%s1] sm:$0xf]
      %v292 = vld [vmem:[%s1 + $0x4] sm:$0xf]
      %v293 = vld [vmem:[%s1 + $0x8] sm:$0xf]
      %v294 = vld [vmem:[%s1 + $0xc] sm:$0xf]
      %v295 = vld [vmem:[%s2] sm:$0x1]
      %v297 = vlaneseq
      %v298 = vshrl.u32 %v297, 7
      %v299 = vsub.s32 0, %v298
      %v300 = vrot.slane %v295, %v299
      %v310 = vunpack.c.l.b16 %v283
      %v311 = vunpack.c.l.b16 %v284
      %v312 = vunpack.c.l.b16 %v285
      %v313 = vunpack.c.l.b16 %v286
      %v314 = vunpack.c.l.b16 %v287
      %v315 = vunpack.c.l.b16 %v288
      %v316 = vunpack.c.l.b16 %v289
      %v317 = vunpack.c.l.b16 %v290
      %v318 = vpack.c.b16 %v311, %v310
      %v319 = vpack.c.b16 %v313, %v312
      %v320 = vpack.c.b16 %v315, %v314
      %v321 = vpack.c.b16 %v317, %v316
      %v326 = vunpack.c.l.b16 %v291
      %v327 = vunpack.c.l.b16 %v292
      %v328 = vunpack.c.l.b16 %v293
      %v329 = vunpack.c.l.b16 %v294
      %v330 = vpack.c.b16 %v327, %v326
      %v331 = vpack.c.b16 %v329, %v328
      %vm334 = vcmask 261120
      %v336 = vsel %vm334, %v318, 0
      %v339 = vsel %vm334, %v319, 0
      %v342 = vsel %vm334, %v320, 0
      %v345 = vsel %vm334, %v321, 0
      %347 = vmatprep.subr.bf16.mxu0 0
      %348 = vmatpush1.bf16.msra.mxu0 %v330
      %349 = vmatprep.subr.bf16.mxu0 0
      %350 = vmatpush1.bf16.msra.mxu0 %v331
      %351 = vmatprep.subr.bf16.mxu0 0
      %352 = vmatpush1.bf16.msra.mxu0 0
      %353 = vmatprep.subr.bf16.mxu0 0
      %354 = vmatpush1.bf16.msra.mxu0 0
      %355 = vmatprep.subr.bf16.mxu0 0
      %356 = vmatpush1.bf16.msra.mxu0 0
      %357 = vmatprep.subr.bf16.mxu0 0
      %358 = vmatpush1.bf16.msra.mxu0 0
      %359 = vmatprep.subr.bf16.mxu0 0
      %360 = vmatpush1.bf16.msra.mxu0 0
      %361 = vmatprep.subr.bf16.mxu0 0
      %362 = vmatpush1.bf16.msra.mxu0 0
      %363 = vmatprep.subr.bf16.mxu0 0
      %364 = vmatpush1.bf16.msra.mxu0 0
      %365 = vmatprep.subr.bf16.mxu0 0
      %366 = vmatpush1.bf16.msra.mxu0 0
      %367 = vmatprep.subr.bf16.mxu0 0
      %368 = vmatpush1.bf16.msra.mxu0 0
      %369 = vmatprep.subr.bf16.mxu0 0
      %370 = vmatpush1.bf16.msra.mxu0 0
      %371 = vmatprep.subr.bf16.mxu0 0
      %372 = vmatpush1.bf16.msra.mxu0 0
      %373 = vmatprep.subr.bf16.mxu0 0
      %374 = vmatpush1.bf16.msra.mxu0 0
      %375 = vmatprep.subr.bf16.mxu0 0
      %376 = vmatpush1.bf16.msra.mxu0 0
      %377 = vmatprep.subr.bf16.mxu0 0
      %378 = vmatpush1.bf16.msra.mxu0 0
      %379 = vmatprep.mubr.bf16.mxu0 0
      %380 = vmatmul.mubr.bf16.gmra.mrb[0].mxu0 %v336
      %v381 = vpop.f32.mrb[0].mxu0
      %v382 = vadd.f32 %v300, %v381
      %v383 = vpop.f32.mrb[0].mxu0
      %v384 = vpop.f32.mrb[0].mxu0
      %v385 = vadd.f32 %v300, %v384
      %v386 = vpop.f32.mrb[0].mxu0
      %387 = vmatprep.mubr.bf16.mxu0 0
      %388 = vmatmul.mubr.bf16.gmra.mrb[0].mxu0 %v339
      %v389 = vpop.f32.mrb[0].mxu0
      %v390 = vadd.f32 %v300, %v389
      %v391 = vpop.f32.mrb[0].mxu0
      %v392 = vpop.f32.mrb[0].mxu0
      %v393 = vadd.f32 %v300, %v392
      %v394 = vpop.f32.mrb[0].mxu0
      %395 = vmatprep.mubr.bf16.mxu0 0
      %396 = vmatmul.mubr.bf16.gmra.mrb[0].mxu0 %v342
      %v397 = vpop.f32.mrb[0].mxu0
      %v398 = vadd.f32 %v300, %v397
      %v399 = vpop.f32.mrb[0].mxu0
      %v400 = vpop.f32.mrb[0].mxu0
      %v401 = vadd.f32 %v300, %v400
      %v402 = vpop.f32.mrb[0].mxu0
      %403 = vmatprep.mubr.bf16.mxu0 0
      %404 = vmatmul.mubr.bf16.gmra.mrb[0].mxu0 %v345
      %v405 = vpop.f32.mrb[0].mxu0
      %v406 = vadd.f32 %v300, %v405
      %v407 = vpop.f32.mrb[0].mxu0
      %v408 = vpop.f32.mrb[0].mxu0
      %v409 = vadd.f32 %v300, %v408
      %v410 = vpop.f32.mrb[0].mxu0
      %411 = vdwg.mxu0
      %v412 = vmax.f32 %v382, 0.0
      %v413 = vmax.f32 %v385, 0.0
      %v414 = vmax.f32 %v390, 0.0
      %v415 = vmax.f32 %v393, 0.0
      %v416 = vmax.f32 %v398, 0.0
      %v417 = vmax.f32 %v401, 0.0
      %v418 = vmax.f32 %v406, 0.0
      %v419 = vmax.f32 %v409, 0.0
      %v420 = vpack.c.bf16 %v413, %v412
      %v421 = vpack.c.bf16 %v415, %v414
      %v422 = vpack.c.bf16 %v417, %v416
      %v423 = vpack.c.bf16 %v419, %v418
      %v424 = vld [vmem:[%s3] sm:$0xf]
      %v425 = vld [vmem:[%s3 + $0x4] sm:$0xf]
      %v426 = vld [vmem:[%s3 + $0x8] sm:$0xf]
      %v427 = vld [vmem:[%s3 + $0xc] sm:$0xf]
      %v428 = vld [vmem:[%s3 + $0x10] sm:$0xf]
      %v429 = vld [vmem:[%s3 + $0x14] sm:$0xf]
      %v430 = vld [vmem:[%s3 + $0x18] sm:$0xf]
      %v431 = vld [vmem:[%s3 + $0x1c] sm:$0xf]
      %v432 = vld [vmem:[%s3 + $0x20] sm:$0xf]
      %v433 = vld [vmem:[%s3 + $0x24] sm:$0xf]
      %v434 = vld [vmem:[%s3 + $0x28] sm:$0xf]
      %v435 = vld [vmem:[%s3 + $0x2c] sm:$0xf]
      %v436 = vld [vmem:[%s3 + $0x30] sm:$0xf]
      %v437 = vld [vmem:[%s3 + $0x34] sm:$0xf]
      %v438 = vld [vmem:[%s3 + $0x38] sm:$0xf]
      %v439 = vld [vmem:[%s3 + $0x3c] sm:$0xf]
      %v440 = vld [vmem:[%s4] sm:$0x1]
      %v442 = vlaneseq
      %v443 = vshrl.u32 %v442, 7
      %v444 = vsub.s32 0, %v443
      %v445 = vrot.slane %v440, %v444
      %v463 = vunpack.c.l.b16 %v424
      %v464 = vunpack.c.l.b16 %v425
      %v465 = vunpack.c.l.b16 %v426
      %v466 = vunpack.c.l.b16 %v427
      %v467 = vunpack.c.l.b16 %v428
      %v468 = vunpack.c.l.b16 %v429
      %v469 = vunpack.c.l.b16 %v430
      %v470 = vunpack.c.l.b16 %v431
      %v471 = vunpack.c.l.b16 %v432
      %v472 = vunpack.c.l.b16 %v433
      %v473 = vunpack.c.l.b16 %v434
      %v474 = vunpack.c.l.b16 %v435
      %v475 = vunpack.c.l.b16 %v436
      %v476 = vunpack.c.l.b16 %v437
      %v477 = vunpack.c.l.b16 %v438
      %v478 = vunpack.c.l.b16 %v439
      %v479 = vpack.c.b16 %v464, %v463
      %v480 = vpack.c.b16 %v466, %v465
      %v481 = vpack.c.b16 %v468, %v467
      %v482 = vpack.c.b16 %v470, %v469
      %v483 = vpack.c.b16 %v472, %v471
      %v484 = vpack.c.b16 %v474, %v473
      %v485 = vpack.c.b16 %v476, %v475
      %v486 = vpack.c.b16 %v478, %v477
      %495 = vmatprep.subr.bf16.mxu0 0
      %496 = vmatpush1.bf16.msra.mxu0 %v479
      %497 = vmatprep.subr.bf16.mxu0 0
      %498 = vmatpush1.bf16.msra.mxu0 %v480
      %499 = vmatprep.subr.bf16.mxu0 0
      %500 = vmatpush1.bf16.msra.mxu0 %v481
      %501 = vmatprep.subr.bf16.mxu0 0
      %502 = vmatpush1.bf16.msra.mxu0 %v482
      %503 = vmatprep.subr.bf16.mxu0 0
      %504 = vmatpush1.bf16.msra.mxu0 %v483
      %505 = vmatprep.subr.bf16.mxu0 0
      %506 = vmatpush1.bf16.msra.mxu0 %v484
      %507 = vmatprep.subr.bf16.mxu0 0
      %508 = vmatpush1.bf16.msra.mxu0 %v485
      %509 = vmatprep.subr.bf16.mxu0 0
      %510 = vmatpush1.bf16.msra.mxu0 %v486
      %511 = vmatprep.subr.bf16.mxu0 0
      %512 = vmatpush1.bf16.msra.mxu0 0
      %513 = vmatprep.subr.bf16.mxu0 0
      %514 = vmatpush1.bf16.msra.mxu0 0
      %515 = vmatprep.subr.bf16.mxu0 0
      %516 = vmatpush1.bf16.msra.mxu0 0
      %517 = vmatprep.subr.bf16.mxu0 0
      %518 = vmatpush1.bf16.msra.mxu0 0
      %519 = vmatprep.subr.bf16.mxu0 0
      %520 = vmatpush1.bf16.msra.mxu0 0
      %521 = vmatprep.subr.bf16.mxu0 0
      %522 = vmatpush1.bf16.msra.mxu0 0
      %523 = vmatprep.subr.bf16.mxu0 0
      %524 = vmatpush1.bf16.msra.mxu0 0
      %525 = vmatprep.subr.bf16.mxu0 0
      %526 = vmatpush1.bf16.msra.mxu0 0
      %527 = vmatprep.mubr.bf16.mxu0 0
      %528 = vmatmul.mubr.bf16.gmra.mrb[0].mxu0 %v420
      %v529 = vpop.f32.mrb[0].mxu0
      %v530 = vadd.f32 %v445, %v529
      %v531 = vpop.f32.mrb[0].mxu0
      %v532 = vpop.f32.mrb[0].mxu0
      %v533 = vadd.f32 %v445, %v532
      %v534 = vpop.f32.mrb[0].mxu0
      %535 = vmatprep.mubr.bf16.mxu0 0
      %536 = vmatmul.mubr.bf16.gmra.mrb[0].mxu0 %v421
      %v537 = vpop.f32.mrb[0].mxu0
      %v538 = vadd.f32 %v445, %v537
      %v539 = vpop.f32.mrb[0].mxu0
      %v540 = vpop.f32.mrb[0].mxu0
      %v541 = vadd.f32 %v445, %v540
      %v542 = vpop.f32.mrb[0].mxu0
      %543 = vmatprep.mubr.bf16.mxu0 0
      %544 = vmatmul.mubr.bf16.gmra.mrb[0].mxu0 %v422
      %v545 = vpop.f32.mrb[0].mxu0
      %v546 = vadd.f32 %v445, %v545
      %v547 = vpop.f32.mrb[0].mxu0
      %v548 = vpop.f32.mrb[0].mxu0
      %v549 = vadd.f32 %v445, %v548
      %v550 = vpop.f32.mrb[0].mxu0
      %551 = vmatprep.mubr.bf16.mxu0 0
      %552 = vmatmul.mubr.bf16.gmra.mrb[0].mxu0 %v423
      %v553 = vpop.f32.mrb[0].mxu0
      %v554 = vadd.f32 %v445, %v553
      %v555 = vpop.f32.mrb[0].mxu0
      %v556 = vpop.f32.mrb[0].mxu0
      %v557 = vadd.f32 %v445, %v556
      %v558 = vpop.f32.mrb[0].mxu0
      %559 = vdwg.mxu0
      %v560 = vunpack.c.l.bf16 %v283
      %v561 = vunpack.c.l.bf16 %v284
      %v562 = vunpack.c.l.bf16 %v285
      %v563 = vunpack.c.l.bf16 %v286
      %v564 = vunpack.c.l.bf16 %v287
      %v565 = vunpack.c.l.bf16 %v288
      %v566 = vunpack.c.l.bf16 %v289
      %v567 = vunpack.c.l.bf16 %v290
      %v568 = vadd.f32 %v560, %v530
      %v569 = vadd.f32 %v561, %v533
      %v570 = vadd.f32 %v562, %v538
      %v571 = vadd.f32 %v563, %v541
      %v572 = vadd.f32 %v564, %v546
      %v573 = vadd.f32 %v565, %v549
      %v574 = vadd.f32 %v566, %v554
      %v575 = vadd.f32 %v567, %v557
      %v576 = vld [vmem:[%s5] sm:$0x1]
      %v577 = vld [vmem:[%s6] sm:$0x1]
      %v578 = vsel %vm334, %v568, 0.0
      %579 = vadd.xlane.f32.xlu0 %v578
      %v580 = vpop.xlane.xlu0 %579
      %v581 = vsel %vm334, %v569, 0.0
      %582 = vadd.xlane.f32.xlu0 %v581
      %v583 = vpop.xlane.xlu0 %582
      %v584 = vsel %vm334, %v570, 0.0
      %585 = vadd.xlane.f32.xlu0 %v584
      %v586 = vpop.xlane.xlu0 %585
      %v587 = vsel %vm334, %v571, 0.0
      %588 = vadd.xlane.f32.xlu0 %v587
      %v589 = vpop.xlane.xlu0 %588
      %v590 = vsel %vm334, %v572, 0.0
      %591 = vadd.xlane.f32.xlu0 %v590
      %v592 = vpop.xlane.xlu0 %591
      %v593 = vsel %vm334, %v573, 0.0
      %594 = vadd.xlane.f32.xlu0 %v593
      %v595 = vpop.xlane.xlu0 %594
      %v596 = vsel %vm334, %v574, 0.0
      %597 = vadd.xlane.f32.xlu0 %v596
      %v598 = vpop.xlane.xlu0 %597
      %v599 = vsel %vm334, %v575, 0.0
      %600 = vadd.xlane.f32.xlu0 %v599
      %v601 = vpop.xlane.xlu0 %600
      %v602 = vrcp.pop 32.0
      %v603 = vmul.f32 %v580, %v602
      %v604 = vmul.f32 %v583, %v602
      %v605 = vmul.f32 %v586, %v602
      %v606 = vmul.f32 %v589, %v602
      %v607 = vmul.f32 %v592, %v602
      %v608 = vmul.f32 %v595, %v602
      %v609 = vmul.f32 %v598, %v602
      %v610 = vmul.f32 %v601, %v602
      %v611 = vsub.f32 %v568, %v603
      %v612 = vsub.f32 %v569, %v604
      %v613 = vsub.f32 %v570, %v605
      %v614 = vsub.f32 %v571, %v606
      %v615 = vsub.f32 %v572, %v607
      %v616 = vsub.f32 %v573, %v608
      %v617 = vsub.f32 %v574, %v609
      %v618 = vsub.f32 %v575, %v610
      %v619 = vmul.f32 %v611, %v611
      %v620 = vmul.f32 %v612, %v612
      %v621 = vmul.f32 %v613, %v613
      %v622 = vmul.f32 %v614, %v614
      %v623 = vmul.f32 %v615, %v615
      %v624 = vmul.f32 %v616, %v616
      %v625 = vmul.f32 %v617, %v617
      %v626 = vmul.f32 %v618, %v618
      %v627 = vsel %vm334, %v619, 0.0
      %628 = vadd.xlane.f32.xlu0 %v627
      %v629 = vpop.xlane.xlu0 %628
      %v630 = vsel %vm334, %v620, 0.0
      %631 = vadd.xlane.f32.xlu0 %v630
      %v632 = vpop.xlane.xlu0 %631
      %v633 = vsel %vm334, %v621, 0.0
      %634 = vadd.xlane.f32.xlu0 %v633
      %v635 = vpop.xlane.xlu0 %634
      %v636 = vsel %vm334, %v622, 0.0
      %637 = vadd.xlane.f32.xlu0 %v636
      %v638 = vpop.xlane.xlu0 %637
      %v639 = vsel %vm334, %v623, 0.0
      %640 = vadd.xlane.f32.xlu0 %v639
      %v641 = vpop.xlane.xlu0 %640
      %v642 = vsel %vm334, %v624, 0.0
      %643 = vadd.xlane.f32.xlu0 %v642
      %v644 = vpop.xlane.xlu0 %643
      %v645 = vsel %vm334, %v625, 0.0
      %646 = vadd.xlane.f32.xlu0 %v645
      %v647 = vpop.xlane.xlu0 %646
      %v648 = vsel %vm334, %v626, 0.0
      %649 = vadd.xlane.f32.xlu0 %v648
      %v650 = vpop.xlane.xlu0 %649
      %v651 = vmul.f32 %v629, %v602
      %v652 = vmul.f32 %v632, %v602
      %v653 = vmul.f32 %v635, %v602
      %v654 = vmul.f32 %v638, %v602
      %v655 = vmul.f32 %v641, %v602
      %v656 = vmul.f32 %v644, %v602
      %v657 = vmul.f32 %v647, %v602
      %v658 = vmul.f32 %v650, %v602
      %v659 = vadd.f32 %v651, 1e-05
      %v660 = vadd.f32 %v652, 1e-05
      %v661 = vadd.f32 %v653, 1e-05
      %v662 = vadd.f32 %v654, 1e-05
      %v663 = vadd.f32 %v655, 1e-05
      %v664 = vadd.f32 %v656, 1e-05
      %v665 = vadd.f32 %v657, 1e-05
      %v666 = vadd.f32 %v658, 1e-05
      %v667 = vrsqrt.pop %v659
      %v668 = vrsqrt.pop %v660
      %v669 = vrsqrt.pop %v661
      %v670 = vrsqrt.pop %v662
      %v671 = vrsqrt.pop %v663
      %v672 = vrsqrt.pop %v664
      %v673 = vrsqrt.pop %v665
      %v674 = vrsqrt.pop %v666
      %v675 = vmul.f32 %v611, %v667
      %v676 = vmul.f32 %v612, %v668
      %v677 = vmul.f32 %v613, %v669
      %v678 = vmul.f32 %v614, %v670
      %v679 = vmul.f32 %v615, %v671
      %v680 = vmul.f32 %v616, %v672
      %v681 = vmul.f32 %v617, %v673
      %v682 = vmul.f32 %v618, %v674
      %v684 = vlaneseq
      %v685 = vshrl.u32 %v684, 7
      %v686 = vsub.s32 0, %v685
      %v687 = vrot.slane %v576, %v686
      %v689 = vmul.f32 %v675, %v687
      %v690 = vmul.f32 %v676, %v687
      %v691 = vmul.f32 %v677, %v687
      %v692 = vmul.f32 %v678, %v687
      %v693 = vmul.f32 %v679, %v687
      %v694 = vmul.f32 %v680, %v687
      %v695 = vmul.f32 %v681, %v687
      %v696 = vmul.f32 %v682, %v687
      %v698 = vlaneseq
      %v699 = vshrl.u32 %v698, 7
      %v700 = vsub.s32 0, %v699
      %v701 = vrot.slane %v577, %v700
      %v703 = vadd.f32 %v689, %v701
      %v704 = vadd.f32 %v690, %v701
      %v705 = vadd.f32 %v691, %v701
      %v706 = vadd.f32 %v692, %v701
      %v707 = vadd.f32 %v693, %v701
      %v708 = vadd.f32 %v694, %v701
      %v709 = vadd.f32 %v695, %v701
      %v710 = vadd.f32 %v696, %v701
      %v711 = vpack.c.bf16 %v704, %v703
      %v712 = vpack.c.bf16 %v706, %v705
      %v713 = vpack.c.bf16 %v708, %v707
      %v714 = vpack.c.bf16 %v710, %v709
      %v719 = vunpack.c.l.b16 %v711
      %v720 = vunpack.c.h.b16 %v711
      %v721 = vunpack.c.l.b16 %v712
      %v722 = vunpack.c.h.b16 %v712
      %v723 = vunpack.c.l.b16 %v713
      %v724 = vunpack.c.h.b16 %v713
      %v725 = vunpack.c.l.b16 %v714
      %v726 = vunpack.c.h.b16 %v714
      %v727 = vpack.c.b16 %v719, %v719
      %v728 = vpack.c.b16 %v720, %v720
      %v729 = vpack.c.b16 %v721, %v721
      %v730 = vpack.c.b16 %v722, %v722
      %v731 = vpack.c.b16 %v723, %v723
      %v732 = vpack.c.b16 %v724, %v724
      %v733 = vpack.c.b16 %v725, %v725
      %v734 = vpack.c.b16 %v726, %v726
      %vm743 = vcmask 257024
      %744 = vst.msk [vmem:[%s280] sm:$0xf] %vm743, %v727
      %745 = vst.msk [vmem:[%s280 + $0x4] sm:$0xf] %vm743, %v728
      %746 = vst.msk [vmem:[%s280 + $0x8] sm:$0xf] %vm743, %v729
      %747 = vst.msk [vmem:[%s280 + $0xc] sm:$0xf] %vm743, %v730
      %748 = vst.msk [vmem:[%s280 + $0x10] sm:$0xf] %vm743, %v731
      %749 = vst.msk [vmem:[%s280 + $0x14] sm:$0xf] %vm743, %v732
      %750 = vst.msk [vmem:[%s280 + $0x18] sm:$0xf] %vm743, %v733
      %751 = vst.msk [vmem:[%s280 + $0x1c] sm:$0xf] %vm743, %v734
      %s752 = smul.u32 8, %s18
      %p753 = scmp.lt.s32.totalorder %s752, 15
      %s754 = scalar_select %p753, %s752, 15
      %s755 = smul.addr %s754, 4
      %s756 = scalar_lea.vmem %s7, %s755
      // Predicated region
      $region49: #{bridger_forward.14} parent=47 // pred_check
        %p757 = pneg %p188
      $region50: #{bridger_forward.14} parent=47 // pred_check_branch
        %759 = sbr.rel (%p757) target = $region52
      $region51: #{bridger_forward.14} parent=47 // pred_region
        %s760 = smul.u32 8, %s18
      $region52: #{bridger_forward.14} parent=47 // pred_fallthru
        _
    $region48: #{bridger_forward.14} parent=5 // pred_fallthru
      _
    %p761 = scmp.le.s32.totalorder 2, %s13
    // Predicated region
    $region53: #{bridger_forward.14} parent=5 // pred_check
      %p762 = pneg %p761
    $region54: #{bridger_forward.14} parent=5 // pred_check_branch
      %764 = sbr.rel (%p762) target = $region56
    $region55: #{bridger_forward.14} parent=5 // pred_region
      %s765 = ssub.s32 %s13, 2
      // Predicated region
      $region57: #{bridger_forward.14} parent=55 // pred_check
        %p766 = pneg %p194
      $region58: #{bridger_forward.14} parent=55 // pred_check_branch
        %768 = sbr.rel (%p766) target = $region60
      $region59: #{bridger_forward.14} parent=55 // pred_region
        %s769 = smul.u32 8, %s19
        %p770 = scmp.lt.s32.totalorder %s769, 15
        %s771 = scalar_select %p770, %s769, 15
        %s772 = smul.addr %s771, 4
        %s773 = scalar_lea.vmem %s7, %s772
      $region60: #{bridger_forward.14} parent=55 // pred_fallthru
        _
    $region56: #{bridger_forward.14} parent=5 // pred_fallthru
      _
  $region6: #{bridger_forward.14} parent=0 // loop_footer
    %s17 = sadd.s32 1, %s13
  $region7: #{bridger_forward.14} parent=0 // loop_footer_branch
    %12 = sbr.rel target = $region3
  $region8: #{bridger_forward.14} parent=0 // loop_exit
    _

// kernel: bridger_forward.19
$region0: #{bridger_forward.19}
  #allocation0 [shape = 'u32[]', space=smem, size = 0x4, offset = 0x4, fixed_abs, tag = 'smem constant byte address 0x4 - core index']
  #allocation1 [shape = 'u32[144,128]{1,0:T(1,128)}', space=vmem, size = 0x12000, scoped, tag = 'internal scratch']
  %s0 = inlined_call_operand.vmem [shape: bf16[16,32], index: 0, kind: input, shape index: {}]
  %s1 = inlined_call_operand.vmem [shape: bf16[32,48], index: 1, kind: input, shape index: {}]
  %s2 = inlined_call_operand.vmem [shape: f32[1,48], index: 2, kind: input, shape index: {}]
  %s3 = inlined_call_operand.vmem [shape: f32[16,48], index: 3, kind: input, shape index: {}]
  %s4 = inlined_call_operand.hbm [shape: f32[16,48], index: 4, kind: output, shape index: {}]
  %s5 = sld [smem:[#allocation0]]
  $region49: #{bridger_forward.19} parent=0
    _
  %s7 = ssub.s32 1, %s5
  %s8 = scalar_select 0, %s7, %s5
  $region1: #{bridger_forward.19} parent=0
    #allocation2 [shape = 'u8[8192]{0}', space=vmem, size = 0x2000, scoped, tag = 'output window, operand 0']
    #allocation3 [shape = 's32[2]{0}', space=sflag, size = 0x8, scoped, tag = 'scoped memory for bridger_forward.19']
    %9 = vsyncpa [#allocation3], 0
    %s10 = scalar_lea.sflag [#allocation3], 1
    %11 = vsyncpa %s10, 0
    loop: start=0, step=1, limit=4
    $region2: #{bridger_forward.19} parent=1 // loop_pre_header
      _
    $region3: #{bridger_forward.19} parent=1 // loop_header
      %s13 = sphi 0, %s17
      %p14 = scmp.ge.s32.totalorder %s13, 4
      %s23 = sphi 0, %s25
      %s26 = sphi 0, %s23
      %s27 = sphi 0, %s26
      %s43 = sphi 0, %s27
      %s47 = sphi 0, %s47
      %s49 = sphi 0, %s47
      %s50 = sphi 0, %s49
      %s64 = sphi 0, %s50
      %s68 = sphi 0, %s68
      %s70 = sphi 0, %s68
      %s71 = sphi 0, %s70
      %s85 = sphi 0, %s71
      %s91 = sphi 0, %s93
      %s94 = sphi 0, %s91
      %s95 = sphi 0, %s94
      %s111 = sphi 0, %s95
      %s117 = sphi 0, %s119
      %s120 = sphi 0, %s117
      %s121 = sphi 0, %s120
      %s137 = sphi 0, %s121
    $region4: #{bridger_forward.19} parent=1 // loop_header_branch
      %16 = sbr.rel (%p14) target = $region8
    $region5: #{bridger_forward.19} parent=1 // loop_body
      %s18 = ssub.s32 %s13, 1
      %s19 = ssub.s32 %s13, 2
      %s20 = sadd.s32 %s13, 1
      %s21 = ssub.s32 %s13, %s20
      %p22 = scmp.eq.s32.totalorder %s21, 0
      %s24 = sadd.s32 %s23, 1
      %s25 = scalar_select %p22, %s23, %s24
      %p28 = pneg %p22
      %p29 = scmp.eq.s32.totalorder %s13, 1
      %p30 = por %p28, %p29
      %p31 = scmp.ne.s32.totalorder %s23, %s26
      %p32 = scmp.eq.s32.totalorder %s13, 0
      %p33 = por %p31, %p32
      %p34 = scmp.ne.s32.totalorder %s23, %s26
      %p35 = scmp.eq.s32.totalorder %s18, 1
      %p36 = por %p34, %p35
      %p37 = scmp.ne.s32.totalorder %s26, %s27
      %p38 = scmp.eq.s32.totalorder %s18, 0
      %p39 = por %p37, %p38
      %p40 = scmp.ne.s32.totalorder %s26, %s27
      %p41 = scmp.eq.s32.totalorder %s19, 1
      %p42 = por %p40, %p41
      %p44 = scmp.ne.s32.totalorder %s27, %s43
      %p45 = scmp.eq.s32.totalorder %s19, 0
      %p46 = por %p44, %p45
      %s48 = sadd.s32 %s47, 1
      %p51 = scmp.eq.s32.totalorder %s13, 1
      %p52 = scmp.ne.s32.totalorder %s47, %s49
      %p53 = scmp.eq.s32.totalorder %s13, 0
      %p54 = por %p52, %p53
      %p55 = scmp.ne.s32.totalorder %s47, %s49
      %p56 = scmp.eq.s32.totalorder %s18, 1
      %p57 = por %p55, %p56
      %p58 = scmp.ne.s32.totalorder %s49, %s50
      %p59 = scmp.eq.s32.totalorder %s18, 0
      %p60 = por %p58, %p59
      %p61 = scmp.ne.s32.totalorder %s49, %s50
      %p62 = scmp.eq.s32.totalorder %s19, 1
      %p63 = por %p61, %p62
      %p65 = scmp.ne.s32.totalorder %s50, %s64
      %p66 = scmp.eq.s32.totalorder %s19, 0
      %p67 = por %p65, %p66
      %s69 = sadd.s32 %s68, 1
      %p72 = scmp.eq.s32.totalorder %s13, 1
      %p73 = scmp.ne.s32.totalorder %s68, %s70
      %p74 = scmp.eq.s32.totalorder %s13, 0
      %p75 = por %p73, %p74
      %p76 = scmp.ne.s32.totalorder %s68, %s70
      %p77 = scmp.eq.s32.totalorder %s18, 1
      %p78 = por %p76, %p77
      %p79 = scmp.ne.s32.totalorder %s70, %s71
      %p80 = scmp.eq.s32.totalorder %s18, 0
      %p81 = por %p79, %p80
      %p82 = scmp.ne.s32.totalorder %s70, %s71
      %p83 = scmp.eq.s32.totalorder %s19, 1
      %p84 = por %p82, %p83
      %p86 = scmp.ne.s32.totalorder %s71, %s85
      %p87 = scmp.eq.s32.totalorder %s19, 0
      %p88 = por %p86, %p87
      %s89 = ssub.s32 %s13, %s20
      %p90 = scmp.eq.s32.totalorder %s89, 0
      %s92 = sadd.s32 %s91, 1
      %s93 = scalar_select %p90, %s91, %s92
      %p96 = pneg %p90
      %p97 = scmp.eq.s32.totalorder %s13, 1
      %p98 = por %p96, %p97
      %p99 = scmp.ne.s32.totalorder %s91, %s94
      %p100 = scmp.eq.s32.totalorder %s13, 0
      %p101 = por %p99, %p100
      %p102 = scmp.ne.s32.totalorder %s91, %s94
      %p103 = scmp.eq.s32.totalorder %s18, 1
      %p104 = por %p102, %p103
      %p105 = scmp.ne.s32.totalorder %s94, %s95
      %p106 = scmp.eq.s32.totalorder %s18, 0
      %p107 = por %p105, %p106
      %p108 = scmp.ne.s32.totalorder %s94, %s95
      %p109 = scmp.eq.s32.totalorder %s19, 1
      %p110 = por %p108, %p109
      %p112 = scmp.ne.s32.totalorder %s95, %s111
      %p113 = scmp.eq.s32.totalorder %s19, 0
      %p114 = por %p112, %p113
      %s115 = ssub.s32 %s13, %s20
      %p116 = scmp.eq.s32.totalorder %s115, 0
      %s118 = sadd.s32 %s117, 1
      %s119 = scalar_select %p116, %s117, %s118
      %p122 = pneg %p116
      %p123 = scmp.eq.s32.totalorder %s13, 1
      %p124 = por %p122, %p123
      %p125 = scmp.ne.s32.totalorder %s117, %s120
      %p126 = scmp.eq.s32.totalorder %s13, 0
      %p127 = por %p125, %p126
      %p128 = scmp.ne.s32.totalorder %s117, %s120
      %p129 = scmp.eq.s32.totalorder %s18, 1
      %p130 = por %p128, %p129
      %p131 = scmp.ne.s32.totalorder %s120, %s121
      %p132 = scmp.eq.s32.totalorder %s18, 0
      %p133 = por %p131, %p132
      %p134 = scmp.ne.s32.totalorder %s120, %s121
      %p135 = scmp.eq.s32.totalorder %s19, 1
      %p136 = por %p134, %p135
      %p138 = scmp.ne.s32.totalorder %s121, %s137
      %p139 = scmp.eq.s32.totalorder %s19, 0
      %p140 = por %p138, %p139
      %p141 = scmp.le.s32.totalorder 1, %s13
      %p142 = scmp.lt.s32.totalorder %s13, 3
      %p143 = pnand %p141, %p142
      %p144 = pneg %p143
      // Predicated region
      $region9: #{bridger_forward.19} parent=5 // pred_check
        _
      $region10: #{bridger_forward.19} parent=5 // pred_check_branch
        %146 = sbr.rel (%p143) target = $region12
      $region11: #{bridger_forward.19} parent=5 // pred_region
        %s147 = ssub.s32 %s13, 1
        // Predicated region
        $region13: #{bridger_forward.19} parent=11 // pred_check
          %p148 = pneg %p60
        $region14: #{bridger_forward.19} parent=11 // pred_check_branch
          %150 = sbr.rel (%p148) target = $region16
        $region15: #{bridger_forward.19} parent=11 // pred_region
          _
        $region16: #{bridger_forward.19} parent=11 // pred_fallthru
          _
        // Predicated region
        $region17: #{bridger_forward.19} parent=11 // pred_check
          %p151 = pneg %p81
        $region18: #{bridger_forward.19} parent=11 // pred_check_branch
          %153 = sbr.rel (%p151) target = $region20
        $region19: #{bridger_forward.19} parent=11 // pred_region
          _
        $region20: #{bridger_forward.19} parent=11 // pred_fallthru
          _
      $region12: #{bridger_forward.19} parent=5 // pred_fallthru
        _
      %p154 = scmp.lt.s32.totalorder %s13, 2
      // Predicated region
      $region21: #{bridger_forward.19} parent=5 // pred_check
        %p155 = pneg %p154
      $region22: #{bridger_forward.19} parent=5 // pred_check_branch
        %157 = sbr.rel (%p155) target = $region24
      $region23: #{bridger_forward.19} parent=5 // pred_region
        // Predicated region
        $region25: #{bridger_forward.19} parent=23 // pred_check
          %p158 = pneg %p33
        $region26: #{bridger_forward.19} parent=23 // pred_check_branch
          %160 = sbr.rel (%p158) target = $region28
        $region27: #{bridger_forward.19} parent=23 // pred_region
          %p161 = scmp.lt.s32.totalorder %s13, 1
          %s162 = scalar_select %p161, %s13, 1
          %s163 = smul.addr %s162, 4
          %s164 = scalar_lea.vmem %s0, %s163
        $region28: #{bridger_forward.19} parent=23 // pred_fallthru
          _
        // Predicated region
        $region29: #{bridger_forward.19} parent=23 // pred_check
          %p165 = pneg %p101
        $region30: #{bridger_forward.19} parent=23 // pred_check_branch
          %167 = sbr.rel (%p165) target = $region32
        $region31: #{bridger_forward.19} parent=23 // pred_region
          %p168 = scmp.lt.s32.totalorder %s13, 1
          %s169 = scalar_select %p168, %s13, 1
          %s170 = smul.addr %s169, 8
          %s171 = scalar_lea.vmem %s3, %s170
        $region32: #{bridger_forward.19} parent=23 // pred_fallthru
          _
      $region24: #{bridger_forward.19} parent=5 // pred_fallthru
        _
      %p172 = scmp.le.s32.totalorder 1, %s13
      %p173 = scmp.lt.s32.totalorder %s13, 3
      %p174 = pnand %p172, %p173
      %p175 = pneg %p174
      // Predicated region
      $region33: #{bridger_forward.19} parent=5 // pred_check
        _
      $region34: #{bridger_forward.19} parent=5 // pred_check_branch
        %177 = sbr.rel (%p174) target = $region36
      $region35: #{bridger_forward.19} parent=5 // pred_region
        %s178 = ssub.s32 %s13, 1
        %p179 = scmp.lt.s32.totalorder %s18, 1
        %s180 = scalar_select %p179, %s18, 1
        %s181 = smul.addr %s180, 4
        %s182 = scalar_lea.vmem %s0, %s181
        %p183 = pneg %p39
        %p184 = pneg %p36
        %p185 = pneg %p60
        %p186 = pneg %p57
        %p187 = pneg %p81
        %p188 = pneg %p78
        %p189 = scmp.lt.s32.totalorder %s18, 1
        %s190 = scalar_select %p189, %s18, 1
        %s191 = smul.addr %s190, 8
        %s192 = scalar_lea.vmem %s3, %s191
        %p193 = pneg %p107
        %p194 = pneg %p104
        %p195 = pneg %p133
        %p196 = pneg %p130
        %s197 = sand.u32 %s120, 1
        %s198 = scalar_lea.sflag [#allocation3], %s197
        %s199 = sand.u32 %s120, 1
        %s200 = smul.addr %s199, 8
        %s201 = scalar_lea.vmem [#allocation2], %s200
        %p202 = scmp.lt.s32.totalorder %s18, 1
        %s203 = scalar_select %p202, %s18, 1
        %s204 = smul.addr %s203, 4
        %s205 = scalar_lea.vmem %s0, %s204
        %p206 = scmp.lt.s32.totalorder %s18, 1
        %s207 = scalar_select %p206, %s18, 1
        %s208 = smul.addr %s207, 8
        %s209 = scalar_lea.vmem %s3, %s208
        %v211 = vld [vmem:[%s205] sm:$0xf]
        %v212 = vld [vmem:[%s1] sm:$0xf]
        %v213 = vld [vmem:[%s1 + $0x4] sm:$0xf]
        %v214 = vld [vmem:[%s1 + $0x8] sm:$0xf]
        %v215 = vld [vmem:[%s1 + $0xc] sm:$0xf]
        %v216 = vld [vmem:[%s2] sm:$0x1]
        %v218 = vlaneseq
        %v219 = vshrl.u32 %v218, 7
        %v220 = vsub.s32 0, %v219
        %v221 = vrot.slane %v216, %v220
        %v227 = vunpack.c.l.b16 %v212
        %v228 = vunpack.c.l.b16 %v213
        %v229 = vunpack.c.l.b16 %v214
        %v230 = vunpack.c.l.b16 %v215
        %v231 = vpack.c.b16 %v228, %v227
        %v232 = vpack.c.b16 %v230, %v229
        %vm235 = vcmask 261120
        %v237 = vsel %vm235, %v211, 0
        %239 = vmatprep.subr.bf16.mxu0 0
        %240 = vmatpush1.bf16.msra.mxu0 %v231
        %241 = vmatprep.subr.bf16.mxu0 0
        %242 = vmatpush1.bf16.msra.mxu0 %v232
        %243 = vmatprep.subr.bf16.mxu0 0
        %244 = vmatpush1.bf16.msra.mxu0 0
        %245 = vmatprep.subr.bf16.mxu0 0
        %246 = vmatpush1.bf16.msra.mxu0 0
        %247 = vmatprep.subr.bf16.mxu0 0
        %248 = vmatpush1.bf16.msra.mxu0 0
        %249 = vmatprep.subr.bf16.mxu0 0
        %250 = vmatpush1.bf16.msra.mxu0 0
        %251 = vmatprep.subr.bf16.mxu0 0
        %252 = vmatpush1.bf16.msra.mxu0 0
        %253 = vmatprep.subr.bf16.mxu0 0
        %254 = vmatpush1.bf16.msra.mxu0 0
        %255 = vmatprep.subr.bf16.mxu0 0
        %256 = vmatpush1.bf16.msra.mxu0 0
        %257 = vmatprep.subr.bf16.mxu0 0
        %258 = vmatpush1.bf16.msra.mxu0 0
        %259 = vmatprep.subr.bf16.mxu0 0
        %260 = vmatpush1.bf16.msra.mxu0 0
        %261 = vmatprep.subr.bf16.mxu0 0
        %262 = vmatpush1.bf16.msra.mxu0 0
        %263 = vmatprep.subr.bf16.mxu0 0
        %264 = vmatpush1.bf16.msra.mxu0 0
        %265 = vmatprep.subr.bf16.mxu0 0
        %266 = vmatpush1.bf16.msra.mxu0 0
        %267 = vmatprep.subr.bf16.mxu0 0
        %268 = vmatpush1.bf16.msra.mxu0 0
        %269 = vmatprep.subr.bf16.mxu0 0
        %270 = vmatpush1.bf16.msra.mxu0 0
        %271 = vmatprep.mubr.bf16.mxu0 0
        %272 = vmatmul.mubr.bf16.gmra.mrb[0].mxu0 %v237
        %v273 = vpop.f32.mrb[0].mxu0
        %v274 = vadd.f32 %v221, %v273
        %v275 = vpop.f32.mrb[0].mxu0
        %v276 = vpop.f32.mrb[0].mxu0
        %v277 = vpop.f32.mrb[0].mxu0
        %278 = vdwg.mxu0
        %v279 = vld [vmem:[%s209] sm:$0xff]
        %v280 = vadd.f32 %v274, %v279
        %vm281 = vcmask 392192
        %282 = vst.msk [vmem:[%s201] sm:$0xff] %vm281, %v280
        %s283 = sand.u32 %s120, 1
        %s284 = scalar_lea.sflag [#allocation3], %s283
        %s285 = sand.u32 %s120, 1
        %s286 = smul.addr %s285, 8
        %s287 = scalar_lea.vmem [#allocation2], %s286
        // Predicated region
        $region37: #{bridger_forward.19} parent=35 // pred_check
          %p288 = pneg %p130
        $region38: #{bridger_forward.19} parent=35 // pred_check_branch
          %290 = sbr.rel (%p288) target = $region40
        $region39: #{bridger_forward.19} parent=35 // pred_region
          %s292 = ssub.s32 128, 128
          %293 = vsyncadd %s284, %s292
          %s294 = smul.addr %s18, 128
          %s295 = scalar_lea.hbm %s4, %s294
          %s297 = sshll.u32 %s287, 4
          %s298 = int_to_ptr.vmem [resolvable:$true] %s297
          %300 = dma.vmem_to_hbm [thread:$0]  %s298, 128, %s295, %s284
        $region40: #{bridger_forward.19} parent=35 // pred_fallthru
          _
      $region36: #{bridger_forward.19} parent=5 // pred_fallthru
        _
      %p301 = scmp.le.s32.totalorder 2, %s13
      // Predicated region
      $region41: #{bridger_forward.19} parent=5 // pred_check
        %p302 = pneg %p301
      $region42: #{bridger_forward.19} parent=5 // pred_check_branch
        %304 = sbr.rel (%p302) target = $region44
      $region43: #{bridger_forward.19} parent=5 // pred_region
        %s305 = ssub.s32 %s13, 2
        // Predicated region
        $region45: #{bridger_forward.19} parent=43 // pred_check
          %p306 = pneg %p136
        $region46: #{bridger_forward.19} parent=43 // pred_check_branch
          %308 = sbr.rel (%p306) target = $region48
        $region47: #{bridger_forward.19} parent=43 // pred_region
          %s309 = sand.u32 %s121, 1
          %s310 = scalar_lea.sflag [#allocation3], %s309
          %s311 = sand.u32 %s121, 1
          %s312 = smul.addr %s311, 8
          %s313 = scalar_lea.vmem [#allocation2], %s312
          %314 = dma.done %s310, 128
        $region48: #{bridger_forward.19} parent=43 // pred_fallthru
          _
      $region44: #{bridger_forward.19} parent=5 // pred_fallthru
        _
    $region6: #{bridger_forward.19} parent=1 // loop_footer
      %s17 = sadd.s32 1, %s13
    $region7: #{bridger_forward.19} parent=1 // loop_footer_branch
      %12 = sbr.rel target = $region3
    $region8: #{bridger_forward.19} parent=1 // loop_exit
      _
    %315 = vsyncpa [#allocation3], 1
    %s316 = scalar_lea.sflag [#allocation3], 1
    %317 = vsyncpa %s316, 1

</llo_original>
